<compile_context>
chip_gen: v6e
topology: v6e:2x2x1
jax: 0.10.0
libtpu: 0.0.40
codegen_flags: <defaults>
</compile_context>

<pallas_src>
import functools

import jax
import jax.numpy as jnp
from jax.experimental import pallas as pl
from jax.experimental.pallas import tpu as pltpu


def _round_up(n, m):
    return ((n + m - 1) // m) * m


def _choose_tile(m, max_tile, align=16, min_split=1024):
    """Pick a row-tile: as large as possible, but >=2 grid steps for big M so
    both v7x TensorCores get work on the 'parallel' point axis."""
    t = min(max_tile, _round_up(m, align))
    if m >= min_split and _round_up(m, t) // t < 2:
        t = _round_up((m + 1) // 2, align)
    return t


# ----------------------------------------------------------------------------
# Parameter construction (deterministic, synthetic) + BN folding
# ----------------------------------------------------------------------------
def _fold_bn(w, b, gamma, beta, mean, var, eps=1e-5):
    scale = gamma / jnp.sqrt(var + eps)           # (Cout,)
    return w * scale[None, :], (b - mean) * scale + beta


def make_conv1d_params(key, cin, cout, with_bn=True):
    """Conv1d(kernel=1) weights stored as (Cin, Cout); bias as (1, Cout)."""
    k = jax.random.split(key, 6)
    w = jax.random.normal(k[0], (cin, cout), jnp.float32) / jnp.sqrt(float(cin))
    b = jax.random.normal(k[1], (cout,), jnp.float32) * 0.05
    if with_bn:
        gamma = 0.5 + jax.random.uniform(k[2], (cout,), jnp.float32)
        beta = jax.random.normal(k[3], (cout,), jnp.float32) * 0.1
        mean = jax.random.normal(k[4], (cout,), jnp.float32) * 0.1
        var = 0.5 + jax.random.uniform(k[5], (cout,), jnp.float32)
        w, b = _fold_bn(w, b, gamma, beta, mean, var)
    return w, b.reshape(1, cout)


# ----------------------------------------------------------------------------
# Kernel 1: pointwise Conv1D (+folded BN)(+ReLU) over rows  -> used for `trans`
# ----------------------------------------------------------------------------
def _linear_kernel(x_ref, w_ref, b_ref, o_ref, *, relu):
    y = jnp.dot(x_ref[...], w_ref[...], preferred_element_type=jnp.float32)
    y = y + b_ref[...]
    if relu:
        y = jnp.maximum(y, 0.0)
    o_ref[...] = y.astype(o_ref.dtype)


def conv1d_rows(x, w, b, *, relu=True, max_tile=2048):
    """x: (M, Cin) -> (M, Cout) f32.  bf16 matmul inputs, f32 accumulate."""
    m, cin = x.shape
    cout = w.shape[1]
    tile = _choose_tile(m, max_tile, align=16)
    mp = _round_up(m, tile)
    xb = x.astype(jnp.bfloat16)
    if mp != m:
        xb = jnp.pad(xb, ((0, mp - m), (0, 0)))
    y = pl.pallas_call(
        functools.partial(_linear_kernel, relu=relu),
        out_shape=jax.ShapeDtypeStruct((mp, cout), jnp.float32),
        grid_spec=pltpu.PrefetchScalarGridSpec(
            num_scalar_prefetch=0,
            grid=(mp // tile,),
            in_specs=[
                pl.BlockSpec((tile, cin), lambda i: (i, 0)),
                pl.BlockSpec((cin, cout), lambda i: (0, 0)),
                pl.BlockSpec((1, cout), lambda i: (0, 0)),
            ],
            out_specs=pl.BlockSpec((tile, cout), lambda i: (i, 0)),
        ),
        compiler_params=pltpu.CompilerParams(dimension_semantics=("parallel",)),
    )(xb, w.astype(jnp.bfloat16), b)
    return y[:m]


# ----------------------------------------------------------------------------
# Kernel 2: GraphConv2 dense chain.  K neighbors processed in-kernel with an
# unrolled loop; hoisted k-invariant terms; lane-concat matmuls; single store.
# ----------------------------------------------------------------------------
def _graph_chain_kernel(edge_ref, h_ref,
                        w1_ref, b1_ref,
                        w2a_ref, w2b_ref, b2_ref,
                        w3ab_ref, w3c_ref, b3_ref,
                        w4abc_ref, w4d_ref, b4_ref,
                        out_ref, *, K):
    bf16 = jnp.bfloat16
    f32 = jnp.float32

    def mm(a, w_ref):
        return jnp.dot(a, w_ref[...], preferred_element_type=f32)

    xr = h_ref[...]                                    # (TP, C) bf16, resident
    # k-invariant terms: computed once per point tile (hoisted out of K loop).
    h2 = mm(xr, w2b_ref) + b2_ref[...]                 # layers_mid[0] pre-ReLU part
    h3 = mm(xr, w3c_ref) + b3_ref[...]                 # layer_last  pre-ReLU part
    h4 = mm(xr, w4d_ref) + b4_ref[...]                 # layer_out (no ReLU): add after max

    def neighbor(k):
        e = edge_ref[k]                                # (TP, 3+C) bf16, static view
        lin1 = jnp.maximum(mm(e, w1_ref) + b1_ref[...], 0.0)
        l1 = lin1.astype(bf16)
        lin2 = jnp.maximum(mm(l1, w2a_ref) + h2, 0.0)
        l2 = lin2.astype(bf16)
        lin3 = jnp.maximum(
            mm(jnp.concatenate([l2, l1], axis=-1), w3ab_ref) + h3, 0.0)
        l3 = lin3.astype(bf16)
        return mm(jnp.concatenate([l3, l2, l1], axis=-1), w4abc_ref)   # (TP, C_out) f32

    acc = neighbor(0)
    for k in range(1, K):          # static unroll; max-reduce over neighbors
        acc = jnp.maximum(acc, neighbor(k))
    out_ref[...] = (acc + h4).astype(out_ref.dtype)    # single store per tile


def graph_conv2_forward(h_rows, pos_bn, knn_idx, gparams, *, B, N, K,
                        tile_points=1024):
    """h_rows: (B*N, C) f32, pos_bn: (B, N, 3), knn_idx: (B, N, K) -> (B*N, C+3g)."""
    M, C = h_rows.shape
    h_bn = h_rows.reshape(B, N, C)

    # TODO(synk): knn_group_v2 neighbor gather + relative edge construction is
    # data-dependent and stays plain-JAX glue; only the dense chain + K-max
    # run in Pallas.
    gather = jax.vmap(lambda feat, idx: feat[idx])      # (N,C),(N,K)->(N,K,C)
    knn_feat = gather(h_bn, knn_idx)                    # (B, N, K, C)
    knn_pos = gather(pos_bn, knn_idx)                   # (B, N, K, 3)
    edge = jnp.concatenate(
        [knn_pos - pos_bn[:, :, None, :], knn_feat - h_bn[:, :, None, :]],
        axis=-1,
    )                                                   # relative_feat_only=True

    c_edge = 3 + C
    # (K, B*N, 3+C): each neighbor is a contiguous (TP, 3+C) plane in the block.
    edge_kmc = jnp.transpose(edge, (2, 0, 1, 3)).reshape(K, M, c_edge)
    edge_kmc = edge_kmc.astype(jnp.bfloat16)
    h_bf = h_rows.astype(jnp.bfloat16)

    TP = _choose_tile(M, tile_points, align=16)
    Mp = _round_up(M, TP)
    if Mp != M:
        edge_kmc = jnp.pad(edge_kmc, ((0, 0), (0, Mp - M), (0, 0)))
        h_bf = jnp.pad(h_bf, ((0, Mp - M), (0, 0)))

    (w1, b1), (w2, b2), (w3, b3), (w4, b4) = gparams
    g = w1.shape[1]
    c_out = w4.shape[1]
    bf16 = jnp.bfloat16
    # Dense-net concat order is [new, prev, ..., x]; split/concat weight rows.
    w1b = w1.astype(bf16)
    w2a, w2b_ = w2[:g].astype(bf16), w2[g:].astype(bf16)
    w3ab, w3c = w3[:2 * g].astype(bf16), w3[2 * g:].astype(bf16)
    w4abc, w4d = w4[:3 * g].astype(bf16), w4[3 * g:].astype(bf16)

    def wspec(arr):
        return pl.BlockSpec(arr.shape, lambda i: (0, 0))

    y = pl.pallas_call(
        functools.partial(_graph_chain_kernel, K=K),
        out_shape=jax.ShapeDtypeStruct((Mp, c_out), jnp.float32),
        grid_spec=pltpu.PrefetchScalarGridSpec(
            num_scalar_prefetch=0,
            grid=(Mp // TP,),
            in_specs=[
                pl.BlockSpec((K, TP, c_edge), lambda i: (0, i, 0)),
                pl.BlockSpec((TP, C), lambda i: (i, 0)),
                wspec(w1b), wspec(b1),
                wspec(w2a), wspec(w2b_), wspec(b2),
                wspec(w3ab), wspec(w3c), wspec(b3),
                wspec(w4abc), wspec(w4d), wspec(b4),
            ],
            out_specs=pl.BlockSpec((TP, c_out), lambda i: (i, 0)),
        ),
        compiler_params=pltpu.CompilerParams(dimension_semantics=("parallel",)),
    )(edge_kmc, h_bf, w1b, b1, w2a, w2b_, b2, w3ab, w3c, b3, w4abc, w4d, b4)
    return y[:M]


# ----------------------------------------------------------------------------
# EncodeNet2 forward (num_convs = 1)
# ----------------------------------------------------------------------------
def encode_net2_forward(x, pos, knn_idx, params, *, tile_points=1024,
                        trans_tile=2048):
    """x: (B, 3, N), pos: (B, 3, N), knn_idx: (B, N, K) -> (B, C_out, N)."""
    B, cin, N = x.shape
    K = knn_idx.shape[-1]
    x_rows = jnp.transpose(x, (0, 2, 1)).reshape(B * N, cin)
    pos_bn = jnp.transpose(pos, (0, 2, 1))                        # (B, N, 3)

    wt, bt = params["trans"]
    h = conv1d_rows(x_rows, wt, bt, relu=True, max_tile=trans_tile)  # (B*N, conv_ch)
    y = graph_conv2_forward(h, pos_bn, knn_idx, params["graph"],
                            B=B, N=N, K=K, tile_points=tile_points)
    return jnp.transpose(y.reshape(B, N, -1), (0, 2, 1))          # (B, C_out, N)


# ----------------------------------------------------------------------------
# Pure-JAX reference (same math, same folded params, same bf16 cast points)
# ----------------------------------------------------------------------------
def reference_forward(x, pos, knn_idx, params):
    bf16 = jnp.bfloat16
    xt = jnp.transpose(x, (0, 2, 1))
    post = jnp.transpose(pos, (0, 2, 1))
    wt, bt = params["trans"]
    h = jnp.maximum(
        jnp.einsum("bnc,cd->bnd", xt.astype(bf16), wt.astype(bf16),
                   preferred_element_type=jnp.float32) + bt, 0.0)
    gather = jax.vmap(lambda f, idx: f[idx])
    knn_feat = gather(h, knn_idx)
    knn_pos = gather(post, knn_idx)
    edge = jnp.concatenate(
        [knn_pos - post[:, :, None, :], knn_feat - h[:, :, None, :]], axis=-1)
    (w1, b1), (w2, b2), (w3, b3), (w4, b4) = params["graph"]
    xr = jnp.broadcast_to(h[:, :, None, :], knn_feat.shape)

    def lin(a, w, b, relu):
        y = jnp.einsum("bnkc,cd->bnkd", a.astype(bf16), w.astype(bf16),
                       preferred_element_type=jnp.float32) + b
        return jnp.maximum(y, 0.0) if relu else y

    y = jnp.concatenate([lin(edge, w1, b1, True), xr], axis=-1)
    y = jnp.concatenate([lin(y, w2, b2, True), y], axis=-1)
    y = jnp.concatenate([lin(y, w3, b3, True), y], axis=-1)
    y = lin(y, w4, b4, False)
    y = jnp.max(y, axis=2)                       # (B, N, C_out)
    return jnp.transpose(y, (0, 2, 1))           # (B, C_out, N)


def knn_indices(pos_t, k, offset=1):
    """Brute-force kNN (excludes self via offset=1), mirroring get_knn_idx."""
    d2 = jnp.sum((pos_t[:, :, None, :] - pos_t[:, None, :, :]) ** 2, axis=-1)
    return jnp.argsort(d2, axis=-1)[:, :, offset:offset + k].astype(jnp.int32)


# ----------------------------------------------------------------------------
if __name__ == "__main__":
    # Module config: EncodeNet2(knn=8) with defaults
    # num_convs=1, in_channels=3, conv_channels=24, growth_rate=12, num_fc_layers=3
    B, N, K = 2, 64, 8
    IN_CH, CONV_CH, GROWTH, NUM_FC = 3, 24, 12, 3
    DIM_OUT = CONV_CH + NUM_FC * GROWTH                         # 60

    key = jax.random.PRNGKey(0)
    kx, kp, kparam = jax.random.split(key, 3)
    x = jax.random.normal(kx, (B, IN_CH, N), jnp.float32)
    pos = jax.random.normal(kp, (B, 3, N), jnp.float32)
    knn_idx = knn_indices(jnp.transpose(pos, (0, 2, 1)), K, offset=1)

    ks = jax.random.split(kparam, 5)
    trans = make_conv1d_params(ks[0], IN_CH, CONV_CH, with_bn=True)
    g1 = make_conv1d_params(ks[1], CONV_CH + 3, GROWTH, with_bn=True)           # layer_first
    g2 = make_conv1d_params(ks[2], CONV_CH + GROWTH, GROWTH, with_bn=True)      # layers_mid[0]
    g3 = make_conv1d_params(ks[3], CONV_CH + 2 * GROWTH, GROWTH, with_bn=True)  # layer_last
    g4 = make_conv1d_params(ks[4], DIM_OUT, DIM_OUT, with_bn=False)             # layer_out
    params = {"trans": trans, "graph": (g1, g2, g3, g4)}

    out = jax.jit(encode_net2_forward)(x, pos, knn_idx, params)
    out = jax.block_until_ready(out)
    assert out.shape == (B, DIM_OUT, N)

    ref = reference_forward(x, pos, knn_idx, params)
    # Both paths use identical bf16 cast points and f32 accumulation; only
    # f32 summation order differs (split/hoisted matmuls), so tolerance is tight.
    if not jnp.allclose(out, ref, atol=1e-3, rtol=1e-3):
        err = float(jnp.max(jnp.abs(out - ref)))
        raise AssertionError(f"Pallas output does not match reference (max err {err})")

    print("KERNEL_OK")
</pallas_src>

<mosaic_0001>
module attributes {stable_mosaic.version = 11 : i64} {
  func.func @_linear_kernel(%arg0: i32, %arg1: memref<128x3xbf16, #tpu.memory_space<vmem>>, %arg2: memref<3x24xbf16, #tpu.memory_space<vmem>>, %arg3: memref<1x24xf32, #tpu.memory_space<vmem>>, %arg4: memref<128x24xf32, #tpu.memory_space<vmem>>) attributes {dimension_semantics = [#tpu.dimension_semantics<parallel>], iteration_bounds = array<i64: 1>, scalar_prefetch = 0 : i64, scratch_operands = 0 : i64, tpu.core_type = #tpu.core_type<tc>, window_params = [{transform_indices = @transform_0, window_bounds = array<i64: 128, 3>}, {pipeline_mode = #tpu.pipeline_mode<synchronous>, transform_indices = @transform_1, window_bounds = array<i64: 3, 24>}, {pipeline_mode = #tpu.pipeline_mode<synchronous>, transform_indices = @transform_2, window_bounds = array<i64: 1, 24>}, {transform_indices = @transform_3, window_bounds = array<i64: 128, 24>}]} {
    %c0 = arith.constant 0 : index
    %c0_0 = arith.constant 0 : index
    %0 = vector.load %arg1[%c0, %c0_0] : memref<128x3xbf16, #tpu.memory_space<vmem>>, vector<128x3xbf16>
    %c0_1 = arith.constant 0 : index
    %c0_2 = arith.constant 0 : index
    %1 = vector.load %arg2[%c0_1, %c0_2] : memref<3x24xbf16, #tpu.memory_space<vmem>>, vector<3x24xbf16>
    %cst = arith.constant dense<0.000000e+00> : vector<128x24xf32>
    %2 = tpu.matmul %0, %1, %cst {dimension_numbers = #tpu.dot_dimension_numbers<[1], [0], [0], [1], [0, 0, 1, 1], [], []>} : vector<128x3xbf16>, vector<3x24xbf16>, vector<128x24xf32> -> vector<128x24xf32>
    %c0_3 = arith.constant 0 : index
    %c0_4 = arith.constant 0 : index
    %3 = vector.load %arg3[%c0_3, %c0_4] : memref<1x24xf32, #tpu.memory_space<vmem>>, vector<1x24xf32>
    %4 = vector.broadcast %3 : vector<1x24xf32> to vector<128x24xf32>
    %5 = arith.addf %2, %4 : vector<128x24xf32>
    %cst_5 = arith.constant 0.000000e+00 : f32
    %6 = vector.broadcast %cst_5 : f32 to vector<128x24xf32>
    %7 = arith.maximumf %5, %6 : vector<128x24xf32>
    %c0_6 = arith.constant 0 : index
    %c0_7 = arith.constant 0 : index
    %8 = vector.load %arg4[%c0_6, %c0_7] : memref<128x24xf32, #tpu.memory_space<vmem>>, vector<128x24xf32>
    tpu.vector_store %arg4[%c0_6, %c0_7], %7 {strides = array<i32>} : memref<128x24xf32, #tpu.memory_space<vmem>>, vector<128x24xf32>,
    return
  }
  func.func @transform_0(%arg0: i32) -> (i32, i32) {
    %c0_i32 = arith.constant 0 : i32
    %c0_i32_0 = arith.constant 0 : i32
    return %arg0, %c0_i32 : i32, i32
  }
  func.func @transform_1(%arg0: i32) -> (i32, i32) {
    %c0_i32 = arith.constant 0 : i32
    %c0_i32_0 = arith.constant 0 : i32
    %c0_i32_1 = arith.constant 0 : i32
    return %c0_i32, %c0_i32_0 : i32, i32
  }
  func.func @transform_2(%arg0: i32) -> (i32, i32) {
    %c0_i32 = arith.constant 0 : i32
    %c0_i32_0 = arith.constant 0 : i32
    %c0_i32_1 = arith.constant 0 : i32
    return %c0_i32, %c0_i32_0 : i32, i32
  }
  func.func @transform_3(%arg0: i32) -> (i32, i32) {
    %c0_i32 = arith.constant 0 : i32
    %c0_i32_0 = arith.constant 0 : i32
    return %arg0, %c0_i32 : i32, i32
  }
}

module attributes {stable_mosaic.version = 11 : i64} {
  func.func @_graph_chain_kernel(%arg0: i32, %arg1: memref<8x128x27xbf16, #tpu.memory_space<vmem>>, %arg2: memref<128x24xbf16, #tpu.memory_space<vmem>>, %arg3: memref<27x12xbf16, #tpu.memory_space<vmem>>, %arg4: memref<1x12xf32, #tpu.memory_space<vmem>>, %arg5: memref<12x12xbf16, #tpu.memory_space<vmem>>, %arg6: memref<24x12xbf16, #tpu.memory_space<vmem>>, %arg7: memref<1x12xf32, #tpu.memory_space<vmem>>, %arg8: memref<24x12xbf16, #tpu.memory_space<vmem>>, %arg9: memref<24x12xbf16, #tpu.memory_space<vmem>>, %arg10: memref<1x12xf32, #tpu.memory_space<vmem>>, %arg11: memref<36x60xbf16, #tpu.memory_space<vmem>>, %arg12: memref<24x60xbf16, #tpu.memory_space<vmem>>, %arg13: memref<1x60xf32, #tpu.memory_space<vmem>>, %arg14: memref<128x60xf32, #tpu.memory_space<vmem>>) attributes {dimension_semantics = [#tpu.dimension_semantics<parallel>], iteration_bounds = array<i64: 1>, scalar_prefetch = 0 : i64, scratch_operands = 0 : i64, tpu.core_type = #tpu.core_type<tc>, window_params = [{transform_indices = @transform_0, window_bounds = array<i64: 8, 128, 27>}, {transform_indices = @transform_1, window_bounds = array<i64: 128, 24>}, {pipeline_mode = #tpu.pipeline_mode<synchronous>, transform_indices = @transform_2, window_bounds = array<i64: 27, 12>}, {pipeline_mode = #tpu.pipeline_mode<synchronous>, transform_indices = @transform_3, window_bounds = array<i64: 1, 12>}, {pipeline_mode = #tpu.pipeline_mode<synchronous>, transform_indices = @transform_4, window_bounds = array<i64: 12, 12>}, {pipeline_mode = #tpu.pipeline_mode<synchronous>, transform_indices = @transform_5, window_bounds = array<i64: 24, 12>}, {pipeline_mode = #tpu.pipeline_mode<synchronous>, transform_indices = @transform_6, window_bounds = array<i64: 1, 12>}, {pipeline_mode = #tpu.pipeline_mode<synchronous>, transform_indices = @transform_7, window_bounds = array<i64: 24, 12>}, {pipeline_mode = #tpu.pipeline_mode<synchronous>, transform_indices = @transform_8, window_bounds = array<i64: 24, 12>}, {pipeline_mode = #tpu.pipeline_mode<synchronous>, transform_indices = @transform_9, window_bounds = array<i64: 1, 12>}, {pipeline_mode = #tpu.pipeline_mode<synchronous>, transform_indices = @transform_10, window_bounds = array<i64: 36, 60>}, {pipeline_mode = #tpu.pipeline_mode<synchronous>, transform_indices = @transform_11, window_bounds = array<i64: 24, 60>}, {pipeline_mode = #tpu.pipeline_mode<synchronous>, transform_indices = @transform_12, window_bounds = array<i64: 1, 60>}, {transform_indices = @transform_13, window_bounds = array<i64: 128, 60>}]} {
    %c0 = arith.constant 0 : index
    %c0_0 = arith.constant 0 : index
    %0 = vector.load %arg2[%c0, %c0_0] : memref<128x24xbf16, #tpu.memory_space<vmem>>, vector<128x24xbf16>
    %c0_1 = arith.constant 0 : index
    %c0_2 = arith.constant 0 : index
    %1 = vector.load %arg6[%c0_1, %c0_2] : memref<24x12xbf16, #tpu.memory_space<vmem>>, vector<24x12xbf16>
    %cst = arith.constant dense<0.000000e+00> : vector<128x12xf32>
    %2 = tpu.matmul %0, %1, %cst {dimension_numbers = #tpu.dot_dimension_numbers<[1], [0], [0], [1], [0, 0, 1, 1], [], []>} : vector<128x24xbf16>, vector<24x12xbf16>, vector<128x12xf32> -> vector<128x12xf32>
    %c0_3 = arith.constant 0 : index
    %c0_4 = arith.constant 0 : index
    %3 = vector.load %arg7[%c0_3, %c0_4] : memref<1x12xf32, #tpu.memory_space<vmem>>, vector<1x12xf32>
    %4 = vector.broadcast %3 : vector<1x12xf32> to vector<128x12xf32>
    %5 = arith.addf %2, %4 : vector<128x12xf32>
    %c0_5 = arith.constant 0 : index
    %c0_6 = arith.constant 0 : index
    %6 = vector.load %arg9[%c0_5, %c0_6] : memref<24x12xbf16, #tpu.memory_space<vmem>>, vector<24x12xbf16>
    %cst_7 = arith.constant dense<0.000000e+00> : vector<128x12xf32>
    %7 = tpu.matmul %0, %6, %cst_7 {dimension_numbers = #tpu.dot_dimension_numbers<[1], [0], [0], [1], [0, 0, 1, 1], [], []>} : vector<128x24xbf16>, vector<24x12xbf16>, vector<128x12xf32> -> vector<128x12xf32>
    %c0_8 = arith.constant 0 : index
    %c0_9 = arith.constant 0 : index
    %8 = vector.load %arg10[%c0_8, %c0_9] : memref<1x12xf32, #tpu.memory_space<vmem>>, vector<1x12xf32>
    %9 = vector.broadcast %8 : vector<1x12xf32> to vector<128x12xf32>
    %10 = arith.addf %7, %9 : vector<128x12xf32>
    %c0_10 = arith.constant 0 : index
    %c0_11 = arith.constant 0 : index
    %11 = vector.load %arg12[%c0_10, %c0_11] : memref<24x60xbf16, #tpu.memory_space<vmem>>, vector<24x60xbf16>
    %cst_12 = arith.constant dense<0.000000e+00> : vector<128x60xf32>
    %12 = tpu.matmul %0, %11, %cst_12 {dimension_numbers = #tpu.dot_dimension_numbers<[1], [0], [0], [1], [0, 0, 1, 1], [], []>} : vector<128x24xbf16>, vector<24x60xbf16>, vector<128x60xf32> -> vector<128x60xf32>
    %c0_13 = arith.constant 0 : index
    %c0_14 = arith.constant 0 : index
    %13 = vector.load %arg13[%c0_13, %c0_14] : memref<1x60xf32, #tpu.memory_space<vmem>>, vector<1x60xf32>
    %14 = vector.broadcast %13 : vector<1x60xf32> to vector<128x60xf32>
    %15 = arith.addf %12, %14 : vector<128x60xf32>
    %c0_15 = arith.constant 0 : index
    %c0_16 = arith.constant 0 : index
    %c0_17 = arith.constant 0 : index
    %16 = vector.load %arg1[%c0_15, %c0_16, %c0_17] : memref<8x128x27xbf16, #tpu.memory_space<vmem>>, vector<1x128x27xbf16>
    %17 = vector.shape_cast %16 : vector<1x128x27xbf16> to vector<128x27xbf16>
    %c0_18 = arith.constant 0 : index
    %c0_19 = arith.constant 0 : index
    %18 = vector.load %arg3[%c0_18, %c0_19] : memref<27x12xbf16, #tpu.memory_space<vmem>>, vector<27x12xbf16>
    %cst_20 = arith.constant dense<0.000000e+00> : vector<128x12xf32>
    %19 = tpu.matmul %17, %18, %cst_20 {dimension_numbers = #tpu.dot_dimension_numbers<[1], [0], [0], [1], [0, 0, 1, 1], [], []>} : vector<128x27xbf16>, vector<27x12xbf16>, vector<128x12xf32> -> vector<128x12xf32>
    %c0_21 = arith.constant 0 : index
    %c0_22 = arith.constant 0 : index
    %20 = vector.load %arg4[%c0_21, %c0_22] : memref<1x12xf32, #tpu.memory_space<vmem>>, vector<1x12xf32>
    %21 = vector.broadcast %20 : vector<1x12xf32> to vector<128x12xf32>
    %22 = arith.addf %19, %21 : vector<128x12xf32>
    %cst_23 = arith.constant 0.000000e+00 : f32
    %23 = vector.broadcast %cst_23 : f32 to vector<128x12xf32>
    %24 = arith.maximumf %22, %23 : vector<128x12xf32>
    %25 = arith.truncf %24 : vector<128x12xf32> to vector<128x12xbf16>
    %c0_24 = arith.constant 0 : index
    %c0_25 = arith.constant 0 : index
    %26 = vector.load %arg5[%c0_24, %c0_25] : memref<12x12xbf16, #tpu.memory_space<vmem>>, vector<12x12xbf16>
    %cst_26 = arith.constant dense<0.000000e+00> : vector<128x12xf32>
    %27 = tpu.matmul %25, %26, %cst_26 {dimension_numbers = #tpu.dot_dimension_numbers<[1], [0], [0], [1], [0, 0, 1, 1], [], []>} : vector<128x12xbf16>, vector<12x12xbf16>, vector<128x12xf32> -> vector<128x12xf32>
    %28 = arith.addf %27, %5 : vector<128x12xf32>
    %cst_27 = arith.constant 0.000000e+00 : f32
    %29 = vector.broadcast %cst_27 : f32 to vector<128x12xf32>
    %30 = arith.maximumf %28, %29 : vector<128x12xf32>
    %31 = arith.truncf %30 : vector<128x12xf32> to vector<128x12xbf16>
    %32 = tpu.concatenate %31, %25 in 1 : vector<128x12xbf16>, vector<128x12xbf16> -> vector<128x24xbf16>
    %c0_28 = arith.constant 0 : index
    %c0_29 = arith.constant 0 : index
    %33 = vector.load %arg8[%c0_28, %c0_29] : memref<24x12xbf16, #tpu.memory_space<vmem>>, vector<24x12xbf16>
    %cst_30 = arith.constant dense<0.000000e+00> : vector<128x12xf32>
    %34 = tpu.matmul %32, %33, %cst_30 {dimension_numbers = #tpu.dot_dimension_numbers<[1], [0], [0], [1], [0, 0, 1, 1], [], []>} : vector<128x24xbf16>, vector<24x12xbf16>, vector<128x12xf32> -> vector<128x12xf32>
    %35 = arith.addf %34, %10 : vector<128x12xf32>
    %cst_31 = arith.constant 0.000000e+00 : f32
    %36 = vector.broadcast %cst_31 : f32 to vector<128x12xf32>
    %37 = arith.maximumf %35, %36 : vector<128x12xf32>
    %38 = arith.truncf %37 : vector<128x12xf32> to vector<128x12xbf16>
    %39 = tpu.concatenate %38, %31, %25 in 1 : vector<128x12xbf16>, vector<128x12xbf16>, vector<128x12xbf16> -> vector<128x36xbf16>
    %c0_32 = arith.constant 0 : index
    %c0_33 = arith.constant 0 : index
    %40 = vector.load %arg11[%c0_32, %c0_33] : memref<36x60xbf16, #tpu.memory_space<vmem>>, vector<36x60xbf16>
    %cst_34 = arith.constant dense<0.000000e+00> : vector<128x60xf32>
    %41 = tpu.matmul %39, %40, %cst_34 {dimension_numbers = #tpu.dot_dimension_numbers<[1], [0], [0], [1], [0, 0, 1, 1], [], []>} : vector<128x36xbf16>, vector<36x60xbf16>, vector<128x60xf32> -> vector<128x60xf32>
    %c1 = arith.constant 1 : index
    %c0_35 = arith.constant 0 : index
    %c0_36 = arith.constant 0 : index
    %42 = vector.load %arg1[%c1, %c0_35, %c0_36] : memref<8x128x27xbf16, #tpu.memory_space<vmem>>, vector<1x128x27xbf16>
    %43 = vector.shape_cast %42 : vector<1x128x27xbf16> to vector<128x27xbf16>
    %c0_37 = arith.constant 0 : index
    %c0_38 = arith.constant 0 : index
    %44 = vector.load %arg3[%c0_37, %c0_38] : memref<27x12xbf16, #tpu.memory_space<vmem>>, vector<27x12xbf16>
    %cst_39 = arith.constant dense<0.000000e+00> : vector<128x12xf32>
    %45 = tpu.matmul %43, %44, %cst_39 {dimension_numbers = #tpu.dot_dimension_numbers<[1], [0], [0], [1], [0, 0, 1, 1], [], []>} : vector<128x27xbf16>, vector<27x12xbf16>, vector<128x12xf32> -> vector<128x12xf32>
    %c0_40 = arith.constant 0 : index
    %c0_41 = arith.constant 0 : index
    %46 = vector.load %arg4[%c0_40, %c0_41] : memref<1x12xf32, #tpu.memory_space<vmem>>, vector<1x12xf32>
    %47 = vector.broadcast %46 : vector<1x12xf32> to vector<128x12xf32>
    %48 = arith.addf %45, %47 : vector<128x12xf32>
    %cst_42 = arith.constant 0.000000e+00 : f32
    %49 = vector.broadcast %cst_42 : f32 to vector<128x12xf32>
    %50 = arith.maximumf %48, %49 : vector<128x12xf32>
    %51 = arith.truncf %50 : vector<128x12xf32> to vector<128x12xbf16>
    %c0_43 = arith.constant 0 : index
    %c0_44 = arith.constant 0 : index
    %52 = vector.load %arg5[%c0_43, %c0_44] : memref<12x12xbf16, #tpu.memory_space<vmem>>, vector<12x12xbf16>
    %cst_45 = arith.constant dense<0.000000e+00> : vector<128x12xf32>
    %53 = tpu.matmul %51, %52, %cst_45 {dimension_numbers = #tpu.dot_dimension_numbers<[1], [0], [0], [1], [0, 0, 1, 1], [], []>} : vector<128x12xbf16>, vector<12x12xbf16>, vector<128x12xf32> -> vector<128x12xf32>
    %54 = arith.addf %53, %5 : vector<128x12xf32>
    %cst_46 = arith.constant 0.000000e+00 : f32
    %55 = vector.broadcast %cst_46 : f32 to vector<128x12xf32>
    %56 = arith.maximumf %54, %55 : vector<128x12xf32>
    %57 = arith.truncf %56 : vector<128x12xf32> to vector<128x12xbf16>
    %58 = tpu.concatenate %57, %51 in 1 : vector<128x12xbf16>, vector<128x12xbf16> -> vector<128x24xbf16>
    %c0_47 = arith.constant 0 : index
    %c0_48 = arith.constant 0 : index
    %59 = vector.load %arg8[%c0_47, %c0_48] : memref<24x12xbf16, #tpu.memory_space<vmem>>, vector<24x12xbf16>
    %cst_49 = arith.constant dense<0.000000e+00> : vector<128x12xf32>
    %60 = tpu.matmul %58, %59, %cst_49 {dimension_numbers = #tpu.dot_dimension_numbers<[1], [0], [0], [1], [0, 0, 1, 1], [], []>} : vector<128x24xbf16>, vector<24x12xbf16>, vector<128x12xf32> -> vector<128x12xf32>
    %61 = arith.addf %60, %10 : vector<128x12xf32>
    %cst_50 = arith.constant 0.000000e+00 : f32
    %62 = vector.broadcast %cst_50 : f32 to vector<128x12xf32>
    %63 = arith.maximumf %61, %62 : vector<128x12xf32>
    %64 = arith.truncf %63 : vector<128x12xf32> to vector<128x12xbf16>
    %65 = tpu.concatenate %64, %57, %51 in 1 : vector<128x12xbf16>, vector<128x12xbf16>, vector<128x12xbf16> -> vector<128x36xbf16>
    %c0_51 = arith.constant 0 : index
    %c0_52 = arith.constant 0 : index
    %66 = vector.load %arg11[%c0_51, %c0_52] : memref<36x60xbf16, #tpu.memory_space<vmem>>, vector<36x60xbf16>
    %cst_53 = arith.constant dense<0.000000e+00> : vector<128x60xf32>
    %67 = tpu.matmul %65, %66, %cst_53 {dimension_numbers = #tpu.dot_dimension_numbers<[1], [0], [0], [1], [0, 0, 1, 1], [], []>} : vector<128x36xbf16>, vector<36x60xbf16>, vector<128x60xf32> -> vector<128x60xf32>
    %68 = arith.maximumf %41, %67 : vector<128x60xf32>
    %c2 = arith.constant 2 : index
    %c0_54 = arith.constant 0 : index
    %c0_55 = arith.constant 0 : index
    %69 = vector.load %arg1[%c2, %c0_54, %c0_55] : memref<8x128x27xbf16, #tpu.memory_space<vmem>>, vector<1x128x27xbf16>
    %70 = vector.shape_cast %69 : vector<1x128x27xbf16> to vector<128x27xbf16>
    %c0_56 = arith.constant 0 : index
    %c0_57 = arith.constant 0 : index
    %71 = vector.load %arg3[%c0_56, %c0_57] : memref<27x12xbf16, #tpu.memory_space<vmem>>, vector<27x12xbf16>
    %cst_58 = arith.constant dense<0.000000e+00> : vector<128x12xf32>
    %72 = tpu.matmul %70, %71, %cst_58 {dimension_numbers = #tpu.dot_dimension_numbers<[1], [0], [0], [1], [0, 0, 1, 1], [], []>} : vector<128x27xbf16>, vector<27x12xbf16>, vector<128x12xf32> -> vector<128x12xf32>
    %c0_59 = arith.constant 0 : index
    %c0_60 = arith.constant 0 : index
    %73 = vector.load %arg4[%c0_59, %c0_60] : memref<1x12xf32, #tpu.memory_space<vmem>>, vector<1x12xf32>
    %74 = vector.broadcast %73 : vector<1x12xf32> to vector<128x12xf32>
    %75 = arith.addf %72, %74 : vector<128x12xf32>
    %cst_61 = arith.constant 0.000000e+00 : f32
    %76 = vector.broadcast %cst_61 : f32 to vector<128x12xf32>
    %77 = arith.maximumf %75, %76 : vector<128x12xf32>
    %78 = arith.truncf %77 : vector<128x12xf32> to vector<128x12xbf16>
    %c0_62 = arith.constant 0 : index
    %c0_63 = arith.constant 0 : index
    %79 = vector.load %arg5[%c0_62, %c0_63] : memref<12x12xbf16, #tpu.memory_space<vmem>>, vector<12x12xbf16>
    %cst_64 = arith.constant dense<0.000000e+00> : vector<128x12xf32>
    %80 = tpu.matmul %78, %79, %cst_64 {dimension_numbers = #tpu.dot_dimension_numbers<[1], [0], [0], [1], [0, 0, 1, 1], [], []>} : vector<128x12xbf16>, vector<12x12xbf16>, vector<128x12xf32> -> vector<128x12xf32>
    %81 = arith.addf %80, %5 : vector<128x12xf32>
    %cst_65 = arith.constant 0.000000e+00 : f32
    %82 = vector.broadcast %cst_65 : f32 to vector<128x12xf32>
    %83 = arith.maximumf %81, %82 : vector<128x12xf32>
    %84 = arith.truncf %83 : vector<128x12xf32> to vector<128x12xbf16>
    %85 = tpu.concatenate %84, %78 in 1 : vector<128x12xbf16>, vector<128x12xbf16> -> vector<128x24xbf16>
    %c0_66 = arith.constant 0 : index
    %c0_67 = arith.constant 0 : index
    %86 = vector.load %arg8[%c0_66, %c0_67] : memref<24x12xbf16, #tpu.memory_space<vmem>>, vector<24x12xbf16>
    %cst_68 = arith.constant dense<0.000000e+00> : vector<128x12xf32>
    %87 = tpu.matmul %85, %86, %cst_68 {dimension_numbers = #tpu.dot_dimension_numbers<[1], [0], [0], [1], [0, 0, 1, 1], [], []>} : vector<128x24xbf16>, vector<24x12xbf16>, vector<128x12xf32> -> vector<128x12xf32>
    %88 = arith.addf %87, %10 : vector<128x12xf32>
    %cst_69 = arith.constant 0.000000e+00 : f32
    %89 = vector.broadcast %cst_69 : f32 to vector<128x12xf32>
    %90 = arith.maximumf %88, %89 : vector<128x12xf32>
    %91 = arith.truncf %90 : vector<128x12xf32> to vector<128x12xbf16>
    %92 = tpu.concatenate %91, %84, %78 in 1 : vector<128x12xbf16>, vector<128x12xbf16>, vector<128x12xbf16> -> vector<128x36xbf16>
    %c0_70 = arith.constant 0 : index
    %c0_71 = arith.constant 0 : index
    %93 = vector.load %arg11[%c0_70, %c0_71] : memref<36x60xbf16, #tpu.memory_space<vmem>>, vector<36x60xbf16>
    %cst_72 = arith.constant dense<0.000000e+00> : vector<128x60xf32>
    %94 = tpu.matmul %92, %93, %cst_72 {dimension_numbers = #tpu.dot_dimension_numbers<[1], [0], [0], [1], [0, 0, 1, 1], [], []>} : vector<128x36xbf16>, vector<36x60xbf16>, vector<128x60xf32> -> vector<128x60xf32>
    %95 = arith.maximumf %68, %94 : vector<128x60xf32>
    %c3 = arith.constant 3 : index
    %c0_73 = arith.constant 0 : index
    %c0_74 = arith.constant 0 : index
    %96 = vector.load %arg1[%c3, %c0_73, %c0_74] : memref<8x128x27xbf16, #tpu.memory_space<vmem>>, vector<1x128x27xbf16>
    %97 = vector.shape_cast %96 : vector<1x128x27xbf16> to vector<128x27xbf16>
    %c0_75 = arith.constant 0 : index
    %c0_76 = arith.constant 0 : index
    %98 = vector.load %arg3[%c0_75, %c0_76] : memref<27x12xbf16, #tpu.memory_space<vmem>>, vector<27x12xbf16>
    %cst_77 = arith.constant dense<0.000000e+00> : vector<128x12xf32>
    %99 = tpu.matmul %97, %98, %cst_77 {dimension_numbers = #tpu.dot_dimension_numbers<[1], [0], [0], [1], [0, 0, 1, 1], [], []>} : vector<128x27xbf16>, vector<27x12xbf16>, vector<128x12xf32> -> vector<128x12xf32>
    %c0_78 = arith.constant 0 : index
    %c0_79 = arith.constant 0 : index
    %100 = vector.load %arg4[%c0_78, %c0_79] : memref<1x12xf32, #tpu.memory_space<vmem>>, vector<1x12xf32>
    %101 = vector.broadcast %100 : vector<1x12xf32> to vector<128x12xf32>
    %102 = arith.addf %99, %101 : vector<128x12xf32>
    %cst_80 = arith.constant 0.000000e+00 : f32
    %103 = vector.broadcast %cst_80 : f32 to vector<128x12xf32>
    %104 = arith.maximumf %102, %103 : vector<128x12xf32>
    %105 = arith.truncf %104 : vector<128x12xf32> to vector<128x12xbf16>
    %c0_81 = arith.constant 0 : index
    %c0_82 = arith.constant 0 : index
    %106 = vector.load %arg5[%c0_81, %c0_82] : memref<12x12xbf16, #tpu.memory_space<vmem>>, vector<12x12xbf16>
    %cst_83 = arith.constant dense<0.000000e+00> : vector<128x12xf32>
    %107 = tpu.matmul %105, %106, %cst_83 {dimension_numbers = #tpu.dot_dimension_numbers<[1], [0], [0], [1], [0, 0, 1, 1], [], []>} : vector<128x12xbf16>, vector<12x12xbf16>, vector<128x12xf32> -> vector<128x12xf32>
    %108 = arith.addf %107, %5 : vector<128x12xf32>
    %cst_84 = arith.constant 0.000000e+00 : f32
    %109 = vector.broadcast %cst_84 : f32 to vector<128x12xf32>
    %110 = arith.maximumf %108, %109 : vector<128x12xf32>
    %111 = arith.truncf %110 : vector<128x12xf32> to vector<128x12xbf16>
    %112 = tpu.concatenate %111, %105 in 1 : vector<128x12xbf16>, vector<128x12xbf16> -> vector<128x24xbf16>
    %c0_85 = arith.constant 0 : index
    %c0_86 = arith.constant 0 : index
    %113 = vector.load %arg8[%c0_85, %c0_86] : memref<24x12xbf16, #tpu.memory_space<vmem>>, vector<24x12xbf16>
    %cst_87 = arith.constant dense<0.000000e+00> : vector<128x12xf32>
    %114 = tpu.matmul %112, %113, %cst_87 {dimension_numbers = #tpu.dot_dimension_numbers<[1], [0], [0], [1], [0, 0, 1, 1], [], []>} : vector<128x24xbf16>, vector<24x12xbf16>, vector<128x12xf32> -> vector<128x12xf32>
    %115 = arith.addf %114, %10 : vector<128x12xf32>
    %cst_88 = arith.constant 0.000000e+00 : f32
    %116 = vector.broadcast %cst_88 : f32 to vector<128x12xf32>
    %117 = arith.maximumf %115, %116 : vector<128x12xf32>
    %118 = arith.truncf %117 : vector<128x12xf32> to vector<128x12xbf16>
    %119 = tpu.concatenate %118, %111, %105 in 1 : vector<128x12xbf16>, vector<128x12xbf16>, vector<128x12xbf16> -> vector<128x36xbf16>
    %c0_89 = arith.constant 0 : index
    %c0_90 = arith.constant 0 : index
    %120 = vector.load %arg11[%c0_89, %c0_90] : memref<36x60xbf16, #tpu.memory_space<vmem>>, vector<36x60xbf16>
    %cst_91 = arith.constant dense<0.000000e+00> : vector<128x60xf32>
    %121 = tpu.matmul %119, %120, %cst_91 {dimension_numbers = #tpu.dot_dimension_numbers<[1], [0], [0], [1], [0, 0, 1, 1], [], []>} : vector<128x36xbf16>, vector<36x60xbf16>, vector<128x60xf32> -> vector<128x60xf32>
    %122 = arith.maximumf %95, %121 : vector<128x60xf32>
    %c4 = arith.constant 4 : index
    %c0_92 = arith.constant 0 : index
    %c0_93 = arith.constant 0 : index
    %123 = vector.load %arg1[%c4, %c0_92, %c0_93] : memref<8x128x27xbf16, #tpu.memory_space<vmem>>, vector<1x128x27xbf16>
    %124 = vector.shape_cast %123 : vector<1x128x27xbf16> to vector<128x27xbf16>
    %c0_94 = arith.constant 0 : index
    %c0_95 = arith.constant 0 : index
    %125 = vector.load %arg3[%c0_94, %c0_95] : memref<27x12xbf16, #tpu.memory_space<vmem>>, vector<27x12xbf16>
    %cst_96 = arith.constant dense<0.000000e+00> : vector<128x12xf32>
    %126 = tpu.matmul %124, %125, %cst_96 {dimension_numbers = #tpu.dot_dimension_numbers<[1], [0], [0], [1], [0, 0, 1, 1], [], []>} : vector<128x27xbf16>, vector<27x12xbf16>, vector<128x12xf32> -> vector<128x12xf32>
    %c0_97 = arith.constant 0 : index
    %c0_98 = arith.constant 0 : index
    %127 = vector.load %arg4[%c0_97, %c0_98] : memref<1x12xf32, #tpu.memory_space<vmem>>, vector<1x12xf32>
    %128 = vector.broadcast %127 : vector<1x12xf32> to vector<128x12xf32>
    %129 = arith.addf %126, %128 : vector<128x12xf32>
    %cst_99 = arith.constant 0.000000e+00 : f32
    %130 = vector.broadcast %cst_99 : f32 to vector<128x12xf32>
    %131 = arith.maximumf %129, %130 : vector<128x12xf32>
    %132 = arith.truncf %131 : vector<128x12xf32> to vector<128x12xbf16>
    %c0_100 = arith.constant 0 : index
    %c0_101 = arith.constant 0 : index
    %133 = vector.load %arg5[%c0_100, %c0_101] : memref<12x12xbf16, #tpu.memory_space<vmem>>, vector<12x12xbf16>
    %cst_102 = arith.constant dense<0.000000e+00> : vector<128x12xf32>
    %134 = tpu.matmul %132, %133, %cst_102 {dimension_numbers = #tpu.dot_dimension_numbers<[1], [0], [0], [1], [0, 0, 1, 1], [], []>} : vector<128x12xbf16>, vector<12x12xbf16>, vector<128x12xf32> -> vector<128x12xf32>
    %135 = arith.addf %134, %5 : vector<128x12xf32>
    %cst_103 = arith.constant 0.000000e+00 : f32
    %136 = vector.broadcast %cst_103 : f32 to vector<128x12xf32>
    %137 = arith.maximumf %135, %136 : vector<128x12xf32>
    %138 = arith.truncf %137 : vector<128x12xf32> to vector<128x12xbf16>
    %139 = tpu.concatenate %138, %132 in 1 : vector<128x12xbf16>, vector<128x12xbf16> -> vector<128x24xbf16>
    %c0_104 = arith.constant 0 : index
    %c0_105 = arith.constant 0 : index
    %140 = vector.load %arg8[%c0_104, %c0_105] : memref<24x12xbf16, #tpu.memory_space<vmem>>, vector<24x12xbf16>
    %cst_106 = arith.constant dense<0.000000e+00> : vector<128x12xf32>
    %141 = tpu.matmul %139, %140, %cst_106 {dimension_numbers = #tpu.dot_dimension_numbers<[1], [0], [0], [1], [0, 0, 1, 1], [], []>} : vector<128x24xbf16>, vector<24x12xbf16>, vector<128x12xf32> -> vector<128x12xf32>
    %142 = arith.addf %141, %10 : vector<128x12xf32>
    %cst_107 = arith.constant 0.000000e+00 : f32
    %143 = vector.broadcast %cst_107 : f32 to vector<128x12xf32>
    %144 = arith.maximumf %142, %143 : vector<128x12xf32>
    %145 = arith.truncf %144 : vector<128x12xf32> to vector<128x12xbf16>
    %146 = tpu.concatenate %145, %138, %132 in 1 : vector<128x12xbf16>, vector<128x12xbf16>, vector<128x12xbf16> -> vector<128x36xbf16>
    %c0_108 = arith.constant 0 : index
    %c0_109 = arith.constant 0 : index
    %147 = vector.load %arg11[%c0_108, %c0_109] : memref<36x60xbf16, #tpu.memory_space<vmem>>, vector<36x60xbf16>
    %cst_110 = arith.constant dense<0.000000e+00> : vector<128x60xf32>
    %148 = tpu.matmul %146, %147, %cst_110 {dimension_numbers = #tpu.dot_dimension_numbers<[1], [0], [0], [1], [0, 0, 1, 1], [], []>} : vector<128x36xbf16>, vector<36x60xbf16>, vector<128x60xf32> -> vector<128x60xf32>
    %149 = arith.maximumf %122, %148 : vector<128x60xf32>
    %c5 = arith.constant 5 : index
    %c0_111 = arith.constant 0 : index
    %c0_112 = arith.constant 0 : index
    %150 = vector.load %arg1[%c5, %c0_111, %c0_112] : memref<8x128x27xbf16, #tpu.memory_space<vmem>>, vector<1x128x27xbf16>
    %151 = vector.shape_cast %150 : vector<1x128x27xbf16> to vector<128x27xbf16>
    %c0_113 = arith.constant 0 : index
    %c0_114 = arith.constant 0 : index
    %152 = vector.load %arg3[%c0_113, %c0_114] : memref<27x12xbf16, #tpu.memory_space<vmem>>, vector<27x12xbf16>
    %cst_115 = arith.constant dense<0.000000e+00> : vector<128x12xf32>
    %153 = tpu.matmul %151, %152, %cst_115 {dimension_numbers = #tpu.dot_dimension_numbers<[1], [0], [0], [1], [0, 0, 1, 1], [], []>} : vector<128x27xbf16>, vector<27x12xbf16>, vector<128x12xf32> -> vector<128x12xf32>
    %c0_116 = arith.constant 0 : index
    %c0_117 = arith.constant 0 : index
    %154 = vector.load %arg4[%c0_116, %c0_117] : memref<1x12xf32, #tpu.memory_space<vmem>>, vector<1x12xf32>
    %155 = vector.broadcast %154 : vector<1x12xf32> to vector<128x12xf32>
    %156 = arith.addf %153, %155 : vector<128x12xf32>
    %cst_118 = arith.constant 0.000000e+00 : f32
    %157 = vector.broadcast %cst_118 : f32 to vector<128x12xf32>
    %158 = arith.maximumf %156, %157 : vector<128x12xf32>
    %159 = arith.truncf %158 : vector<128x12xf32> to vector<128x12xbf16>
    %c0_119 = arith.constant 0 : index
    %c0_120 = arith.constant 0 : index
    %160 = vector.load %arg5[%c0_119, %c0_120] : memref<12x12xbf16, #tpu.memory_space<vmem>>, vector<12x12xbf16>
    %cst_121 = arith.constant dense<0.000000e+00> : vector<128x12xf32>
    %161 = tpu.matmul %159, %160, %cst_121 {dimension_numbers = #tpu.dot_dimension_numbers<[1], [0], [0], [1], [0, 0, 1, 1], [], []>} : vector<128x12xbf16>, vector<12x12xbf16>, vector<128x12xf32> -> vector<128x12xf32>
    %162 = arith.addf %161, %5 : vector<128x12xf32>
    %cst_122 = arith.constant 0.000000e+00 : f32
    %163 = vector.broadcast %cst_122 : f32 to vector<128x12xf32>
    %164 = arith.maximumf %162, %163 : vector<128x12xf32>
    %165 = arith.truncf %164 : vector<128x12xf32> to vector<128x12xbf16>
    %166 = tpu.concatenate %165, %159 in 1 : vector<128x12xbf16>, vector<128x12xbf16> -> vector<128x24xbf16>
    %c0_123 = arith.constant 0 : index
    %c0_124 = arith.constant 0 : index
    %167 = vector.load %arg8[%c0_123, %c0_124] : memref<24x12xbf16, #tpu.memory_space<vmem>>, vector<24x12xbf16>
    %cst_125 = arith.constant dense<0.000000e+00> : vector<128x12xf32>
    %168 = tpu.matmul %166, %167, %cst_125 {dimension_numbers = #tpu.dot_dimension_numbers<[1], [0], [0], [1], [0, 0, 1, 1], [], []>} : vector<128x24xbf16>, vector<24x12xbf16>, vector<128x12xf32> -> vector<128x12xf32>
    %169 = arith.addf %168, %10 : vector<128x12xf32>
    %cst_126 = arith.constant 0.000000e+00 : f32
    %170 = vector.broadcast %cst_126 : f32 to vector<128x12xf32>
    %171 = arith.maximumf %169, %170 : vector<128x12xf32>
    %172 = arith.truncf %171 : vector<128x12xf32> to vector<128x12xbf16>
    %173 = tpu.concatenate %172, %165, %159 in 1 : vector<128x12xbf16>, vector<128x12xbf16>, vector<128x12xbf16> -> vector<128x36xbf16>
    %c0_127 = arith.constant 0 : index
    %c0_128 = arith.constant 0 : index
    %174 = vector.load %arg11[%c0_127, %c0_128] : memref<36x60xbf16, #tpu.memory_space<vmem>>, vector<36x60xbf16>
    %cst_129 = arith.constant dense<0.000000e+00> : vector<128x60xf32>
    %175 = tpu.matmul %173, %174, %cst_129 {dimension_numbers = #tpu.dot_dimension_numbers<[1], [0], [0], [1], [0, 0, 1, 1], [], []>} : vector<128x36xbf16>, vector<36x60xbf16>, vector<128x60xf32> -> vector<128x60xf32>
    %176 = arith.maximumf %149, %175 : vector<128x60xf32>
    %c6 = arith.constant 6 : index
    %c0_130 = arith.constant 0 : index
    %c0_131 = arith.constant 0 : index
    %177 = vector.load %arg1[%c6, %c0_130, %c0_131] : memref<8x128x27xbf16, #tpu.memory_space<vmem>>, vector<1x128x27xbf16>
    %178 = vector.shape_cast %177 : vector<1x128x27xbf16> to vector<128x27xbf16>
    %c0_132 = arith.constant 0 : index
    %c0_133 = arith.constant 0 : index
    %179 = vector.load %arg3[%c0_132, %c0_133] : memref<27x12xbf16, #tpu.memory_space<vmem>>, vector<27x12xbf16>
    %cst_134 = arith.constant dense<0.000000e+00> : vector<128x12xf32>
    %180 = tpu.matmul %178, %179, %cst_134 {dimension_numbers = #tpu.dot_dimension_numbers<[1], [0], [0], [1], [0, 0, 1, 1], [], []>} : vector<128x27xbf16>, vector<27x12xbf16>, vector<128x12xf32> -> vector<128x12xf32>
    %c0_135 = arith.constant 0 : index
    %c0_136 = arith.constant 0 : index
    %181 = vector.load %arg4[%c0_135, %c0_136] : memref<1x12xf32, #tpu.memory_space<vmem>>, vector<1x12xf32>
    %182 = vector.broadcast %181 : vector<1x12xf32> to vector<128x12xf32>
    %183 = arith.addf %180, %182 : vector<128x12xf32>
    %cst_137 = arith.constant 0.000000e+00 : f32
    %184 = vector.broadcast %cst_137 : f32 to vector<128x12xf32>
    %185 = arith.maximumf %183, %184 : vector<128x12xf32>
    %186 = arith.truncf %185 : vector<128x12xf32> to vector<128x12xbf16>
    %c0_138 = arith.constant 0 : index
    %c0_139 = arith.constant 0 : index
    %187 = vector.load %arg5[%c0_138, %c0_139] : memref<12x12xbf16, #tpu.memory_space<vmem>>, vector<12x12xbf16>
    %cst_140 = arith.constant dense<0.000000e+00> : vector<128x12xf32>
    %188 = tpu.matmul %186, %187, %cst_140 {dimension_numbers = #tpu.dot_dimension_numbers<[1], [0], [0], [1], [0, 0, 1, 1], [], []>} : vector<128x12xbf16>, vector<12x12xbf16>, vector<128x12xf32> -> vector<128x12xf32>
    %189 = arith.addf %188, %5 : vector<128x12xf32>
    %cst_141 = arith.constant 0.000000e+00 : f32
    %190 = vector.broadcast %cst_141 : f32 to vector<128x12xf32>
    %191 = arith.maximumf %189, %190 : vector<128x12xf32>
    %192 = arith.truncf %191 : vector<128x12xf32> to vector<128x12xbf16>
    %193 = tpu.concatenate %192, %186 in 1 : vector<128x12xbf16>, vector<128x12xbf16> -> vector<128x24xbf16>
    %c0_142 = arith.constant 0 : index
    %c0_143 = arith.constant 0 : index
    %194 = vector.load %arg8[%c0_142, %c0_143] : memref<24x12xbf16, #tpu.memory_space<vmem>>, vector<24x12xbf16>
    %cst_144 = arith.constant dense<0.000000e+00> : vector<128x12xf32>
    %195 = tpu.matmul %193, %194, %cst_144 {dimension_numbers = #tpu.dot_dimension_numbers<[1], [0], [0], [1], [0, 0, 1, 1], [], []>} : vector<128x24xbf16>, vector<24x12xbf16>, vector<128x12xf32> -> vector<128x12xf32>
    %196 = arith.addf %195, %10 : vector<128x12xf32>
    %cst_145 = arith.constant 0.000000e+00 : f32
    %197 = vector.broadcast %cst_145 : f32 to vector<128x12xf32>
    %198 = arith.maximumf %196, %197 : vector<128x12xf32>
    %199 = arith.truncf %198 : vector<128x12xf32> to vector<128x12xbf16>
    %200 = tpu.concatenate %199, %192, %186 in 1 : vector<128x12xbf16>, vector<128x12xbf16>, vector<128x12xbf16> -> vector<128x36xbf16>
    %c0_146 = arith.constant 0 : index
    %c0_147 = arith.constant 0 : index
    %201 = vector.load %arg11[%c0_146, %c0_147] : memref<36x60xbf16, #tpu.memory_space<vmem>>, vector<36x60xbf16>
    %cst_148 = arith.constant dense<0.000000e+00> : vector<128x60xf32>
    %202 = tpu.matmul %200, %201, %cst_148 {dimension_numbers = #tpu.dot_dimension_numbers<[1], [0], [0], [1], [0, 0, 1, 1], [], []>} : vector<128x36xbf16>, vector<36x60xbf16>, vector<128x60xf32> -> vector<128x60xf32>
    %203 = arith.maximumf %176, %202 : vector<128x60xf32>
    %c7 = arith.constant 7 : index
    %c0_149 = arith.constant 0 : index
    %c0_150 = arith.constant 0 : index
    %204 = vector.load %arg1[%c7, %c0_149, %c0_150] : memref<8x128x27xbf16, #tpu.memory_space<vmem>>, vector<1x128x27xbf16>
    %205 = vector.shape_cast %204 : vector<1x128x27xbf16> to vector<128x27xbf16>
    %c0_151 = arith.constant 0 : index
    %c0_152 = arith.constant 0 : index
    %206 = vector.load %arg3[%c0_151, %c0_152] : memref<27x12xbf16, #tpu.memory_space<vmem>>, vector<27x12xbf16>
    %cst_153 = arith.constant dense<0.000000e+00> : vector<128x12xf32>
    %207 = tpu.matmul %205, %206, %cst_153 {dimension_numbers = #tpu.dot_dimension_numbers<[1], [0], [0], [1], [0, 0, 1, 1], [], []>} : vector<128x27xbf16>, vector<27x12xbf16>, vector<128x12xf32> -> vector<128x12xf32>
    %c0_154 = arith.constant 0 : index
    %c0_155 = arith.constant 0 : index
    %208 = vector.load %arg4[%c0_154, %c0_155] : memref<1x12xf32, #tpu.memory_space<vmem>>, vector<1x12xf32>
    %209 = vector.broadcast %208 : vector<1x12xf32> to vector<128x12xf32>
    %210 = arith.addf %207, %209 : vector<128x12xf32>
    %cst_156 = arith.constant 0.000000e+00 : f32
    %211 = vector.broadcast %cst_156 : f32 to vector<128x12xf32>
    %212 = arith.maximumf %210, %211 : vector<128x12xf32>
    %213 = arith.truncf %212 : vector<128x12xf32> to vector<128x12xbf16>
    %c0_157 = arith.constant 0 : index
    %c0_158 = arith.constant 0 : index
    %214 = vector.load %arg5[%c0_157, %c0_158] : memref<12x12xbf16, #tpu.memory_space<vmem>>, vector<12x12xbf16>
    %cst_159 = arith.constant dense<0.000000e+00> : vector<128x12xf32>
    %215 = tpu.matmul %213, %214, %cst_159 {dimension_numbers = #tpu.dot_dimension_numbers<[1], [0], [0], [1], [0, 0, 1, 1], [], []>} : vector<128x12xbf16>, vector<12x12xbf16>, vector<128x12xf32> -> vector<128x12xf32>
    %216 = arith.addf %215, %5 : vector<128x12xf32>
    %cst_160 = arith.constant 0.000000e+00 : f32
    %217 = vector.broadcast %cst_160 : f32 to vector<128x12xf32>
    %218 = arith.maximumf %216, %217 : vector<128x12xf32>
    %219 = arith.truncf %218 : vector<128x12xf32> to vector<128x12xbf16>
    %220 = tpu.concatenate %219, %213 in 1 : vector<128x12xbf16>, vector<128x12xbf16> -> vector<128x24xbf16>
    %c0_161 = arith.constant 0 : index
    %c0_162 = arith.constant 0 : index
    %221 = vector.load %arg8[%c0_161, %c0_162] : memref<24x12xbf16, #tpu.memory_space<vmem>>, vector<24x12xbf16>
    %cst_163 = arith.constant dense<0.000000e+00> : vector<128x12xf32>
    %222 = tpu.matmul %220, %221, %cst_163 {dimension_numbers = #tpu.dot_dimension_numbers<[1], [0], [0], [1], [0, 0, 1, 1], [], []>} : vector<128x24xbf16>, vector<24x12xbf16>, vector<128x12xf32> -> vector<128x12xf32>
    %223 = arith.addf %222, %10 : vector<128x12xf32>
    %cst_164 = arith.constant 0.000000e+00 : f32
    %224 = vector.broadcast %cst_164 : f32 to vector<128x12xf32>
    %225 = arith.maximumf %223, %224 : vector<128x12xf32>
    %226 = arith.truncf %225 : vector<128x12xf32> to vector<128x12xbf16>
    %227 = tpu.concatenate %226, %219, %213 in 1 : vector<128x12xbf16>, vector<128x12xbf16>, vector<128x12xbf16> -> vector<128x36xbf16>
    %c0_165 = arith.constant 0 : index
    %c0_166 = arith.constant 0 : index
    %228 = vector.load %arg11[%c0_165, %c0_166] : memref<36x60xbf16, #tpu.memory_space<vmem>>, vector<36x60xbf16>
    %cst_167 = arith.constant dense<0.000000e+00> : vector<128x60xf32>
    %229 = tpu.matmul %227, %228, %cst_167 {dimension_numbers = #tpu.dot_dimension_numbers<[1], [0], [0], [1], [0, 0, 1, 1], [], []>} : vector<128x36xbf16>, vector<36x60xbf16>, vector<128x60xf32> -> vector<128x60xf32>
    %230 = arith.maximumf %203, %229 : vector<128x60xf32>
    %231 = arith.addf %230, %15 : vector<128x60xf32>
    %c0_168 = arith.constant 0 : index
    %c0_169 = arith.constant 0 : index
    %232 = vector.load %arg14[%c0_168, %c0_169] : memref<128x60xf32, #tpu.memory_space<vmem>>, vector<128x60xf32>
    tpu.vector_store %arg14[%c0_168, %c0_169], %231 {strides = array<i32>} : memref<128x60xf32, #tpu.memory_space<vmem>>, vector<128x60xf32>,
    return
  }
  func.func @transform_0(%arg0: i32) -> (i32, i32, i32) {
    %c0_i32 = arith.constant 0 : i32
    %c0_i32_0 = arith.constant 0 : i32
    %c0_i32_1 = arith.constant 0 : i32
    return %c0_i32, %arg0, %c0_i32_0 : i32, i32, i32
  }
  func.func @transform_1(%arg0: i32) -> (i32, i32) {
    %c0_i32 = arith.constant 0 : i32
    %c0_i32_0 = arith.constant 0 : i32
    return %arg0, %c0_i32 : i32, i32
  }
  func.func @transform_2(%arg0: i32) -> (i32, i32) {
    %c0_i32 = arith.constant 0 : i32
    %c0_i32_0 = arith.constant 0 : i32
    %c0_i32_1 = arith.constant 0 : i32
    return %c0_i32, %c0_i32_0 : i32, i32
  }
  func.func @transform_3(%arg0: i32) -> (i32, i32) {
    %c0_i32 = arith.constant 0 : i32
    %c0_i32_0 = arith.constant 0 : i32
    %c0_i32_1 = arith.constant 0 : i32
    return %c0_i32, %c0_i32_0 : i32, i32
  }
  func.func @transform_4(%arg0: i32) -> (i32, i32) {
    %c0_i32 = arith.constant 0 : i32
    %c0_i32_0 = arith.constant 0 : i32
    %c0_i32_1 = arith.constant 0 : i32
    return %c0_i32, %c0_i32_0 : i32, i32
  }
  func.func @transform_5(%arg0: i32) -> (i32, i32) {
    %c0_i32 = arith.constant 0 : i32
    %c0_i32_0 = arith.constant 0 : i32
    %c0_i32_1 = arith.constant 0 : i32
    return %c0_i32, %c0_i32_0 : i32, i32
  }
  func.func @transform_6(%arg0: i32) -> (i32, i32) {
    %c0_i32 = arith.constant 0 : i32
    %c0_i32_0 = arith.constant 0 : i32
    %c0_i32_1 = arith.constant 0 : i32
    return %c0_i32, %c0_i32_0 : i32, i32
  }
  func.func @transform_7(%arg0: i32) -> (i32, i32) {
    %c0_i32 = arith.constant 0 : i32
    %c0_i32_0 = arith.constant 0 : i32
    %c0_i32_1 = arith.constant 0 : i32
    return %c0_i32, %c0_i32_0 : i32, i32
  }
  func.func @transform_8(%arg0: i32) -> (i32, i32) {
    %c0_i32 = arith.constant 0 : i32
    %c0_i32_0 = arith.constant 0 : i32
    %c0_i32_1 = arith.constant 0 : i32
    return %c0_i32, %c0_i32_0 : i32, i32
  }
  func.func @transform_9(%arg0: i32) -> (i32, i32) {
    %c0_i32 = arith.constant 0 : i32
    %c0_i32_0 = arith.constant 0 : i32
    %c0_i32_1 = arith.constant 0 : i32
    return %c0_i32, %c0_i32_0 : i32, i32
  }
  func.func @transform_10(%arg0: i32) -> (i32, i32) {
    %c0_i32 = arith.constant 0 : i32
    %c0_i32_0 = arith.constant 0 : i32
    %c0_i32_1 = arith.constant 0 : i32
    return %c0_i32, %c0_i32_0 : i32, i32
  }
  func.func @transform_11(%arg0: i32) -> (i32, i32) {
    %c0_i32 = arith.constant 0 : i32
    %c0_i32_0 = arith.constant 0 : i32
    %c0_i32_1 = arith.constant 0 : i32
    return %c0_i32, %c0_i32_0 : i32, i32
  }
  func.func @transform_12(%arg0: i32) -> (i32, i32) {
    %c0_i32 = arith.constant 0 : i32
    %c0_i32_0 = arith.constant 0 : i32
    %c0_i32_1 = arith.constant 0 : i32
    return %c0_i32, %c0_i32_0 : i32, i32
  }
  func.func @transform_13(%arg0: i32) -> (i32, i32) {
    %c0_i32 = arith.constant 0 : i32
    %c0_i32_0 = arith.constant 0 : i32
    return %arg0, %c0_i32 : i32, i32
  }
}

</mosaic_0001>

<llo_original>
// kernel: encode_net2_forward.2
$region0: #{encode_net2_forward.2}
  #allocation0 [shape = 'u32[]', space=smem, size = 0x4, offset = 0x4, fixed_abs, tag = 'smem constant byte address 0x4 - core index']
  #allocation1 [shape = 'u32[144,128]{1,0:T(1,128)}', space=vmem, size = 0x12000, scoped, tag = 'internal scratch']
  %s0 = inlined_call_operand.vmem [shape: bf16[128,3], index: 0, kind: input, shape index: {}]
  %s1 = inlined_call_operand.vmem [shape: bf16[3,24], index: 1, kind: input, shape index: {}]
  %s2 = inlined_call_operand.vmem [shape: f32[1,24], index: 2, kind: input, shape index: {}]
  %s3 = inlined_call_operand.vmem [shape: f32[128,24], index: 3, kind: output, shape index: {}]
  %s4 = sld [smem:[#allocation0]]
  $region22: #{encode_net2_forward.2} parent=0
    _
  %s6 = ssub.s32 1, %s4
  %s7 = scalar_select 0, %s6, %s4
  // Predicated region
  $region2: #{encode_net2_forward.2} parent=0 // pred_check
    _
  $region3: #{encode_net2_forward.2} parent=0 // pred_check_branch
    %9 = sbr.rel (0) target = $region5
  $region4: #{encode_net2_forward.2} parent=0 // pred_region
    _
  $region5: #{encode_net2_forward.2} parent=0 // pred_fallthru
    _
  // Predicated region
  $region6: #{encode_net2_forward.2} parent=0 // pred_check
    _
  $region7: #{encode_net2_forward.2} parent=0 // pred_check_branch
    %11 = sbr.rel (0) target = $region9
  $region8: #{encode_net2_forward.2} parent=0 // pred_region
    _
  $region9: #{encode_net2_forward.2} parent=0 // pred_fallthru
    _
  // Predicated region
  $region10: #{encode_net2_forward.2} parent=0 // pred_check
    _
  $region11: #{encode_net2_forward.2} parent=0 // pred_check_branch
    %13 = sbr.rel (0) target = $region13
  $region12: #{encode_net2_forward.2} parent=0 // pred_region
    _
  $region13: #{encode_net2_forward.2} parent=0 // pred_fallthru
    _
  %v15 = vld [vmem:[%s0] sm:$0xf]
  %v16 = vld [vmem:[%s0 + $0x4] sm:$0xf]
  %v17 = vld [vmem:[%s0 + $0x8] sm:$0xf]
  %v18 = vld [vmem:[%s0 + $0xc] sm:$0xf]
  %v19 = vld [vmem:[%s0 + $0x10] sm:$0xf]
  %v20 = vld [vmem:[%s0 + $0x14] sm:$0xf]
  %v21 = vld [vmem:[%s0 + $0x18] sm:$0xf]
  %v22 = vld [vmem:[%s0 + $0x1c] sm:$0xf]
  %v23 = vld [vmem:[%s0 + $0x20] sm:$0xf]
  %v24 = vld [vmem:[%s0 + $0x24] sm:$0xf]
  %v25 = vld [vmem:[%s0 + $0x28] sm:$0xf]
  %v26 = vld [vmem:[%s0 + $0x2c] sm:$0xf]
  %v27 = vld [vmem:[%s0 + $0x30] sm:$0xf]
  %v28 = vld [vmem:[%s0 + $0x34] sm:$0xf]
  %v29 = vld [vmem:[%s0 + $0x38] sm:$0xf]
  %v30 = vld [vmem:[%s0 + $0x3c] sm:$0xf]
  %v31 = vld [vmem:[%s1] sm:$0x3]
  %v32 = vld [vmem:[%s2] sm:$0x1]
  %v34 = vlaneseq
  %v35 = vshrl.u32 %v34, 7
  %v36 = vsub.s32 0, %v35
  %v37 = vrot.slane %v32, %v36
  %v55 = vunpack.c.l.b16 %v15
  %v56 = vunpack.c.l.b16 %v16
  %v57 = vunpack.c.l.b16 %v17
  %v58 = vunpack.c.l.b16 %v18
  %v59 = vunpack.c.l.b16 %v19
  %v60 = vunpack.c.l.b16 %v20
  %v61 = vunpack.c.l.b16 %v21
  %v62 = vunpack.c.l.b16 %v22
  %v63 = vunpack.c.l.b16 %v23
  %v64 = vunpack.c.l.b16 %v24
  %v65 = vunpack.c.l.b16 %v25
  %v66 = vunpack.c.l.b16 %v26
  %v67 = vunpack.c.l.b16 %v27
  %v68 = vunpack.c.l.b16 %v28
  %v69 = vunpack.c.l.b16 %v29
  %v70 = vunpack.c.l.b16 %v30
  %v71 = vpack.c.b16 %v56, %v55
  %v72 = vpack.c.b16 %v58, %v57
  %v73 = vpack.c.b16 %v60, %v59
  %v74 = vpack.c.b16 %v62, %v61
  %v75 = vpack.c.b16 %v64, %v63
  %v76 = vpack.c.b16 %v66, %v65
  %v77 = vpack.c.b16 %v68, %v67
  %v78 = vpack.c.b16 %v70, %v69
  %vm79 = vcmask 23552
  %v81 = vsel %vm79, %v71, 0
  %v84 = vsel %vm79, %v72, 0
  %v87 = vsel %vm79, %v73, 0
  %v90 = vsel %vm79, %v74, 0
  %v93 = vsel %vm79, %v75, 0
  %v96 = vsel %vm79, %v76, 0
  %v99 = vsel %vm79, %v77, 0
  %v102 = vsel %vm79, %v78, 0
  %vm104 = vcmask 1040384
  %vm105 = vcmask 1041408
  %v106 = vsel %vm104, 4294967295, 65535
  %v107 = vsel %vm105, %v106, 0
  %v109 = vand.u32 %v31, %v107
  %111 = vmatprep.subr.bf16.mxu0 0
  %112 = vmatpush1.bf16.msra.mxu0 0
  %113 = vmatprep.subr.bf16.mxu0 0
  %114 = vmatpush1.bf16.msra.mxu0 0
  %115 = vmatprep.subr.bf16.mxu0 0
  %116 = vmatpush1.bf16.msra.mxu0 0
  %117 = vmatprep.subr.bf16.mxu0 0
  %118 = vmatpush1.bf16.msra.mxu0 0
  %119 = vmatprep.subr.bf16.mxu0 0
  %120 = vmatpush1.bf16.msra.mxu0 0
  %121 = vmatprep.subr.bf16.mxu0 0
  %122 = vmatpush1.bf16.msra.mxu0 0
  %123 = vmatprep.subr.bf16.mxu0 0
  %124 = vmatpush1.bf16.msra.mxu0 0
  %125 = vmatprep.subr.bf16.mxu0 0
  %126 = vmatpush1.bf16.msra.mxu0 %v109
  %127 = vmatprep.subr.bf16.mxu0 0
  %128 = vmatpush2.bf16.msra.mxu0 0
  %129 = vmatprep.subr.bf16.mxu0 0
  %130 = vmatpush2.bf16.msra.mxu0 0
  %131 = vmatprep.subr.bf16.mxu0 0
  %132 = vmatpush2.bf16.msra.mxu0 0
  %133 = vmatprep.subr.bf16.mxu0 0
  %134 = vmatpush2.bf16.msra.mxu0 0
  %135 = vmatprep.subr.bf16.mxu0 0
  %136 = vmatpush2.bf16.msra.mxu0 0
  %137 = vmatprep.subr.bf16.mxu0 0
  %138 = vmatpush2.bf16.msra.mxu0 0
  %139 = vmatprep.subr.bf16.mxu0 0
  %140 = vmatpush2.bf16.msra.mxu0 0
  %141 = vmatprep.subr.bf16.mxu0 0
  %142 = vmatpush2.bf16.msra.mxu0 0
  %143 = vmatprep.mubr.bf16.mxu0 0
  %144 = vmatmul.mubr.bf16.gmra.mxu0 %v81
  %v145 = vpop.f32.mrf.mxu0
  %v146 = vadd.f32 %v37, %v145
  %v147 = vpop.f32.mrf.mxu0
  %v148 = vpop.f32.mrf.mxu0
  %v149 = vadd.f32 %v37, %v148
  %v150 = vpop.f32.mrf.mxu0
  %151 = vmatprep.mubr.bf16.mxu0 0
  %152 = vmatmul.mubr.bf16.gmra.mxu0 %v84
  %v153 = vpop.f32.mrf.mxu0
  %v154 = vadd.f32 %v37, %v153
  %v155 = vpop.f32.mrf.mxu0
  %v156 = vpop.f32.mrf.mxu0
  %v157 = vadd.f32 %v37, %v156
  %v158 = vpop.f32.mrf.mxu0
  %159 = vmatprep.mubr.bf16.mxu0 0
  %160 = vmatmul.mubr.bf16.gmra.mxu0 %v87
  %v161 = vpop.f32.mrf.mxu0
  %v162 = vadd.f32 %v37, %v161
  %v163 = vpop.f32.mrf.mxu0
  %v164 = vpop.f32.mrf.mxu0
  %v165 = vadd.f32 %v37, %v164
  %v166 = vpop.f32.mrf.mxu0
  %167 = vmatprep.mubr.bf16.mxu0 0
  %168 = vmatmul.mubr.bf16.gmra.mxu0 %v90
  %v169 = vpop.f32.mrf.mxu0
  %v170 = vadd.f32 %v37, %v169
  %v171 = vpop.f32.mrf.mxu0
  %v172 = vpop.f32.mrf.mxu0
  %v173 = vadd.f32 %v37, %v172
  %v174 = vpop.f32.mrf.mxu0
  %175 = vmatprep.mubr.bf16.mxu0 0
  %176 = vmatmul.mubr.bf16.gmra.mxu0 %v93
  %v177 = vpop.f32.mrf.mxu0
  %v178 = vadd.f32 %v37, %v177
  %v179 = vpop.f32.mrf.mxu0
  %v180 = vpop.f32.mrf.mxu0
  %v181 = vadd.f32 %v37, %v180
  %v182 = vpop.f32.mrf.mxu0
  %183 = vmatprep.mubr.bf16.mxu0 0
  %184 = vmatmul.mubr.bf16.gmra.mxu0 %v96
  %v185 = vpop.f32.mrf.mxu0
  %v186 = vadd.f32 %v37, %v185
  %v187 = vpop.f32.mrf.mxu0
  %v188 = vpop.f32.mrf.mxu0
  %v189 = vadd.f32 %v37, %v188
  %v190 = vpop.f32.mrf.mxu0
  %191 = vmatprep.mubr.bf16.mxu0 0
  %192 = vmatmul.mubr.bf16.gmra.mxu0 %v99
  %v193 = vpop.f32.mrf.mxu0
  %v194 = vadd.f32 %v37, %v193
  %v195 = vpop.f32.mrf.mxu0
  %v196 = vpop.f32.mrf.mxu0
  %v197 = vadd.f32 %v37, %v196
  %v198 = vpop.f32.mrf.mxu0
  %199 = vmatprep.mubr.bf16.mxu0 0
  %200 = vmatmul.mubr.bf16.gmra.mxu0 %v102
  %v201 = vpop.f32.mrf.mxu0
  %v202 = vadd.f32 %v37, %v201
  %v203 = vpop.f32.mrf.mxu0
  %v204 = vpop.f32.mrf.mxu0
  %v205 = vadd.f32 %v37, %v204
  %v206 = vpop.f32.mrf.mxu0
  %207 = vdwg.mxu0
  %v208 = vmax.f32 %v146, 0.0
  %v209 = vmax.f32 %v149, 0.0
  %v210 = vmax.f32 %v154, 0.0
  %v211 = vmax.f32 %v157, 0.0
  %v212 = vmax.f32 %v162, 0.0
  %v213 = vmax.f32 %v165, 0.0
  %v214 = vmax.f32 %v170, 0.0
  %v215 = vmax.f32 %v173, 0.0
  %v216 = vmax.f32 %v178, 0.0
  %v217 = vmax.f32 %v181, 0.0
  %v218 = vmax.f32 %v186, 0.0
  %v219 = vmax.f32 %v189, 0.0
  %v220 = vmax.f32 %v194, 0.0
  %v221 = vmax.f32 %v197, 0.0
  %v222 = vmax.f32 %v202, 0.0
  %v223 = vmax.f32 %v205, 0.0
  %vm224 = vcmask 195584
  %225 = vst.msk [vmem:[%s3] sm:$0xff] %vm224, %v208
  %226 = vst.msk [vmem:[%s3 + $0x8] sm:$0xff] %vm224, %v209
  %227 = vst.msk [vmem:[%s3 + $0x10] sm:$0xff] %vm224, %v210
  %228 = vst.msk [vmem:[%s3 + $0x18] sm:$0xff] %vm224, %v211
  %229 = vst.msk [vmem:[%s3 + $0x20] sm:$0xff] %vm224, %v212
  %230 = vst.msk [vmem:[%s3 + $0x28] sm:$0xff] %vm224, %v213
  %231 = vst.msk [vmem:[%s3 + $0x30] sm:$0xff] %vm224, %v214
  %232 = vst.msk [vmem:[%s3 + $0x38] sm:$0xff] %vm224, %v215
  %233 = vst.msk [vmem:[%s3 + $0x40] sm:$0xff] %vm224, %v216
  %234 = vst.msk [vmem:[%s3 + $0x48] sm:$0xff] %vm224, %v217
  %235 = vst.msk [vmem:[%s3 + $0x50] sm:$0xff] %vm224, %v218
  %236 = vst.msk [vmem:[%s3 + $0x58] sm:$0xff] %vm224, %v219
  %237 = vst.msk [vmem:[%s3 + $0x60] sm:$0xff] %vm224, %v220
  %238 = vst.msk [vmem:[%s3 + $0x68] sm:$0xff] %vm224, %v221
  %239 = vst.msk [vmem:[%s3 + $0x70] sm:$0xff] %vm224, %v222
  %240 = vst.msk [vmem:[%s3 + $0x78] sm:$0xff] %vm224, %v223
  // Predicated region
  $region14: #{encode_net2_forward.2} parent=0 // pred_check
    _
  $region15: #{encode_net2_forward.2} parent=0 // pred_check_branch
    %242 = sbr.rel (0) target = $region17
  $region16: #{encode_net2_forward.2} parent=0 // pred_region
    _
  $region17: #{encode_net2_forward.2} parent=0 // pred_fallthru
    _
  // Predicated region
  $region18: #{encode_net2_forward.2} parent=0 // pred_check
    _
  $region19: #{encode_net2_forward.2} parent=0 // pred_check_branch
    %244 = sbr.rel (0) target = $region21
  $region20: #{encode_net2_forward.2} parent=0 // pred_region
    _
  $region21: #{encode_net2_forward.2} parent=0 // pred_fallthru
    _

// kernel: encode_net2_forward.3
$region0: #{encode_net2_forward.3}
  #allocation0 [shape = 'u32[]', space=smem, size = 0x4, offset = 0x4, fixed_abs, tag = 'smem constant byte address 0x4 - core index']
  #allocation1 [shape = 'u32[144,128]{1,0:T(1,128)}', space=vmem, size = 0x12000, scoped, tag = 'internal scratch']
  %s0 = inlined_call_operand.vmem [shape: bf16[8,128,27], index: 0, kind: input, shape index: {}]
  %s1 = inlined_call_operand.vmem [shape: bf16[128,24], index: 1, kind: input, shape index: {}]
  %s2 = inlined_call_operand.vmem [shape: bf16[27,12], index: 2, kind: input, shape index: {}]
  %s3 = inlined_call_operand.vmem [shape: f32[1,12], index: 3, kind: input, shape index: {}]
  %s4 = inlined_call_operand.vmem [shape: bf16[12,12], index: 4, kind: input, shape index: {}]
  %s5 = inlined_call_operand.vmem [shape: bf16[24,12], index: 5, kind: input, shape index: {}]
  %s6 = inlined_call_operand.vmem [shape: f32[1,12], index: 6, kind: input, shape index: {}]
  %s7 = inlined_call_operand.vmem [shape: bf16[24,12], index: 7, kind: input, shape index: {}]
  %s8 = inlined_call_operand.vmem [shape: bf16[24,12], index: 8, kind: input, shape index: {}]
  %s9 = inlined_call_operand.vmem [shape: f32[1,12], index: 9, kind: input, shape index: {}]
  %s10 = inlined_call_operand.vmem [shape: bf16[36,60], index: 10, kind: input, shape index: {}]
  %s11 = inlined_call_operand.vmem [shape: bf16[24,60], index: 11, kind: input, shape index: {}]
  %s12 = inlined_call_operand.vmem [shape: f32[1,60], index: 12, kind: input, shape index: {}]
  %s13 = inlined_call_operand.vmem [shape: f32[128,60], index: 13, kind: output, shape index: {}]
  %s14 = sld [smem:[#allocation0]]
  $region62: #{encode_net2_forward.3} parent=0
    _
  %s16 = ssub.s32 1, %s14
  %s17 = scalar_select 0, %s16, %s14
  // Predicated region
  $region2: #{encode_net2_forward.3} parent=0 // pred_check
    _
  $region3: #{encode_net2_forward.3} parent=0 // pred_check_branch
    %19 = sbr.rel (0) target = $region5
  $region4: #{encode_net2_forward.3} parent=0 // pred_region
    _
  $region5: #{encode_net2_forward.3} parent=0 // pred_fallthru
    _
  // Predicated region
  $region6: #{encode_net2_forward.3} parent=0 // pred_check
    _
  $region7: #{encode_net2_forward.3} parent=0 // pred_check_branch
    %21 = sbr.rel (0) target = $region9
  $region8: #{encode_net2_forward.3} parent=0 // pred_region
    _
  $region9: #{encode_net2_forward.3} parent=0 // pred_fallthru
    _
  // Predicated region
  $region10: #{encode_net2_forward.3} parent=0 // pred_check
    _
  $region11: #{encode_net2_forward.3} parent=0 // pred_check_branch
    %23 = sbr.rel (0) target = $region13
  $region12: #{encode_net2_forward.3} parent=0 // pred_region
    _
  $region13: #{encode_net2_forward.3} parent=0 // pred_fallthru
    _
  // Predicated region
  $region14: #{encode_net2_forward.3} parent=0 // pred_check
    _
  $region15: #{encode_net2_forward.3} parent=0 // pred_check_branch
    %25 = sbr.rel (0) target = $region17
  $region16: #{encode_net2_forward.3} parent=0 // pred_region
    _
  $region17: #{encode_net2_forward.3} parent=0 // pred_fallthru
    _
  // Predicated region
  $region18: #{encode_net2_forward.3} parent=0 // pred_check
    _
  $region19: #{encode_net2_forward.3} parent=0 // pred_check_branch
    %27 = sbr.rel (0) target = $region21
  $region20: #{encode_net2_forward.3} parent=0 // pred_region
    _
  $region21: #{encode_net2_forward.3} parent=0 // pred_fallthru
    _
  // Predicated region
  $region22: #{encode_net2_forward.3} parent=0 // pred_check
    _
  $region23: #{encode_net2_forward.3} parent=0 // pred_check_branch
    %29 = sbr.rel (0) target = $region25
  $region24: #{encode_net2_forward.3} parent=0 // pred_region
    _
  $region25: #{encode_net2_forward.3} parent=0 // pred_fallthru
    _
  // Predicated region
  $region26: #{encode_net2_forward.3} parent=0 // pred_check
    _
  $region27: #{encode_net2_forward.3} parent=0 // pred_check_branch
    %31 = sbr.rel (0) target = $region29
  $region28: #{encode_net2_forward.3} parent=0 // pred_region
    _
  $region29: #{encode_net2_forward.3} parent=0 // pred_fallthru
    _
  // Predicated region
  $region30: #{encode_net2_forward.3} parent=0 // pred_check
    _
  $region31: #{encode_net2_forward.3} parent=0 // pred_check_branch
    %33 = sbr.rel (0) target = $region33
  $region32: #{encode_net2_forward.3} parent=0 // pred_region
    _
  $region33: #{encode_net2_forward.3} parent=0 // pred_fallthru
    _
  // Predicated region
  $region34: #{encode_net2_forward.3} parent=0 // pred_check
    _
  $region35: #{encode_net2_forward.3} parent=0 // pred_check_branch
    %35 = sbr.rel (0) target = $region37
  $region36: #{encode_net2_forward.3} parent=0 // pred_region
    _
  $region37: #{encode_net2_forward.3} parent=0 // pred_fallthru
    _
  // Predicated region
  $region38: #{encode_net2_forward.3} parent=0 // pred_check
    _
  $region39: #{encode_net2_forward.3} parent=0 // pred_check_branch
    %37 = sbr.rel (0) target = $region41
  $region40: #{encode_net2_forward.3} parent=0 // pred_region
    _
  $region41: #{encode_net2_forward.3} parent=0 // pred_fallthru
    _
  // Predicated region
  $region42: #{encode_net2_forward.3} parent=0 // pred_check
    _
  $region43: #{encode_net2_forward.3} parent=0 // pred_check_branch
    %39 = sbr.rel (0) target = $region45
  $region44: #{encode_net2_forward.3} parent=0 // pred_region
    _
  $region45: #{encode_net2_forward.3} parent=0 // pred_fallthru
    _
  // Predicated region
  $region46: #{encode_net2_forward.3} parent=0 // pred_check
    _
  $region47: #{encode_net2_forward.3} parent=0 // pred_check_branch
    %41 = sbr.rel (0) target = $region49
  $region48: #{encode_net2_forward.3} parent=0 // pred_region
    _
  $region49: #{encode_net2_forward.3} parent=0 // pred_fallthru
    _
  // Predicated region
  $region50: #{encode_net2_forward.3} parent=0 // pred_check
    _
  $region51: #{encode_net2_forward.3} parent=0 // pred_check_branch
    %43 = sbr.rel (0) target = $region53
  $region52: #{encode_net2_forward.3} parent=0 // pred_region
    _
  $region53: #{encode_net2_forward.3} parent=0 // pred_fallthru
    _
  %v45 = vld [vmem:[%s1] sm:$0xf]
  %v46 = vld [vmem:[%s1 + $0x4] sm:$0xf]
  %v47 = vld [vmem:[%s1 + $0x8] sm:$0xf]
  %v48 = vld [vmem:[%s1 + $0xc] sm:$0xf]
  %v49 = vld [vmem:[%s1 + $0x10] sm:$0xf]
  %v50 = vld [vmem:[%s1 + $0x14] sm:$0xf]
  %v51 = vld [vmem:[%s1 + $0x18] sm:$0xf]
  %v52 = vld [vmem:[%s1 + $0x1c] sm:$0xf]
  %v53 = vld [vmem:[%s1 + $0x20] sm:$0xf]
  %v54 = vld [vmem:[%s1 + $0x24] sm:$0xf]
  %v55 = vld [vmem:[%s1 + $0x28] sm:$0xf]
  %v56 = vld [vmem:[%s1 + $0x2c] sm:$0xf]
  %v57 = vld [vmem:[%s1 + $0x30] sm:$0xf]
  %v58 = vld [vmem:[%s1 + $0x34] sm:$0xf]
  %v59 = vld [vmem:[%s1 + $0x38] sm:$0xf]
  %v60 = vld [vmem:[%s1 + $0x3c] sm:$0xf]
  %v61 = vld [vmem:[%s5] sm:$0xf]
  %v62 = vld [vmem:[%s5 + $0x4] sm:$0xf]
  %v63 = vld [vmem:[%s5 + $0x8] sm:$0xf]
  %v64 = vld [vmem:[%s6] sm:$0x1]
  %v66 = vlaneseq
  %v67 = vshrl.u32 %v66, 7
  %v68 = vsub.s32 0, %v67
  %v69 = vrot.slane %v64, %v68
  %v87 = vunpack.c.l.b16 %v45
  %v88 = vunpack.c.l.b16 %v46
  %v89 = vunpack.c.l.b16 %v47
  %v90 = vunpack.c.l.b16 %v48
  %v91 = vunpack.c.l.b16 %v49
  %v92 = vunpack.c.l.b16 %v50
  %v93 = vunpack.c.l.b16 %v51
  %v94 = vunpack.c.l.b16 %v52
  %v95 = vunpack.c.l.b16 %v53
  %v96 = vunpack.c.l.b16 %v54
  %v97 = vunpack.c.l.b16 %v55
  %v98 = vunpack.c.l.b16 %v56
  %v99 = vunpack.c.l.b16 %v57
  %v100 = vunpack.c.l.b16 %v58
  %v101 = vunpack.c.l.b16 %v59
  %v102 = vunpack.c.l.b16 %v60
  %v103 = vpack.c.b16 %v88, %v87
  %v104 = vpack.c.b16 %v90, %v89
  %v105 = vpack.c.b16 %v92, %v91
  %v106 = vpack.c.b16 %v94, %v93
  %v107 = vpack.c.b16 %v96, %v95
  %v108 = vpack.c.b16 %v98, %v97
  %v109 = vpack.c.b16 %v100, %v99
  %v110 = vpack.c.b16 %v102, %v101
  %v114 = vunpack.c.l.b16 %v61
  %v115 = vunpack.c.l.b16 %v62
  %v116 = vunpack.c.l.b16 %v63
  %v117 = vpack.c.b16 %v115, %v114
  %v118 = vpack.c.b16 %v116, %v116
  %vm120 = vcmask 195584
  %v122 = vsel %vm120, %v103, 0
  %v125 = vsel %vm120, %v104, 0
  %v128 = vsel %vm120, %v105, 0
  %v131 = vsel %vm120, %v106, 0
  %v134 = vsel %vm120, %v107, 0
  %v137 = vsel %vm120, %v108, 0
  %v140 = vsel %vm120, %v109, 0
  %v143 = vsel %vm120, %v110, 0
  %vm145 = vcmask 1043456
  %v147 = vsel %vm145, %v118, 0
  %149 = vmatprep.subr.bf16.mxu0 0
  %150 = vmatpush1.bf16.msra.mxu0 0
  %151 = vmatprep.subr.bf16.mxu0 0
  %152 = vmatpush1.bf16.msra.mxu0 0
  %153 = vmatprep.subr.bf16.mxu0 0
  %154 = vmatpush1.bf16.msra.mxu0 0
  %155 = vmatprep.subr.bf16.mxu0 0
  %156 = vmatpush1.bf16.msra.mxu0 0
  %157 = vmatprep.subr.bf16.mxu0 0
  %158 = vmatpush1.bf16.msra.mxu0 0
  %159 = vmatprep.subr.bf16.mxu0 0
  %160 = vmatpush1.bf16.msra.mxu0 0
  %161 = vmatprep.subr.bf16.mxu0 0
  %162 = vmatpush1.bf16.msra.mxu0 %v147
  %163 = vmatprep.subr.bf16.mxu0 0
  %164 = vmatpush1.bf16.msra.mxu0 %v117
  %165 = vmatprep.subr.bf16.mxu0 0
  %166 = vmatpush2.bf16.msra.mxu0 0
  %167 = vmatprep.subr.bf16.mxu0 0
  %168 = vmatpush2.bf16.msra.mxu0 0
  %169 = vmatprep.subr.bf16.mxu0 0
  %170 = vmatpush2.bf16.msra.mxu0 0
  %171 = vmatprep.subr.bf16.mxu0 0
  %172 = vmatpush2.bf16.msra.mxu0 0
  %173 = vmatprep.subr.bf16.mxu0 0
  %174 = vmatpush2.bf16.msra.mxu0 0
  %175 = vmatprep.subr.bf16.mxu0 0
  %176 = vmatpush2.bf16.msra.mxu0 0
  %177 = vmatprep.subr.bf16.mxu0 0
  %178 = vmatpush2.bf16.msra.mxu0 0
  %179 = vmatprep.subr.bf16.mxu0 0
  %180 = vmatpush2.bf16.msra.mxu0 0
  %181 = vmatprep.mubr.bf16.mxu0 0
  %182 = vmatmul.mubr.bf16.gmra.mxu0 %v122
  %v183 = vpop.f32.mrf.mxu0
  %v184 = vadd.f32 %v69, %v183
  %v185 = vpop.f32.mrf.mxu0
  %v186 = vpop.f32.mrf.mxu0
  %v187 = vadd.f32 %v69, %v186
  %v188 = vpop.f32.mrf.mxu0
  %189 = vmatprep.mubr.bf16.mxu0 0
  %190 = vmatmul.mubr.bf16.gmra.mxu0 %v125
  %v191 = vpop.f32.mrf.mxu0
  %v192 = vadd.f32 %v69, %v191
  %v193 = vpop.f32.mrf.mxu0
  %v194 = vpop.f32.mrf.mxu0
  %v195 = vadd.f32 %v69, %v194
  %v196 = vpop.f32.mrf.mxu0
  %197 = vmatprep.mubr.bf16.mxu0 0
  %198 = vmatmul.mubr.bf16.gmra.mxu0 %v128
  %v199 = vpop.f32.mrf.mxu0
  %v200 = vadd.f32 %v69, %v199
  %v201 = vpop.f32.mrf.mxu0
  %v202 = vpop.f32.mrf.mxu0
  %v203 = vadd.f32 %v69, %v202
  %v204 = vpop.f32.mrf.mxu0
  %205 = vmatprep.mubr.bf16.mxu0 0
  %206 = vmatmul.mubr.bf16.gmra.mxu0 %v131
  %v207 = vpop.f32.mrf.mxu0
  %v208 = vadd.f32 %v69, %v207
  %v209 = vpop.f32.mrf.mxu0
  %v210 = vpop.f32.mrf.mxu0
  %v211 = vadd.f32 %v69, %v210
  %v212 = vpop.f32.mrf.mxu0
  %213 = vmatprep.mubr.bf16.mxu0 0
  %214 = vmatmul.mubr.bf16.gmra.mxu0 %v134
  %v215 = vpop.f32.mrf.mxu0
  %v216 = vadd.f32 %v69, %v215
  %v217 = vpop.f32.mrf.mxu0
  %v218 = vpop.f32.mrf.mxu0
  %v219 = vadd.f32 %v69, %v218
  %v220 = vpop.f32.mrf.mxu0
  %221 = vmatprep.mubr.bf16.mxu0 0
  %222 = vmatmul.mubr.bf16.gmra.mxu0 %v137
  %v223 = vpop.f32.mrf.mxu0
  %v224 = vadd.f32 %v69, %v223
  %v225 = vpop.f32.mrf.mxu0
  %v226 = vpop.f32.mrf.mxu0
  %v227 = vadd.f32 %v69, %v226
  %v228 = vpop.f32.mrf.mxu0
  %229 = vmatprep.mubr.bf16.mxu0 0
  %230 = vmatmul.mubr.bf16.gmra.mxu0 %v140
  %v231 = vpop.f32.mrf.mxu0
  %v232 = vadd.f32 %v69, %v231
  %v233 = vpop.f32.mrf.mxu0
  %v234 = vpop.f32.mrf.mxu0
  %v235 = vadd.f32 %v69, %v234
  %v236 = vpop.f32.mrf.mxu0
  %237 = vmatprep.mubr.bf16.mxu0 0
  %238 = vmatmul.mubr.bf16.gmra.mxu0 %v143
  %v239 = vpop.f32.mrf.mxu0
  %v240 = vadd.f32 %v69, %v239
  %v241 = vpop.f32.mrf.mxu0
  %v242 = vpop.f32.mrf.mxu0
  %v243 = vadd.f32 %v69, %v242
  %v244 = vpop.f32.mrf.mxu0
  %245 = vdwg.mxu0
  %v246 = vld [vmem:[%s8] sm:$0xf]
  %v247 = vld [vmem:[%s8 + $0x4] sm:$0xf]
  %v248 = vld [vmem:[%s8 + $0x8] sm:$0xf]
  %v249 = vld [vmem:[%s9] sm:$0x1]
  %v251 = vlaneseq
  %v252 = vshrl.u32 %v251, 7
  %v253 = vsub.s32 0, %v252
  %v254 = vrot.slane %v249, %v253
  %v259 = vunpack.c.l.b16 %v246
  %v260 = vunpack.c.l.b16 %v247
  %v261 = vunpack.c.l.b16 %v248
  %v262 = vpack.c.b16 %v260, %v259
  %v263 = vpack.c.b16 %v261, %v261
  %v266 = vsel %vm145, %v263, 0
  %268 = vmatprep.subr.bf16.mxu0 0
  %269 = vmatpush1.bf16.msra.mxu0 0
  %270 = vmatprep.subr.bf16.mxu0 0
  %271 = vmatpush1.bf16.msra.mxu0 0
  %272 = vmatprep.subr.bf16.mxu0 0
  %273 = vmatpush1.bf16.msra.mxu0 0
  %274 = vmatprep.subr.bf16.mxu0 0
  %275 = vmatpush1.bf16.msra.mxu0 0
  %276 = vmatprep.subr.bf16.mxu0 0
  %277 = vmatpush1.bf16.msra.mxu0 0
  %278 = vmatprep.subr.bf16.mxu0 0
  %279 = vmatpush1.bf16.msra.mxu0 0
  %280 = vmatprep.subr.bf16.mxu0 0
  %281 = vmatpush1.bf16.msra.mxu0 %v266
  %282 = vmatprep.subr.bf16.mxu0 0
  %283 = vmatpush1.bf16.msra.mxu0 %v262
  %284 = vmatprep.subr.bf16.mxu0 0
  %285 = vmatpush2.bf16.msra.mxu0 0
  %286 = vmatprep.subr.bf16.mxu0 0
  %287 = vmatpush2.bf16.msra.mxu0 0
  %288 = vmatprep.subr.bf16.mxu0 0
  %289 = vmatpush2.bf16.msra.mxu0 0
  %290 = vmatprep.subr.bf16.mxu0 0
  %291 = vmatpush2.bf16.msra.mxu0 0
  %292 = vmatprep.subr.bf16.mxu0 0
  %293 = vmatpush2.bf16.msra.mxu0 0
  %294 = vmatprep.subr.bf16.mxu0 0
  %295 = vmatpush2.bf16.msra.mxu0 0
  %296 = vmatprep.subr.bf16.mxu0 0
  %297 = vmatpush2.bf16.msra.mxu0 0
  %298 = vmatprep.subr.bf16.mxu0 0
  %299 = vmatpush2.bf16.msra.mxu0 0
  %300 = vmatprep.mubr.bf16.mxu0 0
  %301 = vmatmul.mubr.bf16.gmra.mxu0 %v122
  %v302 = vpop.f32.mrf.mxu0
  %v303 = vadd.f32 %v254, %v302
  %v304 = vpop.f32.mrf.mxu0
  %v305 = vpop.f32.mrf.mxu0
  %v306 = vadd.f32 %v254, %v305
  %v307 = vpop.f32.mrf.mxu0
  %308 = vmatprep.mubr.bf16.mxu0 0
  %309 = vmatmul.mubr.bf16.gmra.mxu0 %v125
  %v310 = vpop.f32.mrf.mxu0
  %v311 = vadd.f32 %v254, %v310
  %v312 = vpop.f32.mrf.mxu0
  %v313 = vpop.f32.mrf.mxu0
  %v314 = vadd.f32 %v254, %v313
  %v315 = vpop.f32.mrf.mxu0
  %316 = vmatprep.mubr.bf16.mxu0 0
  %317 = vmatmul.mubr.bf16.gmra.mxu0 %v128
  %v318 = vpop.f32.mrf.mxu0
  %v319 = vadd.f32 %v254, %v318
  %v320 = vpop.f32.mrf.mxu0
  %v321 = vpop.f32.mrf.mxu0
  %v322 = vadd.f32 %v254, %v321
  %v323 = vpop.f32.mrf.mxu0
  %324 = vmatprep.mubr.bf16.mxu0 0
  %325 = vmatmul.mubr.bf16.gmra.mxu0 %v131
  %v326 = vpop.f32.mrf.mxu0
  %v327 = vadd.f32 %v254, %v326
  %v328 = vpop.f32.mrf.mxu0
  %v329 = vpop.f32.mrf.mxu0
  %v330 = vadd.f32 %v254, %v329
  %v331 = vpop.f32.mrf.mxu0
  %332 = vmatprep.mubr.bf16.mxu0 0
  %333 = vmatmul.mubr.bf16.gmra.mxu0 %v134
  %v334 = vpop.f32.mrf.mxu0
  %v335 = vadd.f32 %v254, %v334
  %v336 = vpop.f32.mrf.mxu0
  %v337 = vpop.f32.mrf.mxu0
  %v338 = vadd.f32 %v254, %v337
  %v339 = vpop.f32.mrf.mxu0
  %340 = vmatprep.mubr.bf16.mxu0 0
  %341 = vmatmul.mubr.bf16.gmra.mxu0 %v137
  %v342 = vpop.f32.mrf.mxu0
  %v343 = vadd.f32 %v254, %v342
  %v344 = vpop.f32.mrf.mxu0
  %v345 = vpop.f32.mrf.mxu0
  %v346 = vadd.f32 %v254, %v345
  %v347 = vpop.f32.mrf.mxu0
  %348 = vmatprep.mubr.bf16.mxu0 0
  %349 = vmatmul.mubr.bf16.gmra.mxu0 %v140
  %v350 = vpop.f32.mrf.mxu0
  %v351 = vadd.f32 %v254, %v350
  %v352 = vpop.f32.mrf.mxu0
  %v353 = vpop.f32.mrf.mxu0
  %v354 = vadd.f32 %v254, %v353
  %v355 = vpop.f32.mrf.mxu0
  %356 = vmatprep.mubr.bf16.mxu0 0
  %357 = vmatmul.mubr.bf16.gmra.mxu0 %v143
  %v358 = vpop.f32.mrf.mxu0
  %v359 = vadd.f32 %v254, %v358
  %v360 = vpop.f32.mrf.mxu0
  %v361 = vpop.f32.mrf.mxu0
  %v362 = vadd.f32 %v254, %v361
  %v363 = vpop.f32.mrf.mxu0
  %364 = vdwg.mxu0
  %v365 = vld [vmem:[%s11] sm:$0xf]
  %v366 = vld [vmem:[%s11 + $0x4] sm:$0xf]
  %v367 = vld [vmem:[%s11 + $0x8] sm:$0xf]
  %v368 = vld [vmem:[%s12] sm:$0x1]
  %v370 = vlaneseq
  %v371 = vshrl.u32 %v370, 7
  %v372 = vsub.s32 0, %v371
  %v373 = vrot.slane %v368, %v372
  %v378 = vunpack.c.l.b16 %v365
  %v379 = vunpack.c.l.b16 %v366
  %v380 = vunpack.c.l.b16 %v367
  %v381 = vpack.c.b16 %v379, %v378
  %v382 = vpack.c.b16 %v380, %v380
  %v385 = vsel %vm145, %v382, 0
  %387 = vmatprep.subr.bf16.mxu0 0
  %388 = vmatpush1.bf16.msra.mxu0 0
  %389 = vmatprep.subr.bf16.mxu0 0
  %390 = vmatpush1.bf16.msra.mxu0 0
  %391 = vmatprep.subr.bf16.mxu0 0
  %392 = vmatpush1.bf16.msra.mxu0 0
  %393 = vmatprep.subr.bf16.mxu0 0
  %394 = vmatpush1.bf16.msra.mxu0 0
  %395 = vmatprep.subr.bf16.mxu0 0
  %396 = vmatpush1.bf16.msra.mxu0 0
  %397 = vmatprep.subr.bf16.mxu0 0
  %398 = vmatpush1.bf16.msra.mxu0 0
  %399 = vmatprep.subr.bf16.mxu0 0
  %400 = vmatpush1.bf16.msra.mxu0 %v385
  %401 = vmatprep.subr.bf16.mxu0 0
  %402 = vmatpush1.bf16.msra.mxu0 %v381
  %403 = vmatprep.subr.bf16.mxu0 0
  %404 = vmatpush2.bf16.msra.mxu0 0
  %405 = vmatprep.subr.bf16.mxu0 0
  %406 = vmatpush2.bf16.msra.mxu0 0
  %407 = vmatprep.subr.bf16.mxu0 0
  %408 = vmatpush2.bf16.msra.mxu0 0
  %409 = vmatprep.subr.bf16.mxu0 0
  %410 = vmatpush2.bf16.msra.mxu0 0
  %411 = vmatprep.subr.bf16.mxu0 0
  %412 = vmatpush2.bf16.msra.mxu0 0
  %413 = vmatprep.subr.bf16.mxu0 0
  %414 = vmatpush2.bf16.msra.mxu0 0
  %415 = vmatprep.subr.bf16.mxu0 0
  %416 = vmatpush2.bf16.msra.mxu0 0
  %417 = vmatprep.subr.bf16.mxu0 0
  %418 = vmatpush2.bf16.msra.mxu0 0
  %419 = vmatprep.mubr.bf16.mxu0 0
  %420 = vmatmul.mubr.bf16.gmra.mxu0 %v122
  %v421 = vpop.f32.mrf.mxu0
  %v422 = vadd.f32 %v373, %v421
  %v423 = vpop.f32.mrf.mxu0
  %v424 = vpop.f32.mrf.mxu0
  %v425 = vadd.f32 %v373, %v424
  %v426 = vpop.f32.mrf.mxu0
  %427 = vmatprep.mubr.bf16.mxu0 0
  %428 = vmatmul.mubr.bf16.gmra.mxu0 %v125
  %v429 = vpop.f32.mrf.mxu0
  %v430 = vadd.f32 %v373, %v429
  %v431 = vpop.f32.mrf.mxu0
  %v432 = vpop.f32.mrf.mxu0
  %v433 = vadd.f32 %v373, %v432
  %v434 = vpop.f32.mrf.mxu0
  %435 = vmatprep.mubr.bf16.mxu0 0
  %436 = vmatmul.mubr.bf16.gmra.mxu0 %v128
  %v437 = vpop.f32.mrf.mxu0
  %v438 = vadd.f32 %v373, %v437
  %v439 = vpop.f32.mrf.mxu0
  %v440 = vpop.f32.mrf.mxu0
  %v441 = vadd.f32 %v373, %v440
  %v442 = vpop.f32.mrf.mxu0
  %443 = vmatprep.mubr.bf16.mxu0 0
  %444 = vmatmul.mubr.bf16.gmra.mxu0 %v131
  %v445 = vpop.f32.mrf.mxu0
  %v446 = vadd.f32 %v373, %v445
  %v447 = vpop.f32.mrf.mxu0
  %v448 = vpop.f32.mrf.mxu0
  %v449 = vadd.f32 %v373, %v448
  %v450 = vpop.f32.mrf.mxu0
  %451 = vmatprep.mubr.bf16.mxu0 0
  %452 = vmatmul.mubr.bf16.gmra.mxu0 %v134
  %v453 = vpop.f32.mrf.mxu0
  %v454 = vadd.f32 %v373, %v453
  %v455 = vpop.f32.mrf.mxu0
  %v456 = vpop.f32.mrf.mxu0
  %v457 = vadd.f32 %v373, %v456
  %v458 = vpop.f32.mrf.mxu0
  %459 = vmatprep.mubr.bf16.mxu0 0
  %460 = vmatmul.mubr.bf16.gmra.mxu0 %v137
  %v461 = vpop.f32.mrf.mxu0
  %v462 = vadd.f32 %v373, %v461
  %v463 = vpop.f32.mrf.mxu0
  %v464 = vpop.f32.mrf.mxu0
  %v465 = vadd.f32 %v373, %v464
  %v466 = vpop.f32.mrf.mxu0
  %467 = vmatprep.mubr.bf16.mxu0 0
  %468 = vmatmul.mubr.bf16.gmra.mxu0 %v140
  %v469 = vpop.f32.mrf.mxu0
  %v470 = vadd.f32 %v373, %v469
  %v471 = vpop.f32.mrf.mxu0
  %v472 = vpop.f32.mrf.mxu0
  %v473 = vadd.f32 %v373, %v472
  %v474 = vpop.f32.mrf.mxu0
  %475 = vmatprep.mubr.bf16.mxu0 0
  %476 = vmatmul.mubr.bf16.gmra.mxu0 %v143
  %v477 = vpop.f32.mrf.mxu0
  %v478 = vadd.f32 %v373, %v477
  %v479 = vpop.f32.mrf.mxu0
  %v480 = vpop.f32.mrf.mxu0
  %v481 = vadd.f32 %v373, %v480
  %v482 = vpop.f32.mrf.mxu0
  %483 = vdwg.mxu0
  %v484 = vld [vmem:[%s0] sm:$0xf]
  %v485 = vld [vmem:[%s0 + $0x4] sm:$0xf]
  %v486 = vld [vmem:[%s0 + $0x8] sm:$0xf]
  %v487 = vld [vmem:[%s0 + $0xc] sm:$0xf]
  %v488 = vld [vmem:[%s0 + $0x10] sm:$0xf]
  %v489 = vld [vmem:[%s0 + $0x14] sm:$0xf]
  %v490 = vld [vmem:[%s0 + $0x18] sm:$0xf]
  %v491 = vld [vmem:[%s0 + $0x1c] sm:$0xf]
  %v492 = vld [vmem:[%s0 + $0x20] sm:$0xf]
  %v493 = vld [vmem:[%s0 + $0x24] sm:$0xf]
  %v494 = vld [vmem:[%s0 + $0x28] sm:$0xf]
  %v495 = vld [vmem:[%s0 + $0x2c] sm:$0xf]
  %v496 = vld [vmem:[%s0 + $0x30] sm:$0xf]
  %v497 = vld [vmem:[%s0 + $0x34] sm:$0xf]
  %v498 = vld [vmem:[%s0 + $0x38] sm:$0xf]
  %v499 = vld [vmem:[%s0 + $0x3c] sm:$0xf]
  %v500 = vld [vmem:[%s2] sm:$0xf]
  %v501 = vld [vmem:[%s2 + $0x4] sm:$0xf]
  %v502 = vld [vmem:[%s2 + $0x8] sm:$0xf]
  %v503 = vld [vmem:[%s2 + $0xc] sm:$0x3]
  %v504 = vld [vmem:[%s3] sm:$0x1]
  %v506 = vlaneseq
  %v507 = vshrl.u32 %v506, 7
  %v508 = vsub.s32 0, %v507
  %v509 = vrot.slane %v504, %v508
  %v527 = vunpack.c.l.b16 %v484
  %v528 = vunpack.c.l.b16 %v485
  %v529 = vunpack.c.l.b16 %v486
  %v530 = vunpack.c.l.b16 %v487
  %v531 = vunpack.c.l.b16 %v488
  %v532 = vunpack.c.l.b16 %v489
  %v533 = vunpack.c.l.b16 %v490
  %v534 = vunpack.c.l.b16 %v491
  %v535 = vunpack.c.l.b16 %v492
  %v536 = vunpack.c.l.b16 %v493
  %v537 = vunpack.c.l.b16 %v494
  %v538 = vunpack.c.l.b16 %v495
  %v539 = vunpack.c.l.b16 %v496
  %v540 = vunpack.c.l.b16 %v497
  %v541 = vunpack.c.l.b16 %v498
  %v542 = vunpack.c.l.b16 %v499
  %v543 = vpack.c.b16 %v528, %v527
  %v544 = vpack.c.b16 %v530, %v529
  %v545 = vpack.c.b16 %v532, %v531
  %v546 = vpack.c.b16 %v534, %v533
  %v547 = vpack.c.b16 %v536, %v535
  %v548 = vpack.c.b16 %v538, %v537
  %v549 = vpack.c.b16 %v540, %v539
  %v550 = vpack.c.b16 %v542, %v541
  %v555 = vunpack.c.l.b16 %v500
  %v556 = vunpack.c.l.b16 %v501
  %v557 = vunpack.c.l.b16 %v502
  %v558 = vunpack.c.l.b16 %v503
  %v559 = vpack.c.b16 %v556, %v555
  %v560 = vpack.c.b16 %v558, %v557
  %vm562 = vcmask 220160
  %v564 = vsel %vm562, %v543, 0
  %v567 = vsel %vm562, %v544, 0
  %v570 = vsel %vm562, %v545, 0
  %v573 = vsel %vm562, %v546, 0
  %v576 = vsel %vm562, %v547, 0
  %v579 = vsel %vm562, %v548, 0
  %v582 = vsel %vm562, %v549, 0
  %v585 = vsel %vm562, %v550, 0
  %vm587 = vcmask 1044480
  %vm588 = vcmask 1045504
  %v589 = vsel %vm587, 4294967295, 65535
  %v590 = vsel %vm588, %v589, 0
  %v592 = vand.u32 %v560, %v590
  %594 = vmatprep.subr.bf16.mxu0 0
  %595 = vmatpush1.bf16.msra.mxu0 0
  %596 = vmatprep.subr.bf16.mxu0 0
  %597 = vmatpush1.bf16.msra.mxu0 0
  %598 = vmatprep.subr.bf16.mxu0 0
  %599 = vmatpush1.bf16.msra.mxu0 0
  %600 = vmatprep.subr.bf16.mxu0 0
  %601 = vmatpush1.bf16.msra.mxu0 0
  %602 = vmatprep.subr.bf16.mxu0 0
  %603 = vmatpush1.bf16.msra.mxu0 0
  %604 = vmatprep.subr.bf16.mxu0 0
  %605 = vmatpush1.bf16.msra.mxu0 0
  %606 = vmatprep.subr.bf16.mxu0 0
  %607 = vmatpush1.bf16.msra.mxu0 %v592
  %608 = vmatprep.subr.bf16.mxu0 0
  %609 = vmatpush1.bf16.msra.mxu0 %v559
  %610 = vmatprep.subr.bf16.mxu0 0
  %611 = vmatpush2.bf16.msra.mxu0 0
  %612 = vmatprep.subr.bf16.mxu0 0
  %613 = vmatpush2.bf16.msra.mxu0 0
  %614 = vmatprep.subr.bf16.mxu0 0
  %615 = vmatpush2.bf16.msra.mxu0 0
  %616 = vmatprep.subr.bf16.mxu0 0
  %617 = vmatpush2.bf16.msra.mxu0 0
  %618 = vmatprep.subr.bf16.mxu0 0
  %619 = vmatpush2.bf16.msra.mxu0 0
  %620 = vmatprep.subr.bf16.mxu0 0
  %621 = vmatpush2.bf16.msra.mxu0 0
  %622 = vmatprep.subr.bf16.mxu0 0
  %623 = vmatpush2.bf16.msra.mxu0 0
  %624 = vmatprep.subr.bf16.mxu0 0
  %625 = vmatpush2.bf16.msra.mxu0 0
  %626 = vmatprep.mubr.bf16.mxu0 0
  %627 = vmatmul.mubr.bf16.gmra.mxu0 %v564
  %v628 = vpop.f32.mrf.mxu0
  %v629 = vadd.f32 %v509, %v628
  %v630 = vpop.f32.mrf.mxu0
  %v631 = vpop.f32.mrf.mxu0
  %v632 = vadd.f32 %v509, %v631
  %v633 = vpop.f32.mrf.mxu0
  %634 = vmatprep.mubr.bf16.mxu0 0
  %635 = vmatmul.mubr.bf16.gmra.mxu0 %v567
  %v636 = vpop.f32.mrf.mxu0
  %v637 = vadd.f32 %v509, %v636
  %v638 = vpop.f32.mrf.mxu0
  %v639 = vpop.f32.mrf.mxu0
  %v640 = vadd.f32 %v509, %v639
  %v641 = vpop.f32.mrf.mxu0
  %642 = vmatprep.mubr.bf16.mxu0 0
  %643 = vmatmul.mubr.bf16.gmra.mxu0 %v570
  %v644 = vpop.f32.mrf.mxu0
  %v645 = vadd.f32 %v509, %v644
  %v646 = vpop.f32.mrf.mxu0
  %v647 = vpop.f32.mrf.mxu0
  %v648 = vadd.f32 %v509, %v647
  %v649 = vpop.f32.mrf.mxu0
  %650 = vmatprep.mubr.bf16.mxu0 0
  %651 = vmatmul.mubr.bf16.gmra.mxu0 %v573
  %v652 = vpop.f32.mrf.mxu0
  %v653 = vadd.f32 %v509, %v652
  %v654 = vpop.f32.mrf.mxu0
  %v655 = vpop.f32.mrf.mxu0
  %v656 = vadd.f32 %v509, %v655
  %v657 = vpop.f32.mrf.mxu0
  %658 = vmatprep.mubr.bf16.mxu0 0
  %659 = vmatmul.mubr.bf16.gmra.mxu0 %v576
  %v660 = vpop.f32.mrf.mxu0
  %v661 = vadd.f32 %v509, %v660
  %v662 = vpop.f32.mrf.mxu0
  %v663 = vpop.f32.mrf.mxu0
  %v664 = vadd.f32 %v509, %v663
  %v665 = vpop.f32.mrf.mxu0
  %666 = vmatprep.mubr.bf16.mxu0 0
  %667 = vmatmul.mubr.bf16.gmra.mxu0 %v579
  %v668 = vpop.f32.mrf.mxu0
  %v669 = vadd.f32 %v509, %v668
  %v670 = vpop.f32.mrf.mxu0
  %v671 = vpop.f32.mrf.mxu0
  %v672 = vadd.f32 %v509, %v671
  %v673 = vpop.f32.mrf.mxu0
  %674 = vmatprep.mubr.bf16.mxu0 0
  %675 = vmatmul.mubr.bf16.gmra.mxu0 %v582
  %v676 = vpop.f32.mrf.mxu0
  %v677 = vadd.f32 %v509, %v676
  %v678 = vpop.f32.mrf.mxu0
  %v679 = vpop.f32.mrf.mxu0
  %v680 = vadd.f32 %v509, %v679
  %v681 = vpop.f32.mrf.mxu0
  %682 = vmatprep.mubr.bf16.mxu0 0
  %683 = vmatmul.mubr.bf16.gmra.mxu0 %v585
  %v684 = vpop.f32.mrf.mxu0
  %v685 = vadd.f32 %v509, %v684
  %v686 = vpop.f32.mrf.mxu0
  %v687 = vpop.f32.mrf.mxu0
  %v688 = vadd.f32 %v509, %v687
  %v689 = vpop.f32.mrf.mxu0
  %690 = vdwg.mxu0
  %v691 = vmax.f32 %v629, 0.0
  %v692 = vmax.f32 %v632, 0.0
  %v693 = vmax.f32 %v637, 0.0
  %v694 = vmax.f32 %v640, 0.0
  %v695 = vmax.f32 %v645, 0.0
  %v696 = vmax.f32 %v648, 0.0
  %v697 = vmax.f32 %v653, 0.0
  %v698 = vmax.f32 %v656, 0.0
  %v699 = vmax.f32 %v661, 0.0
  %v700 = vmax.f32 %v664, 0.0
  %v701 = vmax.f32 %v669, 0.0
  %v702 = vmax.f32 %v672, 0.0
  %v703 = vmax.f32 %v677, 0.0
  %v704 = vmax.f32 %v680, 0.0
  %v705 = vmax.f32 %v685, 0.0
  %v706 = vmax.f32 %v688, 0.0
  %v707 = vpack.c.bf16 %v692, %v691
  %v708 = vpack.c.bf16 %v694, %v693
  %v709 = vpack.c.bf16 %v696, %v695
  %v710 = vpack.c.bf16 %v698, %v697
  %v711 = vpack.c.bf16 %v700, %v699
  %v712 = vpack.c.bf16 %v702, %v701
  %v713 = vpack.c.bf16 %v704, %v703
  %v714 = vpack.c.bf16 %v706, %v705
  %v715 = vld [vmem:[%s4] sm:$0xf]
  %v716 = vld [vmem:[%s4 + $0x4] sm:$0x3]
  %v719 = vunpack.c.l.b16 %v715
  %v720 = vunpack.c.l.b16 %v716
  %v721 = vpack.c.b16 %v720, %v719
  %vm722 = vcmask 97280
  %v724 = vsel %vm722, %v707, 0
  %v727 = vsel %vm722, %v708, 0
  %v730 = vsel %vm722, %v709, 0
  %v733 = vsel %vm722, %v710, 0
  %v736 = vsel %vm722, %v711, 0
  %v739 = vsel %vm722, %v712, 0
  %v742 = vsel %vm722, %v713, 0
  %v745 = vsel %vm722, %v714, 0
  %v748 = vsel %vm588, %v721, 0
  %750 = vmatprep.subr.bf16.mxu0 0
  %751 = vmatpush1.bf16.msra.mxu0 0
  %752 = vmatprep.subr.bf16.mxu0 0
  %753 = vmatpush1.bf16.msra.mxu0 0
  %754 = vmatprep.subr.bf16.mxu0 0
  %755 = vmatpush1.bf16.msra.mxu0 0
  %756 = vmatprep.subr.bf16.mxu0 0
  %757 = vmatpush1.bf16.msra.mxu0 0
  %758 = vmatprep.subr.bf16.mxu0 0
  %759 = vmatpush1.bf16.msra.mxu0 0
  %760 = vmatprep.subr.bf16.mxu0 0
  %761 = vmatpush1.bf16.msra.mxu0 0
  %762 = vmatprep.subr.bf16.mxu0 0
  %763 = vmatpush1.bf16.msra.mxu0 0
  %764 = vmatprep.subr.bf16.mxu0 0
  %765 = vmatpush1.bf16.msra.mxu0 %v748
  %766 = vmatprep.subr.bf16.mxu0 0
  %767 = vmatpush2.bf16.msra.mxu0 0
  %768 = vmatprep.subr.bf16.mxu0 0
  %769 = vmatpush2.bf16.msra.mxu0 0
  %770 = vmatprep.subr.bf16.mxu0 0
  %771 = vmatpush2.bf16.msra.mxu0 0
  %772 = vmatprep.subr.bf16.mxu0 0
  %773 = vmatpush2.bf16.msra.mxu0 0
  %774 = vmatprep.subr.bf16.mxu0 0
  %775 = vmatpush2.bf16.msra.mxu0 0
  %776 = vmatprep.subr.bf16.mxu0 0
  %777 = vmatpush2.bf16.msra.mxu0 0
  %778 = vmatprep.subr.bf16.mxu0 0
  %779 = vmatpush2.bf16.msra.mxu0 0
  %780 = vmatprep.subr.bf16.mxu0 0
  %781 = vmatpush2.bf16.msra.mxu0 0
  %782 = vmatprep.mubr.bf16.mxu0 0
  %783 = vmatmul.mubr.bf16.gmra.mxu0 %v724
  %v784 = vpop.f32.mrf.mxu0
  %v785 = vadd.f32 %v184, %v784
  %v786 = vpop.f32.mrf.mxu0
  %v787 = vpop.f32.mrf.mxu0
  %v788 = vadd.f32 %v187, %v787
  %v789 = vpop.f32.mrf.mxu0
  %790 = vmatprep.mubr.bf16.mxu0 0
  %791 = vmatmul.mubr.bf16.gmra.mxu0 %v727
  %v792 = vpop.f32.mrf.mxu0
  %v793 = vadd.f32 %v192, %v792
  %v794 = vpop.f32.mrf.mxu0
  %v795 = vpop.f32.mrf.mxu0
  %v796 = vadd.f32 %v195, %v795
  %v797 = vpop.f32.mrf.mxu0
  %798 = vmatprep.mubr.bf16.mxu0 0
  %799 = vmatmul.mubr.bf16.gmra.mxu0 %v730
  %v800 = vpop.f32.mrf.mxu0
  %v801 = vadd.f32 %v200, %v800
  %v802 = vpop.f32.mrf.mxu0
  %v803 = vpop.f32.mrf.mxu0
  %v804 = vadd.f32 %v203, %v803
  %v805 = vpop.f32.mrf.mxu0
  %806 = vmatprep.mubr.bf16.mxu0 0
  %807 = vmatmul.mubr.bf16.gmra.mxu0 %v733
  %v808 = vpop.f32.mrf.mxu0
  %v809 = vadd.f32 %v208, %v808
  %v810 = vpop.f32.mrf.mxu0
  %v811 = vpop.f32.mrf.mxu0
  %v812 = vadd.f32 %v211, %v811
  %v813 = vpop.f32.mrf.mxu0
  %814 = vmatprep.mubr.bf16.mxu0 0
  %815 = vmatmul.mubr.bf16.gmra.mxu0 %v736
  %v816 = vpop.f32.mrf.mxu0
  %v817 = vadd.f32 %v216, %v816
  %v818 = vpop.f32.mrf.mxu0
  %v819 = vpop.f32.mrf.mxu0
  %v820 = vadd.f32 %v219, %v819
  %v821 = vpop.f32.mrf.mxu0
  %822 = vmatprep.mubr.bf16.mxu0 0
  %823 = vmatmul.mubr.bf16.gmra.mxu0 %v739
  %v824 = vpop.f32.mrf.mxu0
  %v825 = vadd.f32 %v224, %v824
  %v826 = vpop.f32.mrf.mxu0
  %v827 = vpop.f32.mrf.mxu0
  %v828 = vadd.f32 %v227, %v827
  %v829 = vpop.f32.mrf.mxu0
  %830 = vmatprep.mubr.bf16.mxu0 0
  %831 = vmatmul.mubr.bf16.gmra.mxu0 %v742
  %v832 = vpop.f32.mrf.mxu0
  %v833 = vadd.f32 %v232, %v832
  %v834 = vpop.f32.mrf.mxu0
  %v835 = vpop.f32.mrf.mxu0
  %v836 = vadd.f32 %v235, %v835
  %v837 = vpop.f32.mrf.mxu0
  %838 = vmatprep.mubr.bf16.mxu0 0
  %839 = vmatmul.mubr.bf16.gmra.mxu0 %v745
  %v840 = vpop.f32.mrf.mxu0
  %v841 = vadd.f32 %v240, %v840
  %v842 = vpop.f32.mrf.mxu0
  %v843 = vpop.f32.mrf.mxu0
  %v844 = vadd.f32 %v243, %v843
  %v845 = vpop.f32.mrf.mxu0
  %846 = vdwg.mxu0
  %v847 = vmax.f32 %v785, 0.0
  %v848 = vmax.f32 %v788, 0.0
  %v849 = vmax.f32 %v793, 0.0
  %v850 = vmax.f32 %v796, 0.0
  %v851 = vmax.f32 %v801, 0.0
  %v852 = vmax.f32 %v804, 0.0
  %v853 = vmax.f32 %v809, 0.0
  %v854 = vmax.f32 %v812, 0.0
  %v855 = vmax.f32 %v817, 0.0
  %v856 = vmax.f32 %v820, 0.0
  %v857 = vmax.f32 %v825, 0.0
  %v858 = vmax.f32 %v828, 0.0
  %v859 = vmax.f32 %v833, 0.0
  %v860 = vmax.f32 %v836, 0.0
  %v861 = vmax.f32 %v841, 0.0
  %v862 = vmax.f32 %v844, 0.0
  %v863 = vpack.c.bf16 %v848, %v847
  %v864 = vpack.c.bf16 %v850, %v849
  %v865 = vpack.c.bf16 %v852, %v851
  %v866 = vpack.c.bf16 %v854, %v853
  %v867 = vpack.c.bf16 %v856, %v855
  %v868 = vpack.c.bf16 %v858, %v857
  %v869 = vpack.c.bf16 %v860, %v859
  %v870 = vpack.c.bf16 %v862, %v861
  %879 = vrot.lane.b32.xlu0 %v707, 12
  %v880 = vpop.permute.xlu0 %879
  %881 = vrot.lane.b32.xlu0 %v708, 12
  %v882 = vpop.permute.xlu0 %881
  %883 = vrot.lane.b32.xlu0 %v709, 12
  %v884 = vpop.permute.xlu0 %883
  %885 = vrot.lane.b32.xlu0 %v710, 12
  %v886 = vpop.permute.xlu0 %885
  %887 = vrot.lane.b32.xlu0 %v711, 12
  %v888 = vpop.permute.xlu0 %887
  %889 = vrot.lane.b32.xlu0 %v712, 12
  %v890 = vpop.permute.xlu0 %889
  %891 = vrot.lane.b32.xlu0 %v713, 12
  %v892 = vpop.permute.xlu0 %891
  %893 = vrot.lane.b32.xlu0 %v714, 12
  %v894 = vpop.permute.xlu0 %893
  %v897 = vsel %vm722, %v863, %v880
  %v900 = vsel %vm722, %v864, %v882
  %v903 = vsel %vm722, %v865, %v884
  %v906 = vsel %vm722, %v866, %v886
  %v909 = vsel %vm722, %v867, %v888
  %v912 = vsel %vm722, %v868, %v890
  %v915 = vsel %vm722, %v869, %v892
  %v918 = vsel %vm722, %v870, %v894
  %v919 = vld [vmem:[%s7] sm:$0xf]
  %v920 = vld [vmem:[%s7 + $0x4] sm:$0xf]
  %v921 = vld [vmem:[%s7 + $0x8] sm:$0xf]
  %v925 = vunpack.c.l.b16 %v919
  %v926 = vunpack.c.l.b16 %v920
  %v927 = vunpack.c.l.b16 %v921
  %v928 = vpack.c.b16 %v926, %v925
  %v929 = vpack.c.b16 %v927, %v927
  %v931 = vsel %vm120, %v897, 0
  %v933 = vsel %vm120, %v900, 0
  %v935 = vsel %vm120, %v903, 0
  %v937 = vsel %vm120, %v906, 0
  %v939 = vsel %vm120, %v909, 0
  %v941 = vsel %vm120, %v912, 0
  %v943 = vsel %vm120, %v915, 0
  %v945 = vsel %vm120, %v918, 0
  %v948 = vsel %vm145, %v929, 0
  %950 = vmatprep.subr.bf16.mxu0 0
  %951 = vmatpush1.bf16.msra.mxu0 0
  %952 = vmatprep.subr.bf16.mxu0 0
  %953 = vmatpush1.bf16.msra.mxu0 0
  %954 = vmatprep.subr.bf16.mxu0 0
  %955 = vmatpush1.bf16.msra.mxu0 0
  %956 = vmatprep.subr.bf16.mxu0 0
  %957 = vmatpush1.bf16.msra.mxu0 0
  %958 = vmatprep.subr.bf16.mxu0 0
  %959 = vmatpush1.bf16.msra.mxu0 0
  %960 = vmatprep.subr.bf16.mxu0 0
  %961 = vmatpush1.bf16.msra.mxu0 0
  %962 = vmatprep.subr.bf16.mxu0 0
  %963 = vmatpush1.bf16.msra.mxu0 %v948
  %964 = vmatprep.subr.bf16.mxu0 0
  %965 = vmatpush1.bf16.msra.mxu0 %v928
  %966 = vmatprep.subr.bf16.mxu0 0
  %967 = vmatpush2.bf16.msra.mxu0 0
  %968 = vmatprep.subr.bf16.mxu0 0
  %969 = vmatpush2.bf16.msra.mxu0 0
  %970 = vmatprep.subr.bf16.mxu0 0
  %971 = vmatpush2.bf16.msra.mxu0 0
  %972 = vmatprep.subr.bf16.mxu0 0
  %973 = vmatpush2.bf16.msra.mxu0 0
  %974 = vmatprep.subr.bf16.mxu0 0
  %975 = vmatpush2.bf16.msra.mxu0 0
  %976 = vmatprep.subr.bf16.mxu0 0
  %977 = vmatpush2.bf16.msra.mxu0 0
  %978 = vmatprep.subr.bf16.mxu0 0
  %979 = vmatpush2.bf16.msra.mxu0 0
  %980 = vmatprep.subr.bf16.mxu0 0
  %981 = vmatpush2.bf16.msra.mxu0 0
  %982 = vmatprep.mubr.bf16.mxu0 0
  %983 = vmatmul.mubr.bf16.gmra.mxu0 %v931
  %v984 = vpop.f32.mrf.mxu0
  %v985 = vadd.f32 %v303, %v984
  %v986 = vpop.f32.mrf.mxu0
  %v987 = vpop.f32.mrf.mxu0
  %v988 = vadd.f32 %v306, %v987
  %v989 = vpop.f32.mrf.mxu0
  %990 = vmatprep.mubr.bf16.mxu0 0
  %991 = vmatmul.mubr.bf16.gmra.mxu0 %v933
  %v992 = vpop.f32.mrf.mxu0
  %v993 = vadd.f32 %v311, %v992
  %v994 = vpop.f32.mrf.mxu0
  %v995 = vpop.f32.mrf.mxu0
  %v996 = vadd.f32 %v314, %v995
  %v997 = vpop.f32.mrf.mxu0
  %998 = vmatprep.mubr.bf16.mxu0 0
  %999 = vmatmul.mubr.bf16.gmra.mxu0 %v935
  %v1000 = vpop.f32.mrf.mxu0
  %v1001 = vadd.f32 %v319, %v1000
  %v1002 = vpop.f32.mrf.mxu0
  %v1003 = vpop.f32.mrf.mxu0
  %v1004 = vadd.f32 %v322, %v1003
  %v1005 = vpop.f32.mrf.mxu0
  %1006 = vmatprep.mubr.bf16.mxu0 0
  %1007 = vmatmul.mubr.bf16.gmra.mxu0 %v937
  %v1008 = vpop.f32.mrf.mxu0
  %v1009 = vadd.f32 %v327, %v1008
  %v1010 = vpop.f32.mrf.mxu0
  %v1011 = vpop.f32.mrf.mxu0
  %v1012 = vadd.f32 %v330, %v1011
  %v1013 = vpop.f32.mrf.mxu0
  %1014 = vmatprep.mubr.bf16.mxu0 0
  %1015 = vmatmul.mubr.bf16.gmra.mxu0 %v939
  %v1016 = vpop.f32.mrf.mxu0
  %v1017 = vadd.f32 %v335, %v1016
  %v1018 = vpop.f32.mrf.mxu0
  %v1019 = vpop.f32.mrf.mxu0
  %v1020 = vadd.f32 %v338, %v1019
  %v1021 = vpop.f32.mrf.mxu0
  %1022 = vmatprep.mubr.bf16.mxu0 0
  %1023 = vmatmul.mubr.bf16.gmra.mxu0 %v941
  %v1024 = vpop.f32.mrf.mxu0
  %v1025 = vadd.f32 %v343, %v1024
  %v1026 = vpop.f32.mrf.mxu0
  %v1027 = vpop.f32.mrf.mxu0
  %v1028 = vadd.f32 %v346, %v1027
  %v1029 = vpop.f32.mrf.mxu0
  %1030 = vmatprep.mubr.bf16.mxu0 0
  %1031 = vmatmul.mubr.bf16.gmra.mxu0 %v943
  %v1032 = vpop.f32.mrf.mxu0
  %v1033 = vadd.f32 %v351, %v1032
  %v1034 = vpop.f32.mrf.mxu0
  %v1035 = vpop.f32.mrf.mxu0
  %v1036 = vadd.f32 %v354, %v1035
  %v1037 = vpop.f32.mrf.mxu0
  %1038 = vmatprep.mubr.bf16.mxu0 0
  %1039 = vmatmul.mubr.bf16.gmra.mxu0 %v945
  %v1040 = vpop.f32.mrf.mxu0
  %v1041 = vadd.f32 %v359, %v1040
  %v1042 = vpop.f32.mrf.mxu0
  %v1043 = vpop.f32.mrf.mxu0
  %v1044 = vadd.f32 %v362, %v1043
  %v1045 = vpop.f32.mrf.mxu0
  %1046 = vdwg.mxu0
  %v1047 = vmax.f32 %v985, 0.0
  %v1048 = vmax.f32 %v988, 0.0
  %v1049 = vmax.f32 %v993, 0.0
  %v1050 = vmax.f32 %v996, 0.0
  %v1051 = vmax.f32 %v1001, 0.0
  %v1052 = vmax.f32 %v1004, 0.0
  %v1053 = vmax.f32 %v1009, 0.0
  %v1054 = vmax.f32 %v1012, 0.0
  %v1055 = vmax.f32 %v1017, 0.0
  %v1056 = vmax.f32 %v1020, 0.0
  %v1057 = vmax.f32 %v1025, 0.0
  %v1058 = vmax.f32 %v1028, 0.0
  %v1059 = vmax.f32 %v1033, 0.0
  %v1060 = vmax.f32 %v1036, 0.0
  %v1061 = vmax.f32 %v1041, 0.0
  %v1062 = vmax.f32 %v1044, 0.0
  %v1063 = vpack.c.bf16 %v1048, %v1047
  %v1064 = vpack.c.bf16 %v1050, %v1049
  %v1065 = vpack.c.bf16 %v1052, %v1051
  %v1066 = vpack.c.bf16 %v1054, %v1053
  %v1067 = vpack.c.bf16 %v1056, %v1055
  %v1068 = vpack.c.bf16 %v1058, %v1057
  %v1069 = vpack.c.bf16 %v1060, %v1059
  %v1070 = vpack.c.bf16 %v1062, %v1061
  %1079 = vrot.lane.b32.xlu0 %v863, 12
  %v1080 = vpop.permute.xlu0 %1079
  %1081 = vrot.lane.b32.xlu0 %v864, 12
  %v1082 = vpop.permute.xlu0 %1081
  %1083 = vrot.lane.b32.xlu0 %v865, 12
  %v1084 = vpop.permute.xlu0 %1083
  %1085 = vrot.lane.b32.xlu0 %v866, 12
  %v1086 = vpop.permute.xlu0 %1085
  %1087 = vrot.lane.b32.xlu0 %v867, 12
  %v1088 = vpop.permute.xlu0 %1087
  %1089 = vrot.lane.b32.xlu0 %v868, 12
  %v1090 = vpop.permute.xlu0 %1089
  %1091 = vrot.lane.b32.xlu0 %v869, 12
  %v1092 = vpop.permute.xlu0 %1091
  %1093 = vrot.lane.b32.xlu0 %v870, 12
  %v1094 = vpop.permute.xlu0 %1093
  %1095 = vrot.lane.b32.xlu0 %v707, 24
  %v1096 = vpop.permute.xlu0 %1095
  %1097 = vrot.lane.b32.xlu0 %v708, 24
  %v1098 = vpop.permute.xlu0 %1097
  %1099 = vrot.lane.b32.xlu0 %v709, 24
  %v1100 = vpop.permute.xlu0 %1099
  %1101 = vrot.lane.b32.xlu0 %v710, 24
  %v1102 = vpop.permute.xlu0 %1101
  %1103 = vrot.lane.b32.xlu0 %v711, 24
  %v1104 = vpop.permute.xlu0 %1103
  %1105 = vrot.lane.b32.xlu0 %v712, 24
  %v1106 = vpop.permute.xlu0 %1105
  %1107 = vrot.lane.b32.xlu0 %v713, 24
  %v1108 = vpop.permute.xlu0 %1107
  %1109 = vrot.lane.b32.xlu0 %v714, 24
  %v1110 = vpop.permute.xlu0 %1109
  %v1113 = vsel %vm722, %v1063, %v1080
  %v1116 = vsel %vm722, %v1064, %v1082
  %v1119 = vsel %vm722, %v1065, %v1084
  %v1122 = vsel %vm722, %v1066, %v1086
  %v1125 = vsel %vm722, %v1067, %v1088
  %v1128 = vsel %vm722, %v1068, %v1090
  %v1131 = vsel %vm722, %v1069, %v1092
  %v1134 = vsel %vm722, %v1070, %v1094
  %v1136 = vsel %vm120, %v1113, %v1096
  %v1138 = vsel %vm120, %v1116, %v1098
  %v1140 = vsel %vm120, %v1119, %v1100
  %v1142 = vsel %vm120, %v1122, %v1102
  %v1144 = vsel %vm120, %v1125, %v1104
  %v1146 = vsel %vm120, %v1128, %v1106
  %v1148 = vsel %vm120, %v1131, %v1108
  %v1150 = vsel %vm120, %v1134, %v1110
  %v1151 = vld [vmem:[%s10] sm:$0xf]
  %v1152 = vld [vmem:[%s10 + $0x4] sm:$0xf]
  %v1153 = vld [vmem:[%s10 + $0x8] sm:$0xf]
  %v1154 = vld [vmem:[%s10 + $0xc] sm:$0xf]
  %v1155 = vld [vmem:[%s10 + $0x10] sm:$0x3]
  %v1161 = vunpack.c.l.b16 %v1151
  %v1162 = vunpack.c.l.b16 %v1152
  %v1163 = vunpack.c.l.b16 %v1153
  %v1164 = vunpack.c.l.b16 %v1154
  %v1165 = vunpack.c.l.b16 %v1155
  %v1166 = vpack.c.b16 %v1162, %v1161
  %v1167 = vpack.c.b16 %v1164, %v1163
  %v1168 = vpack.c.b16 %v1165, %v1165
  %vm1171 = vcmask 293888
  %v1172 = vsel %vm1171, %v1136, 0
  %v1174 = vsel %vm1171, %v1138, 0
  %v1176 = vsel %vm1171, %v1140, 0
  %v1178 = vsel %vm1171, %v1142, 0
  %v1180 = vsel %vm1171, %v1144, 0
  %v1182 = vsel %vm1171, %v1146, 0
  %v1184 = vsel %vm1171, %v1148, 0
  %v1186 = vsel %vm1171, %v1150, 0
  %vm1188 = vcmask 1041408
  %v1190 = vsel %vm1188, %v1168, 0
  %1192 = vmatprep.subr.bf16.mxu0 0
  %1193 = vmatpush1.bf16.msra.mxu0 0
  %1194 = vmatprep.subr.bf16.mxu0 0
  %1195 = vmatpush1.bf16.msra.mxu0 0
  %1196 = vmatprep.subr.bf16.mxu0 0
  %1197 = vmatpush1.bf16.msra.mxu0 0
  %1198 = vmatprep.subr.bf16.mxu0 0
  %1199 = vmatpush1.bf16.msra.mxu0 0
  %1200 = vmatprep.subr.bf16.mxu0 0
  %1201 = vmatpush1.bf16.msra.mxu0 0
  %1202 = vmatprep.subr.bf16.mxu0 0
  %1203 = vmatpush1.bf16.msra.mxu0 %v1190
  %1204 = vmatprep.subr.bf16.mxu0 0
  %1205 = vmatpush1.bf16.msra.mxu0 %v1167
  %1206 = vmatprep.subr.bf16.mxu0 0
  %1207 = vmatpush1.bf16.msra.mxu0 %v1166
  %1208 = vmatprep.subr.bf16.mxu0 0
  %1209 = vmatpush2.bf16.msra.mxu0 0
  %1210 = vmatprep.subr.bf16.mxu0 0
  %1211 = vmatpush2.bf16.msra.mxu0 0
  %1212 = vmatprep.subr.bf16.mxu0 0
  %1213 = vmatpush2.bf16.msra.mxu0 0
  %1214 = vmatprep.subr.bf16.mxu0 0
  %1215 = vmatpush2.bf16.msra.mxu0 0
  %1216 = vmatprep.subr.bf16.mxu0 0
  %1217 = vmatpush2.bf16.msra.mxu0 0
  %1218 = vmatprep.subr.bf16.mxu0 0
  %1219 = vmatpush2.bf16.msra.mxu0 0
  %1220 = vmatprep.subr.bf16.mxu0 0
  %1221 = vmatpush2.bf16.msra.mxu0 0
  %1222 = vmatprep.subr.bf16.mxu0 0
  %1223 = vmatpush2.bf16.msra.mxu0 0
  %1224 = vmatprep.mubr.bf16.mxu0 0
  %1225 = vmatmul.mubr.bf16.gmra.mxu0 %v1172
  %v1226 = vpop.f32.mrf.mxu0
  %v1227 = vadd.f32 0.0, %v1226
  %v1228 = vpop.f32.mrf.mxu0
  %v1229 = vpop.f32.mrf.mxu0
  %v1230 = vadd.f32 0.0, %v1229
  %v1231 = vpop.f32.mrf.mxu0
  %1232 = vmatprep.mubr.bf16.mxu0 0
  %1233 = vmatmul.mubr.bf16.gmra.mxu0 %v1174
  %v1234 = vpop.f32.mrf.mxu0
  %v1235 = vadd.f32 0.0, %v1234
  %v1236 = vpop.f32.mrf.mxu0
  %v1237 = vpop.f32.mrf.mxu0
  %v1238 = vadd.f32 0.0, %v1237
  %v1239 = vpop.f32.mrf.mxu0
  %1240 = vmatprep.mubr.bf16.mxu0 0
  %1241 = vmatmul.mubr.bf16.gmra.mxu0 %v1176
  %v1242 = vpop.f32.mrf.mxu0
  %v1243 = vadd.f32 0.0, %v1242
  %v1244 = vpop.f32.mrf.mxu0
  %v1245 = vpop.f32.mrf.mxu0
  %v1246 = vadd.f32 0.0, %v1245
  %v1247 = vpop.f32.mrf.mxu0
  %1248 = vmatprep.mubr.bf16.mxu0 0
  %1249 = vmatmul.mubr.bf16.gmra.mxu0 %v1178
  %v1250 = vpop.f32.mrf.mxu0
  %v1251 = vadd.f32 0.0, %v1250
  %v1252 = vpop.f32.mrf.mxu0
  %v1253 = vpop.f32.mrf.mxu0
  %v1254 = vadd.f32 0.0, %v1253
  %v1255 = vpop.f32.mrf.mxu0
  %1256 = vmatprep.mubr.bf16.mxu0 0
  %1257 = vmatmul.mubr.bf16.gmra.mxu0 %v1180
  %v1258 = vpop.f32.mrf.mxu0
  %v1259 = vadd.f32 0.0, %v1258
  %v1260 = vpop.f32.mrf.mxu0
  %v1261 = vpop.f32.mrf.mxu0
  %v1262 = vadd.f32 0.0, %v1261
  %v1263 = vpop.f32.mrf.mxu0
  %1264 = vmatprep.mubr.bf16.mxu0 0
  %1265 = vmatmul.mubr.bf16.gmra.mxu0 %v1182
  %v1266 = vpop.f32.mrf.mxu0
  %v1267 = vadd.f32 0.0, %v1266
  %v1268 = vpop.f32.mrf.mxu0
  %v1269 = vpop.f32.mrf.mxu0
  %v1270 = vadd.f32 0.0, %v1269
  %v1271 = vpop.f32.mrf.mxu0
  %1272 = vmatprep.mubr.bf16.mxu0 0
  %1273 = vmatmul.mubr.bf16.gmra.mxu0 %v1184
  %v1274 = vpop.f32.mrf.mxu0
  %v1275 = vadd.f32 0.0, %v1274
  %v1276 = vpop.f32.mrf.mxu0
  %v1277 = vpop.f32.mrf.mxu0
  %v1278 = vadd.f32 0.0, %v1277
  %v1279 = vpop.f32.mrf.mxu0
  %1280 = vmatprep.mubr.bf16.mxu0 0
  %1281 = vmatmul.mubr.bf16.gmra.mxu0 %v1186
  %v1282 = vpop.f32.mrf.mxu0
  %v1283 = vadd.f32 0.0, %v1282
  %v1284 = vpop.f32.mrf.mxu0
  %v1285 = vpop.f32.mrf.mxu0
  %v1286 = vadd.f32 0.0, %v1285
  %v1287 = vpop.f32.mrf.mxu0
  %1288 = vdwg.mxu0
  %s1289 = scalar_lea.vmem %s0, 64
  %v1290 = vld [vmem:[%s1289] sm:$0xf]
  %v1291 = vld [vmem:[%s1289 + $0x4] sm:$0xf]
  %v1292 = vld [vmem:[%s1289 + $0x8] sm:$0xf]
  %v1293 = vld [vmem:[%s1289 + $0xc] sm:$0xf]
  %v1294 = vld [vmem:[%s1289 + $0x10] sm:$0xf]
  %v1295 = vld [vmem:[%s1289 + $0x14] sm:$0xf]
  %v1296 = vld [vmem:[%s1289 + $0x18] sm:$0xf]
  %v1297 = vld [vmem:[%s1289 + $0x1c] sm:$0xf]
  %v1298 = vld [vmem:[%s1289 + $0x20] sm:$0xf]
  %v1299 = vld [vmem:[%s1289 + $0x24] sm:$0xf]
  %v1300 = vld [vmem:[%s1289 + $0x28] sm:$0xf]
  %v1301 = vld [vmem:[%s1289 + $0x2c] sm:$0xf]
  %v1302 = vld [vmem:[%s1289 + $0x30] sm:$0xf]
  %v1303 = vld [vmem:[%s1289 + $0x34] sm:$0xf]
  %v1304 = vld [vmem:[%s1289 + $0x38] sm:$0xf]
  %v1305 = vld [vmem:[%s1289 + $0x3c] sm:$0xf]
  %v1322 = vunpack.c.l.b16 %v1290
  %v1323 = vunpack.c.l.b16 %v1291
  %v1324 = vunpack.c.l.b16 %v1292
  %v1325 = vunpack.c.l.b16 %v1293
  %v1326 = vunpack.c.l.b16 %v1294
  %v1327 = vunpack.c.l.b16 %v1295
  %v1328 = vunpack.c.l.b16 %v1296
  %v1329 = vunpack.c.l.b16 %v1297
  %v1330 = vunpack.c.l.b16 %v1298
  %v1331 = vunpack.c.l.b16 %v1299
  %v1332 = vunpack.c.l.b16 %v1300
  %v1333 = vunpack.c.l.b16 %v1301
  %v1334 = vunpack.c.l.b16 %v1302
  %v1335 = vunpack.c.l.b16 %v1303
  %v1336 = vunpack.c.l.b16 %v1304
  %v1337 = vunpack.c.l.b16 %v1305
  %v1338 = vpack.c.b16 %v1323, %v1322
  %v1339 = vpack.c.b16 %v1325, %v1324
  %v1340 = vpack.c.b16 %v1327, %v1326
  %v1341 = vpack.c.b16 %v1329, %v1328
  %v1342 = vpack.c.b16 %v1331, %v1330
  %v1343 = vpack.c.b16 %v1333, %v1332
  %v1344 = vpack.c.b16 %v1335, %v1334
  %v1345 = vpack.c.b16 %v1337, %v1336
  %v1347 = vsel %vm562, %v1338, 0
  %v1350 = vsel %vm562, %v1339, 0
  %v1353 = vsel %vm562, %v1340, 0
  %v1356 = vsel %vm562, %v1341, 0
  %v1359 = vsel %vm562, %v1342, 0
  %v1362 = vsel %vm562, %v1343, 0
  %v1365 = vsel %vm562, %v1344, 0
  %v1368 = vsel %vm562, %v1345, 0
  %1370 = vmatprep.subr.bf16.mxu0 0
  %1371 = vmatpush1.bf16.msra.mxu0 0
  %1372 = vmatprep.subr.bf16.mxu0 0
  %1373 = vmatpush1.bf16.msra.mxu0 0
  %1374 = vmatprep.subr.bf16.mxu0 0
  %1375 = vmatpush1.bf16.msra.mxu0 0
  %1376 = vmatprep.subr.bf16.mxu0 0
  %1377 = vmatpush1.bf16.msra.mxu0 0
  %1378 = vmatprep.subr.bf16.mxu0 0
  %1379 = vmatpush1.bf16.msra.mxu0 0
  %1380 = vmatprep.subr.bf16.mxu0 0
  %1381 = vmatpush1.bf16.msra.mxu0 0
  %1382 = vmatprep.subr.bf16.mxu0 0
  %1383 = vmatpush1.bf16.msra.mxu0 %v592
  %1384 = vmatprep.subr.bf16.mxu0 0
  %1385 = vmatpush1.bf16.msra.mxu0 %v559
  %1386 = vmatprep.subr.bf16.mxu0 0
  %1387 = vmatpush2.bf16.msra.mxu0 0
  %1388 = vmatprep.subr.bf16.mxu0 0
  %1389 = vmatpush2.bf16.msra.mxu0 0
  %1390 = vmatprep.subr.bf16.mxu0 0
  %1391 = vmatpush2.bf16.msra.mxu0 0
  %1392 = vmatprep.subr.bf16.mxu0 0
  %1393 = vmatpush2.bf16.msra.mxu0 0
  %1394 = vmatprep.subr.bf16.mxu0 0
  %1395 = vmatpush2.bf16.msra.mxu0 0
  %1396 = vmatprep.subr.bf16.mxu0 0
  %1397 = vmatpush2.bf16.msra.mxu0 0
  %1398 = vmatprep.subr.bf16.mxu0 0
  %1399 = vmatpush2.bf16.msra.mxu0 0
  %1400 = vmatprep.subr.bf16.mxu0 0
  %1401 = vmatpush2.bf16.msra.mxu0 0
  %1402 = vmatprep.mubr.bf16.mxu0 0
  %1403 = vmatmul.mubr.bf16.gmra.mxu0 %v1347
  %v1404 = vpop.f32.mrf.mxu0
  %v1405 = vadd.f32 %v509, %v1404
  %v1406 = vpop.f32.mrf.mxu0
  %v1407 = vpop.f32.mrf.mxu0
  %v1408 = vadd.f32 %v509, %v1407
  %v1409 = vpop.f32.mrf.mxu0
  %1410 = vmatprep.mubr.bf16.mxu0 0
  %1411 = vmatmul.mubr.bf16.gmra.mxu0 %v1350
  %v1412 = vpop.f32.mrf.mxu0
  %v1413 = vadd.f32 %v509, %v1412
  %v1414 = vpop.f32.mrf.mxu0
  %v1415 = vpop.f32.mrf.mxu0
  %v1416 = vadd.f32 %v509, %v1415
  %v1417 = vpop.f32.mrf.mxu0
  %1418 = vmatprep.mubr.bf16.mxu0 0
  %1419 = vmatmul.mubr.bf16.gmra.mxu0 %v1353
  %v1420 = vpop.f32.mrf.mxu0
  %v1421 = vadd.f32 %v509, %v1420
  %v1422 = vpop.f32.mrf.mxu0
  %v1423 = vpop.f32.mrf.mxu0
  %v1424 = vadd.f32 %v509, %v1423
  %v1425 = vpop.f32.mrf.mxu0
  %1426 = vmatprep.mubr.bf16.mxu0 0
  %1427 = vmatmul.mubr.bf16.gmra.mxu0 %v1356
  %v1428 = vpop.f32.mrf.mxu0
  %v1429 = vadd.f32 %v509, %v1428
  %v1430 = vpop.f32.mrf.mxu0
  %v1431 = vpop.f32.mrf.mxu0
  %v1432 = vadd.f32 %v509, %v1431
  %v1433 = vpop.f32.mrf.mxu0
  %1434 = vmatprep.mubr.bf16.mxu0 0
  %1435 = vmatmul.mubr.bf16.gmra.mxu0 %v1359
  %v1436 = vpop.f32.mrf.mxu0
  %v1437 = vadd.f32 %v509, %v1436
  %v1438 = vpop.f32.mrf.mxu0
  %v1439 = vpop.f32.mrf.mxu0
  %v1440 = vadd.f32 %v509, %v1439
  %v1441 = vpop.f32.mrf.mxu0
  %1442 = vmatprep.mubr.bf16.mxu0 0
  %1443 = vmatmul.mubr.bf16.gmra.mxu0 %v1362
  %v1444 = vpop.f32.mrf.mxu0
  %v1445 = vadd.f32 %v509, %v1444
  %v1446 = vpop.f32.mrf.mxu0
  %v1447 = vpop.f32.mrf.mxu0
  %v1448 = vadd.f32 %v509, %v1447
  %v1449 = vpop.f32.mrf.mxu0
  %1450 = vmatprep.mubr.bf16.mxu0 0
  %1451 = vmatmul.mubr.bf16.gmra.mxu0 %v1365
  %v1452 = vpop.f32.mrf.mxu0
  %v1453 = vadd.f32 %v509, %v1452
  %v1454 = vpop.f32.mrf.mxu0
  %v1455 = vpop.f32.mrf.mxu0
  %v1456 = vadd.f32 %v509, %v1455
  %v1457 = vpop.f32.mrf.mxu0
  %1458 = vmatprep.mubr.bf16.mxu0 0
  %1459 = vmatmul.mubr.bf16.gmra.mxu0 %v1368
  %v1460 = vpop.f32.mrf.mxu0
  %v1461 = vadd.f32 %v509, %v1460
  %v1462 = vpop.f32.mrf.mxu0
  %v1463 = vpop.f32.mrf.mxu0
  %v1464 = vadd.f32 %v509, %v1463
  %v1465 = vpop.f32.mrf.mxu0
  %1466 = vdwg.mxu0
  %v1467 = vmax.f32 %v1405, 0.0
  %v1468 = vmax.f32 %v1408, 0.0
  %v1469 = vmax.f32 %v1413, 0.0
  %v1470 = vmax.f32 %v1416, 0.0
  %v1471 = vmax.f32 %v1421, 0.0
  %v1472 = vmax.f32 %v1424, 0.0
  %v1473 = vmax.f32 %v1429, 0.0
  %v1474 = vmax.f32 %v1432, 0.0
  %v1475 = vmax.f32 %v1437, 0.0
  %v1476 = vmax.f32 %v1440, 0.0
  %v1477 = vmax.f32 %v1445, 0.0
  %v1478 = vmax.f32 %v1448, 0.0
  %v1479 = vmax.f32 %v1453, 0.0
  %v1480 = vmax.f32 %v1456, 0.0
  %v1481 = vmax.f32 %v1461, 0.0
  %v1482 = vmax.f32 %v1464, 0.0
  %v1483 = vpack.c.bf16 %v1468, %v1467
  %v1484 = vpack.c.bf16 %v1470, %v1469
  %v1485 = vpack.c.bf16 %v1472, %v1471
  %v1486 = vpack.c.bf16 %v1474, %v1473
  %v1487 = vpack.c.bf16 %v1476, %v1475
  %v1488 = vpack.c.bf16 %v1478, %v1477
  %v1489 = vpack.c.bf16 %v1480, %v1479
  %v1490 = vpack.c.bf16 %v1482, %v1481
  %v1492 = vsel %vm722, %v1483, 0
  %v1495 = vsel %vm722, %v1484, 0
  %v1498 = vsel %vm722, %v1485, 0
  %v1501 = vsel %vm722, %v1486, 0
  %v1504 = vsel %vm722, %v1487, 0
  %v1507 = vsel %vm722, %v1488, 0
  %v1510 = vsel %vm722, %v1489, 0
  %v1513 = vsel %vm722, %v1490, 0
  %1515 = vmatprep.subr.bf16.mxu0 0
  %1516 = vmatpush1.bf16.msra.mxu0 0
  %1517 = vmatprep.subr.bf16.mxu0 0
  %1518 = vmatpush1.bf16.msra.mxu0 0
  %1519 = vmatprep.subr.bf16.mxu0 0
  %1520 = vmatpush1.bf16.msra.mxu0 0
  %1521 = vmatprep.subr.bf16.mxu0 0
  %1522 = vmatpush1.bf16.msra.mxu0 0
  %1523 = vmatprep.subr.bf16.mxu0 0
  %1524 = vmatpush1.bf16.msra.mxu0 0
  %1525 = vmatprep.subr.bf16.mxu0 0
  %1526 = vmatpush1.bf16.msra.mxu0 0
  %1527 = vmatprep.subr.bf16.mxu0 0
  %1528 = vmatpush1.bf16.msra.mxu0 0
  %1529 = vmatprep.subr.bf16.mxu0 0
  %1530 = vmatpush1.bf16.msra.mxu0 %v748
  %1531 = vmatprep.subr.bf16.mxu0 0
  %1532 = vmatpush2.bf16.msra.mxu0 0
  %1533 = vmatprep.subr.bf16.mxu0 0
  %1534 = vmatpush2.bf16.msra.mxu0 0
  %1535 = vmatprep.subr.bf16.mxu0 0
  %1536 = vmatpush2.bf16.msra.mxu0 0
  %1537 = vmatprep.subr.bf16.mxu0 0
  %1538 = vmatpush2.bf16.msra.mxu0 0
  %1539 = vmatprep.subr.bf16.mxu0 0
  %1540 = vmatpush2.bf16.msra.mxu0 0
  %1541 = vmatprep.subr.bf16.mxu0 0
  %1542 = vmatpush2.bf16.msra.mxu0 0
  %1543 = vmatprep.subr.bf16.mxu0 0
  %1544 = vmatpush2.bf16.msra.mxu0 0
  %1545 = vmatprep.subr.bf16.mxu0 0
  %1546 = vmatpush2.bf16.msra.mxu0 0
  %1547 = vmatprep.mubr.bf16.mxu0 0
  %1548 = vmatmul.mubr.bf16.gmra.mxu0 %v1492
  %v1549 = vpop.f32.mrf.mxu0
  %v1550 = vadd.f32 %v184, %v1549
  %v1551 = vpop.f32.mrf.mxu0
  %v1552 = vpop.f32.mrf.mxu0
  %v1553 = vadd.f32 %v187, %v1552
  %v1554 = vpop.f32.mrf.mxu0
  %1555 = vmatprep.mubr.bf16.mxu0 0
  %1556 = vmatmul.mubr.bf16.gmra.mxu0 %v1495
  %v1557 = vpop.f32.mrf.mxu0
  %v1558 = vadd.f32 %v192, %v1557
  %v1559 = vpop.f32.mrf.mxu0
  %v1560 = vpop.f32.mrf.mxu0
  %v1561 = vadd.f32 %v195, %v1560
  %v1562 = vpop.f32.mrf.mxu0
  %1563 = vmatprep.mubr.bf16.mxu0 0
  %1564 = vmatmul.mubr.bf16.gmra.mxu0 %v1498
  %v1565 = vpop.f32.mrf.mxu0
  %v1566 = vadd.f32 %v200, %v1565
  %v1567 = vpop.f32.mrf.mxu0
  %v1568 = vpop.f32.mrf.mxu0
  %v1569 = vadd.f32 %v203, %v1568
  %v1570 = vpop.f32.mrf.mxu0
  %1571 = vmatprep.mubr.bf16.mxu0 0
  %1572 = vmatmul.mubr.bf16.gmra.mxu0 %v1501
  %v1573 = vpop.f32.mrf.mxu0
  %v1574 = vadd.f32 %v208, %v1573
  %v1575 = vpop.f32.mrf.mxu0
  %v1576 = vpop.f32.mrf.mxu0
  %v1577 = vadd.f32 %v211, %v1576
  %v1578 = vpop.f32.mrf.mxu0
  %1579 = vmatprep.mubr.bf16.mxu0 0
  %1580 = vmatmul.mubr.bf16.gmra.mxu0 %v1504
  %v1581 = vpop.f32.mrf.mxu0
  %v1582 = vadd.f32 %v216, %v1581
  %v1583 = vpop.f32.mrf.mxu0
  %v1584 = vpop.f32.mrf.mxu0
  %v1585 = vadd.f32 %v219, %v1584
  %v1586 = vpop.f32.mrf.mxu0
  %1587 = vmatprep.mubr.bf16.mxu0 0
  %1588 = vmatmul.mubr.bf16.gmra.mxu0 %v1507
  %v1589 = vpop.f32.mrf.mxu0
  %v1590 = vadd.f32 %v224, %v1589
  %v1591 = vpop.f32.mrf.mxu0
  %v1592 = vpop.f32.mrf.mxu0
  %v1593 = vadd.f32 %v227, %v1592
  %v1594 = vpop.f32.mrf.mxu0
  %1595 = vmatprep.mubr.bf16.mxu0 0
  %1596 = vmatmul.mubr.bf16.gmra.mxu0 %v1510
  %v1597 = vpop.f32.mrf.mxu0
  %v1598 = vadd.f32 %v232, %v1597
  %v1599 = vpop.f32.mrf.mxu0
  %v1600 = vpop.f32.mrf.mxu0
  %v1601 = vadd.f32 %v235, %v1600
  %v1602 = vpop.f32.mrf.mxu0
  %1603 = vmatprep.mubr.bf16.mxu0 0
  %1604 = vmatmul.mubr.bf16.gmra.mxu0 %v1513
  %v1605 = vpop.f32.mrf.mxu0
  %v1606 = vadd.f32 %v240, %v1605
  %v1607 = vpop.f32.mrf.mxu0
  %v1608 = vpop.f32.mrf.mxu0
  %v1609 = vadd.f32 %v243, %v1608
  %v1610 = vpop.f32.mrf.mxu0
  %1611 = vdwg.mxu0
  %v1612 = vmax.f32 %v1550, 0.0
  %v1613 = vmax.f32 %v1553, 0.0
  %v1614 = vmax.f32 %v1558, 0.0
  %v1615 = vmax.f32 %v1561, 0.0
  %v1616 = vmax.f32 %v1566, 0.0
  %v1617 = vmax.f32 %v1569, 0.0
  %v1618 = vmax.f32 %v1574, 0.0
  %v1619 = vmax.f32 %v1577, 0.0
  %v1620 = vmax.f32 %v1582, 0.0
  %v1621 = vmax.f32 %v1585, 0.0
  %v1622 = vmax.f32 %v1590, 0.0
  %v1623 = vmax.f32 %v1593, 0.0
  %v1624 = vmax.f32 %v1598, 0.0
  %v1625 = vmax.f32 %v1601, 0.0
  %v1626 = vmax.f32 %v1606, 0.0
  %v1627 = vmax.f32 %v1609, 0.0
  %v1628 = vpack.c.bf16 %v1613, %v1612
  %v1629 = vpack.c.bf16 %v1615, %v1614
  %v1630 = vpack.c.bf16 %v1617, %v1616
  %v1631 = vpack.c.bf16 %v1619, %v1618
  %v1632 = vpack.c.bf16 %v1621, %v1620
  %v1633 = vpack.c.bf16 %v1623, %v1622
  %v1634 = vpack.c.bf16 %v1625, %v1624
  %v1635 = vpack.c.bf16 %v1627, %v1626
  %1644 = vrot.lane.b32.xlu0 %v1483, 12
  %v1645 = vpop.permute.xlu0 %1644
  %1646 = vrot.lane.b32.xlu0 %v1484, 12
  %v1647 = vpop.permute.xlu0 %1646
  %1648 = vrot.lane.b32.xlu0 %v1485, 12
  %v1649 = vpop.permute.xlu0 %1648
  %1650 = vrot.lane.b32.xlu0 %v1486, 12
  %v1651 = vpop.permute.xlu0 %1650
  %1652 = vrot.lane.b32.xlu0 %v1487, 12
  %v1653 = vpop.permute.xlu0 %1652
  %1654 = vrot.lane.b32.xlu0 %v1488, 12
  %v1655 = vpop.permute.xlu0 %1654
  %1656 = vrot.lane.b32.xlu0 %v1489, 12
  %v1657 = vpop.permute.xlu0 %1656
  %1658 = vrot.lane.b32.xlu0 %v1490, 12
  %v1659 = vpop.permute.xlu0 %1658
  %v1662 = vsel %vm722, %v1628, %v1645
  %v1665 = vsel %vm722, %v1629, %v1647
  %v1668 = vsel %vm722, %v1630, %v1649
  %v1671 = vsel %vm722, %v1631, %v1651
  %v1674 = vsel %vm722, %v1632, %v1653
  %v1677 = vsel %vm722, %v1633, %v1655
  %v1680 = vsel %vm722, %v1634, %v1657
  %v1683 = vsel %vm722, %v1635, %v1659
  %v1684 = vsel %vm120, %v1662, 0
  %v1686 = vsel %vm120, %v1665, 0
  %v1688 = vsel %vm120, %v1668, 0
  %v1690 = vsel %vm120, %v1671, 0
  %v1692 = vsel %vm120, %v1674, 0
  %v1694 = vsel %vm120, %v1677, 0
  %v1696 = vsel %vm120, %v1680, 0
  %v1698 = vsel %vm120, %v1683, 0
  %1700 = vmatprep.subr.bf16.mxu0 0
  %1701 = vmatpush1.bf16.msra.mxu0 0
  %1702 = vmatprep.subr.bf16.mxu0 0
  %1703 = vmatpush1.bf16.msra.mxu0 0
  %1704 = vmatprep.subr.bf16.mxu0 0
  %1705 = vmatpush1.bf16.msra.mxu0 0
  %1706 = vmatprep.subr.bf16.mxu0 0
  %1707 = vmatpush1.bf16.msra.mxu0 0
  %1708 = vmatprep.subr.bf16.mxu0 0
  %1709 = vmatpush1.bf16.msra.mxu0 0
  %1710 = vmatprep.subr.bf16.mxu0 0
  %1711 = vmatpush1.bf16.msra.mxu0 0
  %1712 = vmatprep.subr.bf16.mxu0 0
  %1713 = vmatpush1.bf16.msra.mxu0 %v948
  %1714 = vmatprep.subr.bf16.mxu0 0
  %1715 = vmatpush1.bf16.msra.mxu0 %v928
  %1716 = vmatprep.subr.bf16.mxu0 0
  %1717 = vmatpush2.bf16.msra.mxu0 0
  %1718 = vmatprep.subr.bf16.mxu0 0
  %1719 = vmatpush2.bf16.msra.mxu0 0
  %1720 = vmatprep.subr.bf16.mxu0 0
  %1721 = vmatpush2.bf16.msra.mxu0 0
  %1722 = vmatprep.subr.bf16.mxu0 0
  %1723 = vmatpush2.bf16.msra.mxu0 0
  %1724 = vmatprep.subr.bf16.mxu0 0
  %1725 = vmatpush2.bf16.msra.mxu0 0
  %1726 = vmatprep.subr.bf16.mxu0 0
  %1727 = vmatpush2.bf16.msra.mxu0 0
  %1728 = vmatprep.subr.bf16.mxu0 0
  %1729 = vmatpush2.bf16.msra.mxu0 0
  %1730 = vmatprep.subr.bf16.mxu0 0
  %1731 = vmatpush2.bf16.msra.mxu0 0
  %1732 = vmatprep.mubr.bf16.mxu0 0
  %1733 = vmatmul.mubr.bf16.gmra.mxu0 %v1684
  %v1734 = vpop.f32.mrf.mxu0
  %v1735 = vadd.f32 %v303, %v1734
  %v1736 = vpop.f32.mrf.mxu0
  %v1737 = vpop.f32.mrf.mxu0
  %v1738 = vadd.f32 %v306, %v1737
  %v1739 = vpop.f32.mrf.mxu0
  %1740 = vmatprep.mubr.bf16.mxu0 0
  %1741 = vmatmul.mubr.bf16.gmra.mxu0 %v1686
  %v1742 = vpop.f32.mrf.mxu0
  %v1743 = vadd.f32 %v311, %v1742
  %v1744 = vpop.f32.mrf.mxu0
  %v1745 = vpop.f32.mrf.mxu0
  %v1746 = vadd.f32 %v314, %v1745
  %v1747 = vpop.f32.mrf.mxu0
  %1748 = vmatprep.mubr.bf16.mxu0 0
  %1749 = vmatmul.mubr.bf16.gmra.mxu0 %v1688
  %v1750 = vpop.f32.mrf.mxu0
  %v1751 = vadd.f32 %v319, %v1750
  %v1752 = vpop.f32.mrf.mxu0
  %v1753 = vpop.f32.mrf.mxu0
  %v1754 = vadd.f32 %v322, %v1753
  %v1755 = vpop.f32.mrf.mxu0
  %1756 = vmatprep.mubr.bf16.mxu0 0
  %1757 = vmatmul.mubr.bf16.gmra.mxu0 %v1690
  %v1758 = vpop.f32.mrf.mxu0
  %v1759 = vadd.f32 %v327, %v1758
  %v1760 = vpop.f32.mrf.mxu0
  %v1761 = vpop.f32.mrf.mxu0
  %v1762 = vadd.f32 %v330, %v1761
  %v1763 = vpop.f32.mrf.mxu0
  %1764 = vmatprep.mubr.bf16.mxu0 0
  %1765 = vmatmul.mubr.bf16.gmra.mxu0 %v1692
  %v1766 = vpop.f32.mrf.mxu0
  %v1767 = vadd.f32 %v335, %v1766
  %v1768 = vpop.f32.mrf.mxu0
  %v1769 = vpop.f32.mrf.mxu0
  %v1770 = vadd.f32 %v338, %v1769
  %v1771 = vpop.f32.mrf.mxu0
  %1772 = vmatprep.mubr.bf16.mxu0 0
  %1773 = vmatmul.mubr.bf16.gmra.mxu0 %v1694
  %v1774 = vpop.f32.mrf.mxu0
  %v1775 = vadd.f32 %v343, %v1774
  %v1776 = vpop.f32.mrf.mxu0
  %v1777 = vpop.f32.mrf.mxu0
  %v1778 = vadd.f32 %v346, %v1777
  %v1779 = vpop.f32.mrf.mxu0
  %1780 = vmatprep.mubr.bf16.mxu0 0
  %1781 = vmatmul.mubr.bf16.gmra.mxu0 %v1696
  %v1782 = vpop.f32.mrf.mxu0
  %v1783 = vadd.f32 %v351, %v1782
  %v1784 = vpop.f32.mrf.mxu0
  %v1785 = vpop.f32.mrf.mxu0
  %v1786 = vadd.f32 %v354, %v1785
  %v1787 = vpop.f32.mrf.mxu0
  %1788 = vmatprep.mubr.bf16.mxu0 0
  %1789 = vmatmul.mubr.bf16.gmra.mxu0 %v1698
  %v1790 = vpop.f32.mrf.mxu0
  %v1791 = vadd.f32 %v359, %v1790
  %v1792 = vpop.f32.mrf.mxu0
  %v1793 = vpop.f32.mrf.mxu0
  %v1794 = vadd.f32 %v362, %v1793
  %v1795 = vpop.f32.mrf.mxu0
  %1796 = vdwg.mxu0
  %v1797 = vmax.f32 %v1735, 0.0
  %v1798 = vmax.f32 %v1738, 0.0
  %v1799 = vmax.f32 %v1743, 0.0
  %v1800 = vmax.f32 %v1746, 0.0
  %v1801 = vmax.f32 %v1751, 0.0
  %v1802 = vmax.f32 %v1754, 0.0
  %v1803 = vmax.f32 %v1759, 0.0
  %v1804 = vmax.f32 %v1762, 0.0
  %v1805 = vmax.f32 %v1767, 0.0
  %v1806 = vmax.f32 %v1770, 0.0
  %v1807 = vmax.f32 %v1775, 0.0
  %v1808 = vmax.f32 %v1778, 0.0
  %v1809 = vmax.f32 %v1783, 0.0
  %v1810 = vmax.f32 %v1786, 0.0
  %v1811 = vmax.f32 %v1791, 0.0
  %v1812 = vmax.f32 %v1794, 0.0
  %v1813 = vpack.c.bf16 %v1798, %v1797
  %v1814 = vpack.c.bf16 %v1800, %v1799
  %v1815 = vpack.c.bf16 %v1802, %v1801
  %v1816 = vpack.c.bf16 %v1804, %v1803
  %v1817 = vpack.c.bf16 %v1806, %v1805
  %v1818 = vpack.c.bf16 %v1808, %v1807
  %v1819 = vpack.c.bf16 %v1810, %v1809
  %v1820 = vpack.c.bf16 %v1812, %v1811
  %1829 = vrot.lane.b32.xlu0 %v1628, 12
  %v1830 = vpop.permute.xlu0 %1829
  %1831 = vrot.lane.b32.xlu0 %v1629, 12
  %v1832 = vpop.permute.xlu0 %1831
  %1833 = vrot.lane.b32.xlu0 %v1630, 12
  %v1834 = vpop.permute.xlu0 %1833
  %1835 = vrot.lane.b32.xlu0 %v1631, 12
  %v1836 = vpop.permute.xlu0 %1835
  %1837 = vrot.lane.b32.xlu0 %v1632, 12
  %v1838 = vpop.permute.xlu0 %1837
  %1839 = vrot.lane.b32.xlu0 %v1633, 12
  %v1840 = vpop.permute.xlu0 %1839
  %1841 = vrot.lane.b32.xlu0 %v1634, 12
  %v1842 = vpop.permute.xlu0 %1841
  %1843 = vrot.lane.b32.xlu0 %v1635, 12
  %v1844 = vpop.permute.xlu0 %1843
  %1845 = vrot.lane.b32.xlu0 %v1483, 24
  %v1846 = vpop.permute.xlu0 %1845
  %1847 = vrot.lane.b32.xlu0 %v1484, 24
  %v1848 = vpop.permute.xlu0 %1847
  %1849 = vrot.lane.b32.xlu0 %v1485, 24
  %v1850 = vpop.permute.xlu0 %1849
  %1851 = vrot.lane.b32.xlu0 %v1486, 24
  %v1852 = vpop.permute.xlu0 %1851
  %1853 = vrot.lane.b32.xlu0 %v1487, 24
  %v1854 = vpop.permute.xlu0 %1853
  %1855 = vrot.lane.b32.xlu0 %v1488, 24
  %v1856 = vpop.permute.xlu0 %1855
  %1857 = vrot.lane.b32.xlu0 %v1489, 24
  %v1858 = vpop.permute.xlu0 %1857
  %1859 = vrot.lane.b32.xlu0 %v1490, 24
  %v1860 = vpop.permute.xlu0 %1859
  %v1863 = vsel %vm722, %v1813, %v1830
  %v1866 = vsel %vm722, %v1814, %v1832
  %v1869 = vsel %vm722, %v1815, %v1834
  %v1872 = vsel %vm722, %v1816, %v1836
  %v1875 = vsel %vm722, %v1817, %v1838
  %v1878 = vsel %vm722, %v1818, %v1840
  %v1881 = vsel %vm722, %v1819, %v1842
  %v1884 = vsel %vm722, %v1820, %v1844
  %v1886 = vsel %vm120, %v1863, %v1846
  %v1888 = vsel %vm120, %v1866, %v1848
  %v1890 = vsel %vm120, %v1869, %v1850
  %v1892 = vsel %vm120, %v1872, %v1852
  %v1894 = vsel %vm120, %v1875, %v1854
  %v1896 = vsel %vm120, %v1878, %v1856
  %v1898 = vsel %vm120, %v1881, %v1858
  %v1900 = vsel %vm120, %v1884, %v1860
  %v1901 = vsel %vm1171, %v1886, 0
  %v1903 = vsel %vm1171, %v1888, 0
  %v1905 = vsel %vm1171, %v1890, 0
  %v1907 = vsel %vm1171, %v1892, 0
  %v1909 = vsel %vm1171, %v1894, 0
  %v1911 = vsel %vm1171, %v1896, 0
  %v1913 = vsel %vm1171, %v1898, 0
  %v1915 = vsel %vm1171, %v1900, 0
  %1917 = vmatprep.subr.bf16.mxu0 0
  %1918 = vmatpush1.bf16.msra.mxu0 0
  %1919 = vmatprep.subr.bf16.mxu0 0
  %1920 = vmatpush1.bf16.msra.mxu0 0
  %1921 = vmatprep.subr.bf16.mxu0 0
  %1922 = vmatpush1.bf16.msra.mxu0 0
  %1923 = vmatprep.subr.bf16.mxu0 0
  %1924 = vmatpush1.bf16.msra.mxu0 0
  %1925 = vmatprep.subr.bf16.mxu0 0
  %1926 = vmatpush1.bf16.msra.mxu0 0
  %1927 = vmatprep.subr.bf16.mxu0 0
  %1928 = vmatpush1.bf16.msra.mxu0 %v1190
  %1929 = vmatprep.subr.bf16.mxu0 0
  %1930 = vmatpush1.bf16.msra.mxu0 %v1167
  %1931 = vmatprep.subr.bf16.mxu0 0
  %1932 = vmatpush1.bf16.msra.mxu0 %v1166
  %1933 = vmatprep.subr.bf16.mxu0 0
  %1934 = vmatpush2.bf16.msra.mxu0 0
  %1935 = vmatprep.subr.bf16.mxu0 0
  %1936 = vmatpush2.bf16.msra.mxu0 0
  %1937 = vmatprep.subr.bf16.mxu0 0
  %1938 = vmatpush2.bf16.msra.mxu0 0
  %1939 = vmatprep.subr.bf16.mxu0 0
  %1940 = vmatpush2.bf16.msra.mxu0 0
  %1941 = vmatprep.subr.bf16.mxu0 0
  %1942 = vmatpush2.bf16.msra.mxu0 0
  %1943 = vmatprep.subr.bf16.mxu0 0
  %1944 = vmatpush2.bf16.msra.mxu0 0
  %1945 = vmatprep.subr.bf16.mxu0 0
  %1946 = vmatpush2.bf16.msra.mxu0 0
  %1947 = vmatprep.subr.bf16.mxu0 0
  %1948 = vmatpush2.bf16.msra.mxu0 0
  %1949 = vmatprep.mubr.bf16.mxu0 0
  %1950 = vmatmul.mubr.bf16.gmra.mxu0 %v1901
  %v1951 = vpop.f32.mrf.mxu0
  %v1952 = vadd.f32 0.0, %v1951
  %v1953 = vpop.f32.mrf.mxu0
  %v1954 = vpop.f32.mrf.mxu0
  %v1955 = vadd.f32 0.0, %v1954
  %v1956 = vpop.f32.mrf.mxu0
  %1957 = vmatprep.mubr.bf16.mxu0 0
  %1958 = vmatmul.mubr.bf16.gmra.mxu0 %v1903
  %v1959 = vpop.f32.mrf.mxu0
  %v1960 = vadd.f32 0.0, %v1959
  %v1961 = vpop.f32.mrf.mxu0
  %v1962 = vpop.f32.mrf.mxu0
  %v1963 = vadd.f32 0.0, %v1962
  %v1964 = vpop.f32.mrf.mxu0
  %1965 = vmatprep.mubr.bf16.mxu0 0
  %1966 = vmatmul.mubr.bf16.gmra.mxu0 %v1905
  %v1967 = vpop.f32.mrf.mxu0
  %v1968 = vadd.f32 0.0, %v1967
  %v1969 = vpop.f32.mrf.mxu0
  %v1970 = vpop.f32.mrf.mxu0
  %v1971 = vadd.f32 0.0, %v1970
  %v1972 = vpop.f32.mrf.mxu0
  %1973 = vmatprep.mubr.bf16.mxu0 0
  %1974 = vmatmul.mubr.bf16.gmra.mxu0 %v1907
  %v1975 = vpop.f32.mrf.mxu0
  %v1976 = vadd.f32 0.0, %v1975
  %v1977 = vpop.f32.mrf.mxu0
  %v1978 = vpop.f32.mrf.mxu0
  %v1979 = vadd.f32 0.0, %v1978
  %v1980 = vpop.f32.mrf.mxu0
  %1981 = vmatprep.mubr.bf16.mxu0 0
  %1982 = vmatmul.mubr.bf16.gmra.mxu0 %v1909
  %v1983 = vpop.f32.mrf.mxu0
  %v1984 = vadd.f32 0.0, %v1983
  %v1985 = vpop.f32.mrf.mxu0
  %v1986 = vpop.f32.mrf.mxu0
  %v1987 = vadd.f32 0.0, %v1986
  %v1988 = vpop.f32.mrf.mxu0
  %1989 = vmatprep.mubr.bf16.mxu0 0
  %1990 = vmatmul.mubr.bf16.gmra.mxu0 %v1911
  %v1991 = vpop.f32.mrf.mxu0
  %v1992 = vadd.f32 0.0, %v1991
  %v1993 = vpop.f32.mrf.mxu0
  %v1994 = vpop.f32.mrf.mxu0
  %v1995 = vadd.f32 0.0, %v1994
  %v1996 = vpop.f32.mrf.mxu0
  %1997 = vmatprep.mubr.bf16.mxu0 0
  %1998 = vmatmul.mubr.bf16.gmra.mxu0 %v1913
  %v1999 = vpop.f32.mrf.mxu0
  %v2000 = vadd.f32 0.0, %v1999
  %v2001 = vpop.f32.mrf.mxu0
  %v2002 = vpop.f32.mrf.mxu0
  %v2003 = vadd.f32 0.0, %v2002
  %v2004 = vpop.f32.mrf.mxu0
  %2005 = vmatprep.mubr.bf16.mxu0 0
  %2006 = vmatmul.mubr.bf16.gmra.mxu0 %v1915
  %v2007 = vpop.f32.mrf.mxu0
  %v2008 = vadd.f32 0.0, %v2007
  %v2009 = vpop.f32.mrf.mxu0
  %v2010 = vpop.f32.mrf.mxu0
  %v2011 = vadd.f32 0.0, %v2010
  %v2012 = vpop.f32.mrf.mxu0
  %2013 = vdwg.mxu0
  %v2014 = vmax.f32 %v1227, %v1952
  %v2015 = vmax.f32 %v1230, %v1955
  %v2016 = vmax.f32 %v1235, %v1960
  %v2017 = vmax.f32 %v1238, %v1963
  %v2018 = vmax.f32 %v1243, %v1968
  %v2019 = vmax.f32 %v1246, %v1971
  %v2020 = vmax.f32 %v1251, %v1976
  %v2021 = vmax.f32 %v1254, %v1979
  %v2022 = vmax.f32 %v1259, %v1984
  %v2023 = vmax.f32 %v1262, %v1987
  %v2024 = vmax.f32 %v1267, %v1992
  %v2025 = vmax.f32 %v1270, %v1995
  %v2026 = vmax.f32 %v1275, %v2000
  %v2027 = vmax.f32 %v1278, %v2003
  %v2028 = vmax.f32 %v1283, %v2008
  %v2029 = vmax.f32 %v1286, %v2011
  %s2030 = scalar_lea.vmem %s0, 128
  %v2031 = vld [vmem:[%s2030] sm:$0xf]
  %v2032 = vld [vmem:[%s2030 + $0x4] sm:$0xf]
  %v2033 = vld [vmem:[%s2030 + $0x8] sm:$0xf]
  %v2034 = vld [vmem:[%s2030 + $0xc] sm:$0xf]
  %v2035 = vld [vmem:[%s2030 + $0x10] sm:$0xf]
  %v2036 = vld [vmem:[%s2030 + $0x14] sm:$0xf]
  %v2037 = vld [vmem:[%s2030 + $0x18] sm:$0xf]
  %v2038 = vld [vmem:[%s2030 + $0x1c] sm:$0xf]
  %v2039 = vld [vmem:[%s2030 + $0x20] sm:$0xf]
  %v2040 = vld [vmem:[%s2030 + $0x24] sm:$0xf]
  %v2041 = vld [vmem:[%s2030 + $0x28] sm:$0xf]
  %v2042 = vld [vmem:[%s2030 + $0x2c] sm:$0xf]
  %v2043 = vld [vmem:[%s2030 + $0x30] sm:$0xf]
  %v2044 = vld [vmem:[%s2030 + $0x34] sm:$0xf]
  %v2045 = vld [vmem:[%s2030 + $0x38] sm:$0xf]
  %v2046 = vld [vmem:[%s2030 + $0x3c] sm:$0xf]
  %v2063 = vunpack.c.l.b16 %v2031
  %v2064 = vunpack.c.l.b16 %v2032
  %v2065 = vunpack.c.l.b16 %v2033
  %v2066 = vunpack.c.l.b16 %v2034
  %v2067 = vunpack.c.l.b16 %v2035
  %v2068 = vunpack.c.l.b16 %v2036
  %v2069 = vunpack.c.l.b16 %v2037
  %v2070 = vunpack.c.l.b16 %v2038
  %v2071 = vunpack.c.l.b16 %v2039
  %v2072 = vunpack.c.l.b16 %v2040
  %v2073 = vunpack.c.l.b16 %v2041
  %v2074 = vunpack.c.l.b16 %v2042
  %v2075 = vunpack.c.l.b16 %v2043
  %v2076 = vunpack.c.l.b16 %v2044
  %v2077 = vunpack.c.l.b16 %v2045
  %v2078 = vunpack.c.l.b16 %v2046
  %v2079 = vpack.c.b16 %v2064, %v2063
  %v2080 = vpack.c.b16 %v2066, %v2065
  %v2081 = vpack.c.b16 %v2068, %v2067
  %v2082 = vpack.c.b16 %v2070, %v2069
  %v2083 = vpack.c.b16 %v2072, %v2071
  %v2084 = vpack.c.b16 %v2074, %v2073
  %v2085 = vpack.c.b16 %v2076, %v2075
  %v2086 = vpack.c.b16 %v2078, %v2077
  %v2088 = vsel %vm562, %v2079, 0
  %v2091 = vsel %vm562, %v2080, 0
  %v2094 = vsel %vm562, %v2081, 0
  %v2097 = vsel %vm562, %v2082, 0
  %v2100 = vsel %vm562, %v2083, 0
  %v2103 = vsel %vm562, %v2084, 0
  %v2106 = vsel %vm562, %v2085, 0
  %v2109 = vsel %vm562, %v2086, 0
  %2111 = vmatprep.subr.bf16.mxu0 0
  %2112 = vmatpush1.bf16.msra.mxu0 0
  %2113 = vmatprep.subr.bf16.mxu0 0
  %2114 = vmatpush1.bf16.msra.mxu0 0
  %2115 = vmatprep.subr.bf16.mxu0 0
  %2116 = vmatpush1.bf16.msra.mxu0 0
  %2117 = vmatprep.subr.bf16.mxu0 0
  %2118 = vmatpush1.bf16.msra.mxu0 0
  %2119 = vmatprep.subr.bf16.mxu0 0
  %2120 = vmatpush1.bf16.msra.mxu0 0
  %2121 = vmatprep.subr.bf16.mxu0 0
  %2122 = vmatpush1.bf16.msra.mxu0 0
  %2123 = vmatprep.subr.bf16.mxu0 0
  %2124 = vmatpush1.bf16.msra.mxu0 %v592
  %2125 = vmatprep.subr.bf16.mxu0 0
  %2126 = vmatpush1.bf16.msra.mxu0 %v559
  %2127 = vmatprep.subr.bf16.mxu0 0
  %2128 = vmatpush2.bf16.msra.mxu0 0
  %2129 = vmatprep.subr.bf16.mxu0 0
  %2130 = vmatpush2.bf16.msra.mxu0 0
  %2131 = vmatprep.subr.bf16.mxu0 0
  %2132 = vmatpush2.bf16.msra.mxu0 0
  %2133 = vmatprep.subr.bf16.mxu0 0
  %2134 = vmatpush2.bf16.msra.mxu0 0
  %2135 = vmatprep.subr.bf16.mxu0 0
  %2136 = vmatpush2.bf16.msra.mxu0 0
  %2137 = vmatprep.subr.bf16.mxu0 0
  %2138 = vmatpush2.bf16.msra.mxu0 0
  %2139 = vmatprep.subr.bf16.mxu0 0
  %2140 = vmatpush2.bf16.msra.mxu0 0
  %2141 = vmatprep.subr.bf16.mxu0 0
  %2142 = vmatpush2.bf16.msra.mxu0 0
  %2143 = vmatprep.mubr.bf16.mxu0 0
  %2144 = vmatmul.mubr.bf16.gmra.mxu0 %v2088
  %v2145 = vpop.f32.mrf.mxu0
  %v2146 = vadd.f32 %v509, %v2145
  %v2147 = vpop.f32.mrf.mxu0
  %v2148 = vpop.f32.mrf.mxu0
  %v2149 = vadd.f32 %v509, %v2148
  %v2150 = vpop.f32.mrf.mxu0
  %2151 = vmatprep.mubr.bf16.mxu0 0
  %2152 = vmatmul.mubr.bf16.gmra.mxu0 %v2091
  %v2153 = vpop.f32.mrf.mxu0
  %v2154 = vadd.f32 %v509, %v2153
  %v2155 = vpop.f32.mrf.mxu0
  %v2156 = vpop.f32.mrf.mxu0
  %v2157 = vadd.f32 %v509, %v2156
  %v2158 = vpop.f32.mrf.mxu0
  %2159 = vmatprep.mubr.bf16.mxu0 0
  %2160 = vmatmul.mubr.bf16.gmra.mxu0 %v2094
  %v2161 = vpop.f32.mrf.mxu0
  %v2162 = vadd.f32 %v509, %v2161
  %v2163 = vpop.f32.mrf.mxu0
  %v2164 = vpop.f32.mrf.mxu0
  %v2165 = vadd.f32 %v509, %v2164
  %v2166 = vpop.f32.mrf.mxu0
  %2167 = vmatprep.mubr.bf16.mxu0 0
  %2168 = vmatmul.mubr.bf16.gmra.mxu0 %v2097
  %v2169 = vpop.f32.mrf.mxu0
  %v2170 = vadd.f32 %v509, %v2169
  %v2171 = vpop.f32.mrf.mxu0
  %v2172 = vpop.f32.mrf.mxu0
  %v2173 = vadd.f32 %v509, %v2172
  %v2174 = vpop.f32.mrf.mxu0
  %2175 = vmatprep.mubr.bf16.mxu0 0
  %2176 = vmatmul.mubr.bf16.gmra.mxu0 %v2100
  %v2177 = vpop.f32.mrf.mxu0
  %v2178 = vadd.f32 %v509, %v2177
  %v2179 = vpop.f32.mrf.mxu0
  %v2180 = vpop.f32.mrf.mxu0
  %v2181 = vadd.f32 %v509, %v2180
  %v2182 = vpop.f32.mrf.mxu0
  %2183 = vmatprep.mubr.bf16.mxu0 0
  %2184 = vmatmul.mubr.bf16.gmra.mxu0 %v2103
  %v2185 = vpop.f32.mrf.mxu0
  %v2186 = vadd.f32 %v509, %v2185
  %v2187 = vpop.f32.mrf.mxu0
  %v2188 = vpop.f32.mrf.mxu0
  %v2189 = vadd.f32 %v509, %v2188
  %v2190 = vpop.f32.mrf.mxu0
  %2191 = vmatprep.mubr.bf16.mxu0 0
  %2192 = vmatmul.mubr.bf16.gmra.mxu0 %v2106
  %v2193 = vpop.f32.mrf.mxu0
  %v2194 = vadd.f32 %v509, %v2193
  %v2195 = vpop.f32.mrf.mxu0
  %v2196 = vpop.f32.mrf.mxu0
  %v2197 = vadd.f32 %v509, %v2196
  %v2198 = vpop.f32.mrf.mxu0
  %2199 = vmatprep.mubr.bf16.mxu0 0
  %2200 = vmatmul.mubr.bf16.gmra.mxu0 %v2109
  %v2201 = vpop.f32.mrf.mxu0
  %v2202 = vadd.f32 %v509, %v2201
  %v2203 = vpop.f32.mrf.mxu0
  %v2204 = vpop.f32.mrf.mxu0
  %v2205 = vadd.f32 %v509, %v2204
  %v2206 = vpop.f32.mrf.mxu0
  %2207 = vdwg.mxu0
  %v2208 = vmax.f32 %v2146, 0.0
  %v2209 = vmax.f32 %v2149, 0.0
  %v2210 = vmax.f32 %v2154, 0.0
  %v2211 = vmax.f32 %v2157, 0.0
  %v2212 = vmax.f32 %v2162, 0.0
  %v2213 = vmax.f32 %v2165, 0.0
  %v2214 = vmax.f32 %v2170, 0.0
  %v2215 = vmax.f32 %v2173, 0.0
  %v2216 = vmax.f32 %v2178, 0.0
  %v2217 = vmax.f32 %v2181, 0.0
  %v2218 = vmax.f32 %v2186, 0.0
  %v2219 = vmax.f32 %v2189, 0.0
  %v2220 = vmax.f32 %v2194, 0.0
  %v2221 = vmax.f32 %v2197, 0.0
  %v2222 = vmax.f32 %v2202, 0.0
  %v2223 = vmax.f32 %v2205, 0.0
  %v2224 = vpack.c.bf16 %v2209, %v2208
  %v2225 = vpack.c.bf16 %v2211, %v2210
  %v2226 = vpack.c.bf16 %v2213, %v2212
  %v2227 = vpack.c.bf16 %v2215, %v2214
  %v2228 = vpack.c.bf16 %v2217, %v2216
  %v2229 = vpack.c.bf16 %v2219, %v2218
  %v2230 = vpack.c.bf16 %v2221, %v2220
  %v2231 = vpack.c.bf16 %v2223, %v2222
  %v2233 = vsel %vm722, %v2224, 0
  %v2236 = vsel %vm722, %v2225, 0
  %v2239 = vsel %vm722, %v2226, 0
  %v2242 = vsel %vm722, %v2227, 0
  %v2245 = vsel %vm722, %v2228, 0
  %v2248 = vsel %vm722, %v2229, 0
  %v2251 = vsel %vm722, %v2230, 0
  %v2254 = vsel %vm722, %v2231, 0
  %2256 = vmatprep.subr.bf16.mxu0 0
  %2257 = vmatpush1.bf16.msra.mxu0 0
  %2258 = vmatprep.subr.bf16.mxu0 0
  %2259 = vmatpush1.bf16.msra.mxu0 0
  %2260 = vmatprep.subr.bf16.mxu0 0
  %2261 = vmatpush1.bf16.msra.mxu0 0
  %2262 = vmatprep.subr.bf16.mxu0 0
  %2263 = vmatpush1.bf16.msra.mxu0 0
  %2264 = vmatprep.subr.bf16.mxu0 0
  %2265 = vmatpush1.bf16.msra.mxu0 0
  %2266 = vmatprep.subr.bf16.mxu0 0
  %2267 = vmatpush1.bf16.msra.mxu0 0
  %2268 = vmatprep.subr.bf16.mxu0 0
  %2269 = vmatpush1.bf16.msra.mxu0 0
  %2270 = vmatprep.subr.bf16.mxu0 0
  %2271 = vmatpush1.bf16.msra.mxu0 %v748
  %2272 = vmatprep.subr.bf16.mxu0 0
  %2273 = vmatpush2.bf16.msra.mxu0 0
  %2274 = vmatprep.subr.bf16.mxu0 0
  %2275 = vmatpush2.bf16.msra.mxu0 0
  %2276 = vmatprep.subr.bf16.mxu0 0
  %2277 = vmatpush2.bf16.msra.mxu0 0
  %2278 = vmatprep.subr.bf16.mxu0 0
  %2279 = vmatpush2.bf16.msra.mxu0 0
  %2280 = vmatprep.subr.bf16.mxu0 0
  %2281 = vmatpush2.bf16.msra.mxu0 0
  %2282 = vmatprep.subr.bf16.mxu0 0
  %2283 = vmatpush2.bf16.msra.mxu0 0
  %2284 = vmatprep.subr.bf16.mxu0 0
  %2285 = vmatpush2.bf16.msra.mxu0 0
  %2286 = vmatprep.subr.bf16.mxu0 0
  %2287 = vmatpush2.bf16.msra.mxu0 0
  %2288 = vmatprep.mubr.bf16.mxu0 0
  %2289 = vmatmul.mubr.bf16.gmra.mxu0 %v2233
  %v2290 = vpop.f32.mrf.mxu0
  %v2291 = vadd.f32 %v184, %v2290
  %v2292 = vpop.f32.mrf.mxu0
  %v2293 = vpop.f32.mrf.mxu0
  %v2294 = vadd.f32 %v187, %v2293
  %v2295 = vpop.f32.mrf.mxu0
  %2296 = vmatprep.mubr.bf16.mxu0 0
  %2297 = vmatmul.mubr.bf16.gmra.mxu0 %v2236
  %v2298 = vpop.f32.mrf.mxu0
  %v2299 = vadd.f32 %v192, %v2298
  %v2300 = vpop.f32.mrf.mxu0
  %v2301 = vpop.f32.mrf.mxu0
  %v2302 = vadd.f32 %v195, %v2301
  %v2303 = vpop.f32.mrf.mxu0
  %2304 = vmatprep.mubr.bf16.mxu0 0
  %2305 = vmatmul.mubr.bf16.gmra.mxu0 %v2239
  %v2306 = vpop.f32.mrf.mxu0
  %v2307 = vadd.f32 %v200, %v2306
  %v2308 = vpop.f32.mrf.mxu0
  %v2309 = vpop.f32.mrf.mxu0
  %v2310 = vadd.f32 %v203, %v2309
  %v2311 = vpop.f32.mrf.mxu0
  %2312 = vmatprep.mubr.bf16.mxu0 0
  %2313 = vmatmul.mubr.bf16.gmra.mxu0 %v2242
  %v2314 = vpop.f32.mrf.mxu0
  %v2315 = vadd.f32 %v208, %v2314
  %v2316 = vpop.f32.mrf.mxu0
  %v2317 = vpop.f32.mrf.mxu0
  %v2318 = vadd.f32 %v211, %v2317
  %v2319 = vpop.f32.mrf.mxu0
  %2320 = vmatprep.mubr.bf16.mxu0 0
  %2321 = vmatmul.mubr.bf16.gmra.mxu0 %v2245
  %v2322 = vpop.f32.mrf.mxu0
  %v2323 = vadd.f32 %v216, %v2322
  %v2324 = vpop.f32.mrf.mxu0
  %v2325 = vpop.f32.mrf.mxu0
  %v2326 = vadd.f32 %v219, %v2325
  %v2327 = vpop.f32.mrf.mxu0
  %2328 = vmatprep.mubr.bf16.mxu0 0
  %2329 = vmatmul.mubr.bf16.gmra.mxu0 %v2248
  %v2330 = vpop.f32.mrf.mxu0
  %v2331 = vadd.f32 %v224, %v2330
  %v2332 = vpop.f32.mrf.mxu0
  %v2333 = vpop.f32.mrf.mxu0
  %v2334 = vadd.f32 %v227, %v2333
  %v2335 = vpop.f32.mrf.mxu0
  %2336 = vmatprep.mubr.bf16.mxu0 0
  %2337 = vmatmul.mubr.bf16.gmra.mxu0 %v2251
  %v2338 = vpop.f32.mrf.mxu0
  %v2339 = vadd.f32 %v232, %v2338
  %v2340 = vpop.f32.mrf.mxu0
  %v2341 = vpop.f32.mrf.mxu0
  %v2342 = vadd.f32 %v235, %v2341
  %v2343 = vpop.f32.mrf.mxu0
  %2344 = vmatprep.mubr.bf16.mxu0 0
  %2345 = vmatmul.mubr.bf16.gmra.mxu0 %v2254
  %v2346 = vpop.f32.mrf.mxu0
  %v2347 = vadd.f32 %v240, %v2346
  %v2348 = vpop.f32.mrf.mxu0
  %v2349 = vpop.f32.mrf.mxu0
  %v2350 = vadd.f32 %v243, %v2349
  %v2351 = vpop.f32.mrf.mxu0
  %2352 = vdwg.mxu0
  %v2353 = vmax.f32 %v2291, 0.0
  %v2354 = vmax.f32 %v2294, 0.0
  %v2355 = vmax.f32 %v2299, 0.0
  %v2356 = vmax.f32 %v2302, 0.0
  %v2357 = vmax.f32 %v2307, 0.0
  %v2358 = vmax.f32 %v2310, 0.0
  %v2359 = vmax.f32 %v2315, 0.0
  %v2360 = vmax.f32 %v2318, 0.0
  %v2361 = vmax.f32 %v2323, 0.0
  %v2362 = vmax.f32 %v2326, 0.0
  %v2363 = vmax.f32 %v2331, 0.0
  %v2364 = vmax.f32 %v2334, 0.0
  %v2365 = vmax.f32 %v2339, 0.0
  %v2366 = vmax.f32 %v2342, 0.0
  %v2367 = vmax.f32 %v2347, 0.0
  %v2368 = vmax.f32 %v2350, 0.0
  %v2369 = vpack.c.bf16 %v2354, %v2353
  %v2370 = vpack.c.bf16 %v2356, %v2355
  %v2371 = vpack.c.bf16 %v2358, %v2357
  %v2372 = vpack.c.bf16 %v2360, %v2359
  %v2373 = vpack.c.bf16 %v2362, %v2361
  %v2374 = vpack.c.bf16 %v2364, %v2363
  %v2375 = vpack.c.bf16 %v2366, %v2365
  %v2376 = vpack.c.bf16 %v2368, %v2367
  %2385 = vrot.lane.b32.xlu0 %v2224, 12
  %v2386 = vpop.permute.xlu0 %2385
  %2387 = vrot.lane.b32.xlu0 %v2225, 12
  %v2388 = vpop.permute.xlu0 %2387
  %2389 = vrot.lane.b32.xlu0 %v2226, 12
  %v2390 = vpop.permute.xlu0 %2389
  %2391 = vrot.lane.b32.xlu0 %v2227, 12
  %v2392 = vpop.permute.xlu0 %2391
  %2393 = vrot.lane.b32.xlu0 %v2228, 12
  %v2394 = vpop.permute.xlu0 %2393
  %2395 = vrot.lane.b32.xlu0 %v2229, 12
  %v2396 = vpop.permute.xlu0 %2395
  %2397 = vrot.lane.b32.xlu0 %v2230, 12
  %v2398 = vpop.permute.xlu0 %2397
  %2399 = vrot.lane.b32.xlu0 %v2231, 12
  %v2400 = vpop.permute.xlu0 %2399
  %v2403 = vsel %vm722, %v2369, %v2386
  %v2406 = vsel %vm722, %v2370, %v2388
  %v2409 = vsel %vm722, %v2371, %v2390
  %v2412 = vsel %vm722, %v2372, %v2392
  %v2415 = vsel %vm722, %v2373, %v2394
  %v2418 = vsel %vm722, %v2374, %v2396
  %v2421 = vsel %vm722, %v2375, %v2398
  %v2424 = vsel %vm722, %v2376, %v2400
  %v2425 = vsel %vm120, %v2403, 0
  %v2427 = vsel %vm120, %v2406, 0
  %v2429 = vsel %vm120, %v2409, 0
  %v2431 = vsel %vm120, %v2412, 0
  %v2433 = vsel %vm120, %v2415, 0
  %v2435 = vsel %vm120, %v2418, 0
  %v2437 = vsel %vm120, %v2421, 0
  %v2439 = vsel %vm120, %v2424, 0
  %2441 = vmatprep.subr.bf16.mxu0 0
  %2442 = vmatpush1.bf16.msra.mxu0 0
  %2443 = vmatprep.subr.bf16.mxu0 0
  %2444 = vmatpush1.bf16.msra.mxu0 0
  %2445 = vmatprep.subr.bf16.mxu0 0
  %2446 = vmatpush1.bf16.msra.mxu0 0
  %2447 = vmatprep.subr.bf16.mxu0 0
  %2448 = vmatpush1.bf16.msra.mxu0 0
  %2449 = vmatprep.subr.bf16.mxu0 0
  %2450 = vmatpush1.bf16.msra.mxu0 0
  %2451 = vmatprep.subr.bf16.mxu0 0
  %2452 = vmatpush1.bf16.msra.mxu0 0
  %2453 = vmatprep.subr.bf16.mxu0 0
  %2454 = vmatpush1.bf16.msra.mxu0 %v948
  %2455 = vmatprep.subr.bf16.mxu0 0
  %2456 = vmatpush1.bf16.msra.mxu0 %v928
  %2457 = vmatprep.subr.bf16.mxu0 0
  %2458 = vmatpush2.bf16.msra.mxu0 0
  %2459 = vmatprep.subr.bf16.mxu0 0
  %2460 = vmatpush2.bf16.msra.mxu0 0
  %2461 = vmatprep.subr.bf16.mxu0 0
  %2462 = vmatpush2.bf16.msra.mxu0 0
  %2463 = vmatprep.subr.bf16.mxu0 0
  %2464 = vmatpush2.bf16.msra.mxu0 0
  %2465 = vmatprep.subr.bf16.mxu0 0
  %2466 = vmatpush2.bf16.msra.mxu0 0
  %2467 = vmatprep.subr.bf16.mxu0 0
  %2468 = vmatpush2.bf16.msra.mxu0 0
  %2469 = vmatprep.subr.bf16.mxu0 0
  %2470 = vmatpush2.bf16.msra.mxu0 0
  %2471 = vmatprep.subr.bf16.mxu0 0
  %2472 = vmatpush2.bf16.msra.mxu0 0
  %2473 = vmatprep.mubr.bf16.mxu0 0
  %2474 = vmatmul.mubr.bf16.gmra.mxu0 %v2425
  %v2475 = vpop.f32.mrf.mxu0
  %v2476 = vadd.f32 %v303, %v2475
  %v2477 = vpop.f32.mrf.mxu0
  %v2478 = vpop.f32.mrf.mxu0
  %v2479 = vadd.f32 %v306, %v2478
  %v2480 = vpop.f32.mrf.mxu0
  %2481 = vmatprep.mubr.bf16.mxu0 0
  %2482 = vmatmul.mubr.bf16.gmra.mxu0 %v2427
  %v2483 = vpop.f32.mrf.mxu0
  %v2484 = vadd.f32 %v311, %v2483
  %v2485 = vpop.f32.mrf.mxu0
  %v2486 = vpop.f32.mrf.mxu0
  %v2487 = vadd.f32 %v314, %v2486
  %v2488 = vpop.f32.mrf.mxu0
  %2489 = vmatprep.mubr.bf16.mxu0 0
  %2490 = vmatmul.mubr.bf16.gmra.mxu0 %v2429
  %v2491 = vpop.f32.mrf.mxu0
  %v2492 = vadd.f32 %v319, %v2491
  %v2493 = vpop.f32.mrf.mxu0
  %v2494 = vpop.f32.mrf.mxu0
  %v2495 = vadd.f32 %v322, %v2494
  %v2496 = vpop.f32.mrf.mxu0
  %2497 = vmatprep.mubr.bf16.mxu0 0
  %2498 = vmatmul.mubr.bf16.gmra.mxu0 %v2431
  %v2499 = vpop.f32.mrf.mxu0
  %v2500 = vadd.f32 %v327, %v2499
  %v2501 = vpop.f32.mrf.mxu0
  %v2502 = vpop.f32.mrf.mxu0
  %v2503 = vadd.f32 %v330, %v2502
  %v2504 = vpop.f32.mrf.mxu0
  %2505 = vmatprep.mubr.bf16.mxu0 0
  %2506 = vmatmul.mubr.bf16.gmra.mxu0 %v2433
  %v2507 = vpop.f32.mrf.mxu0
  %v2508 = vadd.f32 %v335, %v2507
  %v2509 = vpop.f32.mrf.mxu0
  %v2510 = vpop.f32.mrf.mxu0
  %v2511 = vadd.f32 %v338, %v2510
  %v2512 = vpop.f32.mrf.mxu0
  %2513 = vmatprep.mubr.bf16.mxu0 0
  %2514 = vmatmul.mubr.bf16.gmra.mxu0 %v2435
  %v2515 = vpop.f32.mrf.mxu0
  %v2516 = vadd.f32 %v343, %v2515
  %v2517 = vpop.f32.mrf.mxu0
  %v2518 = vpop.f32.mrf.mxu0
  %v2519 = vadd.f32 %v346, %v2518
  %v2520 = vpop.f32.mrf.mxu0
  %2521 = vmatprep.mubr.bf16.mxu0 0
  %2522 = vmatmul.mubr.bf16.gmra.mxu0 %v2437
  %v2523 = vpop.f32.mrf.mxu0
  %v2524 = vadd.f32 %v351, %v2523
  %v2525 = vpop.f32.mrf.mxu0
  %v2526 = vpop.f32.mrf.mxu0
  %v2527 = vadd.f32 %v354, %v2526
  %v2528 = vpop.f32.mrf.mxu0
  %2529 = vmatprep.mubr.bf16.mxu0 0
  %2530 = vmatmul.mubr.bf16.gmra.mxu0 %v2439
  %v2531 = vpop.f32.mrf.mxu0
  %v2532 = vadd.f32 %v359, %v2531
  %v2533 = vpop.f32.mrf.mxu0
  %v2534 = vpop.f32.mrf.mxu0
  %v2535 = vadd.f32 %v362, %v2534
  %v2536 = vpop.f32.mrf.mxu0
  %2537 = vdwg.mxu0
  %v2538 = vmax.f32 %v2476, 0.0
  %v2539 = vmax.f32 %v2479, 0.0
  %v2540 = vmax.f32 %v2484, 0.0
  %v2541 = vmax.f32 %v2487, 0.0
  %v2542 = vmax.f32 %v2492, 0.0
  %v2543 = vmax.f32 %v2495, 0.0
  %v2544 = vmax.f32 %v2500, 0.0
  %v2545 = vmax.f32 %v2503, 0.0
  %v2546 = vmax.f32 %v2508, 0.0
  %v2547 = vmax.f32 %v2511, 0.0
  %v2548 = vmax.f32 %v2516, 0.0
  %v2549 = vmax.f32 %v2519, 0.0
  %v2550 = vmax.f32 %v2524, 0.0
  %v2551 = vmax.f32 %v2527, 0.0
  %v2552 = vmax.f32 %v2532, 0.0
  %v2553 = vmax.f32 %v2535, 0.0
  %v2554 = vpack.c.bf16 %v2539, %v2538
  %v2555 = vpack.c.bf16 %v2541, %v2540
  %v2556 = vpack.c.bf16 %v2543, %v2542
  %v2557 = vpack.c.bf16 %v2545, %v2544
  %v2558 = vpack.c.bf16 %v2547, %v2546
  %v2559 = vpack.c.bf16 %v2549, %v2548
  %v2560 = vpack.c.bf16 %v2551, %v2550
  %v2561 = vpack.c.bf16 %v2553, %v2552
  %2570 = vrot.lane.b32.xlu0 %v2369, 12
  %v2571 = vpop.permute.xlu0 %2570
  %2572 = vrot.lane.b32.xlu0 %v2370, 12
  %v2573 = vpop.permute.xlu0 %2572
  %2574 = vrot.lane.b32.xlu0 %v2371, 12
  %v2575 = vpop.permute.xlu0 %2574
  %2576 = vrot.lane.b32.xlu0 %v2372, 12
  %v2577 = vpop.permute.xlu0 %2576
  %2578 = vrot.lane.b32.xlu0 %v2373, 12
  %v2579 = vpop.permute.xlu0 %2578
  %2580 = vrot.lane.b32.xlu0 %v2374, 12
  %v2581 = vpop.permute.xlu0 %2580
  %2582 = vrot.lane.b32.xlu0 %v2375, 12
  %v2583 = vpop.permute.xlu0 %2582
  %2584 = vrot.lane.b32.xlu0 %v2376, 12
  %v2585 = vpop.permute.xlu0 %2584
  %2586 = vrot.lane.b32.xlu0 %v2224, 24
  %v2587 = vpop.permute.xlu0 %2586
  %2588 = vrot.lane.b32.xlu0 %v2225, 24
  %v2589 = vpop.permute.xlu0 %2588
  %2590 = vrot.lane.b32.xlu0 %v2226, 24
  %v2591 = vpop.permute.xlu0 %2590
  %2592 = vrot.lane.b32.xlu0 %v2227, 24
  %v2593 = vpop.permute.xlu0 %2592
  %2594 = vrot.lane.b32.xlu0 %v2228, 24
  %v2595 = vpop.permute.xlu0 %2594
  %2596 = vrot.lane.b32.xlu0 %v2229, 24
  %v2597 = vpop.permute.xlu0 %2596
  %2598 = vrot.lane.b32.xlu0 %v2230, 24
  %v2599 = vpop.permute.xlu0 %2598
  %2600 = vrot.lane.b32.xlu0 %v2231, 24
  %v2601 = vpop.permute.xlu0 %2600
  %v2604 = vsel %vm722, %v2554, %v2571
  %v2607 = vsel %vm722, %v2555, %v2573
  %v2610 = vsel %vm722, %v2556, %v2575
  %v2613 = vsel %vm722, %v2557, %v2577
  %v2616 = vsel %vm722, %v2558, %v2579
  %v2619 = vsel %vm722, %v2559, %v2581
  %v2622 = vsel %vm722, %v2560, %v2583
  %v2625 = vsel %vm722, %v2561, %v2585
  %v2627 = vsel %vm120, %v2604, %v2587
  %v2629 = vsel %vm120, %v2607, %v2589
  %v2631 = vsel %vm120, %v2610, %v2591
  %v2633 = vsel %vm120, %v2613, %v2593
  %v2635 = vsel %vm120, %v2616, %v2595
  %v2637 = vsel %vm120, %v2619, %v2597
  %v2639 = vsel %vm120, %v2622, %v2599
  %v2641 = vsel %vm120, %v2625, %v2601
  %v2642 = vsel %vm1171, %v2627, 0
  %v2644 = vsel %vm1171, %v2629, 0
  %v2646 = vsel %vm1171, %v2631, 0
  %v2648 = vsel %vm1171, %v2633, 0
  %v2650 = vsel %vm1171, %v2635, 0
  %v2652 = vsel %vm1171, %v2637, 0
  %v2654 = vsel %vm1171, %v2639, 0
  %v2656 = vsel %vm1171, %v2641, 0
  %2658 = vmatprep.subr.bf16.mxu0 0
  %2659 = vmatpush1.bf16.msra.mxu0 0
  %2660 = vmatprep.subr.bf16.mxu0 0
  %2661 = vmatpush1.bf16.msra.mxu0 0
  %2662 = vmatprep.subr.bf16.mxu0 0
  %2663 = vmatpush1.bf16.msra.mxu0 0
  %2664 = vmatprep.subr.bf16.mxu0 0
  %2665 = vmatpush1.bf16.msra.mxu0 0
  %2666 = vmatprep.subr.bf16.mxu0 0
  %2667 = vmatpush1.bf16.msra.mxu0 0
  %2668 = vmatprep.subr.bf16.mxu0 0
  %2669 = vmatpush1.bf16.msra.mxu0 %v1190
  %2670 = vmatprep.subr.bf16.mxu0 0
  %2671 = vmatpush1.bf16.msra.mxu0 %v1167
  %2672 = vmatprep.subr.bf16.mxu0 0
  %2673 = vmatpush1.bf16.msra.mxu0 %v1166
  %2674 = vmatprep.subr.bf16.mxu0 0
  %2675 = vmatpush2.bf16.msra.mxu0 0
  %2676 = vmatprep.subr.bf16.mxu0 0
  %2677 = vmatpush2.bf16.msra.mxu0 0
  %2678 = vmatprep.subr.bf16.mxu0 0
  %2679 = vmatpush2.bf16.msra.mxu0 0
  %2680 = vmatprep.subr.bf16.mxu0 0
  %2681 = vmatpush2.bf16.msra.mxu0 0
  %2682 = vmatprep.subr.bf16.mxu0 0
  %2683 = vmatpush2.bf16.msra.mxu0 0
  %2684 = vmatprep.subr.bf16.mxu0 0
  %2685 = vmatpush2.bf16.msra.mxu0 0
  %2686 = vmatprep.subr.bf16.mxu0 0
  %2687 = vmatpush2.bf16.msra.mxu0 0
  %2688 = vmatprep.subr.bf16.mxu0 0
  %2689 = vmatpush2.bf16.msra.mxu0 0
  %2690 = vmatprep.mubr.bf16.mxu0 0
  %2691 = vmatmul.mubr.bf16.gmra.mxu0 %v2642
  %v2692 = vpop.f32.mrf.mxu0
  %v2693 = vadd.f32 0.0, %v2692
  %v2694 = vpop.f32.mrf.mxu0
  %v2695 = vpop.f32.mrf.mxu0
  %v2696 = vadd.f32 0.0, %v2695
  %v2697 = vpop.f32.mrf.mxu0
  %2698 = vmatprep.mubr.bf16.mxu0 0
  %2699 = vmatmul.mubr.bf16.gmra.mxu0 %v2644
  %v2700 = vpop.f32.mrf.mxu0
  %v2701 = vadd.f32 0.0, %v2700
  %v2702 = vpop.f32.mrf.mxu0
  %v2703 = vpop.f32.mrf.mxu0
  %v2704 = vadd.f32 0.0, %v2703
  %v2705 = vpop.f32.mrf.mxu0
  %2706 = vmatprep.mubr.bf16.mxu0 0
  %2707 = vmatmul.mubr.bf16.gmra.mxu0 %v2646
  %v2708 = vpop.f32.mrf.mxu0
  %v2709 = vadd.f32 0.0, %v2708
  %v2710 = vpop.f32.mrf.mxu0
  %v2711 = vpop.f32.mrf.mxu0
  %v2712 = vadd.f32 0.0, %v2711
  %v2713 = vpop.f32.mrf.mxu0
  %2714 = vmatprep.mubr.bf16.mxu0 0
  %2715 = vmatmul.mubr.bf16.gmra.mxu0 %v2648
  %v2716 = vpop.f32.mrf.mxu0
  %v2717 = vadd.f32 0.0, %v2716
  %v2718 = vpop.f32.mrf.mxu0
  %v2719 = vpop.f32.mrf.mxu0
  %v2720 = vadd.f32 0.0, %v2719
  %v2721 = vpop.f32.mrf.mxu0
  %2722 = vmatprep.mubr.bf16.mxu0 0
  %2723 = vmatmul.mubr.bf16.gmra.mxu0 %v2650
  %v2724 = vpop.f32.mrf.mxu0
  %v2725 = vadd.f32 0.0, %v2724
  %v2726 = vpop.f32.mrf.mxu0
  %v2727 = vpop.f32.mrf.mxu0
  %v2728 = vadd.f32 0.0, %v2727
  %v2729 = vpop.f32.mrf.mxu0
  %2730 = vmatprep.mubr.bf16.mxu0 0
  %2731 = vmatmul.mubr.bf16.gmra.mxu0 %v2652
  %v2732 = vpop.f32.mrf.mxu0
  %v2733 = vadd.f32 0.0, %v2732
  %v2734 = vpop.f32.mrf.mxu0
  %v2735 = vpop.f32.mrf.mxu0
  %v2736 = vadd.f32 0.0, %v2735
  %v2737 = vpop.f32.mrf.mxu0
  %2738 = vmatprep.mubr.bf16.mxu0 0
  %2739 = vmatmul.mubr.bf16.gmra.mxu0 %v2654
  %v2740 = vpop.f32.mrf.mxu0
  %v2741 = vadd.f32 0.0, %v2740
  %v2742 = vpop.f32.mrf.mxu0
  %v2743 = vpop.f32.mrf.mxu0
  %v2744 = vadd.f32 0.0, %v2743
  %v2745 = vpop.f32.mrf.mxu0
  %2746 = vmatprep.mubr.bf16.mxu0 0
  %2747 = vmatmul.mubr.bf16.gmra.mxu0 %v2656
  %v2748 = vpop.f32.mrf.mxu0
  %v2749 = vadd.f32 0.0, %v2748
  %v2750 = vpop.f32.mrf.mxu0
  %v2751 = vpop.f32.mrf.mxu0
  %v2752 = vadd.f32 0.0, %v2751
  %v2753 = vpop.f32.mrf.mxu0
  %2754 = vdwg.mxu0
  %v2755 = vmax.f32 %v2014, %v2693
  %v2756 = vmax.f32 %v2015, %v2696
  %v2757 = vmax.f32 %v2016, %v2701
  %v2758 = vmax.f32 %v2017, %v2704
  %v2759 = vmax.f32 %v2018, %v2709
  %v2760 = vmax.f32 %v2019, %v2712
  %v2761 = vmax.f32 %v2020, %v2717
  %v2762 = vmax.f32 %v2021, %v2720
  %v2763 = vmax.f32 %v2022, %v2725
  %v2764 = vmax.f32 %v2023, %v2728
  %v2765 = vmax.f32 %v2024, %v2733
  %v2766 = vmax.f32 %v2025, %v2736
  %v2767 = vmax.f32 %v2026, %v2741
  %v2768 = vmax.f32 %v2027, %v2744
  %v2769 = vmax.f32 %v2028, %v2749
  %v2770 = vmax.f32 %v2029, %v2752
  %s2771 = scalar_lea.vmem %s0, 192
  %v2772 = vld [vmem:[%s2771] sm:$0xf]
  %v2773 = vld [vmem:[%s2771 + $0x4] sm:$0xf]
  %v2774 = vld [vmem:[%s2771 + $0x8] sm:$0xf]
  %v2775 = vld [vmem:[%s2771 + $0xc] sm:$0xf]
  %v2776 = vld [vmem:[%s2771 + $0x10] sm:$0xf]
  %v2777 = vld [vmem:[%s2771 + $0x14] sm:$0xf]
  %v2778 = vld [vmem:[%s2771 + $0x18] sm:$0xf]
  %v2779 = vld [vmem:[%s2771 + $0x1c] sm:$0xf]
  %v2780 = vld [vmem:[%s2771 + $0x20] sm:$0xf]
  %v2781 = vld [vmem:[%s2771 + $0x24] sm:$0xf]
  %v2782 = vld [vmem:[%s2771 + $0x28] sm:$0xf]
  %v2783 = vld [vmem:[%s2771 + $0x2c] sm:$0xf]
  %v2784 = vld [vmem:[%s2771 + $0x30] sm:$0xf]
  %v2785 = vld [vmem:[%s2771 + $0x34] sm:$0xf]
  %v2786 = vld [vmem:[%s2771 + $0x38] sm:$0xf]
  %v2787 = vld [vmem:[%s2771 + $0x3c] sm:$0xf]
  %v2804 = vunpack.c.l.b16 %v2772
  %v2805 = vunpack.c.l.b16 %v2773
  %v2806 = vunpack.c.l.b16 %v2774
  %v2807 = vunpack.c.l.b16 %v2775
  %v2808 = vunpack.c.l.b16 %v2776
  %v2809 = vunpack.c.l.b16 %v2777
  %v2810 = vunpack.c.l.b16 %v2778
  %v2811 = vunpack.c.l.b16 %v2779
  %v2812 = vunpack.c.l.b16 %v2780
  %v2813 = vunpack.c.l.b16 %v2781
  %v2814 = vunpack.c.l.b16 %v2782
  %v2815 = vunpack.c.l.b16 %v2783
  %v2816 = vunpack.c.l.b16 %v2784
  %v2817 = vunpack.c.l.b16 %v2785
  %v2818 = vunpack.c.l.b16 %v2786
  %v2819 = vunpack.c.l.b16 %v2787
  %v2820 = vpack.c.b16 %v2805, %v2804
  %v2821 = vpack.c.b16 %v2807, %v2806
  %v2822 = vpack.c.b16 %v2809, %v2808
  %v2823 = vpack.c.b16 %v2811, %v2810
  %v2824 = vpack.c.b16 %v2813, %v2812
  %v2825 = vpack.c.b16 %v2815, %v2814
  %v2826 = vpack.c.b16 %v2817, %v2816
  %v2827 = vpack.c.b16 %v2819, %v2818
  %v2829 = vsel %vm562, %v2820, 0
  %v2832 = vsel %vm562, %v2821, 0
  %v2835 = vsel %vm562, %v2822, 0
  %v2838 = vsel %vm562, %v2823, 0
  %v2841 = vsel %vm562, %v2824, 0
  %v2844 = vsel %vm562, %v2825, 0
  %v2847 = vsel %vm562, %v2826, 0
  %v2850 = vsel %vm562, %v2827, 0
  %2852 = vmatprep.subr.bf16.mxu0 0
  %2853 = vmatpush1.bf16.msra.mxu0 0
  %2854 = vmatprep.subr.bf16.mxu0 0
  %2855 = vmatpush1.bf16.msra.mxu0 0
  %2856 = vmatprep.subr.bf16.mxu0 0
  %2857 = vmatpush1.bf16.msra.mxu0 0
  %2858 = vmatprep.subr.bf16.mxu0 0
  %2859 = vmatpush1.bf16.msra.mxu0 0
  %2860 = vmatprep.subr.bf16.mxu0 0
  %2861 = vmatpush1.bf16.msra.mxu0 0
  %2862 = vmatprep.subr.bf16.mxu0 0
  %2863 = vmatpush1.bf16.msra.mxu0 0
  %2864 = vmatprep.subr.bf16.mxu0 0
  %2865 = vmatpush1.bf16.msra.mxu0 %v592
  %2866 = vmatprep.subr.bf16.mxu0 0
  %2867 = vmatpush1.bf16.msra.mxu0 %v559
  %2868 = vmatprep.subr.bf16.mxu0 0
  %2869 = vmatpush2.bf16.msra.mxu0 0
  %2870 = vmatprep.subr.bf16.mxu0 0
  %2871 = vmatpush2.bf16.msra.mxu0 0
  %2872 = vmatprep.subr.bf16.mxu0 0
  %2873 = vmatpush2.bf16.msra.mxu0 0
  %2874 = vmatprep.subr.bf16.mxu0 0
  %2875 = vmatpush2.bf16.msra.mxu0 0
  %2876 = vmatprep.subr.bf16.mxu0 0
  %2877 = vmatpush2.bf16.msra.mxu0 0
  %2878 = vmatprep.subr.bf16.mxu0 0
  %2879 = vmatpush2.bf16.msra.mxu0 0
  %2880 = vmatprep.subr.bf16.mxu0 0
  %2881 = vmatpush2.bf16.msra.mxu0 0
  %2882 = vmatprep.subr.bf16.mxu0 0
  %2883 = vmatpush2.bf16.msra.mxu0 0
  %2884 = vmatprep.mubr.bf16.mxu0 0
  %2885 = vmatmul.mubr.bf16.gmra.mxu0 %v2829
  %v2886 = vpop.f32.mrf.mxu0
  %v2887 = vadd.f32 %v509, %v2886
  %v2888 = vpop.f32.mrf.mxu0
  %v2889 = vpop.f32.mrf.mxu0
  %v2890 = vadd.f32 %v509, %v2889
  %v2891 = vpop.f32.mrf.mxu0
  %2892 = vmatprep.mubr.bf16.mxu0 0
  %2893 = vmatmul.mubr.bf16.gmra.mxu0 %v2832
  %v2894 = vpop.f32.mrf.mxu0
  %v2895 = vadd.f32 %v509, %v2894
  %v2896 = vpop.f32.mrf.mxu0
  %v2897 = vpop.f32.mrf.mxu0
  %v2898 = vadd.f32 %v509, %v2897
  %v2899 = vpop.f32.mrf.mxu0
  %2900 = vmatprep.mubr.bf16.mxu0 0
  %2901 = vmatmul.mubr.bf16.gmra.mxu0 %v2835
  %v2902 = vpop.f32.mrf.mxu0
  %v2903 = vadd.f32 %v509, %v2902
  %v2904 = vpop.f32.mrf.mxu0
  %v2905 = vpop.f32.mrf.mxu0
  %v2906 = vadd.f32 %v509, %v2905
  %v2907 = vpop.f32.mrf.mxu0
  %2908 = vmatprep.mubr.bf16.mxu0 0
  %2909 = vmatmul.mubr.bf16.gmra.mxu0 %v2838
  %v2910 = vpop.f32.mrf.mxu0
  %v2911 = vadd.f32 %v509, %v2910
  %v2912 = vpop.f32.mrf.mxu0
  %v2913 = vpop.f32.mrf.mxu0
  %v2914 = vadd.f32 %v509, %v2913
  %v2915 = vpop.f32.mrf.mxu0
  %2916 = vmatprep.mubr.bf16.mxu0 0
  %2917 = vmatmul.mubr.bf16.gmra.mxu0 %v2841
  %v2918 = vpop.f32.mrf.mxu0
  %v2919 = vadd.f32 %v509, %v2918
  %v2920 = vpop.f32.mrf.mxu0
  %v2921 = vpop.f32.mrf.mxu0
  %v2922 = vadd.f32 %v509, %v2921
  %v2923 = vpop.f32.mrf.mxu0
  %2924 = vmatprep.mubr.bf16.mxu0 0
  %2925 = vmatmul.mubr.bf16.gmra.mxu0 %v2844
  %v2926 = vpop.f32.mrf.mxu0
  %v2927 = vadd.f32 %v509, %v2926
  %v2928 = vpop.f32.mrf.mxu0
  %v2929 = vpop.f32.mrf.mxu0
  %v2930 = vadd.f32 %v509, %v2929
  %v2931 = vpop.f32.mrf.mxu0
  %2932 = vmatprep.mubr.bf16.mxu0 0
  %2933 = vmatmul.mubr.bf16.gmra.mxu0 %v2847
  %v2934 = vpop.f32.mrf.mxu0
  %v2935 = vadd.f32 %v509, %v2934
  %v2936 = vpop.f32.mrf.mxu0
  %v2937 = vpop.f32.mrf.mxu0
  %v2938 = vadd.f32 %v509, %v2937
  %v2939 = vpop.f32.mrf.mxu0
  %2940 = vmatprep.mubr.bf16.mxu0 0
  %2941 = vmatmul.mubr.bf16.gmra.mxu0 %v2850
  %v2942 = vpop.f32.mrf.mxu0
  %v2943 = vadd.f32 %v509, %v2942
  %v2944 = vpop.f32.mrf.mxu0
  %v2945 = vpop.f32.mrf.mxu0
  %v2946 = vadd.f32 %v509, %v2945
  %v2947 = vpop.f32.mrf.mxu0
  %2948 = vdwg.mxu0
  %v2949 = vmax.f32 %v2887, 0.0
  %v2950 = vmax.f32 %v2890, 0.0
  %v2951 = vmax.f32 %v2895, 0.0
  %v2952 = vmax.f32 %v2898, 0.0
  %v2953 = vmax.f32 %v2903, 0.0
  %v2954 = vmax.f32 %v2906, 0.0
  %v2955 = vmax.f32 %v2911, 0.0
  %v2956 = vmax.f32 %v2914, 0.0
  %v2957 = vmax.f32 %v2919, 0.0
  %v2958 = vmax.f32 %v2922, 0.0
  %v2959 = vmax.f32 %v2927, 0.0
  %v2960 = vmax.f32 %v2930, 0.0
  %v2961 = vmax.f32 %v2935, 0.0
  %v2962 = vmax.f32 %v2938, 0.0
  %v2963 = vmax.f32 %v2943, 0.0
  %v2964 = vmax.f32 %v2946, 0.0
  %v2965 = vpack.c.bf16 %v2950, %v2949
  %v2966 = vpack.c.bf16 %v2952, %v2951
  %v2967 = vpack.c.bf16 %v2954, %v2953
  %v2968 = vpack.c.bf16 %v2956, %v2955
  %v2969 = vpack.c.bf16 %v2958, %v2957
  %v2970 = vpack.c.bf16 %v2960, %v2959
  %v2971 = vpack.c.bf16 %v2962, %v2961
  %v2972 = vpack.c.bf16 %v2964, %v2963
  %v2974 = vsel %vm722, %v2965, 0
  %v2977 = vsel %vm722, %v2966, 0
  %v2980 = vsel %vm722, %v2967, 0
  %v2983 = vsel %vm722, %v2968, 0
  %v2986 = vsel %vm722, %v2969, 0
  %v2989 = vsel %vm722, %v2970, 0
  %v2992 = vsel %vm722, %v2971, 0
  %v2995 = vsel %vm722, %v2972, 0
  %2997 = vmatprep.subr.bf16.mxu0 0
  %2998 = vmatpush1.bf16.msra.mxu0 0
  %2999 = vmatprep.subr.bf16.mxu0 0
  %3000 = vmatpush1.bf16.msra.mxu0 0
  %3001 = vmatprep.subr.bf16.mxu0 0
  %3002 = vmatpush1.bf16.msra.mxu0 0
  %3003 = vmatprep.subr.bf16.mxu0 0
  %3004 = vmatpush1.bf16.msra.mxu0 0
  %3005 = vmatprep.subr.bf16.mxu0 0
  %3006 = vmatpush1.bf16.msra.mxu0 0
  %3007 = vmatprep.subr.bf16.mxu0 0
  %3008 = vmatpush1.bf16.msra.mxu0 0
  %3009 = vmatprep.subr.bf16.mxu0 0
  %3010 = vmatpush1.bf16.msra.mxu0 0
  %3011 = vmatprep.subr.bf16.mxu0 0
  %3012 = vmatpush1.bf16.msra.mxu0 %v748
  %3013 = vmatprep.subr.bf16.mxu0 0
  %3014 = vmatpush2.bf16.msra.mxu0 0
  %3015 = vmatprep.subr.bf16.mxu0 0
  %3016 = vmatpush2.bf16.msra.mxu0 0
  %3017 = vmatprep.subr.bf16.mxu0 0
  %3018 = vmatpush2.bf16.msra.mxu0 0
  %3019 = vmatprep.subr.bf16.mxu0 0
  %3020 = vmatpush2.bf16.msra.mxu0 0
  %3021 = vmatprep.subr.bf16.mxu0 0
  %3022 = vmatpush2.bf16.msra.mxu0 0
  %3023 = vmatprep.subr.bf16.mxu0 0
  %3024 = vmatpush2.bf16.msra.mxu0 0
  %3025 = vmatprep.subr.bf16.mxu0 0
  %3026 = vmatpush2.bf16.msra.mxu0 0
  %3027 = vmatprep.subr.bf16.mxu0 0
  %3028 = vmatpush2.bf16.msra.mxu0 0
  %3029 = vmatprep.mubr.bf16.mxu0 0
  %3030 = vmatmul.mubr.bf16.gmra.mxu0 %v2974
  %v3031 = vpop.f32.mrf.mxu0
  %v3032 = vadd.f32 %v184, %v3031
  %v3033 = vpop.f32.mrf.mxu0
  %v3034 = vpop.f32.mrf.mxu0
  %v3035 = vadd.f32 %v187, %v3034
  %v3036 = vpop.f32.mrf.mxu0
  %3037 = vmatprep.mubr.bf16.mxu0 0
  %3038 = vmatmul.mubr.bf16.gmra.mxu0 %v2977
  %v3039 = vpop.f32.mrf.mxu0
  %v3040 = vadd.f32 %v192, %v3039
  %v3041 = vpop.f32.mrf.mxu0
  %v3042 = vpop.f32.mrf.mxu0
  %v3043 = vadd.f32 %v195, %v3042
  %v3044 = vpop.f32.mrf.mxu0
  %3045 = vmatprep.mubr.bf16.mxu0 0
  %3046 = vmatmul.mubr.bf16.gmra.mxu0 %v2980
  %v3047 = vpop.f32.mrf.mxu0
  %v3048 = vadd.f32 %v200, %v3047
  %v3049 = vpop.f32.mrf.mxu0
  %v3050 = vpop.f32.mrf.mxu0
  %v3051 = vadd.f32 %v203, %v3050
  %v3052 = vpop.f32.mrf.mxu0
  %3053 = vmatprep.mubr.bf16.mxu0 0
  %3054 = vmatmul.mubr.bf16.gmra.mxu0 %v2983
  %v3055 = vpop.f32.mrf.mxu0
  %v3056 = vadd.f32 %v208, %v3055
  %v3057 = vpop.f32.mrf.mxu0
  %v3058 = vpop.f32.mrf.mxu0
  %v3059 = vadd.f32 %v211, %v3058
  %v3060 = vpop.f32.mrf.mxu0
  %3061 = vmatprep.mubr.bf16.mxu0 0
  %3062 = vmatmul.mubr.bf16.gmra.mxu0 %v2986
  %v3063 = vpop.f32.mrf.mxu0
  %v3064 = vadd.f32 %v216, %v3063
  %v3065 = vpop.f32.mrf.mxu0
  %v3066 = vpop.f32.mrf.mxu0
  %v3067 = vadd.f32 %v219, %v3066
  %v3068 = vpop.f32.mrf.mxu0
  %3069 = vmatprep.mubr.bf16.mxu0 0
  %3070 = vmatmul.mubr.bf16.gmra.mxu0 %v2989
  %v3071 = vpop.f32.mrf.mxu0
  %v3072 = vadd.f32 %v224, %v3071
  %v3073 = vpop.f32.mrf.mxu0
  %v3074 = vpop.f32.mrf.mxu0
  %v3075 = vadd.f32 %v227, %v3074
  %v3076 = vpop.f32.mrf.mxu0
  %3077 = vmatprep.mubr.bf16.mxu0 0
  %3078 = vmatmul.mubr.bf16.gmra.mxu0 %v2992
  %v3079 = vpop.f32.mrf.mxu0
  %v3080 = vadd.f32 %v232, %v3079
  %v3081 = vpop.f32.mrf.mxu0
  %v3082 = vpop.f32.mrf.mxu0
  %v3083 = vadd.f32 %v235, %v3082
  %v3084 = vpop.f32.mrf.mxu0
  %3085 = vmatprep.mubr.bf16.mxu0 0
  %3086 = vmatmul.mubr.bf16.gmra.mxu0 %v2995
  %v3087 = vpop.f32.mrf.mxu0
  %v3088 = vadd.f32 %v240, %v3087
  %v3089 = vpop.f32.mrf.mxu0
  %v3090 = vpop.f32.mrf.mxu0
  %v3091 = vadd.f32 %v243, %v3090
  %v3092 = vpop.f32.mrf.mxu0
  %3093 = vdwg.mxu0
  %v3094 = vmax.f32 %v3032, 0.0
  %v3095 = vmax.f32 %v3035, 0.0
  %v3096 = vmax.f32 %v3040, 0.0
  %v3097 = vmax.f32 %v3043, 0.0
  %v3098 = vmax.f32 %v3048, 0.0
  %v3099 = vmax.f32 %v3051, 0.0
  %v3100 = vmax.f32 %v3056, 0.0
  %v3101 = vmax.f32 %v3059, 0.0
  %v3102 = vmax.f32 %v3064, 0.0
  %v3103 = vmax.f32 %v3067, 0.0
  %v3104 = vmax.f32 %v3072, 0.0
  %v3105 = vmax.f32 %v3075, 0.0
  %v3106 = vmax.f32 %v3080, 0.0
  %v3107 = vmax.f32 %v3083, 0.0
  %v3108 = vmax.f32 %v3088, 0.0
  %v3109 = vmax.f32 %v3091, 0.0
  %v3110 = vpack.c.bf16 %v3095, %v3094
  %v3111 = vpack.c.bf16 %v3097, %v3096
  %v3112 = vpack.c.bf16 %v3099, %v3098
  %v3113 = vpack.c.bf16 %v3101, %v3100
  %v3114 = vpack.c.bf16 %v3103, %v3102
  %v3115 = vpack.c.bf16 %v3105, %v3104
  %v3116 = vpack.c.bf16 %v3107, %v3106
  %v3117 = vpack.c.bf16 %v3109, %v3108
  %3126 = vrot.lane.b32.xlu0 %v2965, 12
  %v3127 = vpop.permute.xlu0 %3126
  %3128 = vrot.lane.b32.xlu0 %v2966, 12
  %v3129 = vpop.permute.xlu0 %3128
  %3130 = vrot.lane.b32.xlu0 %v2967, 12
  %v3131 = vpop.permute.xlu0 %3130
  %3132 = vrot.lane.b32.xlu0 %v2968, 12
  %v3133 = vpop.permute.xlu0 %3132
  %3134 = vrot.lane.b32.xlu0 %v2969, 12
  %v3135 = vpop.permute.xlu0 %3134
  %3136 = vrot.lane.b32.xlu0 %v2970, 12
  %v3137 = vpop.permute.xlu0 %3136
  %3138 = vrot.lane.b32.xlu0 %v2971, 12
  %v3139 = vpop.permute.xlu0 %3138
  %3140 = vrot.lane.b32.xlu0 %v2972, 12
  %v3141 = vpop.permute.xlu0 %3140
  %v3144 = vsel %vm722, %v3110, %v3127
  %v3147 = vsel %vm722, %v3111, %v3129
  %v3150 = vsel %vm722, %v3112, %v3131
  %v3153 = vsel %vm722, %v3113, %v3133
  %v3156 = vsel %vm722, %v3114, %v3135
  %v3159 = vsel %vm722, %v3115, %v3137
  %v3162 = vsel %vm722, %v3116, %v3139
  %v3165 = vsel %vm722, %v3117, %v3141
  %v3166 = vsel %vm120, %v3144, 0
  %v3168 = vsel %vm120, %v3147, 0
  %v3170 = vsel %vm120, %v3150, 0
  %v3172 = vsel %vm120, %v3153, 0
  %v3174 = vsel %vm120, %v3156, 0
  %v3176 = vsel %vm120, %v3159, 0
  %v3178 = vsel %vm120, %v3162, 0
  %v3180 = vsel %vm120, %v3165, 0
  %3182 = vmatprep.subr.bf16.mxu0 0
  %3183 = vmatpush1.bf16.msra.mxu0 0
  %3184 = vmatprep.subr.bf16.mxu0 0
  %3185 = vmatpush1.bf16.msra.mxu0 0
  %3186 = vmatprep.subr.bf16.mxu0 0
  %3187 = vmatpush1.bf16.msra.mxu0 0
  %3188 = vmatprep.subr.bf16.mxu0 0
  %3189 = vmatpush1.bf16.msra.mxu0 0
  %3190 = vmatprep.subr.bf16.mxu0 0
  %3191 = vmatpush1.bf16.msra.mxu0 0
  %3192 = vmatprep.subr.bf16.mxu0 0
  %3193 = vmatpush1.bf16.msra.mxu0 0
  %3194 = vmatprep.subr.bf16.mxu0 0
  %3195 = vmatpush1.bf16.msra.mxu0 %v948
  %3196 = vmatprep.subr.bf16.mxu0 0
  %3197 = vmatpush1.bf16.msra.mxu0 %v928
  %3198 = vmatprep.subr.bf16.mxu0 0
  %3199 = vmatpush2.bf16.msra.mxu0 0
  %3200 = vmatprep.subr.bf16.mxu0 0
  %3201 = vmatpush2.bf16.msra.mxu0 0
  %3202 = vmatprep.subr.bf16.mxu0 0
  %3203 = vmatpush2.bf16.msra.mxu0 0
  %3204 = vmatprep.subr.bf16.mxu0 0
  %3205 = vmatpush2.bf16.msra.mxu0 0
  %3206 = vmatprep.subr.bf16.mxu0 0
  %3207 = vmatpush2.bf16.msra.mxu0 0
  %3208 = vmatprep.subr.bf16.mxu0 0
  %3209 = vmatpush2.bf16.msra.mxu0 0
  %3210 = vmatprep.subr.bf16.mxu0 0
  %3211 = vmatpush2.bf16.msra.mxu0 0
  %3212 = vmatprep.subr.bf16.mxu0 0
  %3213 = vmatpush2.bf16.msra.mxu0 0
  %3214 = vmatprep.mubr.bf16.mxu0 0
  %3215 = vmatmul.mubr.bf16.gmra.mxu0 %v3166
  %v3216 = vpop.f32.mrf.mxu0
  %v3217 = vadd.f32 %v303, %v3216
  %v3218 = vpop.f32.mrf.mxu0
  %v3219 = vpop.f32.mrf.mxu0
  %v3220 = vadd.f32 %v306, %v3219
  %v3221 = vpop.f32.mrf.mxu0
  %3222 = vmatprep.mubr.bf16.mxu0 0
  %3223 = vmatmul.mubr.bf16.gmra.mxu0 %v3168
  %v3224 = vpop.f32.mrf.mxu0
  %v3225 = vadd.f32 %v311, %v3224
  %v3226 = vpop.f32.mrf.mxu0
  %v3227 = vpop.f32.mrf.mxu0
  %v3228 = vadd.f32 %v314, %v3227
  %v3229 = vpop.f32.mrf.mxu0
  %3230 = vmatprep.mubr.bf16.mxu0 0
  %3231 = vmatmul.mubr.bf16.gmra.mxu0 %v3170
  %v3232 = vpop.f32.mrf.mxu0
  %v3233 = vadd.f32 %v319, %v3232
  %v3234 = vpop.f32.mrf.mxu0
  %v3235 = vpop.f32.mrf.mxu0
  %v3236 = vadd.f32 %v322, %v3235
  %v3237 = vpop.f32.mrf.mxu0
  %3238 = vmatprep.mubr.bf16.mxu0 0
  %3239 = vmatmul.mubr.bf16.gmra.mxu0 %v3172
  %v3240 = vpop.f32.mrf.mxu0
  %v3241 = vadd.f32 %v327, %v3240
  %v3242 = vpop.f32.mrf.mxu0
  %v3243 = vpop.f32.mrf.mxu0
  %v3244 = vadd.f32 %v330, %v3243
  %v3245 = vpop.f32.mrf.mxu0
  %3246 = vmatprep.mubr.bf16.mxu0 0
  %3247 = vmatmul.mubr.bf16.gmra.mxu0 %v3174
  %v3248 = vpop.f32.mrf.mxu0
  %v3249 = vadd.f32 %v335, %v3248
  %v3250 = vpop.f32.mrf.mxu0
  %v3251 = vpop.f32.mrf.mxu0
  %v3252 = vadd.f32 %v338, %v3251
  %v3253 = vpop.f32.mrf.mxu0
  %3254 = vmatprep.mubr.bf16.mxu0 0
  %3255 = vmatmul.mubr.bf16.gmra.mxu0 %v3176
  %v3256 = vpop.f32.mrf.mxu0
  %v3257 = vadd.f32 %v343, %v3256
  %v3258 = vpop.f32.mrf.mxu0
  %v3259 = vpop.f32.mrf.mxu0
  %v3260 = vadd.f32 %v346, %v3259
  %v3261 = vpop.f32.mrf.mxu0
  %3262 = vmatprep.mubr.bf16.mxu0 0
  %3263 = vmatmul.mubr.bf16.gmra.mxu0 %v3178
  %v3264 = vpop.f32.mrf.mxu0
  %v3265 = vadd.f32 %v351, %v3264
  %v3266 = vpop.f32.mrf.mxu0
  %v3267 = vpop.f32.mrf.mxu0
  %v3268 = vadd.f32 %v354, %v3267
  %v3269 = vpop.f32.mrf.mxu0
  %3270 = vmatprep.mubr.bf16.mxu0 0
  %3271 = vmatmul.mubr.bf16.gmra.mxu0 %v3180
  %v3272 = vpop.f32.mrf.mxu0
  %v3273 = vadd.f32 %v359, %v3272
  %v3274 = vpop.f32.mrf.mxu0
  %v3275 = vpop.f32.mrf.mxu0
  %v3276 = vadd.f32 %v362, %v3275
  %v3277 = vpop.f32.mrf.mxu0
  %3278 = vdwg.mxu0
  %v3279 = vmax.f32 %v3217, 0.0
  %v3280 = vmax.f32 %v3220, 0.0
  %v3281 = vmax.f32 %v3225, 0.0
  %v3282 = vmax.f32 %v3228, 0.0
  %v3283 = vmax.f32 %v3233, 0.0
  %v3284 = vmax.f32 %v3236, 0.0
  %v3285 = vmax.f32 %v3241, 0.0
  %v3286 = vmax.f32 %v3244, 0.0
  %v3287 = vmax.f32 %v3249, 0.0
  %v3288 = vmax.f32 %v3252, 0.0
  %v3289 = vmax.f32 %v3257, 0.0
  %v3290 = vmax.f32 %v3260, 0.0
  %v3291 = vmax.f32 %v3265, 0.0
  %v3292 = vmax.f32 %v3268, 0.0
  %v3293 = vmax.f32 %v3273, 0.0
  %v3294 = vmax.f32 %v3276, 0.0
  %v3295 = vpack.c.bf16 %v3280, %v3279
  %v3296 = vpack.c.bf16 %v3282, %v3281
  %v3297 = vpack.c.bf16 %v3284, %v3283
  %v3298 = vpack.c.bf16 %v3286, %v3285
  %v3299 = vpack.c.bf16 %v3288, %v3287
  %v3300 = vpack.c.bf16 %v3290, %v3289
  %v3301 = vpack.c.bf16 %v3292, %v3291
  %v3302 = vpack.c.bf16 %v3294, %v3293
  %3311 = vrot.lane.b32.xlu0 %v3110, 12
  %v3312 = vpop.permute.xlu0 %3311
  %3313 = vrot.lane.b32.xlu0 %v3111, 12
  %v3314 = vpop.permute.xlu0 %3313
  %3315 = vrot.lane.b32.xlu0 %v3112, 12
  %v3316 = vpop.permute.xlu0 %3315
  %3317 = vrot.lane.b32.xlu0 %v3113, 12
  %v3318 = vpop.permute.xlu0 %3317
  %3319 = vrot.lane.b32.xlu0 %v3114, 12
  %v3320 = vpop.permute.xlu0 %3319
  %3321 = vrot.lane.b32.xlu0 %v3115, 12
  %v3322 = vpop.permute.xlu0 %3321
  %3323 = vrot.lane.b32.xlu0 %v3116, 12
  %v3324 = vpop.permute.xlu0 %3323
  %3325 = vrot.lane.b32.xlu0 %v3117, 12
  %v3326 = vpop.permute.xlu0 %3325
  %3327 = vrot.lane.b32.xlu0 %v2965, 24
  %v3328 = vpop.permute.xlu0 %3327
  %3329 = vrot.lane.b32.xlu0 %v2966, 24
  %v3330 = vpop.permute.xlu0 %3329
  %3331 = vrot.lane.b32.xlu0 %v2967, 24
  %v3332 = vpop.permute.xlu0 %3331
  %3333 = vrot.lane.b32.xlu0 %v2968, 24
  %v3334 = vpop.permute.xlu0 %3333
  %3335 = vrot.lane.b32.xlu0 %v2969, 24
  %v3336 = vpop.permute.xlu0 %3335
  %3337 = vrot.lane.b32.xlu0 %v2970, 24
  %v3338 = vpop.permute.xlu0 %3337
  %3339 = vrot.lane.b32.xlu0 %v2971, 24
  %v3340 = vpop.permute.xlu0 %3339
  %3341 = vrot.lane.b32.xlu0 %v2972, 24
  %v3342 = vpop.permute.xlu0 %3341
  %v3345 = vsel %vm722, %v3295, %v3312
  %v3348 = vsel %vm722, %v3296, %v3314
  %v3351 = vsel %vm722, %v3297, %v3316
  %v3354 = vsel %vm722, %v3298, %v3318
  %v3357 = vsel %vm722, %v3299, %v3320
  %v3360 = vsel %vm722, %v3300, %v3322
  %v3363 = vsel %vm722, %v3301, %v3324
  %v3366 = vsel %vm722, %v3302, %v3326
  %v3368 = vsel %vm120, %v3345, %v3328
  %v3370 = vsel %vm120, %v3348, %v3330
  %v3372 = vsel %vm120, %v3351, %v3332
  %v3374 = vsel %vm120, %v3354, %v3334
  %v3376 = vsel %vm120, %v3357, %v3336
  %v3378 = vsel %vm120, %v3360, %v3338
  %v3380 = vsel %vm120, %v3363, %v3340
  %v3382 = vsel %vm120, %v3366, %v3342
  %v3383 = vsel %vm1171, %v3368, 0
  %v3385 = vsel %vm1171, %v3370, 0
  %v3387 = vsel %vm1171, %v3372, 0
  %v3389 = vsel %vm1171, %v3374, 0
  %v3391 = vsel %vm1171, %v3376, 0
  %v3393 = vsel %vm1171, %v3378, 0
  %v3395 = vsel %vm1171, %v3380, 0
  %v3397 = vsel %vm1171, %v3382, 0
  %3399 = vmatprep.subr.bf16.mxu0 0
  %3400 = vmatpush1.bf16.msra.mxu0 0
  %3401 = vmatprep.subr.bf16.mxu0 0
  %3402 = vmatpush1.bf16.msra.mxu0 0
  %3403 = vmatprep.subr.bf16.mxu0 0
  %3404 = vmatpush1.bf16.msra.mxu0 0
  %3405 = vmatprep.subr.bf16.mxu0 0
  %3406 = vmatpush1.bf16.msra.mxu0 0
  %3407 = vmatprep.subr.bf16.mxu0 0
  %3408 = vmatpush1.bf16.msra.mxu0 0
  %3409 = vmatprep.subr.bf16.mxu0 0
  %3410 = vmatpush1.bf16.msra.mxu0 %v1190
  %3411 = vmatprep.subr.bf16.mxu0 0
  %3412 = vmatpush1.bf16.msra.mxu0 %v1167
  %3413 = vmatprep.subr.bf16.mxu0 0
  %3414 = vmatpush1.bf16.msra.mxu0 %v1166
  %3415 = vmatprep.subr.bf16.mxu0 0
  %3416 = vmatpush2.bf16.msra.mxu0 0
  %3417 = vmatprep.subr.bf16.mxu0 0
  %3418 = vmatpush2.bf16.msra.mxu0 0
  %3419 = vmatprep.subr.bf16.mxu0 0
  %3420 = vmatpush2.bf16.msra.mxu0 0
  %3421 = vmatprep.subr.bf16.mxu0 0
  %3422 = vmatpush2.bf16.msra.mxu0 0
  %3423 = vmatprep.subr.bf16.mxu0 0
  %3424 = vmatpush2.bf16.msra.mxu0 0
  %3425 = vmatprep.subr.bf16.mxu0 0
  %3426 = vmatpush2.bf16.msra.mxu0 0
  %3427 = vmatprep.subr.bf16.mxu0 0
  %3428 = vmatpush2.bf16.msra.mxu0 0
  %3429 = vmatprep.subr.bf16.mxu0 0
  %3430 = vmatpush2.bf16.msra.mxu0 0
  %3431 = vmatprep.mubr.bf16.mxu0 0
  %3432 = vmatmul.mubr.bf16.gmra.mxu0 %v3383
  %v3433 = vpop.f32.mrf.mxu0
  %v3434 = vadd.f32 0.0, %v3433
  %v3435 = vpop.f32.mrf.mxu0
  %v3436 = vpop.f32.mrf.mxu0
  %v3437 = vadd.f32 0.0, %v3436
  %v3438 = vpop.f32.mrf.mxu0
  %3439 = vmatprep.mubr.bf16.mxu0 0
  %3440 = vmatmul.mubr.bf16.gmra.mxu0 %v3385
  %v3441 = vpop.f32.mrf.mxu0
  %v3442 = vadd.f32 0.0, %v3441
  %v3443 = vpop.f32.mrf.mxu0
  %v3444 = vpop.f32.mrf.mxu0
  %v3445 = vadd.f32 0.0, %v3444
  %v3446 = vpop.f32.mrf.mxu0
  %3447 = vmatprep.mubr.bf16.mxu0 0
  %3448 = vmatmul.mubr.bf16.gmra.mxu0 %v3387
  %v3449 = vpop.f32.mrf.mxu0
  %v3450 = vadd.f32 0.0, %v3449
  %v3451 = vpop.f32.mrf.mxu0
  %v3452 = vpop.f32.mrf.mxu0
  %v3453 = vadd.f32 0.0, %v3452
  %v3454 = vpop.f32.mrf.mxu0
  %3455 = vmatprep.mubr.bf16.mxu0 0
  %3456 = vmatmul.mubr.bf16.gmra.mxu0 %v3389
  %v3457 = vpop.f32.mrf.mxu0
  %v3458 = vadd.f32 0.0, %v3457
  %v3459 = vpop.f32.mrf.mxu0
  %v3460 = vpop.f32.mrf.mxu0
  %v3461 = vadd.f32 0.0, %v3460
  %v3462 = vpop.f32.mrf.mxu0
  %3463 = vmatprep.mubr.bf16.mxu0 0
  %3464 = vmatmul.mubr.bf16.gmra.mxu0 %v3391
  %v3465 = vpop.f32.mrf.mxu0
  %v3466 = vadd.f32 0.0, %v3465
  %v3467 = vpop.f32.mrf.mxu0
  %v3468 = vpop.f32.mrf.mxu0
  %v3469 = vadd.f32 0.0, %v3468
  %v3470 = vpop.f32.mrf.mxu0
  %3471 = vmatprep.mubr.bf16.mxu0 0
  %3472 = vmatmul.mubr.bf16.gmra.mxu0 %v3393
  %v3473 = vpop.f32.mrf.mxu0
  %v3474 = vadd.f32 0.0, %v3473
  %v3475 = vpop.f32.mrf.mxu0
  %v3476 = vpop.f32.mrf.mxu0
  %v3477 = vadd.f32 0.0, %v3476
  %v3478 = vpop.f32.mrf.mxu0
  %3479 = vmatprep.mubr.bf16.mxu0 0
  %3480 = vmatmul.mubr.bf16.gmra.mxu0 %v3395
  %v3481 = vpop.f32.mrf.mxu0
  %v3482 = vadd.f32 0.0, %v3481
  %v3483 = vpop.f32.mrf.mxu0
  %v3484 = vpop.f32.mrf.mxu0
  %v3485 = vadd.f32 0.0, %v3484
  %v3486 = vpop.f32.mrf.mxu0
  %3487 = vmatprep.mubr.bf16.mxu0 0
  %3488 = vmatmul.mubr.bf16.gmra.mxu0 %v3397
  %v3489 = vpop.f32.mrf.mxu0
  %v3490 = vadd.f32 0.0, %v3489
  %v3491 = vpop.f32.mrf.mxu0
  %v3492 = vpop.f32.mrf.mxu0
  %v3493 = vadd.f32 0.0, %v3492
  %v3494 = vpop.f32.mrf.mxu0
  %3495 = vdwg.mxu0
  %v3496 = vmax.f32 %v2755, %v3434
  %v3497 = vmax.f32 %v2756, %v3437
  %v3498 = vmax.f32 %v2757, %v3442
  %v3499 = vmax.f32 %v2758, %v3445
  %v3500 = vmax.f32 %v2759, %v3450
  %v3501 = vmax.f32 %v2760, %v3453
  %v3502 = vmax.f32 %v2761, %v3458
  %v3503 = vmax.f32 %v2762, %v3461
  %v3504 = vmax.f32 %v2763, %v3466
  %v3505 = vmax.f32 %v2764, %v3469
  %v3506 = vmax.f32 %v2765, %v3474
  %v3507 = vmax.f32 %v2766, %v3477
  %v3508 = vmax.f32 %v2767, %v3482
  %v3509 = vmax.f32 %v2768, %v3485
  %v3510 = vmax.f32 %v2769, %v3490
  %v3511 = vmax.f32 %v2770, %v3493
  %s3512 = scalar_lea.vmem %s0, 256
  %v3513 = vld [vmem:[%s3512] sm:$0xf]
  %v3514 = vld [vmem:[%s3512 + $0x4] sm:$0xf]
  %v3515 = vld [vmem:[%s3512 + $0x8] sm:$0xf]
  %v3516 = vld [vmem:[%s3512 + $0xc] sm:$0xf]
  %v3517 = vld [vmem:[%s3512 + $0x10] sm:$0xf]
  %v3518 = vld [vmem:[%s3512 + $0x14] sm:$0xf]
  %v3519 = vld [vmem:[%s3512 + $0x18] sm:$0xf]
  %v3520 = vld [vmem:[%s3512 + $0x1c] sm:$0xf]
  %v3521 = vld [vmem:[%s3512 + $0x20] sm:$0xf]
  %v3522 = vld [vmem:[%s3512 + $0x24] sm:$0xf]
  %v3523 = vld [vmem:[%s3512 + $0x28] sm:$0xf]
  %v3524 = vld [vmem:[%s3512 + $0x2c] sm:$0xf]
  %v3525 = vld [vmem:[%s3512 + $0x30] sm:$0xf]
  %v3526 = vld [vmem:[%s3512 + $0x34] sm:$0xf]
  %v3527 = vld [vmem:[%s3512 + $0x38] sm:$0xf]
  %v3528 = vld [vmem:[%s3512 + $0x3c] sm:$0xf]
  %v3545 = vunpack.c.l.b16 %v3513
  %v3546 = vunpack.c.l.b16 %v3514
  %v3547 = vunpack.c.l.b16 %v3515
  %v3548 = vunpack.c.l.b16 %v3516
  %v3549 = vunpack.c.l.b16 %v3517
  %v3550 = vunpack.c.l.b16 %v3518
  %v3551 = vunpack.c.l.b16 %v3519
  %v3552 = vunpack.c.l.b16 %v3520
  %v3553 = vunpack.c.l.b16 %v3521
  %v3554 = vunpack.c.l.b16 %v3522
  %v3555 = vunpack.c.l.b16 %v3523
  %v3556 = vunpack.c.l.b16 %v3524
  %v3557 = vunpack.c.l.b16 %v3525
  %v3558 = vunpack.c.l.b16 %v3526
  %v3559 = vunpack.c.l.b16 %v3527
  %v3560 = vunpack.c.l.b16 %v3528
  %v3561 = vpack.c.b16 %v3546, %v3545
  %v3562 = vpack.c.b16 %v3548, %v3547
  %v3563 = vpack.c.b16 %v3550, %v3549
  %v3564 = vpack.c.b16 %v3552, %v3551
  %v3565 = vpack.c.b16 %v3554, %v3553
  %v3566 = vpack.c.b16 %v3556, %v3555
  %v3567 = vpack.c.b16 %v3558, %v3557
  %v3568 = vpack.c.b16 %v3560, %v3559
  %v3570 = vsel %vm562, %v3561, 0
  %v3573 = vsel %vm562, %v3562, 0
  %v3576 = vsel %vm562, %v3563, 0
  %v3579 = vsel %vm562, %v3564, 0
  %v3582 = vsel %vm562, %v3565, 0
  %v3585 = vsel %vm562, %v3566, 0
  %v3588 = vsel %vm562, %v3567, 0
  %v3591 = vsel %vm562, %v3568, 0
  %3593 = vmatprep.subr.bf16.mxu0 0
  %3594 = vmatpush1.bf16.msra.mxu0 0
  %3595 = vmatprep.subr.bf16.mxu0 0
  %3596 = vmatpush1.bf16.msra.mxu0 0
  %3597 = vmatprep.subr.bf16.mxu0 0
  %3598 = vmatpush1.bf16.msra.mxu0 0
  %3599 = vmatprep.subr.bf16.mxu0 0
  %3600 = vmatpush1.bf16.msra.mxu0 0
  %3601 = vmatprep.subr.bf16.mxu0 0
  %3602 = vmatpush1.bf16.msra.mxu0 0
  %3603 = vmatprep.subr.bf16.mxu0 0
  %3604 = vmatpush1.bf16.msra.mxu0 0
  %3605 = vmatprep.subr.bf16.mxu0 0
  %3606 = vmatpush1.bf16.msra.mxu0 %v592
  %3607 = vmatprep.subr.bf16.mxu0 0
  %3608 = vmatpush1.bf16.msra.mxu0 %v559
  %3609 = vmatprep.subr.bf16.mxu0 0
  %3610 = vmatpush2.bf16.msra.mxu0 0
  %3611 = vmatprep.subr.bf16.mxu0 0
  %3612 = vmatpush2.bf16.msra.mxu0 0
  %3613 = vmatprep.subr.bf16.mxu0 0
  %3614 = vmatpush2.bf16.msra.mxu0 0
  %3615 = vmatprep.subr.bf16.mxu0 0
  %3616 = vmatpush2.bf16.msra.mxu0 0
  %3617 = vmatprep.subr.bf16.mxu0 0
  %3618 = vmatpush2.bf16.msra.mxu0 0
  %3619 = vmatprep.subr.bf16.mxu0 0
  %3620 = vmatpush2.bf16.msra.mxu0 0
  %3621 = vmatprep.subr.bf16.mxu0 0
  %3622 = vmatpush2.bf16.msra.mxu0 0
  %3623 = vmatprep.subr.bf16.mxu0 0
  %3624 = vmatpush2.bf16.msra.mxu0 0
  %3625 = vmatprep.mubr.bf16.mxu0 0
  %3626 = vmatmul.mubr.bf16.gmra.mxu0 %v3570
  %v3627 = vpop.f32.mrf.mxu0
  %v3628 = vadd.f32 %v509, %v3627
  %v3629 = vpop.f32.mrf.mxu0
  %v3630 = vpop.f32.mrf.mxu0
  %v3631 = vadd.f32 %v509, %v3630
  %v3632 = vpop.f32.mrf.mxu0
  %3633 = vmatprep.mubr.bf16.mxu0 0
  %3634 = vmatmul.mubr.bf16.gmra.mxu0 %v3573
  %v3635 = vpop.f32.mrf.mxu0
  %v3636 = vadd.f32 %v509, %v3635
  %v3637 = vpop.f32.mrf.mxu0
  %v3638 = vpop.f32.mrf.mxu0
  %v3639 = vadd.f32 %v509, %v3638
  %v3640 = vpop.f32.mrf.mxu0
  %3641 = vmatprep.mubr.bf16.mxu0 0
  %3642 = vmatmul.mubr.bf16.gmra.mxu0 %v3576
  %v3643 = vpop.f32.mrf.mxu0
  %v3644 = vadd.f32 %v509, %v3643
  %v3645 = vpop.f32.mrf.mxu0
  %v3646 = vpop.f32.mrf.mxu0
  %v3647 = vadd.f32 %v509, %v3646
  %v3648 = vpop.f32.mrf.mxu0
  %3649 = vmatprep.mubr.bf16.mxu0 0
  %3650 = vmatmul.mubr.bf16.gmra.mxu0 %v3579
  %v3651 = vpop.f32.mrf.mxu0
  %v3652 = vadd.f32 %v509, %v3651
  %v3653 = vpop.f32.mrf.mxu0
  %v3654 = vpop.f32.mrf.mxu0
  %v3655 = vadd.f32 %v509, %v3654
  %v3656 = vpop.f32.mrf.mxu0
  %3657 = vmatprep.mubr.bf16.mxu0 0
  %3658 = vmatmul.mubr.bf16.gmra.mxu0 %v3582
  %v3659 = vpop.f32.mrf.mxu0
  %v3660 = vadd.f32 %v509, %v3659
  %v3661 = vpop.f32.mrf.mxu0
  %v3662 = vpop.f32.mrf.mxu0
  %v3663 = vadd.f32 %v509, %v3662
  %v3664 = vpop.f32.mrf.mxu0
  %3665 = vmatprep.mubr.bf16.mxu0 0
  %3666 = vmatmul.mubr.bf16.gmra.mxu0 %v3585
  %v3667 = vpop.f32.mrf.mxu0
  %v3668 = vadd.f32 %v509, %v3667
  %v3669 = vpop.f32.mrf.mxu0
  %v3670 = vpop.f32.mrf.mxu0
  %v3671 = vadd.f32 %v509, %v3670
  %v3672 = vpop.f32.mrf.mxu0
  %3673 = vmatprep.mubr.bf16.mxu0 0
  %3674 = vmatmul.mubr.bf16.gmra.mxu0 %v3588
  %v3675 = vpop.f32.mrf.mxu0
  %v3676 = vadd.f32 %v509, %v3675
  %v3677 = vpop.f32.mrf.mxu0
  %v3678 = vpop.f32.mrf.mxu0
  %v3679 = vadd.f32 %v509, %v3678
  %v3680 = vpop.f32.mrf.mxu0
  %3681 = vmatprep.mubr.bf16.mxu0 0
  %3682 = vmatmul.mubr.bf16.gmra.mxu0 %v3591
  %v3683 = vpop.f32.mrf.mxu0
  %v3684 = vadd.f32 %v509, %v3683
  %v3685 = vpop.f32.mrf.mxu0
  %v3686 = vpop.f32.mrf.mxu0
  %v3687 = vadd.f32 %v509, %v3686
  %v3688 = vpop.f32.mrf.mxu0
  %3689 = vdwg.mxu0
  %v3690 = vmax.f32 %v3628, 0.0
  %v3691 = vmax.f32 %v3631, 0.0
  %v3692 = vmax.f32 %v3636, 0.0
  %v3693 = vmax.f32 %v3639, 0.0
  %v3694 = vmax.f32 %v3644, 0.0
  %v3695 = vmax.f32 %v3647, 0.0
  %v3696 = vmax.f32 %v3652, 0.0
  %v3697 = vmax.f32 %v3655, 0.0
  %v3698 = vmax.f32 %v3660, 0.0
  %v3699 = vmax.f32 %v3663, 0.0
  %v3700 = vmax.f32 %v3668, 0.0
  %v3701 = vmax.f32 %v3671, 0.0
  %v3702 = vmax.f32 %v3676, 0.0
  %v3703 = vmax.f32 %v3679, 0.0
  %v3704 = vmax.f32 %v3684, 0.0
  %v3705 = vmax.f32 %v3687, 0.0
  %v3706 = vpack.c.bf16 %v3691, %v3690
  %v3707 = vpack.c.bf16 %v3693, %v3692
  %v3708 = vpack.c.bf16 %v3695, %v3694
  %v3709 = vpack.c.bf16 %v3697, %v3696
  %v3710 = vpack.c.bf16 %v3699, %v3698
  %v3711 = vpack.c.bf16 %v3701, %v3700
  %v3712 = vpack.c.bf16 %v3703, %v3702
  %v3713 = vpack.c.bf16 %v3705, %v3704
  %v3715 = vsel %vm722, %v3706, 0
  %v3718 = vsel %vm722, %v3707, 0
  %v3721 = vsel %vm722, %v3708, 0
  %v3724 = vsel %vm722, %v3709, 0
  %v3727 = vsel %vm722, %v3710, 0
  %v3730 = vsel %vm722, %v3711, 0
  %v3733 = vsel %vm722, %v3712, 0
  %v3736 = vsel %vm722, %v3713, 0
  %3738 = vmatprep.subr.bf16.mxu0 0
  %3739 = vmatpush1.bf16.msra.mxu0 0
  %3740 = vmatprep.subr.bf16.mxu0 0
  %3741 = vmatpush1.bf16.msra.mxu0 0
  %3742 = vmatprep.subr.bf16.mxu0 0
  %3743 = vmatpush1.bf16.msra.mxu0 0
  %3744 = vmatprep.subr.bf16.mxu0 0
  %3745 = vmatpush1.bf16.msra.mxu0 0
  %3746 = vmatprep.subr.bf16.mxu0 0
  %3747 = vmatpush1.bf16.msra.mxu0 0
  %3748 = vmatprep.subr.bf16.mxu0 0
  %3749 = vmatpush1.bf16.msra.mxu0 0
  %3750 = vmatprep.subr.bf16.mxu0 0
  %3751 = vmatpush1.bf16.msra.mxu0 0
  %3752 = vmatprep.subr.bf16.mxu0 0
  %3753 = vmatpush1.bf16.msra.mxu0 %v748
  %3754 = vmatprep.subr.bf16.mxu0 0
  %3755 = vmatpush2.bf16.msra.mxu0 0
  %3756 = vmatprep.subr.bf16.mxu0 0
  %3757 = vmatpush2.bf16.msra.mxu0 0
  %3758 = vmatprep.subr.bf16.mxu0 0
  %3759 = vmatpush2.bf16.msra.mxu0 0
  %3760 = vmatprep.subr.bf16.mxu0 0
  %3761 = vmatpush2.bf16.msra.mxu0 0
  %3762 = vmatprep.subr.bf16.mxu0 0
  %3763 = vmatpush2.bf16.msra.mxu0 0
  %3764 = vmatprep.subr.bf16.mxu0 0
  %3765 = vmatpush2.bf16.msra.mxu0 0
  %3766 = vmatprep.subr.bf16.mxu0 0
  %3767 = vmatpush2.bf16.msra.mxu0 0
  %3768 = vmatprep.subr.bf16.mxu0 0
  %3769 = vmatpush2.bf16.msra.mxu0 0
  %3770 = vmatprep.mubr.bf16.mxu0 0
  %3771 = vmatmul.mubr.bf16.gmra.mxu0 %v3715
  %v3772 = vpop.f32.mrf.mxu0
  %v3773 = vadd.f32 %v184, %v3772
  %v3774 = vpop.f32.mrf.mxu0
  %v3775 = vpop.f32.mrf.mxu0
  %v3776 = vadd.f32 %v187, %v3775
  %v3777 = vpop.f32.mrf.mxu0
  %3778 = vmatprep.mubr.bf16.mxu0 0
  %3779 = vmatmul.mubr.bf16.gmra.mxu0 %v3718
  %v3780 = vpop.f32.mrf.mxu0
  %v3781 = vadd.f32 %v192, %v3780
  %v3782 = vpop.f32.mrf.mxu0
  %v3783 = vpop.f32.mrf.mxu0
  %v3784 = vadd.f32 %v195, %v3783
  %v3785 = vpop.f32.mrf.mxu0
  %3786 = vmatprep.mubr.bf16.mxu0 0
  %3787 = vmatmul.mubr.bf16.gmra.mxu0 %v3721
  %v3788 = vpop.f32.mrf.mxu0
  %v3789 = vadd.f32 %v200, %v3788
  %v3790 = vpop.f32.mrf.mxu0
  %v3791 = vpop.f32.mrf.mxu0
  %v3792 = vadd.f32 %v203, %v3791
  %v3793 = vpop.f32.mrf.mxu0
  %3794 = vmatprep.mubr.bf16.mxu0 0
  %3795 = vmatmul.mubr.bf16.gmra.mxu0 %v3724
  %v3796 = vpop.f32.mrf.mxu0
  %v3797 = vadd.f32 %v208, %v3796
  %v3798 = vpop.f32.mrf.mxu0
  %v3799 = vpop.f32.mrf.mxu0
  %v3800 = vadd.f32 %v211, %v3799
  %v3801 = vpop.f32.mrf.mxu0
  %3802 = vmatprep.mubr.bf16.mxu0 0
  %3803 = vmatmul.mubr.bf16.gmra.mxu0 %v3727
  %v3804 = vpop.f32.mrf.mxu0
  %v3805 = vadd.f32 %v216, %v3804
  %v3806 = vpop.f32.mrf.mxu0
  %v3807 = vpop.f32.mrf.mxu0
  %v3808 = vadd.f32 %v219, %v3807
  %v3809 = vpop.f32.mrf.mxu0
  %3810 = vmatprep.mubr.bf16.mxu0 0
  %3811 = vmatmul.mubr.bf16.gmra.mxu0 %v3730
  %v3812 = vpop.f32.mrf.mxu0
  %v3813 = vadd.f32 %v224, %v3812
  %v3814 = vpop.f32.mrf.mxu0
  %v3815 = vpop.f32.mrf.mxu0
  %v3816 = vadd.f32 %v227, %v3815
  %v3817 = vpop.f32.mrf.mxu0
  %3818 = vmatprep.mubr.bf16.mxu0 0
  %3819 = vmatmul.mubr.bf16.gmra.mxu0 %v3733
  %v3820 = vpop.f32.mrf.mxu0
  %v3821 = vadd.f32 %v232, %v3820
  %v3822 = vpop.f32.mrf.mxu0
  %v3823 = vpop.f32.mrf.mxu0
  %v3824 = vadd.f32 %v235, %v3823
  %v3825 = vpop.f32.mrf.mxu0
  %3826 = vmatprep.mubr.bf16.mxu0 0
  %3827 = vmatmul.mubr.bf16.gmra.mxu0 %v3736
  %v3828 = vpop.f32.mrf.mxu0
  %v3829 = vadd.f32 %v240, %v3828
  %v3830 = vpop.f32.mrf.mxu0
  %v3831 = vpop.f32.mrf.mxu0
  %v3832 = vadd.f32 %v243, %v3831
  %v3833 = vpop.f32.mrf.mxu0
  %3834 = vdwg.mxu0
  %v3835 = vmax.f32 %v3773, 0.0
  %v3836 = vmax.f32 %v3776, 0.0
  %v3837 = vmax.f32 %v3781, 0.0
  %v3838 = vmax.f32 %v3784, 0.0
  %v3839 = vmax.f32 %v3789, 0.0
  %v3840 = vmax.f32 %v3792, 0.0
  %v3841 = vmax.f32 %v3797, 0.0
  %v3842 = vmax.f32 %v3800, 0.0
  %v3843 = vmax.f32 %v3805, 0.0
  %v3844 = vmax.f32 %v3808, 0.0
  %v3845 = vmax.f32 %v3813, 0.0
  %v3846 = vmax.f32 %v3816, 0.0
  %v3847 = vmax.f32 %v3821, 0.0
  %v3848 = vmax.f32 %v3824, 0.0
  %v3849 = vmax.f32 %v3829, 0.0
  %v3850 = vmax.f32 %v3832, 0.0
  %v3851 = vpack.c.bf16 %v3836, %v3835
  %v3852 = vpack.c.bf16 %v3838, %v3837
  %v3853 = vpack.c.bf16 %v3840, %v3839
  %v3854 = vpack.c.bf16 %v3842, %v3841
  %v3855 = vpack.c.bf16 %v3844, %v3843
  %v3856 = vpack.c.bf16 %v3846, %v3845
  %v3857 = vpack.c.bf16 %v3848, %v3847
  %v3858 = vpack.c.bf16 %v3850, %v3849
  %3867 = vrot.lane.b32.xlu0 %v3706, 12
  %v3868 = vpop.permute.xlu0 %3867
  %3869 = vrot.lane.b32.xlu0 %v3707, 12
  %v3870 = vpop.permute.xlu0 %3869
  %3871 = vrot.lane.b32.xlu0 %v3708, 12
  %v3872 = vpop.permute.xlu0 %3871
  %3873 = vrot.lane.b32.xlu0 %v3709, 12
  %v3874 = vpop.permute.xlu0 %3873
  %3875 = vrot.lane.b32.xlu0 %v3710, 12
  %v3876 = vpop.permute.xlu0 %3875
  %3877 = vrot.lane.b32.xlu0 %v3711, 12
  %v3878 = vpop.permute.xlu0 %3877
  %3879 = vrot.lane.b32.xlu0 %v3712, 12
  %v3880 = vpop.permute.xlu0 %3879
  %3881 = vrot.lane.b32.xlu0 %v3713, 12
  %v3882 = vpop.permute.xlu0 %3881
  %v3885 = vsel %vm722, %v3851, %v3868
  %v3888 = vsel %vm722, %v3852, %v3870
  %v3891 = vsel %vm722, %v3853, %v3872
  %v3894 = vsel %vm722, %v3854, %v3874
  %v3897 = vsel %vm722, %v3855, %v3876
  %v3900 = vsel %vm722, %v3856, %v3878
  %v3903 = vsel %vm722, %v3857, %v3880
  %v3906 = vsel %vm722, %v3858, %v3882
  %v3907 = vsel %vm120, %v3885, 0
  %v3909 = vsel %vm120, %v3888, 0
  %v3911 = vsel %vm120, %v3891, 0
  %v3913 = vsel %vm120, %v3894, 0
  %v3915 = vsel %vm120, %v3897, 0
  %v3917 = vsel %vm120, %v3900, 0
  %v3919 = vsel %vm120, %v3903, 0
  %v3921 = vsel %vm120, %v3906, 0
  %3923 = vmatprep.subr.bf16.mxu0 0
  %3924 = vmatpush1.bf16.msra.mxu0 0
  %3925 = vmatprep.subr.bf16.mxu0 0
  %3926 = vmatpush1.bf16.msra.mxu0 0
  %3927 = vmatprep.subr.bf16.mxu0 0
  %3928 = vmatpush1.bf16.msra.mxu0 0
  %3929 = vmatprep.subr.bf16.mxu0 0
  %3930 = vmatpush1.bf16.msra.mxu0 0
  %3931 = vmatprep.subr.bf16.mxu0 0
  %3932 = vmatpush1.bf16.msra.mxu0 0
  %3933 = vmatprep.subr.bf16.mxu0 0
  %3934 = vmatpush1.bf16.msra.mxu0 0
  %3935 = vmatprep.subr.bf16.mxu0 0
  %3936 = vmatpush1.bf16.msra.mxu0 %v948
  %3937 = vmatprep.subr.bf16.mxu0 0
  %3938 = vmatpush1.bf16.msra.mxu0 %v928
  %3939 = vmatprep.subr.bf16.mxu0 0
  %3940 = vmatpush2.bf16.msra.mxu0 0
  %3941 = vmatprep.subr.bf16.mxu0 0
  %3942 = vmatpush2.bf16.msra.mxu0 0
  %3943 = vmatprep.subr.bf16.mxu0 0
  %3944 = vmatpush2.bf16.msra.mxu0 0
  %3945 = vmatprep.subr.bf16.mxu0 0
  %3946 = vmatpush2.bf16.msra.mxu0 0
  %3947 = vmatprep.subr.bf16.mxu0 0
  %3948 = vmatpush2.bf16.msra.mxu0 0
  %3949 = vmatprep.subr.bf16.mxu0 0
  %3950 = vmatpush2.bf16.msra.mxu0 0
  %3951 = vmatprep.subr.bf16.mxu0 0
  %3952 = vmatpush2.bf16.msra.mxu0 0
  %3953 = vmatprep.subr.bf16.mxu0 0
  %3954 = vmatpush2.bf16.msra.mxu0 0
  %3955 = vmatprep.mubr.bf16.mxu0 0
  %3956 = vmatmul.mubr.bf16.gmra.mxu0 %v3907
  %v3957 = vpop.f32.mrf.mxu0
  %v3958 = vadd.f32 %v303, %v3957
  %v3959 = vpop.f32.mrf.mxu0
  %v3960 = vpop.f32.mrf.mxu0
  %v3961 = vadd.f32 %v306, %v3960
  %v3962 = vpop.f32.mrf.mxu0
  %3963 = vmatprep.mubr.bf16.mxu0 0
  %3964 = vmatmul.mubr.bf16.gmra.mxu0 %v3909
  %v3965 = vpop.f32.mrf.mxu0
  %v3966 = vadd.f32 %v311, %v3965
  %v3967 = vpop.f32.mrf.mxu0
  %v3968 = vpop.f32.mrf.mxu0
  %v3969 = vadd.f32 %v314, %v3968
  %v3970 = vpop.f32.mrf.mxu0
  %3971 = vmatprep.mubr.bf16.mxu0 0
  %3972 = vmatmul.mubr.bf16.gmra.mxu0 %v3911
  %v3973 = vpop.f32.mrf.mxu0
  %v3974 = vadd.f32 %v319, %v3973
  %v3975 = vpop.f32.mrf.mxu0
  %v3976 = vpop.f32.mrf.mxu0
  %v3977 = vadd.f32 %v322, %v3976
  %v3978 = vpop.f32.mrf.mxu0
  %3979 = vmatprep.mubr.bf16.mxu0 0
  %3980 = vmatmul.mubr.bf16.gmra.mxu0 %v3913
  %v3981 = vpop.f32.mrf.mxu0
  %v3982 = vadd.f32 %v327, %v3981
  %v3983 = vpop.f32.mrf.mxu0
  %v3984 = vpop.f32.mrf.mxu0
  %v3985 = vadd.f32 %v330, %v3984
  %v3986 = vpop.f32.mrf.mxu0
  %3987 = vmatprep.mubr.bf16.mxu0 0
  %3988 = vmatmul.mubr.bf16.gmra.mxu0 %v3915
  %v3989 = vpop.f32.mrf.mxu0
  %v3990 = vadd.f32 %v335, %v3989
  %v3991 = vpop.f32.mrf.mxu0
  %v3992 = vpop.f32.mrf.mxu0
  %v3993 = vadd.f32 %v338, %v3992
  %v3994 = vpop.f32.mrf.mxu0
  %3995 = vmatprep.mubr.bf16.mxu0 0
  %3996 = vmatmul.mubr.bf16.gmra.mxu0 %v3917
  %v3997 = vpop.f32.mrf.mxu0
  %v3998 = vadd.f32 %v343, %v3997
  %v3999 = vpop.f32.mrf.mxu0
  %v4000 = vpop.f32.mrf.mxu0
  %v4001 = vadd.f32 %v346, %v4000
  %v4002 = vpop.f32.mrf.mxu0
  %4003 = vmatprep.mubr.bf16.mxu0 0
  %4004 = vmatmul.mubr.bf16.gmra.mxu0 %v3919
  %v4005 = vpop.f32.mrf.mxu0
  %v4006 = vadd.f32 %v351, %v4005
  %v4007 = vpop.f32.mrf.mxu0
  %v4008 = vpop.f32.mrf.mxu0
  %v4009 = vadd.f32 %v354, %v4008
  %v4010 = vpop.f32.mrf.mxu0
  %4011 = vmatprep.mubr.bf16.mxu0 0
  %4012 = vmatmul.mubr.bf16.gmra.mxu0 %v3921
  %v4013 = vpop.f32.mrf.mxu0
  %v4014 = vadd.f32 %v359, %v4013
  %v4015 = vpop.f32.mrf.mxu0
  %v4016 = vpop.f32.mrf.mxu0
  %v4017 = vadd.f32 %v362, %v4016
  %v4018 = vpop.f32.mrf.mxu0
  %4019 = vdwg.mxu0
  %v4020 = vmax.f32 %v3958, 0.0
  %v4021 = vmax.f32 %v3961, 0.0
  %v4022 = vmax.f32 %v3966, 0.0
  %v4023 = vmax.f32 %v3969, 0.0
  %v4024 = vmax.f32 %v3974, 0.0
  %v4025 = vmax.f32 %v3977, 0.0
  %v4026 = vmax.f32 %v3982, 0.0
  %v4027 = vmax.f32 %v3985, 0.0
  %v4028 = vmax.f32 %v3990, 0.0
  %v4029 = vmax.f32 %v3993, 0.0
  %v4030 = vmax.f32 %v3998, 0.0
  %v4031 = vmax.f32 %v4001, 0.0
  %v4032 = vmax.f32 %v4006, 0.0
  %v4033 = vmax.f32 %v4009, 0.0
  %v4034 = vmax.f32 %v4014, 0.0
  %v4035 = vmax.f32 %v4017, 0.0
  %v4036 = vpack.c.bf16 %v4021, %v4020
  %v4037 = vpack.c.bf16 %v4023, %v4022
  %v4038 = vpack.c.bf16 %v4025, %v4024
  %v4039 = vpack.c.bf16 %v4027, %v4026
  %v4040 = vpack.c.bf16 %v4029, %v4028
  %v4041 = vpack.c.bf16 %v4031, %v4030
  %v4042 = vpack.c.bf16 %v4033, %v4032
  %v4043 = vpack.c.bf16 %v4035, %v4034
  %4052 = vrot.lane.b32.xlu0 %v3851, 12
  %v4053 = vpop.permute.xlu0 %4052
  %4054 = vrot.lane.b32.xlu0 %v3852, 12
  %v4055 = vpop.permute.xlu0 %4054
  %4056 = vrot.lane.b32.xlu0 %v3853, 12
  %v4057 = vpop.permute.xlu0 %4056
  %4058 = vrot.lane.b32.xlu0 %v3854, 12
  %v4059 = vpop.permute.xlu0 %4058
  %4060 = vrot.lane.b32.xlu0 %v3855, 12
  %v4061 = vpop.permute.xlu0 %4060
  %4062 = vrot.lane.b32.xlu0 %v3856, 12
  %v4063 = vpop.permute.xlu0 %4062
  %4064 = vrot.lane.b32.xlu0 %v3857, 12
  %v4065 = vpop.permute.xlu0 %4064
  %4066 = vrot.lane.b32.xlu0 %v3858, 12
  %v4067 = vpop.permute.xlu0 %4066
  %4068 = vrot.lane.b32.xlu0 %v3706, 24
  %v4069 = vpop.permute.xlu0 %4068
  %4070 = vrot.lane.b32.xlu0 %v3707, 24
  %v4071 = vpop.permute.xlu0 %4070
  %4072 = vrot.lane.b32.xlu0 %v3708, 24
  %v4073 = vpop.permute.xlu0 %4072
  %4074 = vrot.lane.b32.xlu0 %v3709, 24
  %v4075 = vpop.permute.xlu0 %4074
  %4076 = vrot.lane.b32.xlu0 %v3710, 24
  %v4077 = vpop.permute.xlu0 %4076
  %4078 = vrot.lane.b32.xlu0 %v3711, 24
  %v4079 = vpop.permute.xlu0 %4078
  %4080 = vrot.lane.b32.xlu0 %v3712, 24
  %v4081 = vpop.permute.xlu0 %4080
  %4082 = vrot.lane.b32.xlu0 %v3713, 24
  %v4083 = vpop.permute.xlu0 %4082
  %v4086 = vsel %vm722, %v4036, %v4053
  %v4089 = vsel %vm722, %v4037, %v4055
  %v4092 = vsel %vm722, %v4038, %v4057
  %v4095 = vsel %vm722, %v4039, %v4059
  %v4098 = vsel %vm722, %v4040, %v4061
  %v4101 = vsel %vm722, %v4041, %v4063
  %v4104 = vsel %vm722, %v4042, %v4065
  %v4107 = vsel %vm722, %v4043, %v4067
  %v4109 = vsel %vm120, %v4086, %v4069
  %v4111 = vsel %vm120, %v4089, %v4071
  %v4113 = vsel %vm120, %v4092, %v4073
  %v4115 = vsel %vm120, %v4095, %v4075
  %v4117 = vsel %vm120, %v4098, %v4077
  %v4119 = vsel %vm120, %v4101, %v4079
  %v4121 = vsel %vm120, %v4104, %v4081
  %v4123 = vsel %vm120, %v4107, %v4083
  %v4124 = vsel %vm1171, %v4109, 0
  %v4126 = vsel %vm1171, %v4111, 0
  %v4128 = vsel %vm1171, %v4113, 0
  %v4130 = vsel %vm1171, %v4115, 0
  %v4132 = vsel %vm1171, %v4117, 0
  %v4134 = vsel %vm1171, %v4119, 0
  %v4136 = vsel %vm1171, %v4121, 0
  %v4138 = vsel %vm1171, %v4123, 0
  %4140 = vmatprep.subr.bf16.mxu0 0
  %4141 = vmatpush1.bf16.msra.mxu0 0
  %4142 = vmatprep.subr.bf16.mxu0 0
  %4143 = vmatpush1.bf16.msra.mxu0 0
  %4144 = vmatprep.subr.bf16.mxu0 0
  %4145 = vmatpush1.bf16.msra.mxu0 0
  %4146 = vmatprep.subr.bf16.mxu0 0
  %4147 = vmatpush1.bf16.msra.mxu0 0
  %4148 = vmatprep.subr.bf16.mxu0 0
  %4149 = vmatpush1.bf16.msra.mxu0 0
  %4150 = vmatprep.subr.bf16.mxu0 0
  %4151 = vmatpush1.bf16.msra.mxu0 %v1190
  %4152 = vmatprep.subr.bf16.mxu0 0
  %4153 = vmatpush1.bf16.msra.mxu0 %v1167
  %4154 = vmatprep.subr.bf16.mxu0 0
  %4155 = vmatpush1.bf16.msra.mxu0 %v1166
  %4156 = vmatprep.subr.bf16.mxu0 0
  %4157 = vmatpush2.bf16.msra.mxu0 0
  %4158 = vmatprep.subr.bf16.mxu0 0
  %4159 = vmatpush2.bf16.msra.mxu0 0
  %4160 = vmatprep.subr.bf16.mxu0 0
  %4161 = vmatpush2.bf16.msra.mxu0 0
  %4162 = vmatprep.subr.bf16.mxu0 0
  %4163 = vmatpush2.bf16.msra.mxu0 0
  %4164 = vmatprep.subr.bf16.mxu0 0
  %4165 = vmatpush2.bf16.msra.mxu0 0
  %4166 = vmatprep.subr.bf16.mxu0 0
  %4167 = vmatpush2.bf16.msra.mxu0 0
  %4168 = vmatprep.subr.bf16.mxu0 0
  %4169 = vmatpush2.bf16.msra.mxu0 0
  %4170 = vmatprep.subr.bf16.mxu0 0
  %4171 = vmatpush2.bf16.msra.mxu0 0
  %4172 = vmatprep.mubr.bf16.mxu0 0
  %4173 = vmatmul.mubr.bf16.gmra.mxu0 %v4124
  %v4174 = vpop.f32.mrf.mxu0
  %v4175 = vadd.f32 0.0, %v4174
  %v4176 = vpop.f32.mrf.mxu0
  %v4177 = vpop.f32.mrf.mxu0
  %v4178 = vadd.f32 0.0, %v4177
  %v4179 = vpop.f32.mrf.mxu0
  %4180 = vmatprep.mubr.bf16.mxu0 0
  %4181 = vmatmul.mubr.bf16.gmra.mxu0 %v4126
  %v4182 = vpop.f32.mrf.mxu0
  %v4183 = vadd.f32 0.0, %v4182
  %v4184 = vpop.f32.mrf.mxu0
  %v4185 = vpop.f32.mrf.mxu0
  %v4186 = vadd.f32 0.0, %v4185
  %v4187 = vpop.f32.mrf.mxu0
  %4188 = vmatprep.mubr.bf16.mxu0 0
  %4189 = vmatmul.mubr.bf16.gmra.mxu0 %v4128
  %v4190 = vpop.f32.mrf.mxu0
  %v4191 = vadd.f32 0.0, %v4190
  %v4192 = vpop.f32.mrf.mxu0
  %v4193 = vpop.f32.mrf.mxu0
  %v4194 = vadd.f32 0.0, %v4193
  %v4195 = vpop.f32.mrf.mxu0
  %4196 = vmatprep.mubr.bf16.mxu0 0
  %4197 = vmatmul.mubr.bf16.gmra.mxu0 %v4130
  %v4198 = vpop.f32.mrf.mxu0
  %v4199 = vadd.f32 0.0, %v4198
  %v4200 = vpop.f32.mrf.mxu0
  %v4201 = vpop.f32.mrf.mxu0
  %v4202 = vadd.f32 0.0, %v4201
  %v4203 = vpop.f32.mrf.mxu0
  %4204 = vmatprep.mubr.bf16.mxu0 0
  %4205 = vmatmul.mubr.bf16.gmra.mxu0 %v4132
  %v4206 = vpop.f32.mrf.mxu0
  %v4207 = vadd.f32 0.0, %v4206
  %v4208 = vpop.f32.mrf.mxu0
  %v4209 = vpop.f32.mrf.mxu0
  %v4210 = vadd.f32 0.0, %v4209
  %v4211 = vpop.f32.mrf.mxu0
  %4212 = vmatprep.mubr.bf16.mxu0 0
  %4213 = vmatmul.mubr.bf16.gmra.mxu0 %v4134
  %v4214 = vpop.f32.mrf.mxu0
  %v4215 = vadd.f32 0.0, %v4214
  %v4216 = vpop.f32.mrf.mxu0
  %v4217 = vpop.f32.mrf.mxu0
  %v4218 = vadd.f32 0.0, %v4217
  %v4219 = vpop.f32.mrf.mxu0
  %4220 = vmatprep.mubr.bf16.mxu0 0
  %4221 = vmatmul.mubr.bf16.gmra.mxu0 %v4136
  %v4222 = vpop.f32.mrf.mxu0
  %v4223 = vadd.f32 0.0, %v4222
  %v4224 = vpop.f32.mrf.mxu0
  %v4225 = vpop.f32.mrf.mxu0
  %v4226 = vadd.f32 0.0, %v4225
  %v4227 = vpop.f32.mrf.mxu0
  %4228 = vmatprep.mubr.bf16.mxu0 0
  %4229 = vmatmul.mubr.bf16.gmra.mxu0 %v4138
  %v4230 = vpop.f32.mrf.mxu0
  %v4231 = vadd.f32 0.0, %v4230
  %v4232 = vpop.f32.mrf.mxu0
  %v4233 = vpop.f32.mrf.mxu0
  %v4234 = vadd.f32 0.0, %v4233
  %v4235 = vpop.f32.mrf.mxu0
  %4236 = vdwg.mxu0
  %v4237 = vmax.f32 %v3496, %v4175
  %v4238 = vmax.f32 %v3497, %v4178
  %v4239 = vmax.f32 %v3498, %v4183
  %v4240 = vmax.f32 %v3499, %v4186
  %v4241 = vmax.f32 %v3500, %v4191
  %v4242 = vmax.f32 %v3501, %v4194
  %v4243 = vmax.f32 %v3502, %v4199
  %v4244 = vmax.f32 %v3503, %v4202
  %v4245 = vmax.f32 %v3504, %v4207
  %v4246 = vmax.f32 %v3505, %v4210
  %v4247 = vmax.f32 %v3506, %v4215
  %v4248 = vmax.f32 %v3507, %v4218
  %v4249 = vmax.f32 %v3508, %v4223
  %v4250 = vmax.f32 %v3509, %v4226
  %v4251 = vmax.f32 %v3510, %v4231
  %v4252 = vmax.f32 %v3511, %v4234
  %s4253 = scalar_lea.vmem %s0, 320
  %v4254 = vld [vmem:[%s4253] sm:$0xf]
  %v4255 = vld [vmem:[%s4253 + $0x4] sm:$0xf]
  %v4256 = vld [vmem:[%s4253 + $0x8] sm:$0xf]
  %v4257 = vld [vmem:[%s4253 + $0xc] sm:$0xf]
  %v4258 = vld [vmem:[%s4253 + $0x10] sm:$0xf]
  %v4259 = vld [vmem:[%s4253 + $0x14] sm:$0xf]
  %v4260 = vld [vmem:[%s4253 + $0x18] sm:$0xf]
  %v4261 = vld [vmem:[%s4253 + $0x1c] sm:$0xf]
  %v4262 = vld [vmem:[%s4253 + $0x20] sm:$0xf]
  %v4263 = vld [vmem:[%s4253 + $0x24] sm:$0xf]
  %v4264 = vld [vmem:[%s4253 + $0x28] sm:$0xf]
  %v4265 = vld [vmem:[%s4253 + $0x2c] sm:$0xf]
  %v4266 = vld [vmem:[%s4253 + $0x30] sm:$0xf]
  %v4267 = vld [vmem:[%s4253 + $0x34] sm:$0xf]
  %v4268 = vld [vmem:[%s4253 + $0x38] sm:$0xf]
  %v4269 = vld [vmem:[%s4253 + $0x3c] sm:$0xf]
  %v4286 = vunpack.c.l.b16 %v4254
  %v4287 = vunpack.c.l.b16 %v4255
  %v4288 = vunpack.c.l.b16 %v4256
  %v4289 = vunpack.c.l.b16 %v4257
  %v4290 = vunpack.c.l.b16 %v4258
  %v4291 = vunpack.c.l.b16 %v4259
  %v4292 = vunpack.c.l.b16 %v4260
  %v4293 = vunpack.c.l.b16 %v4261
  %v4294 = vunpack.c.l.b16 %v4262
  %v4295 = vunpack.c.l.b16 %v4263
  %v4296 = vunpack.c.l.b16 %v4264
  %v4297 = vunpack.c.l.b16 %v4265
  %v4298 = vunpack.c.l.b16 %v4266
  %v4299 = vunpack.c.l.b16 %v4267
  %v4300 = vunpack.c.l.b16 %v4268
  %v4301 = vunpack.c.l.b16 %v4269
  %v4302 = vpack.c.b16 %v4287, %v4286
  %v4303 = vpack.c.b16 %v4289, %v4288
  %v4304 = vpack.c.b16 %v4291, %v4290
  %v4305 = vpack.c.b16 %v4293, %v4292
  %v4306 = vpack.c.b16 %v4295, %v4294
  %v4307 = vpack.c.b16 %v4297, %v4296
  %v4308 = vpack.c.b16 %v4299, %v4298
  %v4309 = vpack.c.b16 %v4301, %v4300
  %v4311 = vsel %vm562, %v4302, 0
  %v4314 = vsel %vm562, %v4303, 0
  %v4317 = vsel %vm562, %v4304, 0
  %v4320 = vsel %vm562, %v4305, 0
  %v4323 = vsel %vm562, %v4306, 0
  %v4326 = vsel %vm562, %v4307, 0
  %v4329 = vsel %vm562, %v4308, 0
  %v4332 = vsel %vm562, %v4309, 0
  %4334 = vmatprep.subr.bf16.mxu0 0
  %4335 = vmatpush1.bf16.msra.mxu0 0
  %4336 = vmatprep.subr.bf16.mxu0 0
  %4337 = vmatpush1.bf16.msra.mxu0 0
  %4338 = vmatprep.subr.bf16.mxu0 0
  %4339 = vmatpush1.bf16.msra.mxu0 0
  %4340 = vmatprep.subr.bf16.mxu0 0
  %4341 = vmatpush1.bf16.msra.mxu0 0
  %4342 = vmatprep.subr.bf16.mxu0 0
  %4343 = vmatpush1.bf16.msra.mxu0 0
  %4344 = vmatprep.subr.bf16.mxu0 0
  %4345 = vmatpush1.bf16.msra.mxu0 0
  %4346 = vmatprep.subr.bf16.mxu0 0
  %4347 = vmatpush1.bf16.msra.mxu0 %v592
  %4348 = vmatprep.subr.bf16.mxu0 0
  %4349 = vmatpush1.bf16.msra.mxu0 %v559
  %4350 = vmatprep.subr.bf16.mxu0 0
  %4351 = vmatpush2.bf16.msra.mxu0 0
  %4352 = vmatprep.subr.bf16.mxu0 0
  %4353 = vmatpush2.bf16.msra.mxu0 0
  %4354 = vmatprep.subr.bf16.mxu0 0
  %4355 = vmatpush2.bf16.msra.mxu0 0
  %4356 = vmatprep.subr.bf16.mxu0 0
  %4357 = vmatpush2.bf16.msra.mxu0 0
  %4358 = vmatprep.subr.bf16.mxu0 0
  %4359 = vmatpush2.bf16.msra.mxu0 0
  %4360 = vmatprep.subr.bf16.mxu0 0
  %4361 = vmatpush2.bf16.msra.mxu0 0
  %4362 = vmatprep.subr.bf16.mxu0 0
  %4363 = vmatpush2.bf16.msra.mxu0 0
  %4364 = vmatprep.subr.bf16.mxu0 0
  %4365 = vmatpush2.bf16.msra.mxu0 0
  %4366 = vmatprep.mubr.bf16.mxu0 0
  %4367 = vmatmul.mubr.bf16.gmra.mxu0 %v4311
  %v4368 = vpop.f32.mrf.mxu0
  %v4369 = vadd.f32 %v509, %v4368
  %v4370 = vpop.f32.mrf.mxu0
  %v4371 = vpop.f32.mrf.mxu0
  %v4372 = vadd.f32 %v509, %v4371
  %v4373 = vpop.f32.mrf.mxu0
  %4374 = vmatprep.mubr.bf16.mxu0 0
  %4375 = vmatmul.mubr.bf16.gmra.mxu0 %v4314
  %v4376 = vpop.f32.mrf.mxu0
  %v4377 = vadd.f32 %v509, %v4376
  %v4378 = vpop.f32.mrf.mxu0
  %v4379 = vpop.f32.mrf.mxu0
  %v4380 = vadd.f32 %v509, %v4379
  %v4381 = vpop.f32.mrf.mxu0
  %4382 = vmatprep.mubr.bf16.mxu0 0
  %4383 = vmatmul.mubr.bf16.gmra.mxu0 %v4317
  %v4384 = vpop.f32.mrf.mxu0
  %v4385 = vadd.f32 %v509, %v4384
  %v4386 = vpop.f32.mrf.mxu0
  %v4387 = vpop.f32.mrf.mxu0
  %v4388 = vadd.f32 %v509, %v4387
  %v4389 = vpop.f32.mrf.mxu0
  %4390 = vmatprep.mubr.bf16.mxu0 0
  %4391 = vmatmul.mubr.bf16.gmra.mxu0 %v4320
  %v4392 = vpop.f32.mrf.mxu0
  %v4393 = vadd.f32 %v509, %v4392
  %v4394 = vpop.f32.mrf.mxu0
  %v4395 = vpop.f32.mrf.mxu0
  %v4396 = vadd.f32 %v509, %v4395
  %v4397 = vpop.f32.mrf.mxu0
  %4398 = vmatprep.mubr.bf16.mxu0 0
  %4399 = vmatmul.mubr.bf16.gmra.mxu0 %v4323
  %v4400 = vpop.f32.mrf.mxu0
  %v4401 = vadd.f32 %v509, %v4400
  %v4402 = vpop.f32.mrf.mxu0
  %v4403 = vpop.f32.mrf.mxu0
  %v4404 = vadd.f32 %v509, %v4403
  %v4405 = vpop.f32.mrf.mxu0
  %4406 = vmatprep.mubr.bf16.mxu0 0
  %4407 = vmatmul.mubr.bf16.gmra.mxu0 %v4326
  %v4408 = vpop.f32.mrf.mxu0
  %v4409 = vadd.f32 %v509, %v4408
  %v4410 = vpop.f32.mrf.mxu0
  %v4411 = vpop.f32.mrf.mxu0
  %v4412 = vadd.f32 %v509, %v4411
  %v4413 = vpop.f32.mrf.mxu0
  %4414 = vmatprep.mubr.bf16.mxu0 0
  %4415 = vmatmul.mubr.bf16.gmra.mxu0 %v4329
  %v4416 = vpop.f32.mrf.mxu0
  %v4417 = vadd.f32 %v509, %v4416
  %v4418 = vpop.f32.mrf.mxu0
  %v4419 = vpop.f32.mrf.mxu0
  %v4420 = vadd.f32 %v509, %v4419
  %v4421 = vpop.f32.mrf.mxu0
  %4422 = vmatprep.mubr.bf16.mxu0 0
  %4423 = vmatmul.mubr.bf16.gmra.mxu0 %v4332
  %v4424 = vpop.f32.mrf.mxu0
  %v4425 = vadd.f32 %v509, %v4424
  %v4426 = vpop.f32.mrf.mxu0
  %v4427 = vpop.f32.mrf.mxu0
  %v4428 = vadd.f32 %v509, %v4427
  %v4429 = vpop.f32.mrf.mxu0
  %4430 = vdwg.mxu0
  %v4431 = vmax.f32 %v4369, 0.0
  %v4432 = vmax.f32 %v4372, 0.0
  %v4433 = vmax.f32 %v4377, 0.0
  %v4434 = vmax.f32 %v4380, 0.0
  %v4435 = vmax.f32 %v4385, 0.0
  %v4436 = vmax.f32 %v4388, 0.0
  %v4437 = vmax.f32 %v4393, 0.0
  %v4438 = vmax.f32 %v4396, 0.0
  %v4439 = vmax.f32 %v4401, 0.0
  %v4440 = vmax.f32 %v4404, 0.0
  %v4441 = vmax.f32 %v4409, 0.0
  %v4442 = vmax.f32 %v4412, 0.0
  %v4443 = vmax.f32 %v4417, 0.0
  %v4444 = vmax.f32 %v4420, 0.0
  %v4445 = vmax.f32 %v4425, 0.0
  %v4446 = vmax.f32 %v4428, 0.0
  %v4447 = vpack.c.bf16 %v4432, %v4431
  %v4448 = vpack.c.bf16 %v4434, %v4433
  %v4449 = vpack.c.bf16 %v4436, %v4435
  %v4450 = vpack.c.bf16 %v4438, %v4437
  %v4451 = vpack.c.bf16 %v4440, %v4439
  %v4452 = vpack.c.bf16 %v4442, %v4441
  %v4453 = vpack.c.bf16 %v4444, %v4443
  %v4454 = vpack.c.bf16 %v4446, %v4445
  %v4456 = vsel %vm722, %v4447, 0
  %v4459 = vsel %vm722, %v4448, 0
  %v4462 = vsel %vm722, %v4449, 0
  %v4465 = vsel %vm722, %v4450, 0
  %v4468 = vsel %vm722, %v4451, 0
  %v4471 = vsel %vm722, %v4452, 0
  %v4474 = vsel %vm722, %v4453, 0
  %v4477 = vsel %vm722, %v4454, 0
  %4479 = vmatprep.subr.bf16.mxu0 0
  %4480 = vmatpush1.bf16.msra.mxu0 0
  %4481 = vmatprep.subr.bf16.mxu0 0
  %4482 = vmatpush1.bf16.msra.mxu0 0
  %4483 = vmatprep.subr.bf16.mxu0 0
  %4484 = vmatpush1.bf16.msra.mxu0 0
  %4485 = vmatprep.subr.bf16.mxu0 0
  %4486 = vmatpush1.bf16.msra.mxu0 0
  %4487 = vmatprep.subr.bf16.mxu0 0
  %4488 = vmatpush1.bf16.msra.mxu0 0
  %4489 = vmatprep.subr.bf16.mxu0 0
  %4490 = vmatpush1.bf16.msra.mxu0 0
  %4491 = vmatprep.subr.bf16.mxu0 0
  %4492 = vmatpush1.bf16.msra.mxu0 0
  %4493 = vmatprep.subr.bf16.mxu0 0
  %4494 = vmatpush1.bf16.msra.mxu0 %v748
  %4495 = vmatprep.subr.bf16.mxu0 0
  %4496 = vmatpush2.bf16.msra.mxu0 0
  %4497 = vmatprep.subr.bf16.mxu0 0
  %4498 = vmatpush2.bf16.msra.mxu0 0
  %4499 = vmatprep.subr.bf16.mxu0 0
  %4500 = vmatpush2.bf16.msra.mxu0 0
  %4501 = vmatprep.subr.bf16.mxu0 0
  %4502 = vmatpush2.bf16.msra.mxu0 0
  %4503 = vmatprep.subr.bf16.mxu0 0
  %4504 = vmatpush2.bf16.msra.mxu0 0
  %4505 = vmatprep.subr.bf16.mxu0 0
  %4506 = vmatpush2.bf16.msra.mxu0 0
  %4507 = vmatprep.subr.bf16.mxu0 0
  %4508 = vmatpush2.bf16.msra.mxu0 0
  %4509 = vmatprep.subr.bf16.mxu0 0
  %4510 = vmatpush2.bf16.msra.mxu0 0
  %4511 = vmatprep.mubr.bf16.mxu0 0
  %4512 = vmatmul.mubr.bf16.gmra.mxu0 %v4456
  %v4513 = vpop.f32.mrf.mxu0
  %v4514 = vadd.f32 %v184, %v4513
  %v4515 = vpop.f32.mrf.mxu0
  %v4516 = vpop.f32.mrf.mxu0
  %v4517 = vadd.f32 %v187, %v4516
  %v4518 = vpop.f32.mrf.mxu0
  %4519 = vmatprep.mubr.bf16.mxu0 0
  %4520 = vmatmul.mubr.bf16.gmra.mxu0 %v4459
  %v4521 = vpop.f32.mrf.mxu0
  %v4522 = vadd.f32 %v192, %v4521
  %v4523 = vpop.f32.mrf.mxu0
  %v4524 = vpop.f32.mrf.mxu0
  %v4525 = vadd.f32 %v195, %v4524
  %v4526 = vpop.f32.mrf.mxu0
  %4527 = vmatprep.mubr.bf16.mxu0 0
  %4528 = vmatmul.mubr.bf16.gmra.mxu0 %v4462
  %v4529 = vpop.f32.mrf.mxu0
  %v4530 = vadd.f32 %v200, %v4529
  %v4531 = vpop.f32.mrf.mxu0
  %v4532 = vpop.f32.mrf.mxu0
  %v4533 = vadd.f32 %v203, %v4532
  %v4534 = vpop.f32.mrf.mxu0
  %4535 = vmatprep.mubr.bf16.mxu0 0
  %4536 = vmatmul.mubr.bf16.gmra.mxu0 %v4465
  %v4537 = vpop.f32.mrf.mxu0
  %v4538 = vadd.f32 %v208, %v4537
  %v4539 = vpop.f32.mrf.mxu0
  %v4540 = vpop.f32.mrf.mxu0
  %v4541 = vadd.f32 %v211, %v4540
  %v4542 = vpop.f32.mrf.mxu0
  %4543 = vmatprep.mubr.bf16.mxu0 0
  %4544 = vmatmul.mubr.bf16.gmra.mxu0 %v4468
  %v4545 = vpop.f32.mrf.mxu0
  %v4546 = vadd.f32 %v216, %v4545
  %v4547 = vpop.f32.mrf.mxu0
  %v4548 = vpop.f32.mrf.mxu0
  %v4549 = vadd.f32 %v219, %v4548
  %v4550 = vpop.f32.mrf.mxu0
  %4551 = vmatprep.mubr.bf16.mxu0 0
  %4552 = vmatmul.mubr.bf16.gmra.mxu0 %v4471
  %v4553 = vpop.f32.mrf.mxu0
  %v4554 = vadd.f32 %v224, %v4553
  %v4555 = vpop.f32.mrf.mxu0
  %v4556 = vpop.f32.mrf.mxu0
  %v4557 = vadd.f32 %v227, %v4556
  %v4558 = vpop.f32.mrf.mxu0
  %4559 = vmatprep.mubr.bf16.mxu0 0
  %4560 = vmatmul.mubr.bf16.gmra.mxu0 %v4474
  %v4561 = vpop.f32.mrf.mxu0
  %v4562 = vadd.f32 %v232, %v4561
  %v4563 = vpop.f32.mrf.mxu0
  %v4564 = vpop.f32.mrf.mxu0
  %v4565 = vadd.f32 %v235, %v4564
  %v4566 = vpop.f32.mrf.mxu0
  %4567 = vmatprep.mubr.bf16.mxu0 0
  %4568 = vmatmul.mubr.bf16.gmra.mxu0 %v4477
  %v4569 = vpop.f32.mrf.mxu0
  %v4570 = vadd.f32 %v240, %v4569
  %v4571 = vpop.f32.mrf.mxu0
  %v4572 = vpop.f32.mrf.mxu0
  %v4573 = vadd.f32 %v243, %v4572
  %v4574 = vpop.f32.mrf.mxu0
  %4575 = vdwg.mxu0
  %v4576 = vmax.f32 %v4514, 0.0
  %v4577 = vmax.f32 %v4517, 0.0
  %v4578 = vmax.f32 %v4522, 0.0
  %v4579 = vmax.f32 %v4525, 0.0
  %v4580 = vmax.f32 %v4530, 0.0
  %v4581 = vmax.f32 %v4533, 0.0
  %v4582 = vmax.f32 %v4538, 0.0
  %v4583 = vmax.f32 %v4541, 0.0
  %v4584 = vmax.f32 %v4546, 0.0
  %v4585 = vmax.f32 %v4549, 0.0
  %v4586 = vmax.f32 %v4554, 0.0
  %v4587 = vmax.f32 %v4557, 0.0
  %v4588 = vmax.f32 %v4562, 0.0
  %v4589 = vmax.f32 %v4565, 0.0
  %v4590 = vmax.f32 %v4570, 0.0
  %v4591 = vmax.f32 %v4573, 0.0
  %v4592 = vpack.c.bf16 %v4577, %v4576
  %v4593 = vpack.c.bf16 %v4579, %v4578
  %v4594 = vpack.c.bf16 %v4581, %v4580
  %v4595 = vpack.c.bf16 %v4583, %v4582
  %v4596 = vpack.c.bf16 %v4585, %v4584
  %v4597 = vpack.c.bf16 %v4587, %v4586
  %v4598 = vpack.c.bf16 %v4589, %v4588
  %v4599 = vpack.c.bf16 %v4591, %v4590
  %4608 = vrot.lane.b32.xlu0 %v4447, 12
  %v4609 = vpop.permute.xlu0 %4608
  %4610 = vrot.lane.b32.xlu0 %v4448, 12
  %v4611 = vpop.permute.xlu0 %4610
  %4612 = vrot.lane.b32.xlu0 %v4449, 12
  %v4613 = vpop.permute.xlu0 %4612
  %4614 = vrot.lane.b32.xlu0 %v4450, 12
  %v4615 = vpop.permute.xlu0 %4614
  %4616 = vrot.lane.b32.xlu0 %v4451, 12
  %v4617 = vpop.permute.xlu0 %4616
  %4618 = vrot.lane.b32.xlu0 %v4452, 12
  %v4619 = vpop.permute.xlu0 %4618
  %4620 = vrot.lane.b32.xlu0 %v4453, 12
  %v4621 = vpop.permute.xlu0 %4620
  %4622 = vrot.lane.b32.xlu0 %v4454, 12
  %v4623 = vpop.permute.xlu0 %4622
  %v4626 = vsel %vm722, %v4592, %v4609
  %v4629 = vsel %vm722, %v4593, %v4611
  %v4632 = vsel %vm722, %v4594, %v4613
  %v4635 = vsel %vm722, %v4595, %v4615
  %v4638 = vsel %vm722, %v4596, %v4617
  %v4641 = vsel %vm722, %v4597, %v4619
  %v4644 = vsel %vm722, %v4598, %v4621
  %v4647 = vsel %vm722, %v4599, %v4623
  %v4648 = vsel %vm120, %v4626, 0
  %v4650 = vsel %vm120, %v4629, 0
  %v4652 = vsel %vm120, %v4632, 0
  %v4654 = vsel %vm120, %v4635, 0
  %v4656 = vsel %vm120, %v4638, 0
  %v4658 = vsel %vm120, %v4641, 0
  %v4660 = vsel %vm120, %v4644, 0
  %v4662 = vsel %vm120, %v4647, 0
  %4664 = vmatprep.subr.bf16.mxu0 0
  %4665 = vmatpush1.bf16.msra.mxu0 0
  %4666 = vmatprep.subr.bf16.mxu0 0
  %4667 = vmatpush1.bf16.msra.mxu0 0
  %4668 = vmatprep.subr.bf16.mxu0 0
  %4669 = vmatpush1.bf16.msra.mxu0 0
  %4670 = vmatprep.subr.bf16.mxu0 0
  %4671 = vmatpush1.bf16.msra.mxu0 0
  %4672 = vmatprep.subr.bf16.mxu0 0
  %4673 = vmatpush1.bf16.msra.mxu0 0
  %4674 = vmatprep.subr.bf16.mxu0 0
  %4675 = vmatpush1.bf16.msra.mxu0 0
  %4676 = vmatprep.subr.bf16.mxu0 0
  %4677 = vmatpush1.bf16.msra.mxu0 %v948
  %4678 = vmatprep.subr.bf16.mxu0 0
  %4679 = vmatpush1.bf16.msra.mxu0 %v928
  %4680 = vmatprep.subr.bf16.mxu0 0
  %4681 = vmatpush2.bf16.msra.mxu0 0
  %4682 = vmatprep.subr.bf16.mxu0 0
  %4683 = vmatpush2.bf16.msra.mxu0 0
  %4684 = vmatprep.subr.bf16.mxu0 0
  %4685 = vmatpush2.bf16.msra.mxu0 0
  %4686 = vmatprep.subr.bf16.mxu0 0
  %4687 = vmatpush2.bf16.msra.mxu0 0
  %4688 = vmatprep.subr.bf16.mxu0 0
  %4689 = vmatpush2.bf16.msra.mxu0 0
  %4690 = vmatprep.subr.bf16.mxu0 0
  %4691 = vmatpush2.bf16.msra.mxu0 0
  %4692 = vmatprep.subr.bf16.mxu0 0
  %4693 = vmatpush2.bf16.msra.mxu0 0
  %4694 = vmatprep.subr.bf16.mxu0 0
  %4695 = vmatpush2.bf16.msra.mxu0 0
  %4696 = vmatprep.mubr.bf16.mxu0 0
  %4697 = vmatmul.mubr.bf16.gmra.mxu0 %v4648
  %v4698 = vpop.f32.mrf.mxu0
  %v4699 = vadd.f32 %v303, %v4698
  %v4700 = vpop.f32.mrf.mxu0
  %v4701 = vpop.f32.mrf.mxu0
  %v4702 = vadd.f32 %v306, %v4701
  %v4703 = vpop.f32.mrf.mxu0
  %4704 = vmatprep.mubr.bf16.mxu0 0
  %4705 = vmatmul.mubr.bf16.gmra.mxu0 %v4650
  %v4706 = vpop.f32.mrf.mxu0
  %v4707 = vadd.f32 %v311, %v4706
  %v4708 = vpop.f32.mrf.mxu0
  %v4709 = vpop.f32.mrf.mxu0
  %v4710 = vadd.f32 %v314, %v4709
  %v4711 = vpop.f32.mrf.mxu0
  %4712 = vmatprep.mubr.bf16.mxu0 0
  %4713 = vmatmul.mubr.bf16.gmra.mxu0 %v4652
  %v4714 = vpop.f32.mrf.mxu0
  %v4715 = vadd.f32 %v319, %v4714
  %v4716 = vpop.f32.mrf.mxu0
  %v4717 = vpop.f32.mrf.mxu0
  %v4718 = vadd.f32 %v322, %v4717
  %v4719 = vpop.f32.mrf.mxu0
  %4720 = vmatprep.mubr.bf16.mxu0 0
  %4721 = vmatmul.mubr.bf16.gmra.mxu0 %v4654
  %v4722 = vpop.f32.mrf.mxu0
  %v4723 = vadd.f32 %v327, %v4722
  %v4724 = vpop.f32.mrf.mxu0
  %v4725 = vpop.f32.mrf.mxu0
  %v4726 = vadd.f32 %v330, %v4725
  %v4727 = vpop.f32.mrf.mxu0
  %4728 = vmatprep.mubr.bf16.mxu0 0
  %4729 = vmatmul.mubr.bf16.gmra.mxu0 %v4656
  %v4730 = vpop.f32.mrf.mxu0
  %v4731 = vadd.f32 %v335, %v4730
  %v4732 = vpop.f32.mrf.mxu0
  %v4733 = vpop.f32.mrf.mxu0
  %v4734 = vadd.f32 %v338, %v4733
  %v4735 = vpop.f32.mrf.mxu0
  %4736 = vmatprep.mubr.bf16.mxu0 0
  %4737 = vmatmul.mubr.bf16.gmra.mxu0 %v4658
  %v4738 = vpop.f32.mrf.mxu0
  %v4739 = vadd.f32 %v343, %v4738
  %v4740 = vpop.f32.mrf.mxu0
  %v4741 = vpop.f32.mrf.mxu0
  %v4742 = vadd.f32 %v346, %v4741
  %v4743 = vpop.f32.mrf.mxu0
  %4744 = vmatprep.mubr.bf16.mxu0 0
  %4745 = vmatmul.mubr.bf16.gmra.mxu0 %v4660
  %v4746 = vpop.f32.mrf.mxu0
  %v4747 = vadd.f32 %v351, %v4746
  %v4748 = vpop.f32.mrf.mxu0
  %v4749 = vpop.f32.mrf.mxu0
  %v4750 = vadd.f32 %v354, %v4749
  %v4751 = vpop.f32.mrf.mxu0
  %4752 = vmatprep.mubr.bf16.mxu0 0
  %4753 = vmatmul.mubr.bf16.gmra.mxu0 %v4662
  %v4754 = vpop.f32.mrf.mxu0
  %v4755 = vadd.f32 %v359, %v4754
  %v4756 = vpop.f32.mrf.mxu0
  %v4757 = vpop.f32.mrf.mxu0
  %v4758 = vadd.f32 %v362, %v4757
  %v4759 = vpop.f32.mrf.mxu0
  %4760 = vdwg.mxu0
  %v4761 = vmax.f32 %v4699, 0.0
  %v4762 = vmax.f32 %v4702, 0.0
  %v4763 = vmax.f32 %v4707, 0.0
  %v4764 = vmax.f32 %v4710, 0.0
  %v4765 = vmax.f32 %v4715, 0.0
  %v4766 = vmax.f32 %v4718, 0.0
  %v4767 = vmax.f32 %v4723, 0.0
  %v4768 = vmax.f32 %v4726, 0.0
  %v4769 = vmax.f32 %v4731, 0.0
  %v4770 = vmax.f32 %v4734, 0.0
  %v4771 = vmax.f32 %v4739, 0.0
  %v4772 = vmax.f32 %v4742, 0.0
  %v4773 = vmax.f32 %v4747, 0.0
  %v4774 = vmax.f32 %v4750, 0.0
  %v4775 = vmax.f32 %v4755, 0.0
  %v4776 = vmax.f32 %v4758, 0.0
  %v4777 = vpack.c.bf16 %v4762, %v4761
  %v4778 = vpack.c.bf16 %v4764, %v4763
  %v4779 = vpack.c.bf16 %v4766, %v4765
  %v4780 = vpack.c.bf16 %v4768, %v4767
  %v4781 = vpack.c.bf16 %v4770, %v4769
  %v4782 = vpack.c.bf16 %v4772, %v4771
  %v4783 = vpack.c.bf16 %v4774, %v4773
  %v4784 = vpack.c.bf16 %v4776, %v4775
  %4793 = vrot.lane.b32.xlu0 %v4592, 12
  %v4794 = vpop.permute.xlu0 %4793
  %4795 = vrot.lane.b32.xlu0 %v4593, 12
  %v4796 = vpop.permute.xlu0 %4795
  %4797 = vrot.lane.b32.xlu0 %v4594, 12
  %v4798 = vpop.permute.xlu0 %4797
  %4799 = vrot.lane.b32.xlu0 %v4595, 12
  %v4800 = vpop.permute.xlu0 %4799
  %4801 = vrot.lane.b32.xlu0 %v4596, 12
  %v4802 = vpop.permute.xlu0 %4801
  %4803 = vrot.lane.b32.xlu0 %v4597, 12
  %v4804 = vpop.permute.xlu0 %4803
  %4805 = vrot.lane.b32.xlu0 %v4598, 12
  %v4806 = vpop.permute.xlu0 %4805
  %4807 = vrot.lane.b32.xlu0 %v4599, 12
  %v4808 = vpop.permute.xlu0 %4807
  %4809 = vrot.lane.b32.xlu0 %v4447, 24
  %v4810 = vpop.permute.xlu0 %4809
  %4811 = vrot.lane.b32.xlu0 %v4448, 24
  %v4812 = vpop.permute.xlu0 %4811
  %4813 = vrot.lane.b32.xlu0 %v4449, 24
  %v4814 = vpop.permute.xlu0 %4813
  %4815 = vrot.lane.b32.xlu0 %v4450, 24
  %v4816 = vpop.permute.xlu0 %4815
  %4817 = vrot.lane.b32.xlu0 %v4451, 24
  %v4818 = vpop.permute.xlu0 %4817
  %4819 = vrot.lane.b32.xlu0 %v4452, 24
  %v4820 = vpop.permute.xlu0 %4819
  %4821 = vrot.lane.b32.xlu0 %v4453, 24
  %v4822 = vpop.permute.xlu0 %4821
  %4823 = vrot.lane.b32.xlu0 %v4454, 24
  %v4824 = vpop.permute.xlu0 %4823
  %v4827 = vsel %vm722, %v4777, %v4794
  %v4830 = vsel %vm722, %v4778, %v4796
  %v4833 = vsel %vm722, %v4779, %v4798
  %v4836 = vsel %vm722, %v4780, %v4800
  %v4839 = vsel %vm722, %v4781, %v4802
  %v4842 = vsel %vm722, %v4782, %v4804
  %v4845 = vsel %vm722, %v4783, %v4806
  %v4848 = vsel %vm722, %v4784, %v4808
  %v4850 = vsel %vm120, %v4827, %v4810
  %v4852 = vsel %vm120, %v4830, %v4812
  %v4854 = vsel %vm120, %v4833, %v4814
  %v4856 = vsel %vm120, %v4836, %v4816
  %v4858 = vsel %vm120, %v4839, %v4818
  %v4860 = vsel %vm120, %v4842, %v4820
  %v4862 = vsel %vm120, %v4845, %v4822
  %v4864 = vsel %vm120, %v4848, %v4824
  %v4865 = vsel %vm1171, %v4850, 0
  %v4867 = vsel %vm1171, %v4852, 0
  %v4869 = vsel %vm1171, %v4854, 0
  %v4871 = vsel %vm1171, %v4856, 0
  %v4873 = vsel %vm1171, %v4858, 0
  %v4875 = vsel %vm1171, %v4860, 0
  %v4877 = vsel %vm1171, %v4862, 0
  %v4879 = vsel %vm1171, %v4864, 0
  %4881 = vmatprep.subr.bf16.mxu0 0
  %4882 = vmatpush1.bf16.msra.mxu0 0
  %4883 = vmatprep.subr.bf16.mxu0 0
  %4884 = vmatpush1.bf16.msra.mxu0 0
  %4885 = vmatprep.subr.bf16.mxu0 0
  %4886 = vmatpush1.bf16.msra.mxu0 0
  %4887 = vmatprep.subr.bf16.mxu0 0
  %4888 = vmatpush1.bf16.msra.mxu0 0
  %4889 = vmatprep.subr.bf16.mxu0 0
  %4890 = vmatpush1.bf16.msra.mxu0 0
  %4891 = vmatprep.subr.bf16.mxu0 0
  %4892 = vmatpush1.bf16.msra.mxu0 %v1190
  %4893 = vmatprep.subr.bf16.mxu0 0
  %4894 = vmatpush1.bf16.msra.mxu0 %v1167
  %4895 = vmatprep.subr.bf16.mxu0 0
  %4896 = vmatpush1.bf16.msra.mxu0 %v1166
  %4897 = vmatprep.subr.bf16.mxu0 0
  %4898 = vmatpush2.bf16.msra.mxu0 0
  %4899 = vmatprep.subr.bf16.mxu0 0
  %4900 = vmatpush2.bf16.msra.mxu0 0
  %4901 = vmatprep.subr.bf16.mxu0 0
  %4902 = vmatpush2.bf16.msra.mxu0 0
  %4903 = vmatprep.subr.bf16.mxu0 0
  %4904 = vmatpush2.bf16.msra.mxu0 0
  %4905 = vmatprep.subr.bf16.mxu0 0
  %4906 = vmatpush2.bf16.msra.mxu0 0
  %4907 = vmatprep.subr.bf16.mxu0 0
  %4908 = vmatpush2.bf16.msra.mxu0 0
  %4909 = vmatprep.subr.bf16.mxu0 0
  %4910 = vmatpush2.bf16.msra.mxu0 0
  %4911 = vmatprep.subr.bf16.mxu0 0
  %4912 = vmatpush2.bf16.msra.mxu0 0
  %4913 = vmatprep.mubr.bf16.mxu0 0
  %4914 = vmatmul.mubr.bf16.gmra.mxu0 %v4865
  %v4915 = vpop.f32.mrf.mxu0
  %v4916 = vadd.f32 0.0, %v4915
  %v4917 = vpop.f32.mrf.mxu0
  %v4918 = vpop.f32.mrf.mxu0
  %v4919 = vadd.f32 0.0, %v4918
  %v4920 = vpop.f32.mrf.mxu0
  %4921 = vmatprep.mubr.bf16.mxu0 0
  %4922 = vmatmul.mubr.bf16.gmra.mxu0 %v4867
  %v4923 = vpop.f32.mrf.mxu0
  %v4924 = vadd.f32 0.0, %v4923
  %v4925 = vpop.f32.mrf.mxu0
  %v4926 = vpop.f32.mrf.mxu0
  %v4927 = vadd.f32 0.0, %v4926
  %v4928 = vpop.f32.mrf.mxu0
  %4929 = vmatprep.mubr.bf16.mxu0 0
  %4930 = vmatmul.mubr.bf16.gmra.mxu0 %v4869
  %v4931 = vpop.f32.mrf.mxu0
  %v4932 = vadd.f32 0.0, %v4931
  %v4933 = vpop.f32.mrf.mxu0
  %v4934 = vpop.f32.mrf.mxu0
  %v4935 = vadd.f32 0.0, %v4934
  %v4936 = vpop.f32.mrf.mxu0
  %4937 = vmatprep.mubr.bf16.mxu0 0
  %4938 = vmatmul.mubr.bf16.gmra.mxu0 %v4871
  %v4939 = vpop.f32.mrf.mxu0
  %v4940 = vadd.f32 0.0, %v4939
  %v4941 = vpop.f32.mrf.mxu0
  %v4942 = vpop.f32.mrf.mxu0
  %v4943 = vadd.f32 0.0, %v4942
  %v4944 = vpop.f32.mrf.mxu0
  %4945 = vmatprep.mubr.bf16.mxu0 0
  %4946 = vmatmul.mubr.bf16.gmra.mxu0 %v4873
  %v4947 = vpop.f32.mrf.mxu0
  %v4948 = vadd.f32 0.0, %v4947
  %v4949 = vpop.f32.mrf.mxu0
  %v4950 = vpop.f32.mrf.mxu0
  %v4951 = vadd.f32 0.0, %v4950
  %v4952 = vpop.f32.mrf.mxu0
  %4953 = vmatprep.mubr.bf16.mxu0 0
  %4954 = vmatmul.mubr.bf16.gmra.mxu0 %v4875
  %v4955 = vpop.f32.mrf.mxu0
  %v4956 = vadd.f32 0.0, %v4955
  %v4957 = vpop.f32.mrf.mxu0
  %v4958 = vpop.f32.mrf.mxu0
  %v4959 = vadd.f32 0.0, %v4958
  %v4960 = vpop.f32.mrf.mxu0
  %4961 = vmatprep.mubr.bf16.mxu0 0
  %4962 = vmatmul.mubr.bf16.gmra.mxu0 %v4877
  %v4963 = vpop.f32.mrf.mxu0
  %v4964 = vadd.f32 0.0, %v4963
  %v4965 = vpop.f32.mrf.mxu0
  %v4966 = vpop.f32.mrf.mxu0
  %v4967 = vadd.f32 0.0, %v4966
  %v4968 = vpop.f32.mrf.mxu0
  %4969 = vmatprep.mubr.bf16.mxu0 0
  %4970 = vmatmul.mubr.bf16.gmra.mxu0 %v4879
  %v4971 = vpop.f32.mrf.mxu0
  %v4972 = vadd.f32 0.0, %v4971
  %v4973 = vpop.f32.mrf.mxu0
  %v4974 = vpop.f32.mrf.mxu0
  %v4975 = vadd.f32 0.0, %v4974
  %v4976 = vpop.f32.mrf.mxu0
  %4977 = vdwg.mxu0
  %v4978 = vmax.f32 %v4237, %v4916
  %v4979 = vmax.f32 %v4238, %v4919
  %v4980 = vmax.f32 %v4239, %v4924
  %v4981 = vmax.f32 %v4240, %v4927
  %v4982 = vmax.f32 %v4241, %v4932
  %v4983 = vmax.f32 %v4242, %v4935
  %v4984 = vmax.f32 %v4243, %v4940
  %v4985 = vmax.f32 %v4244, %v4943
  %v4986 = vmax.f32 %v4245, %v4948
  %v4987 = vmax.f32 %v4246, %v4951
  %v4988 = vmax.f32 %v4247, %v4956
  %v4989 = vmax.f32 %v4248, %v4959
  %v4990 = vmax.f32 %v4249, %v4964
  %v4991 = vmax.f32 %v4250, %v4967
  %v4992 = vmax.f32 %v4251, %v4972
  %v4993 = vmax.f32 %v4252, %v4975
  %s4994 = scalar_lea.vmem %s0, 384
  %v4995 = vld [vmem:[%s4994] sm:$0xf]
  %v4996 = vld [vmem:[%s4994 + $0x4] sm:$0xf]
  %v4997 = vld [vmem:[%s4994 + $0x8] sm:$0xf]
  %v4998 = vld [vmem:[%s4994 + $0xc] sm:$0xf]
  %v4999 = vld [vmem:[%s4994 + $0x10] sm:$0xf]
  %v5000 = vld [vmem:[%s4994 + $0x14] sm:$0xf]
  %v5001 = vld [vmem:[%s4994 + $0x18] sm:$0xf]
  %v5002 = vld [vmem:[%s4994 + $0x1c] sm:$0xf]
  %v5003 = vld [vmem:[%s4994 + $0x20] sm:$0xf]
  %v5004 = vld [vmem:[%s4994 + $0x24] sm:$0xf]
  %v5005 = vld [vmem:[%s4994 + $0x28] sm:$0xf]
  %v5006 = vld [vmem:[%s4994 + $0x2c] sm:$0xf]
  %v5007 = vld [vmem:[%s4994 + $0x30] sm:$0xf]
  %v5008 = vld [vmem:[%s4994 + $0x34] sm:$0xf]
  %v5009 = vld [vmem:[%s4994 + $0x38] sm:$0xf]
  %v5010 = vld [vmem:[%s4994 + $0x3c] sm:$0xf]
  %v5027 = vunpack.c.l.b16 %v4995
  %v5028 = vunpack.c.l.b16 %v4996
  %v5029 = vunpack.c.l.b16 %v4997
  %v5030 = vunpack.c.l.b16 %v4998
  %v5031 = vunpack.c.l.b16 %v4999
  %v5032 = vunpack.c.l.b16 %v5000
  %v5033 = vunpack.c.l.b16 %v5001
  %v5034 = vunpack.c.l.b16 %v5002
  %v5035 = vunpack.c.l.b16 %v5003
  %v5036 = vunpack.c.l.b16 %v5004
  %v5037 = vunpack.c.l.b16 %v5005
  %v5038 = vunpack.c.l.b16 %v5006
  %v5039 = vunpack.c.l.b16 %v5007
  %v5040 = vunpack.c.l.b16 %v5008
  %v5041 = vunpack.c.l.b16 %v5009
  %v5042 = vunpack.c.l.b16 %v5010
  %v5043 = vpack.c.b16 %v5028, %v5027
  %v5044 = vpack.c.b16 %v5030, %v5029
  %v5045 = vpack.c.b16 %v5032, %v5031
  %v5046 = vpack.c.b16 %v5034, %v5033
  %v5047 = vpack.c.b16 %v5036, %v5035
  %v5048 = vpack.c.b16 %v5038, %v5037
  %v5049 = vpack.c.b16 %v5040, %v5039
  %v5050 = vpack.c.b16 %v5042, %v5041
  %v5052 = vsel %vm562, %v5043, 0
  %v5055 = vsel %vm562, %v5044, 0
  %v5058 = vsel %vm562, %v5045, 0
  %v5061 = vsel %vm562, %v5046, 0
  %v5064 = vsel %vm562, %v5047, 0
  %v5067 = vsel %vm562, %v5048, 0
  %v5070 = vsel %vm562, %v5049, 0
  %v5073 = vsel %vm562, %v5050, 0
  %5075 = vmatprep.subr.bf16.mxu0 0
  %5076 = vmatpush1.bf16.msra.mxu0 0
  %5077 = vmatprep.subr.bf16.mxu0 0
  %5078 = vmatpush1.bf16.msra.mxu0 0
  %5079 = vmatprep.subr.bf16.mxu0 0
  %5080 = vmatpush1.bf16.msra.mxu0 0
  %5081 = vmatprep.subr.bf16.mxu0 0
  %5082 = vmatpush1.bf16.msra.mxu0 0
  %5083 = vmatprep.subr.bf16.mxu0 0
  %5084 = vmatpush1.bf16.msra.mxu0 0
  %5085 = vmatprep.subr.bf16.mxu0 0
  %5086 = vmatpush1.bf16.msra.mxu0 0
  %5087 = vmatprep.subr.bf16.mxu0 0
  %5088 = vmatpush1.bf16.msra.mxu0 %v592
  %5089 = vmatprep.subr.bf16.mxu0 0
  %5090 = vmatpush1.bf16.msra.mxu0 %v559
  %5091 = vmatprep.subr.bf16.mxu0 0
  %5092 = vmatpush2.bf16.msra.mxu0 0
  %5093 = vmatprep.subr.bf16.mxu0 0
  %5094 = vmatpush2.bf16.msra.mxu0 0
  %5095 = vmatprep.subr.bf16.mxu0 0
  %5096 = vmatpush2.bf16.msra.mxu0 0
  %5097 = vmatprep.subr.bf16.mxu0 0
  %5098 = vmatpush2.bf16.msra.mxu0 0
  %5099 = vmatprep.subr.bf16.mxu0 0
  %5100 = vmatpush2.bf16.msra.mxu0 0
  %5101 = vmatprep.subr.bf16.mxu0 0
  %5102 = vmatpush2.bf16.msra.mxu0 0
  %5103 = vmatprep.subr.bf16.mxu0 0
  %5104 = vmatpush2.bf16.msra.mxu0 0
  %5105 = vmatprep.subr.bf16.mxu0 0
  %5106 = vmatpush2.bf16.msra.mxu0 0
  %5107 = vmatprep.mubr.bf16.mxu0 0
  %5108 = vmatmul.mubr.bf16.gmra.mxu0 %v5052
  %v5109 = vpop.f32.mrf.mxu0
  %v5110 = vadd.f32 %v509, %v5109
  %v5111 = vpop.f32.mrf.mxu0
  %v5112 = vpop.f32.mrf.mxu0
  %v5113 = vadd.f32 %v509, %v5112
  %v5114 = vpop.f32.mrf.mxu0
  %5115 = vmatprep.mubr.bf16.mxu0 0
  %5116 = vmatmul.mubr.bf16.gmra.mxu0 %v5055
  %v5117 = vpop.f32.mrf.mxu0
  %v5118 = vadd.f32 %v509, %v5117
  %v5119 = vpop.f32.mrf.mxu0
  %v5120 = vpop.f32.mrf.mxu0
  %v5121 = vadd.f32 %v509, %v5120
  %v5122 = vpop.f32.mrf.mxu0
  %5123 = vmatprep.mubr.bf16.mxu0 0
  %5124 = vmatmul.mubr.bf16.gmra.mxu0 %v5058
  %v5125 = vpop.f32.mrf.mxu0
  %v5126 = vadd.f32 %v509, %v5125
  %v5127 = vpop.f32.mrf.mxu0
  %v5128 = vpop.f32.mrf.mxu0
  %v5129 = vadd.f32 %v509, %v5128
  %v5130 = vpop.f32.mrf.mxu0
  %5131 = vmatprep.mubr.bf16.mxu0 0
  %5132 = vmatmul.mubr.bf16.gmra.mxu0 %v5061
  %v5133 = vpop.f32.mrf.mxu0
  %v5134 = vadd.f32 %v509, %v5133
  %v5135 = vpop.f32.mrf.mxu0
  %v5136 = vpop.f32.mrf.mxu0
  %v5137 = vadd.f32 %v509, %v5136
  %v5138 = vpop.f32.mrf.mxu0
  %5139 = vmatprep.mubr.bf16.mxu0 0
  %5140 = vmatmul.mubr.bf16.gmra.mxu0 %v5064
  %v5141 = vpop.f32.mrf.mxu0
  %v5142 = vadd.f32 %v509, %v5141
  %v5143 = vpop.f32.mrf.mxu0
  %v5144 = vpop.f32.mrf.mxu0
  %v5145 = vadd.f32 %v509, %v5144
  %v5146 = vpop.f32.mrf.mxu0
  %5147 = vmatprep.mubr.bf16.mxu0 0
  %5148 = vmatmul.mubr.bf16.gmra.mxu0 %v5067
  %v5149 = vpop.f32.mrf.mxu0
  %v5150 = vadd.f32 %v509, %v5149
  %v5151 = vpop.f32.mrf.mxu0
  %v5152 = vpop.f32.mrf.mxu0
  %v5153 = vadd.f32 %v509, %v5152
  %v5154 = vpop.f32.mrf.mxu0
  %5155 = vmatprep.mubr.bf16.mxu0 0
  %5156 = vmatmul.mubr.bf16.gmra.mxu0 %v5070
  %v5157 = vpop.f32.mrf.mxu0
  %v5158 = vadd.f32 %v509, %v5157
  %v5159 = vpop.f32.mrf.mxu0
  %v5160 = vpop.f32.mrf.mxu0
  %v5161 = vadd.f32 %v509, %v5160
  %v5162 = vpop.f32.mrf.mxu0
  %5163 = vmatprep.mubr.bf16.mxu0 0
  %5164 = vmatmul.mubr.bf16.gmra.mxu0 %v5073
  %v5165 = vpop.f32.mrf.mxu0
  %v5166 = vadd.f32 %v509, %v5165
  %v5167 = vpop.f32.mrf.mxu0
  %v5168 = vpop.f32.mrf.mxu0
  %v5169 = vadd.f32 %v509, %v5168
  %v5170 = vpop.f32.mrf.mxu0
  %5171 = vdwg.mxu0
  %v5172 = vmax.f32 %v5110, 0.0
  %v5173 = vmax.f32 %v5113, 0.0
  %v5174 = vmax.f32 %v5118, 0.0
  %v5175 = vmax.f32 %v5121, 0.0
  %v5176 = vmax.f32 %v5126, 0.0
  %v5177 = vmax.f32 %v5129, 0.0
  %v5178 = vmax.f32 %v5134, 0.0
  %v5179 = vmax.f32 %v5137, 0.0
  %v5180 = vmax.f32 %v5142, 0.0
  %v5181 = vmax.f32 %v5145, 0.0
  %v5182 = vmax.f32 %v5150, 0.0
  %v5183 = vmax.f32 %v5153, 0.0
  %v5184 = vmax.f32 %v5158, 0.0
  %v5185 = vmax.f32 %v5161, 0.0
  %v5186 = vmax.f32 %v5166, 0.0
  %v5187 = vmax.f32 %v5169, 0.0
  %v5188 = vpack.c.bf16 %v5173, %v5172
  %v5189 = vpack.c.bf16 %v5175, %v5174
  %v5190 = vpack.c.bf16 %v5177, %v5176
  %v5191 = vpack.c.bf16 %v5179, %v5178
  %v5192 = vpack.c.bf16 %v5181, %v5180
  %v5193 = vpack.c.bf16 %v5183, %v5182
  %v5194 = vpack.c.bf16 %v5185, %v5184
  %v5195 = vpack.c.bf16 %v5187, %v5186
  %v5197 = vsel %vm722, %v5188, 0
  %v5200 = vsel %vm722, %v5189, 0
  %v5203 = vsel %vm722, %v5190, 0
  %v5206 = vsel %vm722, %v5191, 0
  %v5209 = vsel %vm722, %v5192, 0
  %v5212 = vsel %vm722, %v5193, 0
  %v5215 = vsel %vm722, %v5194, 0
  %v5218 = vsel %vm722, %v5195, 0
  %5220 = vmatprep.subr.bf16.mxu0 0
  %5221 = vmatpush1.bf16.msra.mxu0 0
  %5222 = vmatprep.subr.bf16.mxu0 0
  %5223 = vmatpush1.bf16.msra.mxu0 0
  %5224 = vmatprep.subr.bf16.mxu0 0
  %5225 = vmatpush1.bf16.msra.mxu0 0
  %5226 = vmatprep.subr.bf16.mxu0 0
  %5227 = vmatpush1.bf16.msra.mxu0 0
  %5228 = vmatprep.subr.bf16.mxu0 0
  %5229 = vmatpush1.bf16.msra.mxu0 0
  %5230 = vmatprep.subr.bf16.mxu0 0
  %5231 = vmatpush1.bf16.msra.mxu0 0
  %5232 = vmatprep.subr.bf16.mxu0 0
  %5233 = vmatpush1.bf16.msra.mxu0 0
  %5234 = vmatprep.subr.bf16.mxu0 0
  %5235 = vmatpush1.bf16.msra.mxu0 %v748
  %5236 = vmatprep.subr.bf16.mxu0 0
  %5237 = vmatpush2.bf16.msra.mxu0 0
  %5238 = vmatprep.subr.bf16.mxu0 0
  %5239 = vmatpush2.bf16.msra.mxu0 0
  %5240 = vmatprep.subr.bf16.mxu0 0
  %5241 = vmatpush2.bf16.msra.mxu0 0
  %5242 = vmatprep.subr.bf16.mxu0 0
  %5243 = vmatpush2.bf16.msra.mxu0 0
  %5244 = vmatprep.subr.bf16.mxu0 0
  %5245 = vmatpush2.bf16.msra.mxu0 0
  %5246 = vmatprep.subr.bf16.mxu0 0
  %5247 = vmatpush2.bf16.msra.mxu0 0
  %5248 = vmatprep.subr.bf16.mxu0 0
  %5249 = vmatpush2.bf16.msra.mxu0 0
  %5250 = vmatprep.subr.bf16.mxu0 0
  %5251 = vmatpush2.bf16.msra.mxu0 0
  %5252 = vmatprep.mubr.bf16.mxu0 0
  %5253 = vmatmul.mubr.bf16.gmra.mxu0 %v5197
  %v5254 = vpop.f32.mrf.mxu0
  %v5255 = vadd.f32 %v184, %v5254
  %v5256 = vpop.f32.mrf.mxu0
  %v5257 = vpop.f32.mrf.mxu0
  %v5258 = vadd.f32 %v187, %v5257
  %v5259 = vpop.f32.mrf.mxu0
  %5260 = vmatprep.mubr.bf16.mxu0 0
  %5261 = vmatmul.mubr.bf16.gmra.mxu0 %v5200
  %v5262 = vpop.f32.mrf.mxu0
  %v5263 = vadd.f32 %v192, %v5262
  %v5264 = vpop.f32.mrf.mxu0
  %v5265 = vpop.f32.mrf.mxu0
  %v5266 = vadd.f32 %v195, %v5265
  %v5267 = vpop.f32.mrf.mxu0
  %5268 = vmatprep.mubr.bf16.mxu0 0
  %5269 = vmatmul.mubr.bf16.gmra.mxu0 %v5203
  %v5270 = vpop.f32.mrf.mxu0
  %v5271 = vadd.f32 %v200, %v5270
  %v5272 = vpop.f32.mrf.mxu0
  %v5273 = vpop.f32.mrf.mxu0
  %v5274 = vadd.f32 %v203, %v5273
  %v5275 = vpop.f32.mrf.mxu0
  %5276 = vmatprep.mubr.bf16.mxu0 0
  %5277 = vmatmul.mubr.bf16.gmra.mxu0 %v5206
  %v5278 = vpop.f32.mrf.mxu0
  %v5279 = vadd.f32 %v208, %v5278
  %v5280 = vpop.f32.mrf.mxu0
  %v5281 = vpop.f32.mrf.mxu0
  %v5282 = vadd.f32 %v211, %v5281
  %v5283 = vpop.f32.mrf.mxu0
  %5284 = vmatprep.mubr.bf16.mxu0 0
  %5285 = vmatmul.mubr.bf16.gmra.mxu0 %v5209
  %v5286 = vpop.f32.mrf.mxu0
  %v5287 = vadd.f32 %v216, %v5286
  %v5288 = vpop.f32.mrf.mxu0
  %v5289 = vpop.f32.mrf.mxu0
  %v5290 = vadd.f32 %v219, %v5289
  %v5291 = vpop.f32.mrf.mxu0
  %5292 = vmatprep.mubr.bf16.mxu0 0
  %5293 = vmatmul.mubr.bf16.gmra.mxu0 %v5212
  %v5294 = vpop.f32.mrf.mxu0
  %v5295 = vadd.f32 %v224, %v5294
  %v5296 = vpop.f32.mrf.mxu0
  %v5297 = vpop.f32.mrf.mxu0
  %v5298 = vadd.f32 %v227, %v5297
  %v5299 = vpop.f32.mrf.mxu0
  %5300 = vmatprep.mubr.bf16.mxu0 0
  %5301 = vmatmul.mubr.bf16.gmra.mxu0 %v5215
  %v5302 = vpop.f32.mrf.mxu0
  %v5303 = vadd.f32 %v232, %v5302
  %v5304 = vpop.f32.mrf.mxu0
  %v5305 = vpop.f32.mrf.mxu0
  %v5306 = vadd.f32 %v235, %v5305
  %v5307 = vpop.f32.mrf.mxu0
  %5308 = vmatprep.mubr.bf16.mxu0 0
  %5309 = vmatmul.mubr.bf16.gmra.mxu0 %v5218
  %v5310 = vpop.f32.mrf.mxu0
  %v5311 = vadd.f32 %v240, %v5310
  %v5312 = vpop.f32.mrf.mxu0
  %v5313 = vpop.f32.mrf.mxu0
  %v5314 = vadd.f32 %v243, %v5313
  %v5315 = vpop.f32.mrf.mxu0
  %5316 = vdwg.mxu0
  %v5317 = vmax.f32 %v5255, 0.0
  %v5318 = vmax.f32 %v5258, 0.0
  %v5319 = vmax.f32 %v5263, 0.0
  %v5320 = vmax.f32 %v5266, 0.0
  %v5321 = vmax.f32 %v5271, 0.0
  %v5322 = vmax.f32 %v5274, 0.0
  %v5323 = vmax.f32 %v5279, 0.0
  %v5324 = vmax.f32 %v5282, 0.0
  %v5325 = vmax.f32 %v5287, 0.0
  %v5326 = vmax.f32 %v5290, 0.0
  %v5327 = vmax.f32 %v5295, 0.0
  %v5328 = vmax.f32 %v5298, 0.0
  %v5329 = vmax.f32 %v5303, 0.0
  %v5330 = vmax.f32 %v5306, 0.0
  %v5331 = vmax.f32 %v5311, 0.0
  %v5332 = vmax.f32 %v5314, 0.0
  %v5333 = vpack.c.bf16 %v5318, %v5317
  %v5334 = vpack.c.bf16 %v5320, %v5319
  %v5335 = vpack.c.bf16 %v5322, %v5321
  %v5336 = vpack.c.bf16 %v5324, %v5323
  %v5337 = vpack.c.bf16 %v5326, %v5325
  %v5338 = vpack.c.bf16 %v5328, %v5327
  %v5339 = vpack.c.bf16 %v5330, %v5329
  %v5340 = vpack.c.bf16 %v5332, %v5331
  %5349 = vrot.lane.b32.xlu0 %v5188, 12
  %v5350 = vpop.permute.xlu0 %5349
  %5351 = vrot.lane.b32.xlu0 %v5189, 12
  %v5352 = vpop.permute.xlu0 %5351
  %5353 = vrot.lane.b32.xlu0 %v5190, 12
  %v5354 = vpop.permute.xlu0 %5353
  %5355 = vrot.lane.b32.xlu0 %v5191, 12
  %v5356 = vpop.permute.xlu0 %5355
  %5357 = vrot.lane.b32.xlu0 %v5192, 12
  %v5358 = vpop.permute.xlu0 %5357
  %5359 = vrot.lane.b32.xlu0 %v5193, 12
  %v5360 = vpop.permute.xlu0 %5359
  %5361 = vrot.lane.b32.xlu0 %v5194, 12
  %v5362 = vpop.permute.xlu0 %5361
  %5363 = vrot.lane.b32.xlu0 %v5195, 12
  %v5364 = vpop.permute.xlu0 %5363
  %v5367 = vsel %vm722, %v5333, %v5350
  %v5370 = vsel %vm722, %v5334, %v5352
  %v5373 = vsel %vm722, %v5335, %v5354
  %v5376 = vsel %vm722, %v5336, %v5356
  %v5379 = vsel %vm722, %v5337, %v5358
  %v5382 = vsel %vm722, %v5338, %v5360
  %v5385 = vsel %vm722, %v5339, %v5362
  %v5388 = vsel %vm722, %v5340, %v5364
  %v5389 = vsel %vm120, %v5367, 0
  %v5391 = vsel %vm120, %v5370, 0
  %v5393 = vsel %vm120, %v5373, 0
  %v5395 = vsel %vm120, %v5376, 0
  %v5397 = vsel %vm120, %v5379, 0
  %v5399 = vsel %vm120, %v5382, 0
  %v5401 = vsel %vm120, %v5385, 0
  %v5403 = vsel %vm120, %v5388, 0
  %5405 = vmatprep.subr.bf16.mxu0 0
  %5406 = vmatpush1.bf16.msra.mxu0 0
  %5407 = vmatprep.subr.bf16.mxu0 0
  %5408 = vmatpush1.bf16.msra.mxu0 0
  %5409 = vmatprep.subr.bf16.mxu0 0
  %5410 = vmatpush1.bf16.msra.mxu0 0
  %5411 = vmatprep.subr.bf16.mxu0 0
  %5412 = vmatpush1.bf16.msra.mxu0 0
  %5413 = vmatprep.subr.bf16.mxu0 0
  %5414 = vmatpush1.bf16.msra.mxu0 0
  %5415 = vmatprep.subr.bf16.mxu0 0
  %5416 = vmatpush1.bf16.msra.mxu0 0
  %5417 = vmatprep.subr.bf16.mxu0 0
  %5418 = vmatpush1.bf16.msra.mxu0 %v948
  %5419 = vmatprep.subr.bf16.mxu0 0
  %5420 = vmatpush1.bf16.msra.mxu0 %v928
  %5421 = vmatprep.subr.bf16.mxu0 0
  %5422 = vmatpush2.bf16.msra.mxu0 0
  %5423 = vmatprep.subr.bf16.mxu0 0
  %5424 = vmatpush2.bf16.msra.mxu0 0
  %5425 = vmatprep.subr.bf16.mxu0 0
  %5426 = vmatpush2.bf16.msra.mxu0 0
  %5427 = vmatprep.subr.bf16.mxu0 0
  %5428 = vmatpush2.bf16.msra.mxu0 0
  %5429 = vmatprep.subr.bf16.mxu0 0
  %5430 = vmatpush2.bf16.msra.mxu0 0
  %5431 = vmatprep.subr.bf16.mxu0 0
  %5432 = vmatpush2.bf16.msra.mxu0 0
  %5433 = vmatprep.subr.bf16.mxu0 0
  %5434 = vmatpush2.bf16.msra.mxu0 0
  %5435 = vmatprep.subr.bf16.mxu0 0
  %5436 = vmatpush2.bf16.msra.mxu0 0
  %5437 = vmatprep.mubr.bf16.mxu0 0
  %5438 = vmatmul.mubr.bf16.gmra.mxu0 %v5389
  %v5439 = vpop.f32.mrf.mxu0
  %v5440 = vadd.f32 %v303, %v5439
  %v5441 = vpop.f32.mrf.mxu0
  %v5442 = vpop.f32.mrf.mxu0
  %v5443 = vadd.f32 %v306, %v5442
  %v5444 = vpop.f32.mrf.mxu0
  %5445 = vmatprep.mubr.bf16.mxu0 0
  %5446 = vmatmul.mubr.bf16.gmra.mxu0 %v5391
  %v5447 = vpop.f32.mrf.mxu0
  %v5448 = vadd.f32 %v311, %v5447
  %v5449 = vpop.f32.mrf.mxu0
  %v5450 = vpop.f32.mrf.mxu0
  %v5451 = vadd.f32 %v314, %v5450
  %v5452 = vpop.f32.mrf.mxu0
  %5453 = vmatprep.mubr.bf16.mxu0 0
  %5454 = vmatmul.mubr.bf16.gmra.mxu0 %v5393
  %v5455 = vpop.f32.mrf.mxu0
  %v5456 = vadd.f32 %v319, %v5455
  %v5457 = vpop.f32.mrf.mxu0
  %v5458 = vpop.f32.mrf.mxu0
  %v5459 = vadd.f32 %v322, %v5458
  %v5460 = vpop.f32.mrf.mxu0
  %5461 = vmatprep.mubr.bf16.mxu0 0
  %5462 = vmatmul.mubr.bf16.gmra.mxu0 %v5395
  %v5463 = vpop.f32.mrf.mxu0
  %v5464 = vadd.f32 %v327, %v5463
  %v5465 = vpop.f32.mrf.mxu0
  %v5466 = vpop.f32.mrf.mxu0
  %v5467 = vadd.f32 %v330, %v5466
  %v5468 = vpop.f32.mrf.mxu0
  %5469 = vmatprep.mubr.bf16.mxu0 0
  %5470 = vmatmul.mubr.bf16.gmra.mxu0 %v5397
  %v5471 = vpop.f32.mrf.mxu0
  %v5472 = vadd.f32 %v335, %v5471
  %v5473 = vpop.f32.mrf.mxu0
  %v5474 = vpop.f32.mrf.mxu0
  %v5475 = vadd.f32 %v338, %v5474
  %v5476 = vpop.f32.mrf.mxu0
  %5477 = vmatprep.mubr.bf16.mxu0 0
  %5478 = vmatmul.mubr.bf16.gmra.mxu0 %v5399
  %v5479 = vpop.f32.mrf.mxu0
  %v5480 = vadd.f32 %v343, %v5479
  %v5481 = vpop.f32.mrf.mxu0
  %v5482 = vpop.f32.mrf.mxu0
  %v5483 = vadd.f32 %v346, %v5482
  %v5484 = vpop.f32.mrf.mxu0
  %5485 = vmatprep.mubr.bf16.mxu0 0
  %5486 = vmatmul.mubr.bf16.gmra.mxu0 %v5401
  %v5487 = vpop.f32.mrf.mxu0
  %v5488 = vadd.f32 %v351, %v5487
  %v5489 = vpop.f32.mrf.mxu0
  %v5490 = vpop.f32.mrf.mxu0
  %v5491 = vadd.f32 %v354, %v5490
  %v5492 = vpop.f32.mrf.mxu0
  %5493 = vmatprep.mubr.bf16.mxu0 0
  %5494 = vmatmul.mubr.bf16.gmra.mxu0 %v5403
  %v5495 = vpop.f32.mrf.mxu0
  %v5496 = vadd.f32 %v359, %v5495
  %v5497 = vpop.f32.mrf.mxu0
  %v5498 = vpop.f32.mrf.mxu0
  %v5499 = vadd.f32 %v362, %v5498
  %v5500 = vpop.f32.mrf.mxu0
  %5501 = vdwg.mxu0
  %v5502 = vmax.f32 %v5440, 0.0
  %v5503 = vmax.f32 %v5443, 0.0
  %v5504 = vmax.f32 %v5448, 0.0
  %v5505 = vmax.f32 %v5451, 0.0
  %v5506 = vmax.f32 %v5456, 0.0
  %v5507 = vmax.f32 %v5459, 0.0
  %v5508 = vmax.f32 %v5464, 0.0
  %v5509 = vmax.f32 %v5467, 0.0
  %v5510 = vmax.f32 %v5472, 0.0
  %v5511 = vmax.f32 %v5475, 0.0
  %v5512 = vmax.f32 %v5480, 0.0
  %v5513 = vmax.f32 %v5483, 0.0
  %v5514 = vmax.f32 %v5488, 0.0
  %v5515 = vmax.f32 %v5491, 0.0
  %v5516 = vmax.f32 %v5496, 0.0
  %v5517 = vmax.f32 %v5499, 0.0
  %v5518 = vpack.c.bf16 %v5503, %v5502
  %v5519 = vpack.c.bf16 %v5505, %v5504
  %v5520 = vpack.c.bf16 %v5507, %v5506
  %v5521 = vpack.c.bf16 %v5509, %v5508
  %v5522 = vpack.c.bf16 %v5511, %v5510
  %v5523 = vpack.c.bf16 %v5513, %v5512
  %v5524 = vpack.c.bf16 %v5515, %v5514
  %v5525 = vpack.c.bf16 %v5517, %v5516
  %5534 = vrot.lane.b32.xlu0 %v5333, 12
  %v5535 = vpop.permute.xlu0 %5534
  %5536 = vrot.lane.b32.xlu0 %v5334, 12
  %v5537 = vpop.permute.xlu0 %5536
  %5538 = vrot.lane.b32.xlu0 %v5335, 12
  %v5539 = vpop.permute.xlu0 %5538
  %5540 = vrot.lane.b32.xlu0 %v5336, 12
  %v5541 = vpop.permute.xlu0 %5540
  %5542 = vrot.lane.b32.xlu0 %v5337, 12
  %v5543 = vpop.permute.xlu0 %5542
  %5544 = vrot.lane.b32.xlu0 %v5338, 12
  %v5545 = vpop.permute.xlu0 %5544
  %5546 = vrot.lane.b32.xlu0 %v5339, 12
  %v5547 = vpop.permute.xlu0 %5546
  %5548 = vrot.lane.b32.xlu0 %v5340, 12
  %v5549 = vpop.permute.xlu0 %5548
  %5550 = vrot.lane.b32.xlu0 %v5188, 24
  %v5551 = vpop.permute.xlu0 %5550
  %5552 = vrot.lane.b32.xlu0 %v5189, 24
  %v5553 = vpop.permute.xlu0 %5552
  %5554 = vrot.lane.b32.xlu0 %v5190, 24
  %v5555 = vpop.permute.xlu0 %5554
  %5556 = vrot.lane.b32.xlu0 %v5191, 24
  %v5557 = vpop.permute.xlu0 %5556
  %5558 = vrot.lane.b32.xlu0 %v5192, 24
  %v5559 = vpop.permute.xlu0 %5558
  %5560 = vrot.lane.b32.xlu0 %v5193, 24
  %v5561 = vpop.permute.xlu0 %5560
  %5562 = vrot.lane.b32.xlu0 %v5194, 24
  %v5563 = vpop.permute.xlu0 %5562
  %5564 = vrot.lane.b32.xlu0 %v5195, 24
  %v5565 = vpop.permute.xlu0 %5564
  %v5568 = vsel %vm722, %v5518, %v5535
  %v5571 = vsel %vm722, %v5519, %v5537
  %v5574 = vsel %vm722, %v5520, %v5539
  %v5577 = vsel %vm722, %v5521, %v5541
  %v5580 = vsel %vm722, %v5522, %v5543
  %v5583 = vsel %vm722, %v5523, %v5545
  %v5586 = vsel %vm722, %v5524, %v5547
  %v5589 = vsel %vm722, %v5525, %v5549
  %v5591 = vsel %vm120, %v5568, %v5551
  %v5593 = vsel %vm120, %v5571, %v5553
  %v5595 = vsel %vm120, %v5574, %v5555
  %v5597 = vsel %vm120, %v5577, %v5557
  %v5599 = vsel %vm120, %v5580, %v5559
  %v5601 = vsel %vm120, %v5583, %v5561
  %v5603 = vsel %vm120, %v5586, %v5563
  %v5605 = vsel %vm120, %v5589, %v5565
  %v5606 = vsel %vm1171, %v5591, 0
  %v5608 = vsel %vm1171, %v5593, 0
  %v5610 = vsel %vm1171, %v5595, 0
  %v5612 = vsel %vm1171, %v5597, 0
  %v5614 = vsel %vm1171, %v5599, 0
  %v5616 = vsel %vm1171, %v5601, 0
  %v5618 = vsel %vm1171, %v5603, 0
  %v5620 = vsel %vm1171, %v5605, 0
  %5622 = vmatprep.subr.bf16.mxu0 0
  %5623 = vmatpush1.bf16.msra.mxu0 0
  %5624 = vmatprep.subr.bf16.mxu0 0
  %5625 = vmatpush1.bf16.msra.mxu0 0
  %5626 = vmatprep.subr.bf16.mxu0 0
  %5627 = vmatpush1.bf16.msra.mxu0 0
  %5628 = vmatprep.subr.bf16.mxu0 0
  %5629 = vmatpush1.bf16.msra.mxu0 0
  %5630 = vmatprep.subr.bf16.mxu0 0
  %5631 = vmatpush1.bf16.msra.mxu0 0
  %5632 = vmatprep.subr.bf16.mxu0 0
  %5633 = vmatpush1.bf16.msra.mxu0 %v1190
  %5634 = vmatprep.subr.bf16.mxu0 0
  %5635 = vmatpush1.bf16.msra.mxu0 %v1167
  %5636 = vmatprep.subr.bf16.mxu0 0
  %5637 = vmatpush1.bf16.msra.mxu0 %v1166
  %5638 = vmatprep.subr.bf16.mxu0 0
  %5639 = vmatpush2.bf16.msra.mxu0 0
  %5640 = vmatprep.subr.bf16.mxu0 0
  %5641 = vmatpush2.bf16.msra.mxu0 0
  %5642 = vmatprep.subr.bf16.mxu0 0
  %5643 = vmatpush2.bf16.msra.mxu0 0
  %5644 = vmatprep.subr.bf16.mxu0 0
  %5645 = vmatpush2.bf16.msra.mxu0 0
  %5646 = vmatprep.subr.bf16.mxu0 0
  %5647 = vmatpush2.bf16.msra.mxu0 0
  %5648 = vmatprep.subr.bf16.mxu0 0
  %5649 = vmatpush2.bf16.msra.mxu0 0
  %5650 = vmatprep.subr.bf16.mxu0 0
  %5651 = vmatpush2.bf16.msra.mxu0 0
  %5652 = vmatprep.subr.bf16.mxu0 0
  %5653 = vmatpush2.bf16.msra.mxu0 0
  %5654 = vmatprep.mubr.bf16.mxu0 0
  %5655 = vmatmul.mubr.bf16.gmra.mxu0 %v5606
  %v5656 = vpop.f32.mrf.mxu0
  %v5657 = vadd.f32 0.0, %v5656
  %v5658 = vpop.f32.mrf.mxu0
  %v5659 = vpop.f32.mrf.mxu0
  %v5660 = vadd.f32 0.0, %v5659
  %v5661 = vpop.f32.mrf.mxu0
  %5662 = vmatprep.mubr.bf16.mxu0 0
  %5663 = vmatmul.mubr.bf16.gmra.mxu0 %v5608
  %v5664 = vpop.f32.mrf.mxu0
  %v5665 = vadd.f32 0.0, %v5664
  %v5666 = vpop.f32.mrf.mxu0
  %v5667 = vpop.f32.mrf.mxu0
  %v5668 = vadd.f32 0.0, %v5667
  %v5669 = vpop.f32.mrf.mxu0
  %5670 = vmatprep.mubr.bf16.mxu0 0
  %5671 = vmatmul.mubr.bf16.gmra.mxu0 %v5610
  %v5672 = vpop.f32.mrf.mxu0
  %v5673 = vadd.f32 0.0, %v5672
  %v5674 = vpop.f32.mrf.mxu0
  %v5675 = vpop.f32.mrf.mxu0
  %v5676 = vadd.f32 0.0, %v5675
  %v5677 = vpop.f32.mrf.mxu0
  %5678 = vmatprep.mubr.bf16.mxu0 0
  %5679 = vmatmul.mubr.bf16.gmra.mxu0 %v5612
  %v5680 = vpop.f32.mrf.mxu0
  %v5681 = vadd.f32 0.0, %v5680
  %v5682 = vpop.f32.mrf.mxu0
  %v5683 = vpop.f32.mrf.mxu0
  %v5684 = vadd.f32 0.0, %v5683
  %v5685 = vpop.f32.mrf.mxu0
  %5686 = vmatprep.mubr.bf16.mxu0 0
  %5687 = vmatmul.mubr.bf16.gmra.mxu0 %v5614
  %v5688 = vpop.f32.mrf.mxu0
  %v5689 = vadd.f32 0.0, %v5688
  %v5690 = vpop.f32.mrf.mxu0
  %v5691 = vpop.f32.mrf.mxu0
  %v5692 = vadd.f32 0.0, %v5691
  %v5693 = vpop.f32.mrf.mxu0
  %5694 = vmatprep.mubr.bf16.mxu0 0
  %5695 = vmatmul.mubr.bf16.gmra.mxu0 %v5616
  %v5696 = vpop.f32.mrf.mxu0
  %v5697 = vadd.f32 0.0, %v5696
  %v5698 = vpop.f32.mrf.mxu0
  %v5699 = vpop.f32.mrf.mxu0
  %v5700 = vadd.f32 0.0, %v5699
  %v5701 = vpop.f32.mrf.mxu0
  %5702 = vmatprep.mubr.bf16.mxu0 0
  %5703 = vmatmul.mubr.bf16.gmra.mxu0 %v5618
  %v5704 = vpop.f32.mrf.mxu0
  %v5705 = vadd.f32 0.0, %v5704
  %v5706 = vpop.f32.mrf.mxu0
  %v5707 = vpop.f32.mrf.mxu0
  %v5708 = vadd.f32 0.0, %v5707
  %v5709 = vpop.f32.mrf.mxu0
  %5710 = vmatprep.mubr.bf16.mxu0 0
  %5711 = vmatmul.mubr.bf16.gmra.mxu0 %v5620
  %v5712 = vpop.f32.mrf.mxu0
  %v5713 = vadd.f32 0.0, %v5712
  %v5714 = vpop.f32.mrf.mxu0
  %v5715 = vpop.f32.mrf.mxu0
  %v5716 = vadd.f32 0.0, %v5715
  %v5717 = vpop.f32.mrf.mxu0
  %5718 = vdwg.mxu0
  %v5719 = vmax.f32 %v4978, %v5657
  %v5720 = vmax.f32 %v4979, %v5660
  %v5721 = vmax.f32 %v4980, %v5665
  %v5722 = vmax.f32 %v4981, %v5668
  %v5723 = vmax.f32 %v4982, %v5673
  %v5724 = vmax.f32 %v4983, %v5676
  %v5725 = vmax.f32 %v4984, %v5681
  %v5726 = vmax.f32 %v4985, %v5684
  %v5727 = vmax.f32 %v4986, %v5689
  %v5728 = vmax.f32 %v4987, %v5692
  %v5729 = vmax.f32 %v4988, %v5697
  %v5730 = vmax.f32 %v4989, %v5700
  %v5731 = vmax.f32 %v4990, %v5705
  %v5732 = vmax.f32 %v4991, %v5708
  %v5733 = vmax.f32 %v4992, %v5713
  %v5734 = vmax.f32 %v4993, %v5716
  %s5735 = scalar_lea.vmem %s0, 448
  %v5736 = vld [vmem:[%s5735] sm:$0xf]
  %v5737 = vld [vmem:[%s5735 + $0x4] sm:$0xf]
  %v5738 = vld [vmem:[%s5735 + $0x8] sm:$0xf]
  %v5739 = vld [vmem:[%s5735 + $0xc] sm:$0xf]
  %v5740 = vld [vmem:[%s5735 + $0x10] sm:$0xf]
  %v5741 = vld [vmem:[%s5735 + $0x14] sm:$0xf]
  %v5742 = vld [vmem:[%s5735 + $0x18] sm:$0xf]
  %v5743 = vld [vmem:[%s5735 + $0x1c] sm:$0xf]
  %v5744 = vld [vmem:[%s5735 + $0x20] sm:$0xf]
  %v5745 = vld [vmem:[%s5735 + $0x24] sm:$0xf]
  %v5746 = vld [vmem:[%s5735 + $0x28] sm:$0xf]
  %v5747 = vld [vmem:[%s5735 + $0x2c] sm:$0xf]
  %v5748 = vld [vmem:[%s5735 + $0x30] sm:$0xf]
  %v5749 = vld [vmem:[%s5735 + $0x34] sm:$0xf]
  %v5750 = vld [vmem:[%s5735 + $0x38] sm:$0xf]
  %v5751 = vld [vmem:[%s5735 + $0x3c] sm:$0xf]
  %v5768 = vunpack.c.l.b16 %v5736
  %v5769 = vunpack.c.l.b16 %v5737
  %v5770 = vunpack.c.l.b16 %v5738
  %v5771 = vunpack.c.l.b16 %v5739
  %v5772 = vunpack.c.l.b16 %v5740
  %v5773 = vunpack.c.l.b16 %v5741
  %v5774 = vunpack.c.l.b16 %v5742
  %v5775 = vunpack.c.l.b16 %v5743
  %v5776 = vunpack.c.l.b16 %v5744
  %v5777 = vunpack.c.l.b16 %v5745
  %v5778 = vunpack.c.l.b16 %v5746
  %v5779 = vunpack.c.l.b16 %v5747
  %v5780 = vunpack.c.l.b16 %v5748
  %v5781 = vunpack.c.l.b16 %v5749
  %v5782 = vunpack.c.l.b16 %v5750
  %v5783 = vunpack.c.l.b16 %v5751
  %v5784 = vpack.c.b16 %v5769, %v5768
  %v5785 = vpack.c.b16 %v5771, %v5770
  %v5786 = vpack.c.b16 %v5773, %v5772
  %v5787 = vpack.c.b16 %v5775, %v5774
  %v5788 = vpack.c.b16 %v5777, %v5776
  %v5789 = vpack.c.b16 %v5779, %v5778
  %v5790 = vpack.c.b16 %v5781, %v5780
  %v5791 = vpack.c.b16 %v5783, %v5782
  %v5793 = vsel %vm562, %v5784, 0
  %v5796 = vsel %vm562, %v5785, 0
  %v5799 = vsel %vm562, %v5786, 0
  %v5802 = vsel %vm562, %v5787, 0
  %v5805 = vsel %vm562, %v5788, 0
  %v5808 = vsel %vm562, %v5789, 0
  %v5811 = vsel %vm562, %v5790, 0
  %v5814 = vsel %vm562, %v5791, 0
  %5816 = vmatprep.subr.bf16.mxu0 0
  %5817 = vmatpush1.bf16.msra.mxu0 0
  %5818 = vmatprep.subr.bf16.mxu0 0
  %5819 = vmatpush1.bf16.msra.mxu0 0
  %5820 = vmatprep.subr.bf16.mxu0 0
  %5821 = vmatpush1.bf16.msra.mxu0 0
  %5822 = vmatprep.subr.bf16.mxu0 0
  %5823 = vmatpush1.bf16.msra.mxu0 0
  %5824 = vmatprep.subr.bf16.mxu0 0
  %5825 = vmatpush1.bf16.msra.mxu0 0
  %5826 = vmatprep.subr.bf16.mxu0 0
  %5827 = vmatpush1.bf16.msra.mxu0 0
  %5828 = vmatprep.subr.bf16.mxu0 0
  %5829 = vmatpush1.bf16.msra.mxu0 %v592
  %5830 = vmatprep.subr.bf16.mxu0 0
  %5831 = vmatpush1.bf16.msra.mxu0 %v559
  %5832 = vmatprep.subr.bf16.mxu0 0
  %5833 = vmatpush2.bf16.msra.mxu0 0
  %5834 = vmatprep.subr.bf16.mxu0 0
  %5835 = vmatpush2.bf16.msra.mxu0 0
  %5836 = vmatprep.subr.bf16.mxu0 0
  %5837 = vmatpush2.bf16.msra.mxu0 0
  %5838 = vmatprep.subr.bf16.mxu0 0
  %5839 = vmatpush2.bf16.msra.mxu0 0
  %5840 = vmatprep.subr.bf16.mxu0 0
  %5841 = vmatpush2.bf16.msra.mxu0 0
  %5842 = vmatprep.subr.bf16.mxu0 0
  %5843 = vmatpush2.bf16.msra.mxu0 0
  %5844 = vmatprep.subr.bf16.mxu0 0
  %5845 = vmatpush2.bf16.msra.mxu0 0
  %5846 = vmatprep.subr.bf16.mxu0 0
  %5847 = vmatpush2.bf16.msra.mxu0 0
  %5848 = vmatprep.mubr.bf16.mxu0 0
  %5849 = vmatmul.mubr.bf16.gmra.mxu0 %v5793
  %v5850 = vpop.f32.mrf.mxu0
  %v5851 = vadd.f32 %v509, %v5850
  %v5852 = vpop.f32.mrf.mxu0
  %v5853 = vpop.f32.mrf.mxu0
  %v5854 = vadd.f32 %v509, %v5853
  %v5855 = vpop.f32.mrf.mxu0
  %5856 = vmatprep.mubr.bf16.mxu0 0
  %5857 = vmatmul.mubr.bf16.gmra.mxu0 %v5796
  %v5858 = vpop.f32.mrf.mxu0
  %v5859 = vadd.f32 %v509, %v5858
  %v5860 = vpop.f32.mrf.mxu0
  %v5861 = vpop.f32.mrf.mxu0
  %v5862 = vadd.f32 %v509, %v5861
  %v5863 = vpop.f32.mrf.mxu0
  %5864 = vmatprep.mubr.bf16.mxu0 0
  %5865 = vmatmul.mubr.bf16.gmra.mxu0 %v5799
  %v5866 = vpop.f32.mrf.mxu0
  %v5867 = vadd.f32 %v509, %v5866
  %v5868 = vpop.f32.mrf.mxu0
  %v5869 = vpop.f32.mrf.mxu0
  %v5870 = vadd.f32 %v509, %v5869
  %v5871 = vpop.f32.mrf.mxu0
  %5872 = vmatprep.mubr.bf16.mxu0 0
  %5873 = vmatmul.mubr.bf16.gmra.mxu0 %v5802
  %v5874 = vpop.f32.mrf.mxu0
  %v5875 = vadd.f32 %v509, %v5874
  %v5876 = vpop.f32.mrf.mxu0
  %v5877 = vpop.f32.mrf.mxu0
  %v5878 = vadd.f32 %v509, %v5877
  %v5879 = vpop.f32.mrf.mxu0
  %5880 = vmatprep.mubr.bf16.mxu0 0
  %5881 = vmatmul.mubr.bf16.gmra.mxu0 %v5805
  %v5882 = vpop.f32.mrf.mxu0
  %v5883 = vadd.f32 %v509, %v5882
  %v5884 = vpop.f32.mrf.mxu0
  %v5885 = vpop.f32.mrf.mxu0
  %v5886 = vadd.f32 %v509, %v5885
  %v5887 = vpop.f32.mrf.mxu0
  %5888 = vmatprep.mubr.bf16.mxu0 0
  %5889 = vmatmul.mubr.bf16.gmra.mxu0 %v5808
  %v5890 = vpop.f32.mrf.mxu0
  %v5891 = vadd.f32 %v509, %v5890
  %v5892 = vpop.f32.mrf.mxu0
  %v5893 = vpop.f32.mrf.mxu0
  %v5894 = vadd.f32 %v509, %v5893
  %v5895 = vpop.f32.mrf.mxu0
  %5896 = vmatprep.mubr.bf16.mxu0 0
  %5897 = vmatmul.mubr.bf16.gmra.mxu0 %v5811
  %v5898 = vpop.f32.mrf.mxu0
  %v5899 = vadd.f32 %v509, %v5898
  %v5900 = vpop.f32.mrf.mxu0
  %v5901 = vpop.f32.mrf.mxu0
  %v5902 = vadd.f32 %v509, %v5901
  %v5903 = vpop.f32.mrf.mxu0
  %5904 = vmatprep.mubr.bf16.mxu0 0
  %5905 = vmatmul.mubr.bf16.gmra.mxu0 %v5814
  %v5906 = vpop.f32.mrf.mxu0
  %v5907 = vadd.f32 %v509, %v5906
  %v5908 = vpop.f32.mrf.mxu0
  %v5909 = vpop.f32.mrf.mxu0
  %v5910 = vadd.f32 %v509, %v5909
  %v5911 = vpop.f32.mrf.mxu0
  %5912 = vdwg.mxu0
  %v5913 = vmax.f32 %v5851, 0.0
  %v5914 = vmax.f32 %v5854, 0.0
  %v5915 = vmax.f32 %v5859, 0.0
  %v5916 = vmax.f32 %v5862, 0.0
  %v5917 = vmax.f32 %v5867, 0.0
  %v5918 = vmax.f32 %v5870, 0.0
  %v5919 = vmax.f32 %v5875, 0.0
  %v5920 = vmax.f32 %v5878, 0.0
  %v5921 = vmax.f32 %v5883, 0.0
  %v5922 = vmax.f32 %v5886, 0.0
  %v5923 = vmax.f32 %v5891, 0.0
  %v5924 = vmax.f32 %v5894, 0.0
  %v5925 = vmax.f32 %v5899, 0.0
  %v5926 = vmax.f32 %v5902, 0.0
  %v5927 = vmax.f32 %v5907, 0.0
  %v5928 = vmax.f32 %v5910, 0.0
  %v5929 = vpack.c.bf16 %v5914, %v5913
  %v5930 = vpack.c.bf16 %v5916, %v5915
  %v5931 = vpack.c.bf16 %v5918, %v5917
  %v5932 = vpack.c.bf16 %v5920, %v5919
  %v5933 = vpack.c.bf16 %v5922, %v5921
  %v5934 = vpack.c.bf16 %v5924, %v5923
  %v5935 = vpack.c.bf16 %v5926, %v5925
  %v5936 = vpack.c.bf16 %v5928, %v5927
  %v5938 = vsel %vm722, %v5929, 0
  %v5941 = vsel %vm722, %v5930, 0
  %v5944 = vsel %vm722, %v5931, 0
  %v5947 = vsel %vm722, %v5932, 0
  %v5950 = vsel %vm722, %v5933, 0
  %v5953 = vsel %vm722, %v5934, 0
  %v5956 = vsel %vm722, %v5935, 0
  %v5959 = vsel %vm722, %v5936, 0
  %5961 = vmatprep.subr.bf16.mxu0 0
  %5962 = vmatpush1.bf16.msra.mxu0 0
  %5963 = vmatprep.subr.bf16.mxu0 0
  %5964 = vmatpush1.bf16.msra.mxu0 0
  %5965 = vmatprep.subr.bf16.mxu0 0
  %5966 = vmatpush1.bf16.msra.mxu0 0
  %5967 = vmatprep.subr.bf16.mxu0 0
  %5968 = vmatpush1.bf16.msra.mxu0 0
  %5969 = vmatprep.subr.bf16.mxu0 0
  %5970 = vmatpush1.bf16.msra.mxu0 0
  %5971 = vmatprep.subr.bf16.mxu0 0
  %5972 = vmatpush1.bf16.msra.mxu0 0
  %5973 = vmatprep.subr.bf16.mxu0 0
  %5974 = vmatpush1.bf16.msra.mxu0 0
  %5975 = vmatprep.subr.bf16.mxu0 0
  %5976 = vmatpush1.bf16.msra.mxu0 %v748
  %5977 = vmatprep.subr.bf16.mxu0 0
  %5978 = vmatpush2.bf16.msra.mxu0 0
  %5979 = vmatprep.subr.bf16.mxu0 0
  %5980 = vmatpush2.bf16.msra.mxu0 0
  %5981 = vmatprep.subr.bf16.mxu0 0
  %5982 = vmatpush2.bf16.msra.mxu0 0
  %5983 = vmatprep.subr.bf16.mxu0 0
  %5984 = vmatpush2.bf16.msra.mxu0 0
  %5985 = vmatprep.subr.bf16.mxu0 0
  %5986 = vmatpush2.bf16.msra.mxu0 0
  %5987 = vmatprep.subr.bf16.mxu0 0
  %5988 = vmatpush2.bf16.msra.mxu0 0
  %5989 = vmatprep.subr.bf16.mxu0 0
  %5990 = vmatpush2.bf16.msra.mxu0 0
  %5991 = vmatprep.subr.bf16.mxu0 0
  %5992 = vmatpush2.bf16.msra.mxu0 0
  %5993 = vmatprep.mubr.bf16.mxu0 0
  %5994 = vmatmul.mubr.bf16.gmra.mxu0 %v5938
  %v5995 = vpop.f32.mrf.mxu0
  %v5996 = vadd.f32 %v184, %v5995
  %v5997 = vpop.f32.mrf.mxu0
  %v5998 = vpop.f32.mrf.mxu0
  %v5999 = vadd.f32 %v187, %v5998
  %v6000 = vpop.f32.mrf.mxu0
  %6001 = vmatprep.mubr.bf16.mxu0 0
  %6002 = vmatmul.mubr.bf16.gmra.mxu0 %v5941
  %v6003 = vpop.f32.mrf.mxu0
  %v6004 = vadd.f32 %v192, %v6003
  %v6005 = vpop.f32.mrf.mxu0
  %v6006 = vpop.f32.mrf.mxu0
  %v6007 = vadd.f32 %v195, %v6006
  %v6008 = vpop.f32.mrf.mxu0
  %6009 = vmatprep.mubr.bf16.mxu0 0
  %6010 = vmatmul.mubr.bf16.gmra.mxu0 %v5944
  %v6011 = vpop.f32.mrf.mxu0
  %v6012 = vadd.f32 %v200, %v6011
  %v6013 = vpop.f32.mrf.mxu0
  %v6014 = vpop.f32.mrf.mxu0
  %v6015 = vadd.f32 %v203, %v6014
  %v6016 = vpop.f32.mrf.mxu0
  %6017 = vmatprep.mubr.bf16.mxu0 0
  %6018 = vmatmul.mubr.bf16.gmra.mxu0 %v5947
  %v6019 = vpop.f32.mrf.mxu0
  %v6020 = vadd.f32 %v208, %v6019
  %v6021 = vpop.f32.mrf.mxu0
  %v6022 = vpop.f32.mrf.mxu0
  %v6023 = vadd.f32 %v211, %v6022
  %v6024 = vpop.f32.mrf.mxu0
  %6025 = vmatprep.mubr.bf16.mxu0 0
  %6026 = vmatmul.mubr.bf16.gmra.mxu0 %v5950
  %v6027 = vpop.f32.mrf.mxu0
  %v6028 = vadd.f32 %v216, %v6027
  %v6029 = vpop.f32.mrf.mxu0
  %v6030 = vpop.f32.mrf.mxu0
  %v6031 = vadd.f32 %v219, %v6030
  %v6032 = vpop.f32.mrf.mxu0
  %6033 = vmatprep.mubr.bf16.mxu0 0
  %6034 = vmatmul.mubr.bf16.gmra.mxu0 %v5953
  %v6035 = vpop.f32.mrf.mxu0
  %v6036 = vadd.f32 %v224, %v6035
  %v6037 = vpop.f32.mrf.mxu0
  %v6038 = vpop.f32.mrf.mxu0
  %v6039 = vadd.f32 %v227, %v6038
  %v6040 = vpop.f32.mrf.mxu0
  %6041 = vmatprep.mubr.bf16.mxu0 0
  %6042 = vmatmul.mubr.bf16.gmra.mxu0 %v5956
  %v6043 = vpop.f32.mrf.mxu0
  %v6044 = vadd.f32 %v232, %v6043
  %v6045 = vpop.f32.mrf.mxu0
  %v6046 = vpop.f32.mrf.mxu0
  %v6047 = vadd.f32 %v235, %v6046
  %v6048 = vpop.f32.mrf.mxu0
  %6049 = vmatprep.mubr.bf16.mxu0 0
  %6050 = vmatmul.mubr.bf16.gmra.mxu0 %v5959
  %v6051 = vpop.f32.mrf.mxu0
  %v6052 = vadd.f32 %v240, %v6051
  %v6053 = vpop.f32.mrf.mxu0
  %v6054 = vpop.f32.mrf.mxu0
  %v6055 = vadd.f32 %v243, %v6054
  %v6056 = vpop.f32.mrf.mxu0
  %6057 = vdwg.mxu0
  %v6058 = vmax.f32 %v5996, 0.0
  %v6059 = vmax.f32 %v5999, 0.0
  %v6060 = vmax.f32 %v6004, 0.0
  %v6061 = vmax.f32 %v6007, 0.0
  %v6062 = vmax.f32 %v6012, 0.0
  %v6063 = vmax.f32 %v6015, 0.0
  %v6064 = vmax.f32 %v6020, 0.0
  %v6065 = vmax.f32 %v6023, 0.0
  %v6066 = vmax.f32 %v6028, 0.0
  %v6067 = vmax.f32 %v6031, 0.0
  %v6068 = vmax.f32 %v6036, 0.0
  %v6069 = vmax.f32 %v6039, 0.0
  %v6070 = vmax.f32 %v6044, 0.0
  %v6071 = vmax.f32 %v6047, 0.0
  %v6072 = vmax.f32 %v6052, 0.0
  %v6073 = vmax.f32 %v6055, 0.0
  %v6074 = vpack.c.bf16 %v6059, %v6058
  %v6075 = vpack.c.bf16 %v6061, %v6060
  %v6076 = vpack.c.bf16 %v6063, %v6062
  %v6077 = vpack.c.bf16 %v6065, %v6064
  %v6078 = vpack.c.bf16 %v6067, %v6066
  %v6079 = vpack.c.bf16 %v6069, %v6068
  %v6080 = vpack.c.bf16 %v6071, %v6070
  %v6081 = vpack.c.bf16 %v6073, %v6072
  %6090 = vrot.lane.b32.xlu0 %v5929, 12
  %v6091 = vpop.permute.xlu0 %6090
  %6092 = vrot.lane.b32.xlu0 %v5930, 12
  %v6093 = vpop.permute.xlu0 %6092
  %6094 = vrot.lane.b32.xlu0 %v5931, 12
  %v6095 = vpop.permute.xlu0 %6094
  %6096 = vrot.lane.b32.xlu0 %v5932, 12
  %v6097 = vpop.permute.xlu0 %6096
  %6098 = vrot.lane.b32.xlu0 %v5933, 12
  %v6099 = vpop.permute.xlu0 %6098
  %6100 = vrot.lane.b32.xlu0 %v5934, 12
  %v6101 = vpop.permute.xlu0 %6100
  %6102 = vrot.lane.b32.xlu0 %v5935, 12
  %v6103 = vpop.permute.xlu0 %6102
  %6104 = vrot.lane.b32.xlu0 %v5936, 12
  %v6105 = vpop.permute.xlu0 %6104
  %v6108 = vsel %vm722, %v6074, %v6091
  %v6111 = vsel %vm722, %v6075, %v6093
  %v6114 = vsel %vm722, %v6076, %v6095
  %v6117 = vsel %vm722, %v6077, %v6097
  %v6120 = vsel %vm722, %v6078, %v6099
  %v6123 = vsel %vm722, %v6079, %v6101
  %v6126 = vsel %vm722, %v6080, %v6103
  %v6129 = vsel %vm722, %v6081, %v6105
  %v6130 = vsel %vm120, %v6108, 0
  %v6132 = vsel %vm120, %v6111, 0
  %v6134 = vsel %vm120, %v6114, 0
  %v6136 = vsel %vm120, %v6117, 0
  %v6138 = vsel %vm120, %v6120, 0
  %v6140 = vsel %vm120, %v6123, 0
  %v6142 = vsel %vm120, %v6126, 0
  %v6144 = vsel %vm120, %v6129, 0
  %6146 = vmatprep.subr.bf16.mxu0 0
  %6147 = vmatpush1.bf16.msra.mxu0 0
  %6148 = vmatprep.subr.bf16.mxu0 0
  %6149 = vmatpush1.bf16.msra.mxu0 0
  %6150 = vmatprep.subr.bf16.mxu0 0
  %6151 = vmatpush1.bf16.msra.mxu0 0
  %6152 = vmatprep.subr.bf16.mxu0 0
  %6153 = vmatpush1.bf16.msra.mxu0 0
  %6154 = vmatprep.subr.bf16.mxu0 0
  %6155 = vmatpush1.bf16.msra.mxu0 0
  %6156 = vmatprep.subr.bf16.mxu0 0
  %6157 = vmatpush1.bf16.msra.mxu0 0
  %6158 = vmatprep.subr.bf16.mxu0 0
  %6159 = vmatpush1.bf16.msra.mxu0 %v948
  %6160 = vmatprep.subr.bf16.mxu0 0
  %6161 = vmatpush1.bf16.msra.mxu0 %v928
  %6162 = vmatprep.subr.bf16.mxu0 0
  %6163 = vmatpush2.bf16.msra.mxu0 0
  %6164 = vmatprep.subr.bf16.mxu0 0
  %6165 = vmatpush2.bf16.msra.mxu0 0
  %6166 = vmatprep.subr.bf16.mxu0 0
  %6167 = vmatpush2.bf16.msra.mxu0 0
  %6168 = vmatprep.subr.bf16.mxu0 0
  %6169 = vmatpush2.bf16.msra.mxu0 0
  %6170 = vmatprep.subr.bf16.mxu0 0
  %6171 = vmatpush2.bf16.msra.mxu0 0
  %6172 = vmatprep.subr.bf16.mxu0 0
  %6173 = vmatpush2.bf16.msra.mxu0 0
  %6174 = vmatprep.subr.bf16.mxu0 0
  %6175 = vmatpush2.bf16.msra.mxu0 0
  %6176 = vmatprep.subr.bf16.mxu0 0
  %6177 = vmatpush2.bf16.msra.mxu0 0
  %6178 = vmatprep.mubr.bf16.mxu0 0
  %6179 = vmatmul.mubr.bf16.gmra.mxu0 %v6130
  %v6180 = vpop.f32.mrf.mxu0
  %v6181 = vadd.f32 %v303, %v6180
  %v6182 = vpop.f32.mrf.mxu0
  %v6183 = vpop.f32.mrf.mxu0
  %v6184 = vadd.f32 %v306, %v6183
  %v6185 = vpop.f32.mrf.mxu0
  %6186 = vmatprep.mubr.bf16.mxu0 0
  %6187 = vmatmul.mubr.bf16.gmra.mxu0 %v6132
  %v6188 = vpop.f32.mrf.mxu0
  %v6189 = vadd.f32 %v311, %v6188
  %v6190 = vpop.f32.mrf.mxu0
  %v6191 = vpop.f32.mrf.mxu0
  %v6192 = vadd.f32 %v314, %v6191
  %v6193 = vpop.f32.mrf.mxu0
  %6194 = vmatprep.mubr.bf16.mxu0 0
  %6195 = vmatmul.mubr.bf16.gmra.mxu0 %v6134
  %v6196 = vpop.f32.mrf.mxu0
  %v6197 = vadd.f32 %v319, %v6196
  %v6198 = vpop.f32.mrf.mxu0
  %v6199 = vpop.f32.mrf.mxu0
  %v6200 = vadd.f32 %v322, %v6199
  %v6201 = vpop.f32.mrf.mxu0
  %6202 = vmatprep.mubr.bf16.mxu0 0
  %6203 = vmatmul.mubr.bf16.gmra.mxu0 %v6136
  %v6204 = vpop.f32.mrf.mxu0
  %v6205 = vadd.f32 %v327, %v6204
  %v6206 = vpop.f32.mrf.mxu0
  %v6207 = vpop.f32.mrf.mxu0
  %v6208 = vadd.f32 %v330, %v6207
  %v6209 = vpop.f32.mrf.mxu0
  %6210 = vmatprep.mubr.bf16.mxu0 0
  %6211 = vmatmul.mubr.bf16.gmra.mxu0 %v6138
  %v6212 = vpop.f32.mrf.mxu0
  %v6213 = vadd.f32 %v335, %v6212
  %v6214 = vpop.f32.mrf.mxu0
  %v6215 = vpop.f32.mrf.mxu0
  %v6216 = vadd.f32 %v338, %v6215
  %v6217 = vpop.f32.mrf.mxu0
  %6218 = vmatprep.mubr.bf16.mxu0 0
  %6219 = vmatmul.mubr.bf16.gmra.mxu0 %v6140
  %v6220 = vpop.f32.mrf.mxu0
  %v6221 = vadd.f32 %v343, %v6220
  %v6222 = vpop.f32.mrf.mxu0
  %v6223 = vpop.f32.mrf.mxu0
  %v6224 = vadd.f32 %v346, %v6223
  %v6225 = vpop.f32.mrf.mxu0
  %6226 = vmatprep.mubr.bf16.mxu0 0
  %6227 = vmatmul.mubr.bf16.gmra.mxu0 %v6142
  %v6228 = vpop.f32.mrf.mxu0
  %v6229 = vadd.f32 %v351, %v6228
  %v6230 = vpop.f32.mrf.mxu0
  %v6231 = vpop.f32.mrf.mxu0
  %v6232 = vadd.f32 %v354, %v6231
  %v6233 = vpop.f32.mrf.mxu0
  %6234 = vmatprep.mubr.bf16.mxu0 0
  %6235 = vmatmul.mubr.bf16.gmra.mxu0 %v6144
  %v6236 = vpop.f32.mrf.mxu0
  %v6237 = vadd.f32 %v359, %v6236
  %v6238 = vpop.f32.mrf.mxu0
  %v6239 = vpop.f32.mrf.mxu0
  %v6240 = vadd.f32 %v362, %v6239
  %v6241 = vpop.f32.mrf.mxu0
  %6242 = vdwg.mxu0
  %v6243 = vmax.f32 %v6181, 0.0
  %v6244 = vmax.f32 %v6184, 0.0
  %v6245 = vmax.f32 %v6189, 0.0
  %v6246 = vmax.f32 %v6192, 0.0
  %v6247 = vmax.f32 %v6197, 0.0
  %v6248 = vmax.f32 %v6200, 0.0
  %v6249 = vmax.f32 %v6205, 0.0
  %v6250 = vmax.f32 %v6208, 0.0
  %v6251 = vmax.f32 %v6213, 0.0
  %v6252 = vmax.f32 %v6216, 0.0
  %v6253 = vmax.f32 %v6221, 0.0
  %v6254 = vmax.f32 %v6224, 0.0
  %v6255 = vmax.f32 %v6229, 0.0
  %v6256 = vmax.f32 %v6232, 0.0
  %v6257 = vmax.f32 %v6237, 0.0
  %v6258 = vmax.f32 %v6240, 0.0
  %v6259 = vpack.c.bf16 %v6244, %v6243
  %v6260 = vpack.c.bf16 %v6246, %v6245
  %v6261 = vpack.c.bf16 %v6248, %v6247
  %v6262 = vpack.c.bf16 %v6250, %v6249
  %v6263 = vpack.c.bf16 %v6252, %v6251
  %v6264 = vpack.c.bf16 %v6254, %v6253
  %v6265 = vpack.c.bf16 %v6256, %v6255
  %v6266 = vpack.c.bf16 %v6258, %v6257
  %6275 = vrot.lane.b32.xlu0 %v6074, 12
  %v6276 = vpop.permute.xlu0 %6275
  %6277 = vrot.lane.b32.xlu0 %v6075, 12
  %v6278 = vpop.permute.xlu0 %6277
  %6279 = vrot.lane.b32.xlu0 %v6076, 12
  %v6280 = vpop.permute.xlu0 %6279
  %6281 = vrot.lane.b32.xlu0 %v6077, 12
  %v6282 = vpop.permute.xlu0 %6281
  %6283 = vrot.lane.b32.xlu0 %v6078, 12
  %v6284 = vpop.permute.xlu0 %6283
  %6285 = vrot.lane.b32.xlu0 %v6079, 12
  %v6286 = vpop.permute.xlu0 %6285
  %6287 = vrot.lane.b32.xlu0 %v6080, 12
  %v6288 = vpop.permute.xlu0 %6287
  %6289 = vrot.lane.b32.xlu0 %v6081, 12
  %v6290 = vpop.permute.xlu0 %6289
  %6291 = vrot.lane.b32.xlu0 %v5929, 24
  %v6292 = vpop.permute.xlu0 %6291
  %6293 = vrot.lane.b32.xlu0 %v5930, 24
  %v6294 = vpop.permute.xlu0 %6293
  %6295 = vrot.lane.b32.xlu0 %v5931, 24
  %v6296 = vpop.permute.xlu0 %6295
  %6297 = vrot.lane.b32.xlu0 %v5932, 24
  %v6298 = vpop.permute.xlu0 %6297
  %6299 = vrot.lane.b32.xlu0 %v5933, 24
  %v6300 = vpop.permute.xlu0 %6299
  %6301 = vrot.lane.b32.xlu0 %v5934, 24
  %v6302 = vpop.permute.xlu0 %6301
  %6303 = vrot.lane.b32.xlu0 %v5935, 24
  %v6304 = vpop.permute.xlu0 %6303
  %6305 = vrot.lane.b32.xlu0 %v5936, 24
  %v6306 = vpop.permute.xlu0 %6305
  %v6309 = vsel %vm722, %v6259, %v6276
  %v6312 = vsel %vm722, %v6260, %v6278
  %v6315 = vsel %vm722, %v6261, %v6280
  %v6318 = vsel %vm722, %v6262, %v6282
  %v6321 = vsel %vm722, %v6263, %v6284
  %v6324 = vsel %vm722, %v6264, %v6286
  %v6327 = vsel %vm722, %v6265, %v6288
  %v6330 = vsel %vm722, %v6266, %v6290
  %v6332 = vsel %vm120, %v6309, %v6292
  %v6334 = vsel %vm120, %v6312, %v6294
  %v6336 = vsel %vm120, %v6315, %v6296
  %v6338 = vsel %vm120, %v6318, %v6298
  %v6340 = vsel %vm120, %v6321, %v6300
  %v6342 = vsel %vm120, %v6324, %v6302
  %v6344 = vsel %vm120, %v6327, %v6304
  %v6346 = vsel %vm120, %v6330, %v6306
  %v6347 = vsel %vm1171, %v6332, 0
  %v6349 = vsel %vm1171, %v6334, 0
  %v6351 = vsel %vm1171, %v6336, 0
  %v6353 = vsel %vm1171, %v6338, 0
  %v6355 = vsel %vm1171, %v6340, 0
  %v6357 = vsel %vm1171, %v6342, 0
  %v6359 = vsel %vm1171, %v6344, 0
  %v6361 = vsel %vm1171, %v6346, 0
  %6363 = vmatprep.subr.bf16.mxu0 0
  %6364 = vmatpush1.bf16.msra.mxu0 0
  %6365 = vmatprep.subr.bf16.mxu0 0
  %6366 = vmatpush1.bf16.msra.mxu0 0
  %6367 = vmatprep.subr.bf16.mxu0 0
  %6368 = vmatpush1.bf16.msra.mxu0 0
  %6369 = vmatprep.subr.bf16.mxu0 0
  %6370 = vmatpush1.bf16.msra.mxu0 0
  %6371 = vmatprep.subr.bf16.mxu0 0
  %6372 = vmatpush1.bf16.msra.mxu0 0
  %6373 = vmatprep.subr.bf16.mxu0 0
  %6374 = vmatpush1.bf16.msra.mxu0 %v1190
  %6375 = vmatprep.subr.bf16.mxu0 0
  %6376 = vmatpush1.bf16.msra.mxu0 %v1167
  %6377 = vmatprep.subr.bf16.mxu0 0
  %6378 = vmatpush1.bf16.msra.mxu0 %v1166
  %6379 = vmatprep.subr.bf16.mxu0 0
  %6380 = vmatpush2.bf16.msra.mxu0 0
  %6381 = vmatprep.subr.bf16.mxu0 0
  %6382 = vmatpush2.bf16.msra.mxu0 0
  %6383 = vmatprep.subr.bf16.mxu0 0
  %6384 = vmatpush2.bf16.msra.mxu0 0
  %6385 = vmatprep.subr.bf16.mxu0 0
  %6386 = vmatpush2.bf16.msra.mxu0 0
  %6387 = vmatprep.subr.bf16.mxu0 0
  %6388 = vmatpush2.bf16.msra.mxu0 0
  %6389 = vmatprep.subr.bf16.mxu0 0
  %6390 = vmatpush2.bf16.msra.mxu0 0
  %6391 = vmatprep.subr.bf16.mxu0 0
  %6392 = vmatpush2.bf16.msra.mxu0 0
  %6393 = vmatprep.subr.bf16.mxu0 0
  %6394 = vmatpush2.bf16.msra.mxu0 0
  %6395 = vmatprep.mubr.bf16.mxu0 0
  %6396 = vmatmul.mubr.bf16.gmra.mxu0 %v6347
  %v6397 = vpop.f32.mrf.mxu0
  %v6398 = vadd.f32 0.0, %v6397
  %v6399 = vpop.f32.mrf.mxu0
  %v6400 = vpop.f32.mrf.mxu0
  %v6401 = vadd.f32 0.0, %v6400
  %v6402 = vpop.f32.mrf.mxu0
  %6403 = vmatprep.mubr.bf16.mxu0 0
  %6404 = vmatmul.mubr.bf16.gmra.mxu0 %v6349
  %v6405 = vpop.f32.mrf.mxu0
  %v6406 = vadd.f32 0.0, %v6405
  %v6407 = vpop.f32.mrf.mxu0
  %v6408 = vpop.f32.mrf.mxu0
  %v6409 = vadd.f32 0.0, %v6408
  %v6410 = vpop.f32.mrf.mxu0
  %6411 = vmatprep.mubr.bf16.mxu0 0
  %6412 = vmatmul.mubr.bf16.gmra.mxu0 %v6351
  %v6413 = vpop.f32.mrf.mxu0
  %v6414 = vadd.f32 0.0, %v6413
  %v6415 = vpop.f32.mrf.mxu0
  %v6416 = vpop.f32.mrf.mxu0
  %v6417 = vadd.f32 0.0, %v6416
  %v6418 = vpop.f32.mrf.mxu0
  %6419 = vmatprep.mubr.bf16.mxu0 0
  %6420 = vmatmul.mubr.bf16.gmra.mxu0 %v6353
  %v6421 = vpop.f32.mrf.mxu0
  %v6422 = vadd.f32 0.0, %v6421
  %v6423 = vpop.f32.mrf.mxu0
  %v6424 = vpop.f32.mrf.mxu0
  %v6425 = vadd.f32 0.0, %v6424
  %v6426 = vpop.f32.mrf.mxu0
  %6427 = vmatprep.mubr.bf16.mxu0 0
  %6428 = vmatmul.mubr.bf16.gmra.mxu0 %v6355
  %v6429 = vpop.f32.mrf.mxu0
  %v6430 = vadd.f32 0.0, %v6429
  %v6431 = vpop.f32.mrf.mxu0
  %v6432 = vpop.f32.mrf.mxu0
  %v6433 = vadd.f32 0.0, %v6432
  %v6434 = vpop.f32.mrf.mxu0
  %6435 = vmatprep.mubr.bf16.mxu0 0
  %6436 = vmatmul.mubr.bf16.gmra.mxu0 %v6357
  %v6437 = vpop.f32.mrf.mxu0
  %v6438 = vadd.f32 0.0, %v6437
  %v6439 = vpop.f32.mrf.mxu0
  %v6440 = vpop.f32.mrf.mxu0
  %v6441 = vadd.f32 0.0, %v6440
  %v6442 = vpop.f32.mrf.mxu0
  %6443 = vmatprep.mubr.bf16.mxu0 0
  %6444 = vmatmul.mubr.bf16.gmra.mxu0 %v6359
  %v6445 = vpop.f32.mrf.mxu0
  %v6446 = vadd.f32 0.0, %v6445
  %v6447 = vpop.f32.mrf.mxu0
  %v6448 = vpop.f32.mrf.mxu0
  %v6449 = vadd.f32 0.0, %v6448
  %v6450 = vpop.f32.mrf.mxu0
  %6451 = vmatprep.mubr.bf16.mxu0 0
  %6452 = vmatmul.mubr.bf16.gmra.mxu0 %v6361
  %v6453 = vpop.f32.mrf.mxu0
  %v6454 = vadd.f32 0.0, %v6453
  %v6455 = vpop.f32.mrf.mxu0
  %v6456 = vpop.f32.mrf.mxu0
  %v6457 = vadd.f32 0.0, %v6456
  %v6458 = vpop.f32.mrf.mxu0
  %6459 = vdwg.mxu0
  %v6460 = vmax.f32 %v5719, %v6398
  %v6461 = vmax.f32 %v5720, %v6401
  %v6462 = vmax.f32 %v5721, %v6406
  %v6463 = vmax.f32 %v5722, %v6409
  %v6464 = vmax.f32 %v5723, %v6414
  %v6465 = vmax.f32 %v5724, %v6417
  %v6466 = vmax.f32 %v5725, %v6422
  %v6467 = vmax.f32 %v5726, %v6425
  %v6468 = vmax.f32 %v5727, %v6430
  %v6469 = vmax.f32 %v5728, %v6433
  %v6470 = vmax.f32 %v5729, %v6438
  %v6471 = vmax.f32 %v5730, %v6441
  %v6472 = vmax.f32 %v5731, %v6446
  %v6473 = vmax.f32 %v5732, %v6449
  %v6474 = vmax.f32 %v5733, %v6454
  %v6475 = vmax.f32 %v5734, %v6457
  %v6476 = vadd.f32 %v6460, %v422
  %v6477 = vadd.f32 %v6461, %v425
  %v6478 = vadd.f32 %v6462, %v430
  %v6479 = vadd.f32 %v6463, %v433
  %v6480 = vadd.f32 %v6464, %v438
  %v6481 = vadd.f32 %v6465, %v441
  %v6482 = vadd.f32 %v6466, %v446
  %v6483 = vadd.f32 %v6467, %v449
  %v6484 = vadd.f32 %v6468, %v454
  %v6485 = vadd.f32 %v6469, %v457
  %v6486 = vadd.f32 %v6470, %v462
  %v6487 = vadd.f32 %v6471, %v465
  %v6488 = vadd.f32 %v6472, %v470
  %v6489 = vadd.f32 %v6473, %v473
  %v6490 = vadd.f32 %v6474, %v478
  %v6491 = vadd.f32 %v6475, %v481
  %vm6492 = vcmask 490496
  %6493 = vst.msk [vmem:[%s13] sm:$0xff] %vm6492, %v6476
  %6494 = vst.msk [vmem:[%s13 + $0x8] sm:$0xff] %vm6492, %v6477
  %6495 = vst.msk [vmem:[%s13 + $0x10] sm:$0xff] %vm6492, %v6478
  %6496 = vst.msk [vmem:[%s13 + $0x18] sm:$0xff] %vm6492, %v6479
  %6497 = vst.msk [vmem:[%s13 + $0x20] sm:$0xff] %vm6492, %v6480
  %6498 = vst.msk [vmem:[%s13 + $0x28] sm:$0xff] %vm6492, %v6481
  %6499 = vst.msk [vmem:[%s13 + $0x30] sm:$0xff] %vm6492, %v6482
  %6500 = vst.msk [vmem:[%s13 + $0x38] sm:$0xff] %vm6492, %v6483
  %6501 = vst.msk [vmem:[%s13 + $0x40] sm:$0xff] %vm6492, %v6484
  %6502 = vst.msk [vmem:[%s13 + $0x48] sm:$0xff] %vm6492, %v6485
  %6503 = vst.msk [vmem:[%s13 + $0x50] sm:$0xff] %vm6492, %v6486
  %6504 = vst.msk [vmem:[%s13 + $0x58] sm:$0xff] %vm6492, %v6487
  %6505 = vst.msk [vmem:[%s13 + $0x60] sm:$0xff] %vm6492, %v6488
  %6506 = vst.msk [vmem:[%s13 + $0x68] sm:$0xff] %vm6492, %v6489
  %6507 = vst.msk [vmem:[%s13 + $0x70] sm:$0xff] %vm6492, %v6490
  %6508 = vst.msk [vmem:[%s13 + $0x78] sm:$0xff] %vm6492, %v6491
  // Predicated region
  $region54: #{encode_net2_forward.3} parent=0 // pred_check
    _
  $region55: #{encode_net2_forward.3} parent=0 // pred_check_branch
    %6510 = sbr.rel (0) target = $region57
  $region56: #{encode_net2_forward.3} parent=0 // pred_region
    _
  $region57: #{encode_net2_forward.3} parent=0 // pred_fallthru
    _
  // Predicated region
  $region58: #{encode_net2_forward.3} parent=0 // pred_check
    _
  $region59: #{encode_net2_forward.3} parent=0 // pred_check_branch
    %6512 = sbr.rel (0) target = $region61
  $region60: #{encode_net2_forward.3} parent=0 // pred_region
    _
  $region61: #{encode_net2_forward.3} parent=0 // pred_fallthru
    _

</llo_original>
